<compile_context>
chip_gen: v6e
topology: v6e:2x2x1
jax: 0.10.0
libtpu: 0.0.40
codegen_flags: <defaults>
</compile_context>

<pallas_src>
import math
import jax
import jax.numpy as jnp
from jax import lax
from jax.experimental import pallas as pl
from jax.experimental.pallas import tpu as pltpu

# ------------------- configuration (module defaults, small) -----------------
IMG_SIZE = 16
PATCH = 4
IN_CH = 3
MODEL_DIM = 32
NUM_HEADS = 4
HEAD_DIM = MODEL_DIM // NUM_HEADS
FF_DIM = 32
NUM_LAYERS = 4
BOTTLENECK_LEN = 8
BOTTLENECK_DIM = 16
BATCH = 2
GRID_HW = IMG_SIZE // PATCH
NUM_PATCHES = GRID_HW * GRID_HW
PATCH_DIM = IN_CH * PATCH * PATCH
LN_EPS = 1e-5
ATTN_SCALE = 1.0 / math.sqrt(HEAD_DIM)


# ------------------------------ fused Pallas kernel ---------------------------
def fused_encoder_kernel(
    patches_ref,                       # (B, N, PATCH_DIM)
    x0_ref,                            # (L, D)  initbottleneck
    patch_w_ref, patch_b_ref,          # (PATCH_DIM, D), (1, D)
    pos_ref,                           # (N, D)  fixed sin/cos pos embedding
    wq_ref, bq_ref,                    # (NL, D, D), (NL, 1, D)
    wkv_ref, bkv_ref,                  # (NL, D, 2D), (NL, 1, 2D)
    wo_ref, bo_ref,                    # (NL, D, D), (NL, 1, D)
    ln_ref,                            # (NL, 4, D) = [ln1w, ln1b, ln2w, ln2b]
    w1_ref, b1_ref,                    # (NL, D, FF), (NL, 1, FF)
    w2_ref, b2_ref,                    # (NL, FF, D), (NL, 1, D)
    fc_w_ref, fc_b_ref,                # (D, BD), (1, BD)
    out_ref,                           # (B, L, BD)
):
    B, N, PD = patches_ref.shape
    L, D = x0_ref.shape
    BD = fc_w_ref.shape[1]

    def layernorm(y, w, b):
        mu = jnp.mean(y, axis=-1, keepdims=True)
        var = jnp.mean((y - mu) ** 2, axis=-1, keepdims=True)
        return (y - mu) * lax.rsqrt(var + LN_EPS) * w + b

    # ---- patch embedding + fixed 2D sin/cos positional embedding ------------
    patches = patches_ref[...].astype(jnp.float32).reshape(B * N, PD)
    ctx = jnp.dot(patches, patch_w_ref[...], preferred_element_type=jnp.float32)
    ctx = ctx + patch_b_ref[...] + jnp.concatenate([pos_ref[...]] * B, axis=0)

    # ---- bottleneck tokens (batch folded into sublanes) ----------------------
    x0_tiled = jnp.concatenate([x0_ref[...].astype(jnp.float32)] * B, axis=0)  # (B*L, D)
    h = x0_tiled

    # ---- NUM_LAYERS post-norm cross-attention blocks (statically unrolled) ---
    for l in range(NUM_LAYERS):
        # fused projections on flattened operands (one matmul each)
        q = jnp.dot(h, wq_ref[l], preferred_element_type=jnp.float32) + bq_ref[l]
        kv = jnp.dot(ctx, wkv_ref[l], preferred_element_type=jnp.float32) + bkv_ref[l]
        k, v = kv[:, :D], kv[:, D:]

        q3 = q.reshape(B, L, D)
        k3 = k.reshape(B, N, D)
        v3 = v.reshape(B, N, D)
        wo_l = wo_ref[l]

        # multi-head cross-attention; output projection folded into head loop
        attn = jnp.zeros((B * L, D), jnp.float32)
        for hh in range(NUM_HEADS):
            sl = slice(hh * HEAD_DIM, (hh + 1) * HEAD_DIM)
            s = jnp.einsum("bld,bnd->bln", q3[:, :, sl], k3[:, :, sl],
                           preferred_element_type=jnp.float32) * ATTN_SCALE
            s = s - jnp.max(s, axis=-1, keepdims=True)
            e = jnp.exp(s)
            p = e * pl.reciprocal(jnp.sum(e, axis=-1, keepdims=True), approx=True)
            oh = jnp.einsum("bln,bnd->bld", p, v3[:, :, sl],
                            preferred_element_type=jnp.float32)
            attn = attn + jnp.dot(oh.reshape(B * L, HEAD_DIM), wo_l[sl, :],
                                  preferred_element_type=jnp.float32)
        attn = attn + bo_ref[l]

        ln_l = ln_ref[l]                                    # (4, D)
        h1 = layernorm(h + attn, ln_l[0:1, :], ln_l[1:2, :])
        ff = jnp.maximum(
            jnp.dot(h1, w1_ref[l], preferred_element_type=jnp.float32) + b1_ref[l], 0.0)
        ff = jnp.dot(ff, w2_ref[l], preferred_element_type=jnp.float32) + b2_ref[l]
        h = layernorm(h1 + ff, ln_l[2:3, :], ln_l[3:4, :])

    # ---- bottleneck head: (initbottleneck + h) @ W + b (singlelayerMLP) ------
    y = jnp.dot(x0_tiled + h, fc_w_ref[...], preferred_element_type=jnp.float32)
    y = y + fc_b_ref[...]
    out_ref[...] = y.reshape(B, L, BD).astype(out_ref.dtype)


# ------------------------------ pallas_call wrapper ---------------------------
@jax.jit
def host_img_transformer_encoder(image, params):
    """image: (B, C, H, W) float32 (NCHW, like PyTorch). focal_loc=False path."""
    B = image.shape[0]
    # glue: non-overlapping patch extraction; (c, ph, pw) flattening order
    # matches reshaping the Conv2d weight (D, C, P, P) -> (C*P*P, D).
    patches = image.reshape(B, IN_CH, GRID_HW, PATCH, GRID_HW, PATCH)
    patches = patches.transpose(0, 2, 4, 1, 3, 5).reshape(B, NUM_PATCHES, PATCH_DIM)

    args = (
        patches, params["initbottleneck"], params["patch_w"], params["patch_b"],
        params["pos"], params["wq"], params["bq"], params["wkv"], params["bkv"],
        params["wo"], params["bo"], params["ln"], params["w1"], params["b1"],
        params["w2"], params["b2"], params["fc_w"], params["fc_b"],
    )
    # TODO(synk): focal_loc=True branch (SinusoidalMLPPositionalEmbedding of the
    # event location concatenated to the context) is not exercised here.
    return pl.pallas_call(
        fused_encoder_kernel,
        out_shape=jax.ShapeDtypeStruct((B, BOTTLENECK_LEN, BOTTLENECK_DIM), jnp.float32),
        in_specs=[pl.BlockSpec(memory_space=pltpu.MemorySpace.VMEM)] * len(args),
        out_specs=pl.BlockSpec(memory_space=pltpu.MemorySpace.VMEM),
    )(*args)


# ------------------------- fixed 2D sin/cos pos. embed ------------------------
def sincos_pos_embed_2d(dim, grid_h, grid_w):
    assert dim % 4 == 0
    d_half = dim // 2

    def one_axis(pos, d):
        omega = 1.0 / (10000.0 ** (jnp.arange(d // 2, dtype=jnp.float32) / (d // 2)))
        out = pos[:, None] * omega[None, :]
        return jnp.concatenate([jnp.sin(out), jnp.cos(out)], axis=1)

    yy, xx = jnp.meshgrid(jnp.arange(grid_h, dtype=jnp.float32),
                          jnp.arange(grid_w, dtype=jnp.float32), indexing="ij")
    emb_h = one_axis(yy.reshape(-1), d_half)
    emb_w = one_axis(xx.reshape(-1), d_half)
    return jnp.concatenate([emb_h, emb_w], axis=1)  # (N, dim)


# --------------------------------- parameters ---------------------------------
def init_params(key):
    keys = iter(jax.random.split(key, 16))

    def nrm(shape, s=0.02):
        return (s * jax.random.normal(next(keys), shape)).astype(jnp.float32)

    NL, D, FF = NUM_LAYERS, MODEL_DIM, FF_DIM
    ln_one_layer = jnp.stack([jnp.ones((D,)), jnp.zeros((D,)),
                              jnp.ones((D,)), jnp.zeros((D,))])           # (4, D)
    params = {
        "initbottleneck": nrm((BOTTLENECK_LEN, D), 1.0),
        # Conv2d(C, D, k=stride=P) weight reshaped to (C*P*P, D) for the matmul
        "patch_w": nrm((PATCH_DIM, D)),
        "patch_b": nrm((1, D)),
        "pos": sincos_pos_embed_2d(D, GRID_HW, GRID_HW).astype(jnp.float32),
        # per-layer weights stacked along a leading NUM_LAYERS axis
        "wq": nrm((NL, D, D)), "bq": nrm((NL, 1, D)),
        "wkv": nrm((NL, D, 2 * D)), "bkv": nrm((NL, 1, 2 * D)),   # Wk|Wv fused
        "wo": nrm((NL, D, D)), "bo": nrm((NL, 1, D)),
        "ln": jnp.tile(ln_one_layer[None], (NL, 1, 1)).astype(jnp.float32),
        "w1": nrm((NL, D, FF)), "b1": nrm((NL, 1, FF)),
        "w2": nrm((NL, FF, D)), "b2": nrm((NL, 1, D)),
        "fc_w": nrm((D, BOTTLENECK_DIM)),
        "fc_b": nrm((1, BOTTLENECK_DIM)),
    }
    return params


if __name__ == "__main__":
    key = jax.random.PRNGKey(0)
    k_img, k_par = jax.random.split(key)
    image = jax.random.normal(k_img, (BATCH, IN_CH, IMG_SIZE, IMG_SIZE), jnp.float32)
    params = init_params(k_par)

    out = host_img_transformer_encoder(image, params)
    out = jax.block_until_ready(out)
    assert out.shape == (BATCH, BOTTLENECK_LEN, BOTTLENECK_DIM)
    assert bool(jnp.all(jnp.isfinite(out)))
    print("KERNEL_OK")
</pallas_src>

<mosaic_0001>
module attributes {stable_mosaic.version = 11 : i64} {
  func.func @fused_encoder_kernel(%arg0: memref<2x16x48xf32, #tpu.memory_space<vmem>>, %arg1: memref<8x32xf32, #tpu.memory_space<vmem>>, %arg2: memref<48x32xf32, #tpu.memory_space<vmem>>, %arg3: memref<1x32xf32, #tpu.memory_space<vmem>>, %arg4: memref<16x32xf32, #tpu.memory_space<vmem>>, %arg5: memref<4x32x32xf32, #tpu.memory_space<vmem>>, %arg6: memref<4x1x32xf32, #tpu.memory_space<vmem>>, %arg7: memref<4x32x64xf32, #tpu.memory_space<vmem>>, %arg8: memref<4x1x64xf32, #tpu.memory_space<vmem>>, %arg9: memref<4x32x32xf32, #tpu.memory_space<vmem>>, %arg10: memref<4x1x32xf32, #tpu.memory_space<vmem>>, %arg11: memref<4x4x32xf32, #tpu.memory_space<vmem>>, %arg12: memref<4x32x32xf32, #tpu.memory_space<vmem>>, %arg13: memref<4x1x32xf32, #tpu.memory_space<vmem>>, %arg14: memref<4x32x32xf32, #tpu.memory_space<vmem>>, %arg15: memref<4x1x32xf32, #tpu.memory_space<vmem>>, %arg16: memref<32x16xf32, #tpu.memory_space<vmem>>, %arg17: memref<1x16xf32, #tpu.memory_space<vmem>>, %arg18: memref<2x8x16xf32, #tpu.memory_space<vmem>>) attributes {dimension_semantics = [], scalar_prefetch = 0 : i64, scratch_operands = 0 : i64, tpu.core_type = #tpu.core_type<tc>} {
    %c0 = arith.constant 0 : index
    %c0_0 = arith.constant 0 : index
    %c0_1 = arith.constant 0 : index
    %0 = vector.load %arg0[%c0, %c0_0, %c0_1] : memref<2x16x48xf32, #tpu.memory_space<vmem>>, vector<2x16x48xf32>
    %1 = vector.shape_cast %0 : vector<2x16x48xf32> to vector<32x48xf32>
    %c0_2 = arith.constant 0 : index
    %c0_3 = arith.constant 0 : index
    %2 = vector.load %arg2[%c0_2, %c0_3] : memref<48x32xf32, #tpu.memory_space<vmem>>, vector<48x32xf32>
    %cst = arith.constant dense<0.000000e+00> : vector<32x32xf32>
    %3 = tpu.matmul %1, %2, %cst {dimension_numbers = #tpu.dot_dimension_numbers<[1], [0], [0], [1], [0, 0, 1, 1], [], []>} : vector<32x48xf32>, vector<48x32xf32>, vector<32x32xf32> -> vector<32x32xf32>
    %c0_4 = arith.constant 0 : index
    %c0_5 = arith.constant 0 : index
    %4 = vector.load %arg3[%c0_4, %c0_5] : memref<1x32xf32, #tpu.memory_space<vmem>>, vector<1x32xf32>
    %5 = vector.broadcast %4 : vector<1x32xf32> to vector<32x32xf32>
    %6 = arith.addf %3, %5 : vector<32x32xf32>
    %c0_6 = arith.constant 0 : index
    %c0_7 = arith.constant 0 : index
    %7 = vector.load %arg4[%c0_6, %c0_7] : memref<16x32xf32, #tpu.memory_space<vmem>>, vector<16x32xf32>
    %8 = tpu.concatenate %7, %7 in 0 : vector<16x32xf32>, vector<16x32xf32> -> vector<32x32xf32>
    %9 = arith.addf %6, %8 : vector<32x32xf32>
    %c0_8 = arith.constant 0 : index
    %c0_9 = arith.constant 0 : index
    %10 = vector.load %arg1[%c0_8, %c0_9] : memref<8x32xf32, #tpu.memory_space<vmem>>, vector<8x32xf32>
    %11 = tpu.concatenate %10, %10 in 0 : vector<8x32xf32>, vector<8x32xf32> -> vector<16x32xf32>
    %c0_10 = arith.constant 0 : index
    %c0_11 = arith.constant 0 : index
    %c0_12 = arith.constant 0 : index
    %12 = vector.load %arg5[%c0_10, %c0_11, %c0_12] : memref<4x32x32xf32, #tpu.memory_space<vmem>>, vector<1x32x32xf32>
    %13 = vector.shape_cast %12 : vector<1x32x32xf32> to vector<32x32xf32>
    %cst_13 = arith.constant dense<0.000000e+00> : vector<16x32xf32>
    %14 = tpu.matmul %11, %13, %cst_13 {dimension_numbers = #tpu.dot_dimension_numbers<[1], [0], [0], [1], [0, 0, 1, 1], [], []>} : vector<16x32xf32>, vector<32x32xf32>, vector<16x32xf32> -> vector<16x32xf32>
    %c0_14 = arith.constant 0 : index
    %c0_15 = arith.constant 0 : index
    %c0_16 = arith.constant 0 : index
    %15 = vector.load %arg6[%c0_14, %c0_15, %c0_16] : memref<4x1x32xf32, #tpu.memory_space<vmem>>, vector<1x1x32xf32>
    %16 = vector.shape_cast %15 : vector<1x1x32xf32> to vector<1x32xf32>
    %17 = vector.broadcast %16 : vector<1x32xf32> to vector<16x32xf32>
    %18 = arith.addf %14, %17 : vector<16x32xf32>
    %c0_17 = arith.constant 0 : index
    %c0_18 = arith.constant 0 : index
    %c0_19 = arith.constant 0 : index
    %19 = vector.load %arg7[%c0_17, %c0_18, %c0_19] : memref<4x32x64xf32, #tpu.memory_space<vmem>>, vector<1x32x64xf32>
    %20 = vector.shape_cast %19 : vector<1x32x64xf32> to vector<32x64xf32>
    %cst_20 = arith.constant dense<0.000000e+00> : vector<32x64xf32>
    %21 = tpu.matmul %9, %20, %cst_20 {dimension_numbers = #tpu.dot_dimension_numbers<[1], [0], [0], [1], [0, 0, 1, 1], [], []>} : vector<32x32xf32>, vector<32x64xf32>, vector<32x64xf32> -> vector<32x64xf32>
    %c0_21 = arith.constant 0 : index
    %c0_22 = arith.constant 0 : index
    %c0_23 = arith.constant 0 : index
    %22 = vector.load %arg8[%c0_21, %c0_22, %c0_23] : memref<4x1x64xf32, #tpu.memory_space<vmem>>, vector<1x1x64xf32>
    %23 = vector.shape_cast %22 : vector<1x1x64xf32> to vector<1x64xf32>
    %24 = vector.broadcast %23 : vector<1x64xf32> to vector<32x64xf32>
    %25 = arith.addf %21, %24 : vector<32x64xf32>
    %26 = vector.extract_strided_slice %25 {offsets = [0, 0], sizes = [32, 32], strides = [1, 1]} : vector<32x64xf32> to vector<32x32xf32>
    %27 = vector.extract_strided_slice %25 {offsets = [0, 32], sizes = [32, 32], strides = [1, 1]} : vector<32x64xf32> to vector<32x32xf32>
    %28 = vector.shape_cast %18 : vector<16x32xf32> to vector<2x8x32xf32>
    %29 = vector.shape_cast %26 : vector<32x32xf32> to vector<2x16x32xf32>
    %30 = vector.shape_cast %27 : vector<32x32xf32> to vector<2x16x32xf32>
    %c0_24 = arith.constant 0 : index
    %c0_25 = arith.constant 0 : index
    %c0_26 = arith.constant 0 : index
    %31 = vector.load %arg9[%c0_24, %c0_25, %c0_26] : memref<4x32x32xf32, #tpu.memory_space<vmem>>, vector<1x32x32xf32>
    %32 = vector.shape_cast %31 : vector<1x32x32xf32> to vector<32x32xf32>
    %cst_27 = arith.constant 0.000000e+00 : f32
    %33 = vector.broadcast %cst_27 : f32 to vector<16x32xf32>
    %34 = vector.extract_strided_slice %28 {offsets = [0, 0, 0], sizes = [2, 8, 8], strides = [1, 1, 1]} : vector<2x8x32xf32> to vector<2x8x8xf32>
    %35 = vector.extract_strided_slice %29 {offsets = [0, 0, 0], sizes = [2, 16, 8], strides = [1, 1, 1]} : vector<2x16x32xf32> to vector<2x16x8xf32>
    "tpu.trace_start"() <{level = 10 : i32, message = "bld,bnd->bln"}> : () -> ()
    %cst_28 = arith.constant dense<0.000000e+00> : vector<2x8x16xf32>
    %36 = tpu.matmul %34, %35, %cst_28 {dimension_numbers = #tpu.dot_dimension_numbers<[2], [2], [1], [1], [0, 0, 0, 1, 1, 1], [0], [0]>} : vector<2x8x8xf32>, vector<2x16x8xf32>, vector<2x8x16xf32> -> vector<2x8x16xf32>
    "tpu.trace_stop"() : () -> ()
    %cst_29 = arith.constant 0.353553385 : f32
    %37 = vector.broadcast %cst_29 : f32 to vector<2x8x16xf32>
    %38 = arith.mulf %36, %37 : vector<2x8x16xf32>
    %cst_30 = arith.constant dense<0xFF800000> : vector<2x8xf32>
    %39 = vector.multi_reduction <maximumf>, %38, %cst_30 [2] : vector<2x8x16xf32> to vector<2x8xf32>
    %40 = vector.shape_cast %39 : vector<2x8xf32> to vector<2x8x1xf32>
    %41 = vector.broadcast %40 : vector<2x8x1xf32> to vector<2x8x16xf32>
    %42 = arith.subf %38, %41 : vector<2x8x16xf32>
    %43 = math.exp %42 : vector<2x8x16xf32>
    %cst_31 = arith.constant dense<0.000000e+00> : vector<2x8xf32>
    %44 = vector.multi_reduction <add>, %43, %cst_31 [2] : vector<2x8x16xf32> to vector<2x8xf32>
    %45 = vector.shape_cast %44 : vector<2x8xf32> to vector<2x8x1xf32>
    %46 = tpu.reciprocal %45 {approx = true} : vector<2x8x1xf32> -> vector<2x8x1xf32>
    %47 = vector.broadcast %46 : vector<2x8x1xf32> to vector<2x8x16xf32>
    %48 = arith.mulf %43, %47 : vector<2x8x16xf32>
    %49 = vector.extract_strided_slice %30 {offsets = [0, 0, 0], sizes = [2, 16, 8], strides = [1, 1, 1]} : vector<2x16x32xf32> to vector<2x16x8xf32>
    "tpu.trace_start"() <{level = 10 : i32, message = "bln,bnd->bld"}> : () -> ()
    %cst_32 = arith.constant dense<0.000000e+00> : vector<2x8x8xf32>
    %50 = tpu.matmul %48, %49, %cst_32 {dimension_numbers = #tpu.dot_dimension_numbers<[2], [1], [1], [2], [0, 0, 0, 1, 1, 2], [0], [0]>} : vector<2x8x16xf32>, vector<2x16x8xf32>, vector<2x8x8xf32> -> vector<2x8x8xf32>
    "tpu.trace_stop"() : () -> ()
    %51 = vector.shape_cast %50 : vector<2x8x8xf32> to vector<16x8xf32>
    %52 = vector.extract_strided_slice %32 {offsets = [0, 0], sizes = [8, 32], strides = [1, 1]} : vector<32x32xf32> to vector<8x32xf32>
    %cst_33 = arith.constant dense<0.000000e+00> : vector<16x32xf32>
    %53 = tpu.matmul %51, %52, %cst_33 {dimension_numbers = #tpu.dot_dimension_numbers<[1], [0], [0], [1], [0, 0, 1, 1], [], []>} : vector<16x8xf32>, vector<8x32xf32>, vector<16x32xf32> -> vector<16x32xf32>
    %54 = arith.addf %33, %53 : vector<16x32xf32>
    %55 = vector.extract_strided_slice %28 {offsets = [0, 0, 8], sizes = [2, 8, 8], strides = [1, 1, 1]} : vector<2x8x32xf32> to vector<2x8x8xf32>
    %56 = vector.extract_strided_slice %29 {offsets = [0, 0, 8], sizes = [2, 16, 8], strides = [1, 1, 1]} : vector<2x16x32xf32> to vector<2x16x8xf32>
    "tpu.trace_start"() <{level = 10 : i32, message = "bld,bnd->bln"}> : () -> ()
    %cst_34 = arith.constant dense<0.000000e+00> : vector<2x8x16xf32>
    %57 = tpu.matmul %55, %56, %cst_34 {dimension_numbers = #tpu.dot_dimension_numbers<[2], [2], [1], [1], [0, 0, 0, 1, 1, 1], [0], [0]>} : vector<2x8x8xf32>, vector<2x16x8xf32>, vector<2x8x16xf32> -> vector<2x8x16xf32>
    "tpu.trace_stop"() : () -> ()
    %cst_35 = arith.constant 0.353553385 : f32
    %58 = vector.broadcast %cst_35 : f32 to vector<2x8x16xf32>
    %59 = arith.mulf %57, %58 : vector<2x8x16xf32>
    %cst_36 = arith.constant dense<0xFF800000> : vector<2x8xf32>
    %60 = vector.multi_reduction <maximumf>, %59, %cst_36 [2] : vector<2x8x16xf32> to vector<2x8xf32>
    %61 = vector.shape_cast %60 : vector<2x8xf32> to vector<2x8x1xf32>
    %62 = vector.broadcast %61 : vector<2x8x1xf32> to vector<2x8x16xf32>
    %63 = arith.subf %59, %62 : vector<2x8x16xf32>
    %64 = math.exp %63 : vector<2x8x16xf32>
    %cst_37 = arith.constant dense<0.000000e+00> : vector<2x8xf32>
    %65 = vector.multi_reduction <add>, %64, %cst_37 [2] : vector<2x8x16xf32> to vector<2x8xf32>
    %66 = vector.shape_cast %65 : vector<2x8xf32> to vector<2x8x1xf32>
    %67 = tpu.reciprocal %66 {approx = true} : vector<2x8x1xf32> -> vector<2x8x1xf32>
    %68 = vector.broadcast %67 : vector<2x8x1xf32> to vector<2x8x16xf32>
    %69 = arith.mulf %64, %68 : vector<2x8x16xf32>
    %70 = vector.extract_strided_slice %30 {offsets = [0, 0, 8], sizes = [2, 16, 8], strides = [1, 1, 1]} : vector<2x16x32xf32> to vector<2x16x8xf32>
    "tpu.trace_start"() <{level = 10 : i32, message = "bln,bnd->bld"}> : () -> ()
    %cst_38 = arith.constant dense<0.000000e+00> : vector<2x8x8xf32>
    %71 = tpu.matmul %69, %70, %cst_38 {dimension_numbers = #tpu.dot_dimension_numbers<[2], [1], [1], [2], [0, 0, 0, 1, 1, 2], [0], [0]>} : vector<2x8x16xf32>, vector<2x16x8xf32>, vector<2x8x8xf32> -> vector<2x8x8xf32>
    "tpu.trace_stop"() : () -> ()
    %72 = vector.shape_cast %71 : vector<2x8x8xf32> to vector<16x8xf32>
    %73 = vector.extract_strided_slice %32 {offsets = [8, 0], sizes = [8, 32], strides = [1, 1]} : vector<32x32xf32> to vector<8x32xf32>
    %cst_39 = arith.constant dense<0.000000e+00> : vector<16x32xf32>
    %74 = tpu.matmul %72, %73, %cst_39 {dimension_numbers = #tpu.dot_dimension_numbers<[1], [0], [0], [1], [0, 0, 1, 1], [], []>} : vector<16x8xf32>, vector<8x32xf32>, vector<16x32xf32> -> vector<16x32xf32>
    %75 = arith.addf %54, %74 : vector<16x32xf32>
    %76 = vector.extract_strided_slice %28 {offsets = [0, 0, 16], sizes = [2, 8, 8], strides = [1, 1, 1]} : vector<2x8x32xf32> to vector<2x8x8xf32>
    %77 = vector.extract_strided_slice %29 {offsets = [0, 0, 16], sizes = [2, 16, 8], strides = [1, 1, 1]} : vector<2x16x32xf32> to vector<2x16x8xf32>
    "tpu.trace_start"() <{level = 10 : i32, message = "bld,bnd->bln"}> : () -> ()
    %cst_40 = arith.constant dense<0.000000e+00> : vector<2x8x16xf32>
    %78 = tpu.matmul %76, %77, %cst_40 {dimension_numbers = #tpu.dot_dimension_numbers<[2], [2], [1], [1], [0, 0, 0, 1, 1, 1], [0], [0]>} : vector<2x8x8xf32>, vector<2x16x8xf32>, vector<2x8x16xf32> -> vector<2x8x16xf32>
    "tpu.trace_stop"() : () -> ()
    %cst_41 = arith.constant 0.353553385 : f32
    %79 = vector.broadcast %cst_41 : f32 to vector<2x8x16xf32>
    %80 = arith.mulf %78, %79 : vector<2x8x16xf32>
    %cst_42 = arith.constant dense<0xFF800000> : vector<2x8xf32>
    %81 = vector.multi_reduction <maximumf>, %80, %cst_42 [2] : vector<2x8x16xf32> to vector<2x8xf32>
    %82 = vector.shape_cast %81 : vector<2x8xf32> to vector<2x8x1xf32>
    %83 = vector.broadcast %82 : vector<2x8x1xf32> to vector<2x8x16xf32>
    %84 = arith.subf %80, %83 : vector<2x8x16xf32>
    %85 = math.exp %84 : vector<2x8x16xf32>
    %cst_43 = arith.constant dense<0.000000e+00> : vector<2x8xf32>
    %86 = vector.multi_reduction <add>, %85, %cst_43 [2] : vector<2x8x16xf32> to vector<2x8xf32>
    %87 = vector.shape_cast %86 : vector<2x8xf32> to vector<2x8x1xf32>
    %88 = tpu.reciprocal %87 {approx = true} : vector<2x8x1xf32> -> vector<2x8x1xf32>
    %89 = vector.broadcast %88 : vector<2x8x1xf32> to vector<2x8x16xf32>
    %90 = arith.mulf %85, %89 : vector<2x8x16xf32>
    %91 = vector.extract_strided_slice %30 {offsets = [0, 0, 16], sizes = [2, 16, 8], strides = [1, 1, 1]} : vector<2x16x32xf32> to vector<2x16x8xf32>
    "tpu.trace_start"() <{level = 10 : i32, message = "bln,bnd->bld"}> : () -> ()
    %cst_44 = arith.constant dense<0.000000e+00> : vector<2x8x8xf32>
    %92 = tpu.matmul %90, %91, %cst_44 {dimension_numbers = #tpu.dot_dimension_numbers<[2], [1], [1], [2], [0, 0, 0, 1, 1, 2], [0], [0]>} : vector<2x8x16xf32>, vector<2x16x8xf32>, vector<2x8x8xf32> -> vector<2x8x8xf32>
    "tpu.trace_stop"() : () -> ()
    %93 = vector.shape_cast %92 : vector<2x8x8xf32> to vector<16x8xf32>
    %94 = vector.extract_strided_slice %32 {offsets = [16, 0], sizes = [8, 32], strides = [1, 1]} : vector<32x32xf32> to vector<8x32xf32>
    %cst_45 = arith.constant dense<0.000000e+00> : vector<16x32xf32>
    %95 = tpu.matmul %93, %94, %cst_45 {dimension_numbers = #tpu.dot_dimension_numbers<[1], [0], [0], [1], [0, 0, 1, 1], [], []>} : vector<16x8xf32>, vector<8x32xf32>, vector<16x32xf32> -> vector<16x32xf32>
    %96 = arith.addf %75, %95 : vector<16x32xf32>
    %97 = vector.extract_strided_slice %28 {offsets = [0, 0, 24], sizes = [2, 8, 8], strides = [1, 1, 1]} : vector<2x8x32xf32> to vector<2x8x8xf32>
    %98 = vector.extract_strided_slice %29 {offsets = [0, 0, 24], sizes = [2, 16, 8], strides = [1, 1, 1]} : vector<2x16x32xf32> to vector<2x16x8xf32>
    "tpu.trace_start"() <{level = 10 : i32, message = "bld,bnd->bln"}> : () -> ()
    %cst_46 = arith.constant dense<0.000000e+00> : vector<2x8x16xf32>
    %99 = tpu.matmul %97, %98, %cst_46 {dimension_numbers = #tpu.dot_dimension_numbers<[2], [2], [1], [1], [0, 0, 0, 1, 1, 1], [0], [0]>} : vector<2x8x8xf32>, vector<2x16x8xf32>, vector<2x8x16xf32> -> vector<2x8x16xf32>
    "tpu.trace_stop"() : () -> ()
    %cst_47 = arith.constant 0.353553385 : f32
    %100 = vector.broadcast %cst_47 : f32 to vector<2x8x16xf32>
    %101 = arith.mulf %99, %100 : vector<2x8x16xf32>
    %cst_48 = arith.constant dense<0xFF800000> : vector<2x8xf32>
    %102 = vector.multi_reduction <maximumf>, %101, %cst_48 [2] : vector<2x8x16xf32> to vector<2x8xf32>
    %103 = vector.shape_cast %102 : vector<2x8xf32> to vector<2x8x1xf32>
    %104 = vector.broadcast %103 : vector<2x8x1xf32> to vector<2x8x16xf32>
    %105 = arith.subf %101, %104 : vector<2x8x16xf32>
    %106 = math.exp %105 : vector<2x8x16xf32>
    %cst_49 = arith.constant dense<0.000000e+00> : vector<2x8xf32>
    %107 = vector.multi_reduction <add>, %106, %cst_49 [2] : vector<2x8x16xf32> to vector<2x8xf32>
    %108 = vector.shape_cast %107 : vector<2x8xf32> to vector<2x8x1xf32>
    %109 = tpu.reciprocal %108 {approx = true} : vector<2x8x1xf32> -> vector<2x8x1xf32>
    %110 = vector.broadcast %109 : vector<2x8x1xf32> to vector<2x8x16xf32>
    %111 = arith.mulf %106, %110 : vector<2x8x16xf32>
    %112 = vector.extract_strided_slice %30 {offsets = [0, 0, 24], sizes = [2, 16, 8], strides = [1, 1, 1]} : vector<2x16x32xf32> to vector<2x16x8xf32>
    "tpu.trace_start"() <{level = 10 : i32, message = "bln,bnd->bld"}> : () -> ()
    %cst_50 = arith.constant dense<0.000000e+00> : vector<2x8x8xf32>
    %113 = tpu.matmul %111, %112, %cst_50 {dimension_numbers = #tpu.dot_dimension_numbers<[2], [1], [1], [2], [0, 0, 0, 1, 1, 2], [0], [0]>} : vector<2x8x16xf32>, vector<2x16x8xf32>, vector<2x8x8xf32> -> vector<2x8x8xf32>
    "tpu.trace_stop"() : () -> ()
    %114 = vector.shape_cast %113 : vector<2x8x8xf32> to vector<16x8xf32>
    %115 = vector.extract_strided_slice %32 {offsets = [24, 0], sizes = [8, 32], strides = [1, 1]} : vector<32x32xf32> to vector<8x32xf32>
    %cst_51 = arith.constant dense<0.000000e+00> : vector<16x32xf32>
    %116 = tpu.matmul %114, %115, %cst_51 {dimension_numbers = #tpu.dot_dimension_numbers<[1], [0], [0], [1], [0, 0, 1, 1], [], []>} : vector<16x8xf32>, vector<8x32xf32>, vector<16x32xf32> -> vector<16x32xf32>
    %117 = arith.addf %96, %116 : vector<16x32xf32>
    %c0_52 = arith.constant 0 : index
    %c0_53 = arith.constant 0 : index
    %c0_54 = arith.constant 0 : index
    %118 = vector.load %arg10[%c0_52, %c0_53, %c0_54] : memref<4x1x32xf32, #tpu.memory_space<vmem>>, vector<1x1x32xf32>
    %119 = vector.shape_cast %118 : vector<1x1x32xf32> to vector<1x32xf32>
    %120 = vector.broadcast %119 : vector<1x32xf32> to vector<16x32xf32>
    %121 = arith.addf %117, %120 : vector<16x32xf32>
    %c0_55 = arith.constant 0 : index
    %c0_56 = arith.constant 0 : index
    %c0_57 = arith.constant 0 : index
    %122 = vector.load %arg11[%c0_55, %c0_56, %c0_57] : memref<4x4x32xf32, #tpu.memory_space<vmem>>, vector<1x4x32xf32>
    %123 = vector.shape_cast %122 : vector<1x4x32xf32> to vector<4x32xf32>
    %124 = arith.addf %11, %121 : vector<16x32xf32>
    %125 = vector.extract_strided_slice %123 {offsets = [0, 0], sizes = [1, 32], strides = [1, 1]} : vector<4x32xf32> to vector<1x32xf32>
    %126 = vector.extract_strided_slice %123 {offsets = [1, 0], sizes = [1, 32], strides = [1, 1]} : vector<4x32xf32> to vector<1x32xf32>
    %cst_58 = arith.constant dense<0.000000e+00> : vector<16xf32>
    %127 = vector.multi_reduction <add>, %124, %cst_58 [1] : vector<16x32xf32> to vector<16xf32>
    %128 = vector.shape_cast %127 : vector<16xf32> to vector<16x1xf32>
    %cst_59 = arith.constant 3.200000e+01 : f32
    %129 = vector.broadcast %cst_59 : f32 to vector<16x1xf32>
    %130 = arith.divf %128, %129 : vector<16x1xf32>
    %131 = vector.broadcast %130 : vector<16x1xf32> to vector<16x32xf32>
    %132 = arith.subf %124, %131 : vector<16x32xf32>
    %133 = arith.mulf %132, %132 : vector<16x32xf32>
    %cst_60 = arith.constant dense<0.000000e+00> : vector<16xf32>
    %134 = vector.multi_reduction <add>, %133, %cst_60 [1] : vector<16x32xf32> to vector<16xf32>
    %135 = vector.shape_cast %134 : vector<16xf32> to vector<16x1xf32>
    %cst_61 = arith.constant 3.200000e+01 : f32
    %136 = vector.broadcast %cst_61 : f32 to vector<16x1xf32>
    %137 = arith.divf %135, %136 : vector<16x1xf32>
    %138 = vector.broadcast %130 : vector<16x1xf32> to vector<16x32xf32>
    %139 = arith.subf %124, %138 : vector<16x32xf32>
    %cst_62 = arith.constant 9.99999974E-6 : f32
    %140 = vector.broadcast %cst_62 : f32 to vector<16x1xf32>
    %141 = arith.addf %137, %140 : vector<16x1xf32>
    %142 = math.rsqrt %141 : vector<16x1xf32>
    %143 = vector.broadcast %142 : vector<16x1xf32> to vector<16x32xf32>
    %144 = arith.mulf %139, %143 : vector<16x32xf32>
    %145 = vector.broadcast %125 : vector<1x32xf32> to vector<16x32xf32>
    %146 = arith.mulf %144, %145 : vector<16x32xf32>
    %147 = vector.broadcast %126 : vector<1x32xf32> to vector<16x32xf32>
    %148 = arith.addf %146, %147 : vector<16x32xf32>
    %c0_63 = arith.constant 0 : index
    %c0_64 = arith.constant 0 : index
    %c0_65 = arith.constant 0 : index
    %149 = vector.load %arg12[%c0_63, %c0_64, %c0_65] : memref<4x32x32xf32, #tpu.memory_space<vmem>>, vector<1x32x32xf32>
    %150 = vector.shape_cast %149 : vector<1x32x32xf32> to vector<32x32xf32>
    %cst_66 = arith.constant dense<0.000000e+00> : vector<16x32xf32>
    %151 = tpu.matmul %148, %150, %cst_66 {dimension_numbers = #tpu.dot_dimension_numbers<[1], [0], [0], [1], [0, 0, 1, 1], [], []>} : vector<16x32xf32>, vector<32x32xf32>, vector<16x32xf32> -> vector<16x32xf32>
    %c0_67 = arith.constant 0 : index
    %c0_68 = arith.constant 0 : index
    %c0_69 = arith.constant 0 : index
    %152 = vector.load %arg13[%c0_67, %c0_68, %c0_69] : memref<4x1x32xf32, #tpu.memory_space<vmem>>, vector<1x1x32xf32>
    %153 = vector.shape_cast %152 : vector<1x1x32xf32> to vector<1x32xf32>
    %154 = vector.broadcast %153 : vector<1x32xf32> to vector<16x32xf32>
    %155 = arith.addf %151, %154 : vector<16x32xf32>
    %cst_70 = arith.constant 0.000000e+00 : f32
    %156 = vector.broadcast %cst_70 : f32 to vector<16x32xf32>
    %157 = arith.maximumf %155, %156 : vector<16x32xf32>
    %c0_71 = arith.constant 0 : index
    %c0_72 = arith.constant 0 : index
    %c0_73 = arith.constant 0 : index
    %158 = vector.load %arg14[%c0_71, %c0_72, %c0_73] : memref<4x32x32xf32, #tpu.memory_space<vmem>>, vector<1x32x32xf32>
    %159 = vector.shape_cast %158 : vector<1x32x32xf32> to vector<32x32xf32>
    %cst_74 = arith.constant dense<0.000000e+00> : vector<16x32xf32>
    %160 = tpu.matmul %157, %159, %cst_74 {dimension_numbers = #tpu.dot_dimension_numbers<[1], [0], [0], [1], [0, 0, 1, 1], [], []>} : vector<16x32xf32>, vector<32x32xf32>, vector<16x32xf32> -> vector<16x32xf32>
    %c0_75 = arith.constant 0 : index
    %c0_76 = arith.constant 0 : index
    %c0_77 = arith.constant 0 : index
    %161 = vector.load %arg15[%c0_75, %c0_76, %c0_77] : memref<4x1x32xf32, #tpu.memory_space<vmem>>, vector<1x1x32xf32>
    %162 = vector.shape_cast %161 : vector<1x1x32xf32> to vector<1x32xf32>
    %163 = vector.broadcast %162 : vector<1x32xf32> to vector<16x32xf32>
    %164 = arith.addf %160, %163 : vector<16x32xf32>
    %165 = arith.addf %148, %164 : vector<16x32xf32>
    %166 = vector.extract_strided_slice %123 {offsets = [2, 0], sizes = [1, 32], strides = [1, 1]} : vector<4x32xf32> to vector<1x32xf32>
    %167 = vector.extract_strided_slice %123 {offsets = [3, 0], sizes = [1, 32], strides = [1, 1]} : vector<4x32xf32> to vector<1x32xf32>
    %cst_78 = arith.constant dense<0.000000e+00> : vector<16xf32>
    %168 = vector.multi_reduction <add>, %165, %cst_78 [1] : vector<16x32xf32> to vector<16xf32>
    %169 = vector.shape_cast %168 : vector<16xf32> to vector<16x1xf32>
    %cst_79 = arith.constant 3.200000e+01 : f32
    %170 = vector.broadcast %cst_79 : f32 to vector<16x1xf32>
    %171 = arith.divf %169, %170 : vector<16x1xf32>
    %172 = vector.broadcast %171 : vector<16x1xf32> to vector<16x32xf32>
    %173 = arith.subf %165, %172 : vector<16x32xf32>
    %174 = arith.mulf %173, %173 : vector<16x32xf32>
    %cst_80 = arith.constant dense<0.000000e+00> : vector<16xf32>
    %175 = vector.multi_reduction <add>, %174, %cst_80 [1] : vector<16x32xf32> to vector<16xf32>
    %176 = vector.shape_cast %175 : vector<16xf32> to vector<16x1xf32>
    %cst_81 = arith.constant 3.200000e+01 : f32
    %177 = vector.broadcast %cst_81 : f32 to vector<16x1xf32>
    %178 = arith.divf %176, %177 : vector<16x1xf32>
    %179 = vector.broadcast %171 : vector<16x1xf32> to vector<16x32xf32>
    %180 = arith.subf %165, %179 : vector<16x32xf32>
    %cst_82 = arith.constant 9.99999974E-6 : f32
    %181 = vector.broadcast %cst_82 : f32 to vector<16x1xf32>
    %182 = arith.addf %178, %181 : vector<16x1xf32>
    %183 = math.rsqrt %182 : vector<16x1xf32>
    %184 = vector.broadcast %183 : vector<16x1xf32> to vector<16x32xf32>
    %185 = arith.mulf %180, %184 : vector<16x32xf32>
    %186 = vector.broadcast %166 : vector<1x32xf32> to vector<16x32xf32>
    %187 = arith.mulf %185, %186 : vector<16x32xf32>
    %188 = vector.broadcast %167 : vector<1x32xf32> to vector<16x32xf32>
    %189 = arith.addf %187, %188 : vector<16x32xf32>
    %c1 = arith.constant 1 : index
    %c0_83 = arith.constant 0 : index
    %c0_84 = arith.constant 0 : index
    %190 = vector.load %arg5[%c1, %c0_83, %c0_84] : memref<4x32x32xf32, #tpu.memory_space<vmem>>, vector<1x32x32xf32>
    %191 = vector.shape_cast %190 : vector<1x32x32xf32> to vector<32x32xf32>
    %cst_85 = arith.constant dense<0.000000e+00> : vector<16x32xf32>
    %192 = tpu.matmul %189, %191, %cst_85 {dimension_numbers = #tpu.dot_dimension_numbers<[1], [0], [0], [1], [0, 0, 1, 1], [], []>} : vector<16x32xf32>, vector<32x32xf32>, vector<16x32xf32> -> vector<16x32xf32>
    %c1_86 = arith.constant 1 : index
    %c0_87 = arith.constant 0 : index
    %c0_88 = arith.constant 0 : index
    %193 = vector.load %arg6[%c1_86, %c0_87, %c0_88] : memref<4x1x32xf32, #tpu.memory_space<vmem>>, vector<1x1x32xf32>
    %194 = vector.shape_cast %193 : vector<1x1x32xf32> to vector<1x32xf32>
    %195 = vector.broadcast %194 : vector<1x32xf32> to vector<16x32xf32>
    %196 = arith.addf %192, %195 : vector<16x32xf32>
    %c1_89 = arith.constant 1 : index
    %c0_90 = arith.constant 0 : index
    %c0_91 = arith.constant 0 : index
    %197 = vector.load %arg7[%c1_89, %c0_90, %c0_91] : memref<4x32x64xf32, #tpu.memory_space<vmem>>, vector<1x32x64xf32>
    %198 = vector.shape_cast %197 : vector<1x32x64xf32> to vector<32x64xf32>
    %cst_92 = arith.constant dense<0.000000e+00> : vector<32x64xf32>
    %199 = tpu.matmul %9, %198, %cst_92 {dimension_numbers = #tpu.dot_dimension_numbers<[1], [0], [0], [1], [0, 0, 1, 1], [], []>} : vector<32x32xf32>, vector<32x64xf32>, vector<32x64xf32> -> vector<32x64xf32>
    %c1_93 = arith.constant 1 : index
    %c0_94 = arith.constant 0 : index
    %c0_95 = arith.constant 0 : index
    %200 = vector.load %arg8[%c1_93, %c0_94, %c0_95] : memref<4x1x64xf32, #tpu.memory_space<vmem>>, vector<1x1x64xf32>
    %201 = vector.shape_cast %200 : vector<1x1x64xf32> to vector<1x64xf32>
    %202 = vector.broadcast %201 : vector<1x64xf32> to vector<32x64xf32>
    %203 = arith.addf %199, %202 : vector<32x64xf32>
    %204 = vector.extract_strided_slice %203 {offsets = [0, 0], sizes = [32, 32], strides = [1, 1]} : vector<32x64xf32> to vector<32x32xf32>
    %205 = vector.extract_strided_slice %203 {offsets = [0, 32], sizes = [32, 32], strides = [1, 1]} : vector<32x64xf32> to vector<32x32xf32>
    %206 = vector.shape_cast %196 : vector<16x32xf32> to vector<2x8x32xf32>
    %207 = vector.shape_cast %204 : vector<32x32xf32> to vector<2x16x32xf32>
    %208 = vector.shape_cast %205 : vector<32x32xf32> to vector<2x16x32xf32>
    %c1_96 = arith.constant 1 : index
    %c0_97 = arith.constant 0 : index
    %c0_98 = arith.constant 0 : index
    %209 = vector.load %arg9[%c1_96, %c0_97, %c0_98] : memref<4x32x32xf32, #tpu.memory_space<vmem>>, vector<1x32x32xf32>
    %210 = vector.shape_cast %209 : vector<1x32x32xf32> to vector<32x32xf32>
    %cst_99 = arith.constant 0.000000e+00 : f32
    %211 = vector.broadcast %cst_99 : f32 to vector<16x32xf32>
    %212 = vector.extract_strided_slice %206 {offsets = [0, 0, 0], sizes = [2, 8, 8], strides = [1, 1, 1]} : vector<2x8x32xf32> to vector<2x8x8xf32>
    %213 = vector.extract_strided_slice %207 {offsets = [0, 0, 0], sizes = [2, 16, 8], strides = [1, 1, 1]} : vector<2x16x32xf32> to vector<2x16x8xf32>
    "tpu.trace_start"() <{level = 10 : i32, message = "bld,bnd->bln"}> : () -> ()
    %cst_100 = arith.constant dense<0.000000e+00> : vector<2x8x16xf32>
    %214 = tpu.matmul %212, %213, %cst_100 {dimension_numbers = #tpu.dot_dimension_numbers<[2], [2], [1], [1], [0, 0, 0, 1, 1, 1], [0], [0]>} : vector<2x8x8xf32>, vector<2x16x8xf32>, vector<2x8x16xf32> -> vector<2x8x16xf32>
    "tpu.trace_stop"() : () -> ()
    %cst_101 = arith.constant 0.353553385 : f32
    %215 = vector.broadcast %cst_101 : f32 to vector<2x8x16xf32>
    %216 = arith.mulf %214, %215 : vector<2x8x16xf32>
    %cst_102 = arith.constant dense<0xFF800000> : vector<2x8xf32>
    %217 = vector.multi_reduction <maximumf>, %216, %cst_102 [2] : vector<2x8x16xf32> to vector<2x8xf32>
    %218 = vector.shape_cast %217 : vector<2x8xf32> to vector<2x8x1xf32>
    %219 = vector.broadcast %218 : vector<2x8x1xf32> to vector<2x8x16xf32>
    %220 = arith.subf %216, %219 : vector<2x8x16xf32>
    %221 = math.exp %220 : vector<2x8x16xf32>
    %cst_103 = arith.constant dense<0.000000e+00> : vector<2x8xf32>
    %222 = vector.multi_reduction <add>, %221, %cst_103 [2] : vector<2x8x16xf32> to vector<2x8xf32>
    %223 = vector.shape_cast %222 : vector<2x8xf32> to vector<2x8x1xf32>
    %224 = tpu.reciprocal %223 {approx = true} : vector<2x8x1xf32> -> vector<2x8x1xf32>
    %225 = vector.broadcast %224 : vector<2x8x1xf32> to vector<2x8x16xf32>
    %226 = arith.mulf %221, %225 : vector<2x8x16xf32>
    %227 = vector.extract_strided_slice %208 {offsets = [0, 0, 0], sizes = [2, 16, 8], strides = [1, 1, 1]} : vector<2x16x32xf32> to vector<2x16x8xf32>
    "tpu.trace_start"() <{level = 10 : i32, message = "bln,bnd->bld"}> : () -> ()
    %cst_104 = arith.constant dense<0.000000e+00> : vector<2x8x8xf32>
    %228 = tpu.matmul %226, %227, %cst_104 {dimension_numbers = #tpu.dot_dimension_numbers<[2], [1], [1], [2], [0, 0, 0, 1, 1, 2], [0], [0]>} : vector<2x8x16xf32>, vector<2x16x8xf32>, vector<2x8x8xf32> -> vector<2x8x8xf32>
    "tpu.trace_stop"() : () -> ()
    %229 = vector.shape_cast %228 : vector<2x8x8xf32> to vector<16x8xf32>
    %230 = vector.extract_strided_slice %210 {offsets = [0, 0], sizes = [8, 32], strides = [1, 1]} : vector<32x32xf32> to vector<8x32xf32>
    %cst_105 = arith.constant dense<0.000000e+00> : vector<16x32xf32>
    %231 = tpu.matmul %229, %230, %cst_105 {dimension_numbers = #tpu.dot_dimension_numbers<[1], [0], [0], [1], [0, 0, 1, 1], [], []>} : vector<16x8xf32>, vector<8x32xf32>, vector<16x32xf32> -> vector<16x32xf32>
    %232 = arith.addf %211, %231 : vector<16x32xf32>
    %233 = vector.extract_strided_slice %206 {offsets = [0, 0, 8], sizes = [2, 8, 8], strides = [1, 1, 1]} : vector<2x8x32xf32> to vector<2x8x8xf32>
    %234 = vector.extract_strided_slice %207 {offsets = [0, 0, 8], sizes = [2, 16, 8], strides = [1, 1, 1]} : vector<2x16x32xf32> to vector<2x16x8xf32>
    "tpu.trace_start"() <{level = 10 : i32, message = "bld,bnd->bln"}> : () -> ()
    %cst_106 = arith.constant dense<0.000000e+00> : vector<2x8x16xf32>
    %235 = tpu.matmul %233, %234, %cst_106 {dimension_numbers = #tpu.dot_dimension_numbers<[2], [2], [1], [1], [0, 0, 0, 1, 1, 1], [0], [0]>} : vector<2x8x8xf32>, vector<2x16x8xf32>, vector<2x8x16xf32> -> vector<2x8x16xf32>
    "tpu.trace_stop"() : () -> ()
    %cst_107 = arith.constant 0.353553385 : f32
    %236 = vector.broadcast %cst_107 : f32 to vector<2x8x16xf32>
    %237 = arith.mulf %235, %236 : vector<2x8x16xf32>
    %cst_108 = arith.constant dense<0xFF800000> : vector<2x8xf32>
    %238 = vector.multi_reduction <maximumf>, %237, %cst_108 [2] : vector<2x8x16xf32> to vector<2x8xf32>
    %239 = vector.shape_cast %238 : vector<2x8xf32> to vector<2x8x1xf32>
    %240 = vector.broadcast %239 : vector<2x8x1xf32> to vector<2x8x16xf32>
    %241 = arith.subf %237, %240 : vector<2x8x16xf32>
    %242 = math.exp %241 : vector<2x8x16xf32>
    %cst_109 = arith.constant dense<0.000000e+00> : vector<2x8xf32>
    %243 = vector.multi_reduction <add>, %242, %cst_109 [2] : vector<2x8x16xf32> to vector<2x8xf32>
    %244 = vector.shape_cast %243 : vector<2x8xf32> to vector<2x8x1xf32>
    %245 = tpu.reciprocal %244 {approx = true} : vector<2x8x1xf32> -> vector<2x8x1xf32>
    %246 = vector.broadcast %245 : vector<2x8x1xf32> to vector<2x8x16xf32>
    %247 = arith.mulf %242, %246 : vector<2x8x16xf32>
    %248 = vector.extract_strided_slice %208 {offsets = [0, 0, 8], sizes = [2, 16, 8], strides = [1, 1, 1]} : vector<2x16x32xf32> to vector<2x16x8xf32>
    "tpu.trace_start"() <{level = 10 : i32, message = "bln,bnd->bld"}> : () -> ()
    %cst_110 = arith.constant dense<0.000000e+00> : vector<2x8x8xf32>
    %249 = tpu.matmul %247, %248, %cst_110 {dimension_numbers = #tpu.dot_dimension_numbers<[2], [1], [1], [2], [0, 0, 0, 1, 1, 2], [0], [0]>} : vector<2x8x16xf32>, vector<2x16x8xf32>, vector<2x8x8xf32> -> vector<2x8x8xf32>
    "tpu.trace_stop"() : () -> ()
    %250 = vector.shape_cast %249 : vector<2x8x8xf32> to vector<16x8xf32>
    %251 = vector.extract_strided_slice %210 {offsets = [8, 0], sizes = [8, 32], strides = [1, 1]} : vector<32x32xf32> to vector<8x32xf32>
    %cst_111 = arith.constant dense<0.000000e+00> : vector<16x32xf32>
    %252 = tpu.matmul %250, %251, %cst_111 {dimension_numbers = #tpu.dot_dimension_numbers<[1], [0], [0], [1], [0, 0, 1, 1], [], []>} : vector<16x8xf32>, vector<8x32xf32>, vector<16x32xf32> -> vector<16x32xf32>
    %253 = arith.addf %232, %252 : vector<16x32xf32>
    %254 = vector.extract_strided_slice %206 {offsets = [0, 0, 16], sizes = [2, 8, 8], strides = [1, 1, 1]} : vector<2x8x32xf32> to vector<2x8x8xf32>
    %255 = vector.extract_strided_slice %207 {offsets = [0, 0, 16], sizes = [2, 16, 8], strides = [1, 1, 1]} : vector<2x16x32xf32> to vector<2x16x8xf32>
    "tpu.trace_start"() <{level = 10 : i32, message = "bld,bnd->bln"}> : () -> ()
    %cst_112 = arith.constant dense<0.000000e+00> : vector<2x8x16xf32>
    %256 = tpu.matmul %254, %255, %cst_112 {dimension_numbers = #tpu.dot_dimension_numbers<[2], [2], [1], [1], [0, 0, 0, 1, 1, 1], [0], [0]>} : vector<2x8x8xf32>, vector<2x16x8xf32>, vector<2x8x16xf32> -> vector<2x8x16xf32>
    "tpu.trace_stop"() : () -> ()
    %cst_113 = arith.constant 0.353553385 : f32
    %257 = vector.broadcast %cst_113 : f32 to vector<2x8x16xf32>
    %258 = arith.mulf %256, %257 : vector<2x8x16xf32>
    %cst_114 = arith.constant dense<0xFF800000> : vector<2x8xf32>
    %259 = vector.multi_reduction <maximumf>, %258, %cst_114 [2] : vector<2x8x16xf32> to vector<2x8xf32>
    %260 = vector.shape_cast %259 : vector<2x8xf32> to vector<2x8x1xf32>
    %261 = vector.broadcast %260 : vector<2x8x1xf32> to vector<2x8x16xf32>
    %262 = arith.subf %258, %261 : vector<2x8x16xf32>
    %263 = math.exp %262 : vector<2x8x16xf32>
    %cst_115 = arith.constant dense<0.000000e+00> : vector<2x8xf32>
    %264 = vector.multi_reduction <add>, %263, %cst_115 [2] : vector<2x8x16xf32> to vector<2x8xf32>
    %265 = vector.shape_cast %264 : vector<2x8xf32> to vector<2x8x1xf32>
    %266 = tpu.reciprocal %265 {approx = true} : vector<2x8x1xf32> -> vector<2x8x1xf32>
    %267 = vector.broadcast %266 : vector<2x8x1xf32> to vector<2x8x16xf32>
    %268 = arith.mulf %263, %267 : vector<2x8x16xf32>
    %269 = vector.extract_strided_slice %208 {offsets = [0, 0, 16], sizes = [2, 16, 8], strides = [1, 1, 1]} : vector<2x16x32xf32> to vector<2x16x8xf32>
    "tpu.trace_start"() <{level = 10 : i32, message = "bln,bnd->bld"}> : () -> ()
    %cst_116 = arith.constant dense<0.000000e+00> : vector<2x8x8xf32>
    %270 = tpu.matmul %268, %269, %cst_116 {dimension_numbers = #tpu.dot_dimension_numbers<[2], [1], [1], [2], [0, 0, 0, 1, 1, 2], [0], [0]>} : vector<2x8x16xf32>, vector<2x16x8xf32>, vector<2x8x8xf32> -> vector<2x8x8xf32>
    "tpu.trace_stop"() : () -> ()
    %271 = vector.shape_cast %270 : vector<2x8x8xf32> to vector<16x8xf32>
    %272 = vector.extract_strided_slice %210 {offsets = [16, 0], sizes = [8, 32], strides = [1, 1]} : vector<32x32xf32> to vector<8x32xf32>
    %cst_117 = arith.constant dense<0.000000e+00> : vector<16x32xf32>
    %273 = tpu.matmul %271, %272, %cst_117 {dimension_numbers = #tpu.dot_dimension_numbers<[1], [0], [0], [1], [0, 0, 1, 1], [], []>} : vector<16x8xf32>, vector<8x32xf32>, vector<16x32xf32> -> vector<16x32xf32>
    %274 = arith.addf %253, %273 : vector<16x32xf32>
    %275 = vector.extract_strided_slice %206 {offsets = [0, 0, 24], sizes = [2, 8, 8], strides = [1, 1, 1]} : vector<2x8x32xf32> to vector<2x8x8xf32>
    %276 = vector.extract_strided_slice %207 {offsets = [0, 0, 24], sizes = [2, 16, 8], strides = [1, 1, 1]} : vector<2x16x32xf32> to vector<2x16x8xf32>
    "tpu.trace_start"() <{level = 10 : i32, message = "bld,bnd->bln"}> : () -> ()
    %cst_118 = arith.constant dense<0.000000e+00> : vector<2x8x16xf32>
    %277 = tpu.matmul %275, %276, %cst_118 {dimension_numbers = #tpu.dot_dimension_numbers<[2], [2], [1], [1], [0, 0, 0, 1, 1, 1], [0], [0]>} : vector<2x8x8xf32>, vector<2x16x8xf32>, vector<2x8x16xf32> -> vector<2x8x16xf32>
    "tpu.trace_stop"() : () -> ()
    %cst_119 = arith.constant 0.353553385 : f32
    %278 = vector.broadcast %cst_119 : f32 to vector<2x8x16xf32>
    %279 = arith.mulf %277, %278 : vector<2x8x16xf32>
    %cst_120 = arith.constant dense<0xFF800000> : vector<2x8xf32>
    %280 = vector.multi_reduction <maximumf>, %279, %cst_120 [2] : vector<2x8x16xf32> to vector<2x8xf32>
    %281 = vector.shape_cast %280 : vector<2x8xf32> to vector<2x8x1xf32>
    %282 = vector.broadcast %281 : vector<2x8x1xf32> to vector<2x8x16xf32>
    %283 = arith.subf %279, %282 : vector<2x8x16xf32>
    %284 = math.exp %283 : vector<2x8x16xf32>
    %cst_121 = arith.constant dense<0.000000e+00> : vector<2x8xf32>
    %285 = vector.multi_reduction <add>, %284, %cst_121 [2] : vector<2x8x16xf32> to vector<2x8xf32>
    %286 = vector.shape_cast %285 : vector<2x8xf32> to vector<2x8x1xf32>
    %287 = tpu.reciprocal %286 {approx = true} : vector<2x8x1xf32> -> vector<2x8x1xf32>
    %288 = vector.broadcast %287 : vector<2x8x1xf32> to vector<2x8x16xf32>
    %289 = arith.mulf %284, %288 : vector<2x8x16xf32>
    %290 = vector.extract_strided_slice %208 {offsets = [0, 0, 24], sizes = [2, 16, 8], strides = [1, 1, 1]} : vector<2x16x32xf32> to vector<2x16x8xf32>
    "tpu.trace_start"() <{level = 10 : i32, message = "bln,bnd->bld"}> : () -> ()
    %cst_122 = arith.constant dense<0.000000e+00> : vector<2x8x8xf32>
    %291 = tpu.matmul %289, %290, %cst_122 {dimension_numbers = #tpu.dot_dimension_numbers<[2], [1], [1], [2], [0, 0, 0, 1, 1, 2], [0], [0]>} : vector<2x8x16xf32>, vector<2x16x8xf32>, vector<2x8x8xf32> -> vector<2x8x8xf32>
    "tpu.trace_stop"() : () -> ()
    %292 = vector.shape_cast %291 : vector<2x8x8xf32> to vector<16x8xf32>
    %293 = vector.extract_strided_slice %210 {offsets = [24, 0], sizes = [8, 32], strides = [1, 1]} : vector<32x32xf32> to vector<8x32xf32>
    %cst_123 = arith.constant dense<0.000000e+00> : vector<16x32xf32>
    %294 = tpu.matmul %292, %293, %cst_123 {dimension_numbers = #tpu.dot_dimension_numbers<[1], [0], [0], [1], [0, 0, 1, 1], [], []>} : vector<16x8xf32>, vector<8x32xf32>, vector<16x32xf32> -> vector<16x32xf32>
    %295 = arith.addf %274, %294 : vector<16x32xf32>
    %c1_124 = arith.constant 1 : index
    %c0_125 = arith.constant 0 : index
    %c0_126 = arith.constant 0 : index
    %296 = vector.load %arg10[%c1_124, %c0_125, %c0_126] : memref<4x1x32xf32, #tpu.memory_space<vmem>>, vector<1x1x32xf32>
    %297 = vector.shape_cast %296 : vector<1x1x32xf32> to vector<1x32xf32>
    %298 = vector.broadcast %297 : vector<1x32xf32> to vector<16x32xf32>
    %299 = arith.addf %295, %298 : vector<16x32xf32>
    %c1_127 = arith.constant 1 : index
    %c0_128 = arith.constant 0 : index
    %c0_129 = arith.constant 0 : index
    %300 = vector.load %arg11[%c1_127, %c0_128, %c0_129] : memref<4x4x32xf32, #tpu.memory_space<vmem>>, vector<1x4x32xf32>
    %301 = vector.shape_cast %300 : vector<1x4x32xf32> to vector<4x32xf32>
    %302 = arith.addf %189, %299 : vector<16x32xf32>
    %303 = vector.extract_strided_slice %301 {offsets = [0, 0], sizes = [1, 32], strides = [1, 1]} : vector<4x32xf32> to vector<1x32xf32>
    %304 = vector.extract_strided_slice %301 {offsets = [1, 0], sizes = [1, 32], strides = [1, 1]} : vector<4x32xf32> to vector<1x32xf32>
    %cst_130 = arith.constant dense<0.000000e+00> : vector<16xf32>
    %305 = vector.multi_reduction <add>, %302, %cst_130 [1] : vector<16x32xf32> to vector<16xf32>
    %306 = vector.shape_cast %305 : vector<16xf32> to vector<16x1xf32>
    %cst_131 = arith.constant 3.200000e+01 : f32
    %307 = vector.broadcast %cst_131 : f32 to vector<16x1xf32>
    %308 = arith.divf %306, %307 : vector<16x1xf32>
    %309 = vector.broadcast %308 : vector<16x1xf32> to vector<16x32xf32>
    %310 = arith.subf %302, %309 : vector<16x32xf32>
    %311 = arith.mulf %310, %310 : vector<16x32xf32>
    %cst_132 = arith.constant dense<0.000000e+00> : vector<16xf32>
    %312 = vector.multi_reduction <add>, %311, %cst_132 [1] : vector<16x32xf32> to vector<16xf32>
    %313 = vector.shape_cast %312 : vector<16xf32> to vector<16x1xf32>
    %cst_133 = arith.constant 3.200000e+01 : f32
    %314 = vector.broadcast %cst_133 : f32 to vector<16x1xf32>
    %315 = arith.divf %313, %314 : vector<16x1xf32>
    %316 = vector.broadcast %308 : vector<16x1xf32> to vector<16x32xf32>
    %317 = arith.subf %302, %316 : vector<16x32xf32>
    %cst_134 = arith.constant 9.99999974E-6 : f32
    %318 = vector.broadcast %cst_134 : f32 to vector<16x1xf32>
    %319 = arith.addf %315, %318 : vector<16x1xf32>
    %320 = math.rsqrt %319 : vector<16x1xf32>
    %321 = vector.broadcast %320 : vector<16x1xf32> to vector<16x32xf32>
    %322 = arith.mulf %317, %321 : vector<16x32xf32>
    %323 = vector.broadcast %303 : vector<1x32xf32> to vector<16x32xf32>
    %324 = arith.mulf %322, %323 : vector<16x32xf32>
    %325 = vector.broadcast %304 : vector<1x32xf32> to vector<16x32xf32>
    %326 = arith.addf %324, %325 : vector<16x32xf32>
    %c1_135 = arith.constant 1 : index
    %c0_136 = arith.constant 0 : index
    %c0_137 = arith.constant 0 : index
    %327 = vector.load %arg12[%c1_135, %c0_136, %c0_137] : memref<4x32x32xf32, #tpu.memory_space<vmem>>, vector<1x32x32xf32>
    %328 = vector.shape_cast %327 : vector<1x32x32xf32> to vector<32x32xf32>
    %cst_138 = arith.constant dense<0.000000e+00> : vector<16x32xf32>
    %329 = tpu.matmul %326, %328, %cst_138 {dimension_numbers = #tpu.dot_dimension_numbers<[1], [0], [0], [1], [0, 0, 1, 1], [], []>} : vector<16x32xf32>, vector<32x32xf32>, vector<16x32xf32> -> vector<16x32xf32>
    %c1_139 = arith.constant 1 : index
    %c0_140 = arith.constant 0 : index
    %c0_141 = arith.constant 0 : index
    %330 = vector.load %arg13[%c1_139, %c0_140, %c0_141] : memref<4x1x32xf32, #tpu.memory_space<vmem>>, vector<1x1x32xf32>
    %331 = vector.shape_cast %330 : vector<1x1x32xf32> to vector<1x32xf32>
    %332 = vector.broadcast %331 : vector<1x32xf32> to vector<16x32xf32>
    %333 = arith.addf %329, %332 : vector<16x32xf32>
    %cst_142 = arith.constant 0.000000e+00 : f32
    %334 = vector.broadcast %cst_142 : f32 to vector<16x32xf32>
    %335 = arith.maximumf %333, %334 : vector<16x32xf32>
    %c1_143 = arith.constant 1 : index
    %c0_144 = arith.constant 0 : index
    %c0_145 = arith.constant 0 : index
    %336 = vector.load %arg14[%c1_143, %c0_144, %c0_145] : memref<4x32x32xf32, #tpu.memory_space<vmem>>, vector<1x32x32xf32>
    %337 = vector.shape_cast %336 : vector<1x32x32xf32> to vector<32x32xf32>
    %cst_146 = arith.constant dense<0.000000e+00> : vector<16x32xf32>
    %338 = tpu.matmul %335, %337, %cst_146 {dimension_numbers = #tpu.dot_dimension_numbers<[1], [0], [0], [1], [0, 0, 1, 1], [], []>} : vector<16x32xf32>, vector<32x32xf32>, vector<16x32xf32> -> vector<16x32xf32>
    %c1_147 = arith.constant 1 : index
    %c0_148 = arith.constant 0 : index
    %c0_149 = arith.constant 0 : index
    %339 = vector.load %arg15[%c1_147, %c0_148, %c0_149] : memref<4x1x32xf32, #tpu.memory_space<vmem>>, vector<1x1x32xf32>
    %340 = vector.shape_cast %339 : vector<1x1x32xf32> to vector<1x32xf32>
    %341 = vector.broadcast %340 : vector<1x32xf32> to vector<16x32xf32>
    %342 = arith.addf %338, %341 : vector<16x32xf32>
    %343 = arith.addf %326, %342 : vector<16x32xf32>
    %344 = vector.extract_strided_slice %301 {offsets = [2, 0], sizes = [1, 32], strides = [1, 1]} : vector<4x32xf32> to vector<1x32xf32>
    %345 = vector.extract_strided_slice %301 {offsets = [3, 0], sizes = [1, 32], strides = [1, 1]} : vector<4x32xf32> to vector<1x32xf32>
    %cst_150 = arith.constant dense<0.000000e+00> : vector<16xf32>
    %346 = vector.multi_reduction <add>, %343, %cst_150 [1] : vector<16x32xf32> to vector<16xf32>
    %347 = vector.shape_cast %346 : vector<16xf32> to vector<16x1xf32>
    %cst_151 = arith.constant 3.200000e+01 : f32
    %348 = vector.broadcast %cst_151 : f32 to vector<16x1xf32>
    %349 = arith.divf %347, %348 : vector<16x1xf32>
    %350 = vector.broadcast %349 : vector<16x1xf32> to vector<16x32xf32>
    %351 = arith.subf %343, %350 : vector<16x32xf32>
    %352 = arith.mulf %351, %351 : vector<16x32xf32>
    %cst_152 = arith.constant dense<0.000000e+00> : vector<16xf32>
    %353 = vector.multi_reduction <add>, %352, %cst_152 [1] : vector<16x32xf32> to vector<16xf32>
    %354 = vector.shape_cast %353 : vector<16xf32> to vector<16x1xf32>
    %cst_153 = arith.constant 3.200000e+01 : f32
    %355 = vector.broadcast %cst_153 : f32 to vector<16x1xf32>
    %356 = arith.divf %354, %355 : vector<16x1xf32>
    %357 = vector.broadcast %349 : vector<16x1xf32> to vector<16x32xf32>
    %358 = arith.subf %343, %357 : vector<16x32xf32>
    %cst_154 = arith.constant 9.99999974E-6 : f32
    %359 = vector.broadcast %cst_154 : f32 to vector<16x1xf32>
    %360 = arith.addf %356, %359 : vector<16x1xf32>
    %361 = math.rsqrt %360 : vector<16x1xf32>
    %362 = vector.broadcast %361 : vector<16x1xf32> to vector<16x32xf32>
    %363 = arith.mulf %358, %362 : vector<16x32xf32>
    %364 = vector.broadcast %344 : vector<1x32xf32> to vector<16x32xf32>
    %365 = arith.mulf %363, %364 : vector<16x32xf32>
    %366 = vector.broadcast %345 : vector<1x32xf32> to vector<16x32xf32>
    %367 = arith.addf %365, %366 : vector<16x32xf32>
    %c2 = arith.constant 2 : index
    %c0_155 = arith.constant 0 : index
    %c0_156 = arith.constant 0 : index
    %368 = vector.load %arg5[%c2, %c0_155, %c0_156] : memref<4x32x32xf32, #tpu.memory_space<vmem>>, vector<1x32x32xf32>
    %369 = vector.shape_cast %368 : vector<1x32x32xf32> to vector<32x32xf32>
    %cst_157 = arith.constant dense<0.000000e+00> : vector<16x32xf32>
    %370 = tpu.matmul %367, %369, %cst_157 {dimension_numbers = #tpu.dot_dimension_numbers<[1], [0], [0], [1], [0, 0, 1, 1], [], []>} : vector<16x32xf32>, vector<32x32xf32>, vector<16x32xf32> -> vector<16x32xf32>
    %c2_158 = arith.constant 2 : index
    %c0_159 = arith.constant 0 : index
    %c0_160 = arith.constant 0 : index
    %371 = vector.load %arg6[%c2_158, %c0_159, %c0_160] : memref<4x1x32xf32, #tpu.memory_space<vmem>>, vector<1x1x32xf32>
    %372 = vector.shape_cast %371 : vector<1x1x32xf32> to vector<1x32xf32>
    %373 = vector.broadcast %372 : vector<1x32xf32> to vector<16x32xf32>
    %374 = arith.addf %370, %373 : vector<16x32xf32>
    %c2_161 = arith.constant 2 : index
    %c0_162 = arith.constant 0 : index
    %c0_163 = arith.constant 0 : index
    %375 = vector.load %arg7[%c2_161, %c0_162, %c0_163] : memref<4x32x64xf32, #tpu.memory_space<vmem>>, vector<1x32x64xf32>
    %376 = vector.shape_cast %375 : vector<1x32x64xf32> to vector<32x64xf32>
    %cst_164 = arith.constant dense<0.000000e+00> : vector<32x64xf32>
    %377 = tpu.matmul %9, %376, %cst_164 {dimension_numbers = #tpu.dot_dimension_numbers<[1], [0], [0], [1], [0, 0, 1, 1], [], []>} : vector<32x32xf32>, vector<32x64xf32>, vector<32x64xf32> -> vector<32x64xf32>
    %c2_165 = arith.constant 2 : index
    %c0_166 = arith.constant 0 : index
    %c0_167 = arith.constant 0 : index
    %378 = vector.load %arg8[%c2_165, %c0_166, %c0_167] : memref<4x1x64xf32, #tpu.memory_space<vmem>>, vector<1x1x64xf32>
    %379 = vector.shape_cast %378 : vector<1x1x64xf32> to vector<1x64xf32>
    %380 = vector.broadcast %379 : vector<1x64xf32> to vector<32x64xf32>
    %381 = arith.addf %377, %380 : vector<32x64xf32>
    %382 = vector.extract_strided_slice %381 {offsets = [0, 0], sizes = [32, 32], strides = [1, 1]} : vector<32x64xf32> to vector<32x32xf32>
    %383 = vector.extract_strided_slice %381 {offsets = [0, 32], sizes = [32, 32], strides = [1, 1]} : vector<32x64xf32> to vector<32x32xf32>
    %384 = vector.shape_cast %374 : vector<16x32xf32> to vector<2x8x32xf32>
    %385 = vector.shape_cast %382 : vector<32x32xf32> to vector<2x16x32xf32>
    %386 = vector.shape_cast %383 : vector<32x32xf32> to vector<2x16x32xf32>
    %c2_168 = arith.constant 2 : index
    %c0_169 = arith.constant 0 : index
    %c0_170 = arith.constant 0 : index
    %387 = vector.load %arg9[%c2_168, %c0_169, %c0_170] : memref<4x32x32xf32, #tpu.memory_space<vmem>>, vector<1x32x32xf32>
    %388 = vector.shape_cast %387 : vector<1x32x32xf32> to vector<32x32xf32>
    %cst_171 = arith.constant 0.000000e+00 : f32
    %389 = vector.broadcast %cst_171 : f32 to vector<16x32xf32>
    %390 = vector.extract_strided_slice %384 {offsets = [0, 0, 0], sizes = [2, 8, 8], strides = [1, 1, 1]} : vector<2x8x32xf32> to vector<2x8x8xf32>
    %391 = vector.extract_strided_slice %385 {offsets = [0, 0, 0], sizes = [2, 16, 8], strides = [1, 1, 1]} : vector<2x16x32xf32> to vector<2x16x8xf32>
    "tpu.trace_start"() <{level = 10 : i32, message = "bld,bnd->bln"}> : () -> ()
    %cst_172 = arith.constant dense<0.000000e+00> : vector<2x8x16xf32>
    %392 = tpu.matmul %390, %391, %cst_172 {dimension_numbers = #tpu.dot_dimension_numbers<[2], [2], [1], [1], [0, 0, 0, 1, 1, 1], [0], [0]>} : vector<2x8x8xf32>, vector<2x16x8xf32>, vector<2x8x16xf32> -> vector<2x8x16xf32>
    "tpu.trace_stop"() : () -> ()
    %cst_173 = arith.constant 0.353553385 : f32
    %393 = vector.broadcast %cst_173 : f32 to vector<2x8x16xf32>
    %394 = arith.mulf %392, %393 : vector<2x8x16xf32>
    %cst_174 = arith.constant dense<0xFF800000> : vector<2x8xf32>
    %395 = vector.multi_reduction <maximumf>, %394, %cst_174 [2] : vector<2x8x16xf32> to vector<2x8xf32>
    %396 = vector.shape_cast %395 : vector<2x8xf32> to vector<2x8x1xf32>
    %397 = vector.broadcast %396 : vector<2x8x1xf32> to vector<2x8x16xf32>
    %398 = arith.subf %394, %397 : vector<2x8x16xf32>
    %399 = math.exp %398 : vector<2x8x16xf32>
    %cst_175 = arith.constant dense<0.000000e+00> : vector<2x8xf32>
    %400 = vector.multi_reduction <add>, %399, %cst_175 [2] : vector<2x8x16xf32> to vector<2x8xf32>
    %401 = vector.shape_cast %400 : vector<2x8xf32> to vector<2x8x1xf32>
    %402 = tpu.reciprocal %401 {approx = true} : vector<2x8x1xf32> -> vector<2x8x1xf32>
    %403 = vector.broadcast %402 : vector<2x8x1xf32> to vector<2x8x16xf32>
    %404 = arith.mulf %399, %403 : vector<2x8x16xf32>
    %405 = vector.extract_strided_slice %386 {offsets = [0, 0, 0], sizes = [2, 16, 8], strides = [1, 1, 1]} : vector<2x16x32xf32> to vector<2x16x8xf32>
    "tpu.trace_start"() <{level = 10 : i32, message = "bln,bnd->bld"}> : () -> ()
    %cst_176 = arith.constant dense<0.000000e+00> : vector<2x8x8xf32>
    %406 = tpu.matmul %404, %405, %cst_176 {dimension_numbers = #tpu.dot_dimension_numbers<[2], [1], [1], [2], [0, 0, 0, 1, 1, 2], [0], [0]>} : vector<2x8x16xf32>, vector<2x16x8xf32>, vector<2x8x8xf32> -> vector<2x8x8xf32>
    "tpu.trace_stop"() : () -> ()
    %407 = vector.shape_cast %406 : vector<2x8x8xf32> to vector<16x8xf32>
    %408 = vector.extract_strided_slice %388 {offsets = [0, 0], sizes = [8, 32], strides = [1, 1]} : vector<32x32xf32> to vector<8x32xf32>
    %cst_177 = arith.constant dense<0.000000e+00> : vector<16x32xf32>
    %409 = tpu.matmul %407, %408, %cst_177 {dimension_numbers = #tpu.dot_dimension_numbers<[1], [0], [0], [1], [0, 0, 1, 1], [], []>} : vector<16x8xf32>, vector<8x32xf32>, vector<16x32xf32> -> vector<16x32xf32>
    %410 = arith.addf %389, %409 : vector<16x32xf32>
    %411 = vector.extract_strided_slice %384 {offsets = [0, 0, 8], sizes = [2, 8, 8], strides = [1, 1, 1]} : vector<2x8x32xf32> to vector<2x8x8xf32>
    %412 = vector.extract_strided_slice %385 {offsets = [0, 0, 8], sizes = [2, 16, 8], strides = [1, 1, 1]} : vector<2x16x32xf32> to vector<2x16x8xf32>
    "tpu.trace_start"() <{level = 10 : i32, message = "bld,bnd->bln"}> : () -> ()
    %cst_178 = arith.constant dense<0.000000e+00> : vector<2x8x16xf32>
    %413 = tpu.matmul %411, %412, %cst_178 {dimension_numbers = #tpu.dot_dimension_numbers<[2], [2], [1], [1], [0, 0, 0, 1, 1, 1], [0], [0]>} : vector<2x8x8xf32>, vector<2x16x8xf32>, vector<2x8x16xf32> -> vector<2x8x16xf32>
    "tpu.trace_stop"() : () -> ()
    %cst_179 = arith.constant 0.353553385 : f32
    %414 = vector.broadcast %cst_179 : f32 to vector<2x8x16xf32>
    %415 = arith.mulf %413, %414 : vector<2x8x16xf32>
    %cst_180 = arith.constant dense<0xFF800000> : vector<2x8xf32>
    %416 = vector.multi_reduction <maximumf>, %415, %cst_180 [2] : vector<2x8x16xf32> to vector<2x8xf32>
    %417 = vector.shape_cast %416 : vector<2x8xf32> to vector<2x8x1xf32>
    %418 = vector.broadcast %417 : vector<2x8x1xf32> to vector<2x8x16xf32>
    %419 = arith.subf %415, %418 : vector<2x8x16xf32>
    %420 = math.exp %419 : vector<2x8x16xf32>
    %cst_181 = arith.constant dense<0.000000e+00> : vector<2x8xf32>
    %421 = vector.multi_reduction <add>, %420, %cst_181 [2] : vector<2x8x16xf32> to vector<2x8xf32>
    %422 = vector.shape_cast %421 : vector<2x8xf32> to vector<2x8x1xf32>
    %423 = tpu.reciprocal %422 {approx = true} : vector<2x8x1xf32> -> vector<2x8x1xf32>
    %424 = vector.broadcast %423 : vector<2x8x1xf32> to vector<2x8x16xf32>
    %425 = arith.mulf %420, %424 : vector<2x8x16xf32>
    %426 = vector.extract_strided_slice %386 {offsets = [0, 0, 8], sizes = [2, 16, 8], strides = [1, 1, 1]} : vector<2x16x32xf32> to vector<2x16x8xf32>
    "tpu.trace_start"() <{level = 10 : i32, message = "bln,bnd->bld"}> : () -> ()
    %cst_182 = arith.constant dense<0.000000e+00> : vector<2x8x8xf32>
    %427 = tpu.matmul %425, %426, %cst_182 {dimension_numbers = #tpu.dot_dimension_numbers<[2], [1], [1], [2], [0, 0, 0, 1, 1, 2], [0], [0]>} : vector<2x8x16xf32>, vector<2x16x8xf32>, vector<2x8x8xf32> -> vector<2x8x8xf32>
    "tpu.trace_stop"() : () -> ()
    %428 = vector.shape_cast %427 : vector<2x8x8xf32> to vector<16x8xf32>
    %429 = vector.extract_strided_slice %388 {offsets = [8, 0], sizes = [8, 32], strides = [1, 1]} : vector<32x32xf32> to vector<8x32xf32>
    %cst_183 = arith.constant dense<0.000000e+00> : vector<16x32xf32>
    %430 = tpu.matmul %428, %429, %cst_183 {dimension_numbers = #tpu.dot_dimension_numbers<[1], [0], [0], [1], [0, 0, 1, 1], [], []>} : vector<16x8xf32>, vector<8x32xf32>, vector<16x32xf32> -> vector<16x32xf32>
    %431 = arith.addf %410, %430 : vector<16x32xf32>
    %432 = vector.extract_strided_slice %384 {offsets = [0, 0, 16], sizes = [2, 8, 8], strides = [1, 1, 1]} : vector<2x8x32xf32> to vector<2x8x8xf32>
    %433 = vector.extract_strided_slice %385 {offsets = [0, 0, 16], sizes = [2, 16, 8], strides = [1, 1, 1]} : vector<2x16x32xf32> to vector<2x16x8xf32>
    "tpu.trace_start"() <{level = 10 : i32, message = "bld,bnd->bln"}> : () -> ()
    %cst_184 = arith.constant dense<0.000000e+00> : vector<2x8x16xf32>
    %434 = tpu.matmul %432, %433, %cst_184 {dimension_numbers = #tpu.dot_dimension_numbers<[2], [2], [1], [1], [0, 0, 0, 1, 1, 1], [0], [0]>} : vector<2x8x8xf32>, vector<2x16x8xf32>, vector<2x8x16xf32> -> vector<2x8x16xf32>
    "tpu.trace_stop"() : () -> ()
    %cst_185 = arith.constant 0.353553385 : f32
    %435 = vector.broadcast %cst_185 : f32 to vector<2x8x16xf32>
    %436 = arith.mulf %434, %435 : vector<2x8x16xf32>
    %cst_186 = arith.constant dense<0xFF800000> : vector<2x8xf32>
    %437 = vector.multi_reduction <maximumf>, %436, %cst_186 [2] : vector<2x8x16xf32> to vector<2x8xf32>
    %438 = vector.shape_cast %437 : vector<2x8xf32> to vector<2x8x1xf32>
    %439 = vector.broadcast %438 : vector<2x8x1xf32> to vector<2x8x16xf32>
    %440 = arith.subf %436, %439 : vector<2x8x16xf32>
    %441 = math.exp %440 : vector<2x8x16xf32>
    %cst_187 = arith.constant dense<0.000000e+00> : vector<2x8xf32>
    %442 = vector.multi_reduction <add>, %441, %cst_187 [2] : vector<2x8x16xf32> to vector<2x8xf32>
    %443 = vector.shape_cast %442 : vector<2x8xf32> to vector<2x8x1xf32>
    %444 = tpu.reciprocal %443 {approx = true} : vector<2x8x1xf32> -> vector<2x8x1xf32>
    %445 = vector.broadcast %444 : vector<2x8x1xf32> to vector<2x8x16xf32>
    %446 = arith.mulf %441, %445 : vector<2x8x16xf32>
    %447 = vector.extract_strided_slice %386 {offsets = [0, 0, 16], sizes = [2, 16, 8], strides = [1, 1, 1]} : vector<2x16x32xf32> to vector<2x16x8xf32>
    "tpu.trace_start"() <{level = 10 : i32, message = "bln,bnd->bld"}> : () -> ()
    %cst_188 = arith.constant dense<0.000000e+00> : vector<2x8x8xf32>
    %448 = tpu.matmul %446, %447, %cst_188 {dimension_numbers = #tpu.dot_dimension_numbers<[2], [1], [1], [2], [0, 0, 0, 1, 1, 2], [0], [0]>} : vector<2x8x16xf32>, vector<2x16x8xf32>, vector<2x8x8xf32> -> vector<2x8x8xf32>
    "tpu.trace_stop"() : () -> ()
    %449 = vector.shape_cast %448 : vector<2x8x8xf32> to vector<16x8xf32>
    %450 = vector.extract_strided_slice %388 {offsets = [16, 0], sizes = [8, 32], strides = [1, 1]} : vector<32x32xf32> to vector<8x32xf32>
    %cst_189 = arith.constant dense<0.000000e+00> : vector<16x32xf32>
    %451 = tpu.matmul %449, %450, %cst_189 {dimension_numbers = #tpu.dot_dimension_numbers<[1], [0], [0], [1], [0, 0, 1, 1], [], []>} : vector<16x8xf32>, vector<8x32xf32>, vector<16x32xf32> -> vector<16x32xf32>
    %452 = arith.addf %431, %451 : vector<16x32xf32>
    %453 = vector.extract_strided_slice %384 {offsets = [0, 0, 24], sizes = [2, 8, 8], strides = [1, 1, 1]} : vector<2x8x32xf32> to vector<2x8x8xf32>
    %454 = vector.extract_strided_slice %385 {offsets = [0, 0, 24], sizes = [2, 16, 8], strides = [1, 1, 1]} : vector<2x16x32xf32> to vector<2x16x8xf32>
    "tpu.trace_start"() <{level = 10 : i32, message = "bld,bnd->bln"}> : () -> ()
    %cst_190 = arith.constant dense<0.000000e+00> : vector<2x8x16xf32>
    %455 = tpu.matmul %453, %454, %cst_190 {dimension_numbers = #tpu.dot_dimension_numbers<[2], [2], [1], [1], [0, 0, 0, 1, 1, 1], [0], [0]>} : vector<2x8x8xf32>, vector<2x16x8xf32>, vector<2x8x16xf32> -> vector<2x8x16xf32>
    "tpu.trace_stop"() : () -> ()
    %cst_191 = arith.constant 0.353553385 : f32
    %456 = vector.broadcast %cst_191 : f32 to vector<2x8x16xf32>
    %457 = arith.mulf %455, %456 : vector<2x8x16xf32>
    %cst_192 = arith.constant dense<0xFF800000> : vector<2x8xf32>
    %458 = vector.multi_reduction <maximumf>, %457, %cst_192 [2] : vector<2x8x16xf32> to vector<2x8xf32>
    %459 = vector.shape_cast %458 : vector<2x8xf32> to vector<2x8x1xf32>
    %460 = vector.broadcast %459 : vector<2x8x1xf32> to vector<2x8x16xf32>
    %461 = arith.subf %457, %460 : vector<2x8x16xf32>
    %462 = math.exp %461 : vector<2x8x16xf32>
    %cst_193 = arith.constant dense<0.000000e+00> : vector<2x8xf32>
    %463 = vector.multi_reduction <add>, %462, %cst_193 [2] : vector<2x8x16xf32> to vector<2x8xf32>
    %464 = vector.shape_cast %463 : vector<2x8xf32> to vector<2x8x1xf32>
    %465 = tpu.reciprocal %464 {approx = true} : vector<2x8x1xf32> -> vector<2x8x1xf32>
    %466 = vector.broadcast %465 : vector<2x8x1xf32> to vector<2x8x16xf32>
    %467 = arith.mulf %462, %466 : vector<2x8x16xf32>
    %468 = vector.extract_strided_slice %386 {offsets = [0, 0, 24], sizes = [2, 16, 8], strides = [1, 1, 1]} : vector<2x16x32xf32> to vector<2x16x8xf32>
    "tpu.trace_start"() <{level = 10 : i32, message = "bln,bnd->bld"}> : () -> ()
    %cst_194 = arith.constant dense<0.000000e+00> : vector<2x8x8xf32>
    %469 = tpu.matmul %467, %468, %cst_194 {dimension_numbers = #tpu.dot_dimension_numbers<[2], [1], [1], [2], [0, 0, 0, 1, 1, 2], [0], [0]>} : vector<2x8x16xf32>, vector<2x16x8xf32>, vector<2x8x8xf32> -> vector<2x8x8xf32>
    "tpu.trace_stop"() : () -> ()
    %470 = vector.shape_cast %469 : vector<2x8x8xf32> to vector<16x8xf32>
    %471 = vector.extract_strided_slice %388 {offsets = [24, 0], sizes = [8, 32], strides = [1, 1]} : vector<32x32xf32> to vector<8x32xf32>
    %cst_195 = arith.constant dense<0.000000e+00> : vector<16x32xf32>
    %472 = tpu.matmul %470, %471, %cst_195 {dimension_numbers = #tpu.dot_dimension_numbers<[1], [0], [0], [1], [0, 0, 1, 1], [], []>} : vector<16x8xf32>, vector<8x32xf32>, vector<16x32xf32> -> vector<16x32xf32>
    %473 = arith.addf %452, %472 : vector<16x32xf32>
    %c2_196 = arith.constant 2 : index
    %c0_197 = arith.constant 0 : index
    %c0_198 = arith.constant 0 : index
    %474 = vector.load %arg10[%c2_196, %c0_197, %c0_198] : memref<4x1x32xf32, #tpu.memory_space<vmem>>, vector<1x1x32xf32>
    %475 = vector.shape_cast %474 : vector<1x1x32xf32> to vector<1x32xf32>
    %476 = vector.broadcast %475 : vector<1x32xf32> to vector<16x32xf32>
    %477 = arith.addf %473, %476 : vector<16x32xf32>
    %c2_199 = arith.constant 2 : index
    %c0_200 = arith.constant 0 : index
    %c0_201 = arith.constant 0 : index
    %478 = vector.load %arg11[%c2_199, %c0_200, %c0_201] : memref<4x4x32xf32, #tpu.memory_space<vmem>>, vector<1x4x32xf32>
    %479 = vector.shape_cast %478 : vector<1x4x32xf32> to vector<4x32xf32>
    %480 = arith.addf %367, %477 : vector<16x32xf32>
    %481 = vector.extract_strided_slice %479 {offsets = [0, 0], sizes = [1, 32], strides = [1, 1]} : vector<4x32xf32> to vector<1x32xf32>
    %482 = vector.extract_strided_slice %479 {offsets = [1, 0], sizes = [1, 32], strides = [1, 1]} : vector<4x32xf32> to vector<1x32xf32>
    %cst_202 = arith.constant dense<0.000000e+00> : vector<16xf32>
    %483 = vector.multi_reduction <add>, %480, %cst_202 [1] : vector<16x32xf32> to vector<16xf32>
    %484 = vector.shape_cast %483 : vector<16xf32> to vector<16x1xf32>
    %cst_203 = arith.constant 3.200000e+01 : f32
    %485 = vector.broadcast %cst_203 : f32 to vector<16x1xf32>
    %486 = arith.divf %484, %485 : vector<16x1xf32>
    %487 = vector.broadcast %486 : vector<16x1xf32> to vector<16x32xf32>
    %488 = arith.subf %480, %487 : vector<16x32xf32>
    %489 = arith.mulf %488, %488 : vector<16x32xf32>
    %cst_204 = arith.constant dense<0.000000e+00> : vector<16xf32>
    %490 = vector.multi_reduction <add>, %489, %cst_204 [1] : vector<16x32xf32> to vector<16xf32>
    %491 = vector.shape_cast %490 : vector<16xf32> to vector<16x1xf32>
    %cst_205 = arith.constant 3.200000e+01 : f32
    %492 = vector.broadcast %cst_205 : f32 to vector<16x1xf32>
    %493 = arith.divf %491, %492 : vector<16x1xf32>
    %494 = vector.broadcast %486 : vector<16x1xf32> to vector<16x32xf32>
    %495 = arith.subf %480, %494 : vector<16x32xf32>
    %cst_206 = arith.constant 9.99999974E-6 : f32
    %496 = vector.broadcast %cst_206 : f32 to vector<16x1xf32>
    %497 = arith.addf %493, %496 : vector<16x1xf32>
    %498 = math.rsqrt %497 : vector<16x1xf32>
    %499 = vector.broadcast %498 : vector<16x1xf32> to vector<16x32xf32>
    %500 = arith.mulf %495, %499 : vector<16x32xf32>
    %501 = vector.broadcast %481 : vector<1x32xf32> to vector<16x32xf32>
    %502 = arith.mulf %500, %501 : vector<16x32xf32>
    %503 = vector.broadcast %482 : vector<1x32xf32> to vector<16x32xf32>
    %504 = arith.addf %502, %503 : vector<16x32xf32>
    %c2_207 = arith.constant 2 : index
    %c0_208 = arith.constant 0 : index
    %c0_209 = arith.constant 0 : index
    %505 = vector.load %arg12[%c2_207, %c0_208, %c0_209] : memref<4x32x32xf32, #tpu.memory_space<vmem>>, vector<1x32x32xf32>
    %506 = vector.shape_cast %505 : vector<1x32x32xf32> to vector<32x32xf32>
    %cst_210 = arith.constant dense<0.000000e+00> : vector<16x32xf32>
    %507 = tpu.matmul %504, %506, %cst_210 {dimension_numbers = #tpu.dot_dimension_numbers<[1], [0], [0], [1], [0, 0, 1, 1], [], []>} : vector<16x32xf32>, vector<32x32xf32>, vector<16x32xf32> -> vector<16x32xf32>
    %c2_211 = arith.constant 2 : index
    %c0_212 = arith.constant 0 : index
    %c0_213 = arith.constant 0 : index
    %508 = vector.load %arg13[%c2_211, %c0_212, %c0_213] : memref<4x1x32xf32, #tpu.memory_space<vmem>>, vector<1x1x32xf32>
    %509 = vector.shape_cast %508 : vector<1x1x32xf32> to vector<1x32xf32>
    %510 = vector.broadcast %509 : vector<1x32xf32> to vector<16x32xf32>
    %511 = arith.addf %507, %510 : vector<16x32xf32>
    %cst_214 = arith.constant 0.000000e+00 : f32
    %512 = vector.broadcast %cst_214 : f32 to vector<16x32xf32>
    %513 = arith.maximumf %511, %512 : vector<16x32xf32>
    %c2_215 = arith.constant 2 : index
    %c0_216 = arith.constant 0 : index
    %c0_217 = arith.constant 0 : index
    %514 = vector.load %arg14[%c2_215, %c0_216, %c0_217] : memref<4x32x32xf32, #tpu.memory_space<vmem>>, vector<1x32x32xf32>
    %515 = vector.shape_cast %514 : vector<1x32x32xf32> to vector<32x32xf32>
    %cst_218 = arith.constant dense<0.000000e+00> : vector<16x32xf32>
    %516 = tpu.matmul %513, %515, %cst_218 {dimension_numbers = #tpu.dot_dimension_numbers<[1], [0], [0], [1], [0, 0, 1, 1], [], []>} : vector<16x32xf32>, vector<32x32xf32>, vector<16x32xf32> -> vector<16x32xf32>
    %c2_219 = arith.constant 2 : index
    %c0_220 = arith.constant 0 : index
    %c0_221 = arith.constant 0 : index
    %517 = vector.load %arg15[%c2_219, %c0_220, %c0_221] : memref<4x1x32xf32, #tpu.memory_space<vmem>>, vector<1x1x32xf32>
    %518 = vector.shape_cast %517 : vector<1x1x32xf32> to vector<1x32xf32>
    %519 = vector.broadcast %518 : vector<1x32xf32> to vector<16x32xf32>
    %520 = arith.addf %516, %519 : vector<16x32xf32>
    %521 = arith.addf %504, %520 : vector<16x32xf32>
    %522 = vector.extract_strided_slice %479 {offsets = [2, 0], sizes = [1, 32], strides = [1, 1]} : vector<4x32xf32> to vector<1x32xf32>
    %523 = vector.extract_strided_slice %479 {offsets = [3, 0], sizes = [1, 32], strides = [1, 1]} : vector<4x32xf32> to vector<1x32xf32>
    %cst_222 = arith.constant dense<0.000000e+00> : vector<16xf32>
    %524 = vector.multi_reduction <add>, %521, %cst_222 [1] : vector<16x32xf32> to vector<16xf32>
    %525 = vector.shape_cast %524 : vector<16xf32> to vector<16x1xf32>
    %cst_223 = arith.constant 3.200000e+01 : f32
    %526 = vector.broadcast %cst_223 : f32 to vector<16x1xf32>
    %527 = arith.divf %525, %526 : vector<16x1xf32>
    %528 = vector.broadcast %527 : vector<16x1xf32> to vector<16x32xf32>
    %529 = arith.subf %521, %528 : vector<16x32xf32>
    %530 = arith.mulf %529, %529 : vector<16x32xf32>
    %cst_224 = arith.constant dense<0.000000e+00> : vector<16xf32>
    %531 = vector.multi_reduction <add>, %530, %cst_224 [1] : vector<16x32xf32> to vector<16xf32>
    %532 = vector.shape_cast %531 : vector<16xf32> to vector<16x1xf32>
    %cst_225 = arith.constant 3.200000e+01 : f32
    %533 = vector.broadcast %cst_225 : f32 to vector<16x1xf32>
    %534 = arith.divf %532, %533 : vector<16x1xf32>
    %535 = vector.broadcast %527 : vector<16x1xf32> to vector<16x32xf32>
    %536 = arith.subf %521, %535 : vector<16x32xf32>
    %cst_226 = arith.constant 9.99999974E-6 : f32
    %537 = vector.broadcast %cst_226 : f32 to vector<16x1xf32>
    %538 = arith.addf %534, %537 : vector<16x1xf32>
    %539 = math.rsqrt %538 : vector<16x1xf32>
    %540 = vector.broadcast %539 : vector<16x1xf32> to vector<16x32xf32>
    %541 = arith.mulf %536, %540 : vector<16x32xf32>
    %542 = vector.broadcast %522 : vector<1x32xf32> to vector<16x32xf32>
    %543 = arith.mulf %541, %542 : vector<16x32xf32>
    %544 = vector.broadcast %523 : vector<1x32xf32> to vector<16x32xf32>
    %545 = arith.addf %543, %544 : vector<16x32xf32>
    %c3 = arith.constant 3 : index
    %c0_227 = arith.constant 0 : index
    %c0_228 = arith.constant 0 : index
    %546 = vector.load %arg5[%c3, %c0_227, %c0_228] : memref<4x32x32xf32, #tpu.memory_space<vmem>>, vector<1x32x32xf32>
    %547 = vector.shape_cast %546 : vector<1x32x32xf32> to vector<32x32xf32>
    %cst_229 = arith.constant dense<0.000000e+00> : vector<16x32xf32>
    %548 = tpu.matmul %545, %547, %cst_229 {dimension_numbers = #tpu.dot_dimension_numbers<[1], [0], [0], [1], [0, 0, 1, 1], [], []>} : vector<16x32xf32>, vector<32x32xf32>, vector<16x32xf32> -> vector<16x32xf32>
    %c3_230 = arith.constant 3 : index
    %c0_231 = arith.constant 0 : index
    %c0_232 = arith.constant 0 : index
    %549 = vector.load %arg6[%c3_230, %c0_231, %c0_232] : memref<4x1x32xf32, #tpu.memory_space<vmem>>, vector<1x1x32xf32>
    %550 = vector.shape_cast %549 : vector<1x1x32xf32> to vector<1x32xf32>
    %551 = vector.broadcast %550 : vector<1x32xf32> to vector<16x32xf32>
    %552 = arith.addf %548, %551 : vector<16x32xf32>
    %c3_233 = arith.constant 3 : index
    %c0_234 = arith.constant 0 : index
    %c0_235 = arith.constant 0 : index
    %553 = vector.load %arg7[%c3_233, %c0_234, %c0_235] : memref<4x32x64xf32, #tpu.memory_space<vmem>>, vector<1x32x64xf32>
    %554 = vector.shape_cast %553 : vector<1x32x64xf32> to vector<32x64xf32>
    %cst_236 = arith.constant dense<0.000000e+00> : vector<32x64xf32>
    %555 = tpu.matmul %9, %554, %cst_236 {dimension_numbers = #tpu.dot_dimension_numbers<[1], [0], [0], [1], [0, 0, 1, 1], [], []>} : vector<32x32xf32>, vector<32x64xf32>, vector<32x64xf32> -> vector<32x64xf32>
    %c3_237 = arith.constant 3 : index
    %c0_238 = arith.constant 0 : index
    %c0_239 = arith.constant 0 : index
    %556 = vector.load %arg8[%c3_237, %c0_238, %c0_239] : memref<4x1x64xf32, #tpu.memory_space<vmem>>, vector<1x1x64xf32>
    %557 = vector.shape_cast %556 : vector<1x1x64xf32> to vector<1x64xf32>
    %558 = vector.broadcast %557 : vector<1x64xf32> to vector<32x64xf32>
    %559 = arith.addf %555, %558 : vector<32x64xf32>
    %560 = vector.extract_strided_slice %559 {offsets = [0, 0], sizes = [32, 32], strides = [1, 1]} : vector<32x64xf32> to vector<32x32xf32>
    %561 = vector.extract_strided_slice %559 {offsets = [0, 32], sizes = [32, 32], strides = [1, 1]} : vector<32x64xf32> to vector<32x32xf32>
    %562 = vector.shape_cast %552 : vector<16x32xf32> to vector<2x8x32xf32>
    %563 = vector.shape_cast %560 : vector<32x32xf32> to vector<2x16x32xf32>
    %564 = vector.shape_cast %561 : vector<32x32xf32> to vector<2x16x32xf32>
    %c3_240 = arith.constant 3 : index
    %c0_241 = arith.constant 0 : index
    %c0_242 = arith.constant 0 : index
    %565 = vector.load %arg9[%c3_240, %c0_241, %c0_242] : memref<4x32x32xf32, #tpu.memory_space<vmem>>, vector<1x32x32xf32>
    %566 = vector.shape_cast %565 : vector<1x32x32xf32> to vector<32x32xf32>
    %cst_243 = arith.constant 0.000000e+00 : f32
    %567 = vector.broadcast %cst_243 : f32 to vector<16x32xf32>
    %568 = vector.extract_strided_slice %562 {offsets = [0, 0, 0], sizes = [2, 8, 8], strides = [1, 1, 1]} : vector<2x8x32xf32> to vector<2x8x8xf32>
    %569 = vector.extract_strided_slice %563 {offsets = [0, 0, 0], sizes = [2, 16, 8], strides = [1, 1, 1]} : vector<2x16x32xf32> to vector<2x16x8xf32>
    "tpu.trace_start"() <{level = 10 : i32, message = "bld,bnd->bln"}> : () -> ()
    %cst_244 = arith.constant dense<0.000000e+00> : vector<2x8x16xf32>
    %570 = tpu.matmul %568, %569, %cst_244 {dimension_numbers = #tpu.dot_dimension_numbers<[2], [2], [1], [1], [0, 0, 0, 1, 1, 1], [0], [0]>} : vector<2x8x8xf32>, vector<2x16x8xf32>, vector<2x8x16xf32> -> vector<2x8x16xf32>
    "tpu.trace_stop"() : () -> ()
    %cst_245 = arith.constant 0.353553385 : f32
    %571 = vector.broadcast %cst_245 : f32 to vector<2x8x16xf32>
    %572 = arith.mulf %570, %571 : vector<2x8x16xf32>
    %cst_246 = arith.constant dense<0xFF800000> : vector<2x8xf32>
    %573 = vector.multi_reduction <maximumf>, %572, %cst_246 [2] : vector<2x8x16xf32> to vector<2x8xf32>
    %574 = vector.shape_cast %573 : vector<2x8xf32> to vector<2x8x1xf32>
    %575 = vector.broadcast %574 : vector<2x8x1xf32> to vector<2x8x16xf32>
    %576 = arith.subf %572, %575 : vector<2x8x16xf32>
    %577 = math.exp %576 : vector<2x8x16xf32>
    %cst_247 = arith.constant dense<0.000000e+00> : vector<2x8xf32>
    %578 = vector.multi_reduction <add>, %577, %cst_247 [2] : vector<2x8x16xf32> to vector<2x8xf32>
    %579 = vector.shape_cast %578 : vector<2x8xf32> to vector<2x8x1xf32>
    %580 = tpu.reciprocal %579 {approx = true} : vector<2x8x1xf32> -> vector<2x8x1xf32>
    %581 = vector.broadcast %580 : vector<2x8x1xf32> to vector<2x8x16xf32>
    %582 = arith.mulf %577, %581 : vector<2x8x16xf32>
    %583 = vector.extract_strided_slice %564 {offsets = [0, 0, 0], sizes = [2, 16, 8], strides = [1, 1, 1]} : vector<2x16x32xf32> to vector<2x16x8xf32>
    "tpu.trace_start"() <{level = 10 : i32, message = "bln,bnd->bld"}> : () -> ()
    %cst_248 = arith.constant dense<0.000000e+00> : vector<2x8x8xf32>
    %584 = tpu.matmul %582, %583, %cst_248 {dimension_numbers = #tpu.dot_dimension_numbers<[2], [1], [1], [2], [0, 0, 0, 1, 1, 2], [0], [0]>} : vector<2x8x16xf32>, vector<2x16x8xf32>, vector<2x8x8xf32> -> vector<2x8x8xf32>
    "tpu.trace_stop"() : () -> ()
    %585 = vector.shape_cast %584 : vector<2x8x8xf32> to vector<16x8xf32>
    %586 = vector.extract_strided_slice %566 {offsets = [0, 0], sizes = [8, 32], strides = [1, 1]} : vector<32x32xf32> to vector<8x32xf32>
    %cst_249 = arith.constant dense<0.000000e+00> : vector<16x32xf32>
    %587 = tpu.matmul %585, %586, %cst_249 {dimension_numbers = #tpu.dot_dimension_numbers<[1], [0], [0], [1], [0, 0, 1, 1], [], []>} : vector<16x8xf32>, vector<8x32xf32>, vector<16x32xf32> -> vector<16x32xf32>
    %588 = arith.addf %567, %587 : vector<16x32xf32>
    %589 = vector.extract_strided_slice %562 {offsets = [0, 0, 8], sizes = [2, 8, 8], strides = [1, 1, 1]} : vector<2x8x32xf32> to vector<2x8x8xf32>
    %590 = vector.extract_strided_slice %563 {offsets = [0, 0, 8], sizes = [2, 16, 8], strides = [1, 1, 1]} : vector<2x16x32xf32> to vector<2x16x8xf32>
    "tpu.trace_start"() <{level = 10 : i32, message = "bld,bnd->bln"}> : () -> ()
    %cst_250 = arith.constant dense<0.000000e+00> : vector<2x8x16xf32>
    %591 = tpu.matmul %589, %590, %cst_250 {dimension_numbers = #tpu.dot_dimension_numbers<[2], [2], [1], [1], [0, 0, 0, 1, 1, 1], [0], [0]>} : vector<2x8x8xf32>, vector<2x16x8xf32>, vector<2x8x16xf32> -> vector<2x8x16xf32>
    "tpu.trace_stop"() : () -> ()
    %cst_251 = arith.constant 0.353553385 : f32
    %592 = vector.broadcast %cst_251 : f32 to vector<2x8x16xf32>
    %593 = arith.mulf %591, %592 : vector<2x8x16xf32>
    %cst_252 = arith.constant dense<0xFF800000> : vector<2x8xf32>
    %594 = vector.multi_reduction <maximumf>, %593, %cst_252 [2] : vector<2x8x16xf32> to vector<2x8xf32>
    %595 = vector.shape_cast %594 : vector<2x8xf32> to vector<2x8x1xf32>
    %596 = vector.broadcast %595 : vector<2x8x1xf32> to vector<2x8x16xf32>
    %597 = arith.subf %593, %596 : vector<2x8x16xf32>
    %598 = math.exp %597 : vector<2x8x16xf32>
    %cst_253 = arith.constant dense<0.000000e+00> : vector<2x8xf32>
    %599 = vector.multi_reduction <add>, %598, %cst_253 [2] : vector<2x8x16xf32> to vector<2x8xf32>
    %600 = vector.shape_cast %599 : vector<2x8xf32> to vector<2x8x1xf32>
    %601 = tpu.reciprocal %600 {approx = true} : vector<2x8x1xf32> -> vector<2x8x1xf32>
    %602 = vector.broadcast %601 : vector<2x8x1xf32> to vector<2x8x16xf32>
    %603 = arith.mulf %598, %602 : vector<2x8x16xf32>
    %604 = vector.extract_strided_slice %564 {offsets = [0, 0, 8], sizes = [2, 16, 8], strides = [1, 1, 1]} : vector<2x16x32xf32> to vector<2x16x8xf32>
    "tpu.trace_start"() <{level = 10 : i32, message = "bln,bnd->bld"}> : () -> ()
    %cst_254 = arith.constant dense<0.000000e+00> : vector<2x8x8xf32>
    %605 = tpu.matmul %603, %604, %cst_254 {dimension_numbers = #tpu.dot_dimension_numbers<[2], [1], [1], [2], [0, 0, 0, 1, 1, 2], [0], [0]>} : vector<2x8x16xf32>, vector<2x16x8xf32>, vector<2x8x8xf32> -> vector<2x8x8xf32>
    "tpu.trace_stop"() : () -> ()
    %606 = vector.shape_cast %605 : vector<2x8x8xf32> to vector<16x8xf32>
    %607 = vector.extract_strided_slice %566 {offsets = [8, 0], sizes = [8, 32], strides = [1, 1]} : vector<32x32xf32> to vector<8x32xf32>
    %cst_255 = arith.constant dense<0.000000e+00> : vector<16x32xf32>
    %608 = tpu.matmul %606, %607, %cst_255 {dimension_numbers = #tpu.dot_dimension_numbers<[1], [0], [0], [1], [0, 0, 1, 1], [], []>} : vector<16x8xf32>, vector<8x32xf32>, vector<16x32xf32> -> vector<16x32xf32>
    %609 = arith.addf %588, %608 : vector<16x32xf32>
    %610 = vector.extract_strided_slice %562 {offsets = [0, 0, 16], sizes = [2, 8, 8], strides = [1, 1, 1]} : vector<2x8x32xf32> to vector<2x8x8xf32>
    %611 = vector.extract_strided_slice %563 {offsets = [0, 0, 16], sizes = [2, 16, 8], strides = [1, 1, 1]} : vector<2x16x32xf32> to vector<2x16x8xf32>
    "tpu.trace_start"() <{level = 10 : i32, message = "bld,bnd->bln"}> : () -> ()
    %cst_256 = arith.constant dense<0.000000e+00> : vector<2x8x16xf32>
    %612 = tpu.matmul %610, %611, %cst_256 {dimension_numbers = #tpu.dot_dimension_numbers<[2], [2], [1], [1], [0, 0, 0, 1, 1, 1], [0], [0]>} : vector<2x8x8xf32>, vector<2x16x8xf32>, vector<2x8x16xf32> -> vector<2x8x16xf32>
    "tpu.trace_stop"() : () -> ()
    %cst_257 = arith.constant 0.353553385 : f32
    %613 = vector.broadcast %cst_257 : f32 to vector<2x8x16xf32>
    %614 = arith.mulf %612, %613 : vector<2x8x16xf32>
    %cst_258 = arith.constant dense<0xFF800000> : vector<2x8xf32>
    %615 = vector.multi_reduction <maximumf>, %614, %cst_258 [2] : vector<2x8x16xf32> to vector<2x8xf32>
    %616 = vector.shape_cast %615 : vector<2x8xf32> to vector<2x8x1xf32>
    %617 = vector.broadcast %616 : vector<2x8x1xf32> to vector<2x8x16xf32>
    %618 = arith.subf %614, %617 : vector<2x8x16xf32>
    %619 = math.exp %618 : vector<2x8x16xf32>
    %cst_259 = arith.constant dense<0.000000e+00> : vector<2x8xf32>
    %620 = vector.multi_reduction <add>, %619, %cst_259 [2] : vector<2x8x16xf32> to vector<2x8xf32>
    %621 = vector.shape_cast %620 : vector<2x8xf32> to vector<2x8x1xf32>
    %622 = tpu.reciprocal %621 {approx = true} : vector<2x8x1xf32> -> vector<2x8x1xf32>
    %623 = vector.broadcast %622 : vector<2x8x1xf32> to vector<2x8x16xf32>
    %624 = arith.mulf %619, %623 : vector<2x8x16xf32>
    %625 = vector.extract_strided_slice %564 {offsets = [0, 0, 16], sizes = [2, 16, 8], strides = [1, 1, 1]} : vector<2x16x32xf32> to vector<2x16x8xf32>
    "tpu.trace_start"() <{level = 10 : i32, message = "bln,bnd->bld"}> : () -> ()
    %cst_260 = arith.constant dense<0.000000e+00> : vector<2x8x8xf32>
    %626 = tpu.matmul %624, %625, %cst_260 {dimension_numbers = #tpu.dot_dimension_numbers<[2], [1], [1], [2], [0, 0, 0, 1, 1, 2], [0], [0]>} : vector<2x8x16xf32>, vector<2x16x8xf32>, vector<2x8x8xf32> -> vector<2x8x8xf32>
    "tpu.trace_stop"() : () -> ()
    %627 = vector.shape_cast %626 : vector<2x8x8xf32> to vector<16x8xf32>
    %628 = vector.extract_strided_slice %566 {offsets = [16, 0], sizes = [8, 32], strides = [1, 1]} : vector<32x32xf32> to vector<8x32xf32>
    %cst_261 = arith.constant dense<0.000000e+00> : vector<16x32xf32>
    %629 = tpu.matmul %627, %628, %cst_261 {dimension_numbers = #tpu.dot_dimension_numbers<[1], [0], [0], [1], [0, 0, 1, 1], [], []>} : vector<16x8xf32>, vector<8x32xf32>, vector<16x32xf32> -> vector<16x32xf32>
    %630 = arith.addf %609, %629 : vector<16x32xf32>
    %631 = vector.extract_strided_slice %562 {offsets = [0, 0, 24], sizes = [2, 8, 8], strides = [1, 1, 1]} : vector<2x8x32xf32> to vector<2x8x8xf32>
    %632 = vector.extract_strided_slice %563 {offsets = [0, 0, 24], sizes = [2, 16, 8], strides = [1, 1, 1]} : vector<2x16x32xf32> to vector<2x16x8xf32>
    "tpu.trace_start"() <{level = 10 : i32, message = "bld,bnd->bln"}> : () -> ()
    %cst_262 = arith.constant dense<0.000000e+00> : vector<2x8x16xf32>
    %633 = tpu.matmul %631, %632, %cst_262 {dimension_numbers = #tpu.dot_dimension_numbers<[2], [2], [1], [1], [0, 0, 0, 1, 1, 1], [0], [0]>} : vector<2x8x8xf32>, vector<2x16x8xf32>, vector<2x8x16xf32> -> vector<2x8x16xf32>
    "tpu.trace_stop"() : () -> ()
    %cst_263 = arith.constant 0.353553385 : f32
    %634 = vector.broadcast %cst_263 : f32 to vector<2x8x16xf32>
    %635 = arith.mulf %633, %634 : vector<2x8x16xf32>
    %cst_264 = arith.constant dense<0xFF800000> : vector<2x8xf32>
    %636 = vector.multi_reduction <maximumf>, %635, %cst_264 [2] : vector<2x8x16xf32> to vector<2x8xf32>
    %637 = vector.shape_cast %636 : vector<2x8xf32> to vector<2x8x1xf32>
    %638 = vector.broadcast %637 : vector<2x8x1xf32> to vector<2x8x16xf32>
    %639 = arith.subf %635, %638 : vector<2x8x16xf32>
    %640 = math.exp %639 : vector<2x8x16xf32>
    %cst_265 = arith.constant dense<0.000000e+00> : vector<2x8xf32>
    %641 = vector.multi_reduction <add>, %640, %cst_265 [2] : vector<2x8x16xf32> to vector<2x8xf32>
    %642 = vector.shape_cast %641 : vector<2x8xf32> to vector<2x8x1xf32>
    %643 = tpu.reciprocal %642 {approx = true} : vector<2x8x1xf32> -> vector<2x8x1xf32>
    %644 = vector.broadcast %643 : vector<2x8x1xf32> to vector<2x8x16xf32>
    %645 = arith.mulf %640, %644 : vector<2x8x16xf32>
    %646 = vector.extract_strided_slice %564 {offsets = [0, 0, 24], sizes = [2, 16, 8], strides = [1, 1, 1]} : vector<2x16x32xf32> to vector<2x16x8xf32>
    "tpu.trace_start"() <{level = 10 : i32, message = "bln,bnd->bld"}> : () -> ()
    %cst_266 = arith.constant dense<0.000000e+00> : vector<2x8x8xf32>
    %647 = tpu.matmul %645, %646, %cst_266 {dimension_numbers = #tpu.dot_dimension_numbers<[2], [1], [1], [2], [0, 0, 0, 1, 1, 2], [0], [0]>} : vector<2x8x16xf32>, vector<2x16x8xf32>, vector<2x8x8xf32> -> vector<2x8x8xf32>
    "tpu.trace_stop"() : () -> ()
    %648 = vector.shape_cast %647 : vector<2x8x8xf32> to vector<16x8xf32>
    %649 = vector.extract_strided_slice %566 {offsets = [24, 0], sizes = [8, 32], strides = [1, 1]} : vector<32x32xf32> to vector<8x32xf32>
    %cst_267 = arith.constant dense<0.000000e+00> : vector<16x32xf32>
    %650 = tpu.matmul %648, %649, %cst_267 {dimension_numbers = #tpu.dot_dimension_numbers<[1], [0], [0], [1], [0, 0, 1, 1], [], []>} : vector<16x8xf32>, vector<8x32xf32>, vector<16x32xf32> -> vector<16x32xf32>
    %651 = arith.addf %630, %650 : vector<16x32xf32>
    %c3_268 = arith.constant 3 : index
    %c0_269 = arith.constant 0 : index
    %c0_270 = arith.constant 0 : index
    %652 = vector.load %arg10[%c3_268, %c0_269, %c0_270] : memref<4x1x32xf32, #tpu.memory_space<vmem>>, vector<1x1x32xf32>
    %653 = vector.shape_cast %652 : vector<1x1x32xf32> to vector<1x32xf32>
    %654 = vector.broadcast %653 : vector<1x32xf32> to vector<16x32xf32>
    %655 = arith.addf %651, %654 : vector<16x32xf32>
    %c3_271 = arith.constant 3 : index
    %c0_272 = arith.constant 0 : index
    %c0_273 = arith.constant 0 : index
    %656 = vector.load %arg11[%c3_271, %c0_272, %c0_273] : memref<4x4x32xf32, #tpu.memory_space<vmem>>, vector<1x4x32xf32>
    %657 = vector.shape_cast %656 : vector<1x4x32xf32> to vector<4x32xf32>
    %658 = arith.addf %545, %655 : vector<16x32xf32>
    %659 = vector.extract_strided_slice %657 {offsets = [0, 0], sizes = [1, 32], strides = [1, 1]} : vector<4x32xf32> to vector<1x32xf32>
    %660 = vector.extract_strided_slice %657 {offsets = [1, 0], sizes = [1, 32], strides = [1, 1]} : vector<4x32xf32> to vector<1x32xf32>
    %cst_274 = arith.constant dense<0.000000e+00> : vector<16xf32>
    %661 = vector.multi_reduction <add>, %658, %cst_274 [1] : vector<16x32xf32> to vector<16xf32>
    %662 = vector.shape_cast %661 : vector<16xf32> to vector<16x1xf32>
    %cst_275 = arith.constant 3.200000e+01 : f32
    %663 = vector.broadcast %cst_275 : f32 to vector<16x1xf32>
    %664 = arith.divf %662, %663 : vector<16x1xf32>
    %665 = vector.broadcast %664 : vector<16x1xf32> to vector<16x32xf32>
    %666 = arith.subf %658, %665 : vector<16x32xf32>
    %667 = arith.mulf %666, %666 : vector<16x32xf32>
    %cst_276 = arith.constant dense<0.000000e+00> : vector<16xf32>
    %668 = vector.multi_reduction <add>, %667, %cst_276 [1] : vector<16x32xf32> to vector<16xf32>
    %669 = vector.shape_cast %668 : vector<16xf32> to vector<16x1xf32>
    %cst_277 = arith.constant 3.200000e+01 : f32
    %670 = vector.broadcast %cst_277 : f32 to vector<16x1xf32>
    %671 = arith.divf %669, %670 : vector<16x1xf32>
    %672 = vector.broadcast %664 : vector<16x1xf32> to vector<16x32xf32>
    %673 = arith.subf %658, %672 : vector<16x32xf32>
    %cst_278 = arith.constant 9.99999974E-6 : f32
    %674 = vector.broadcast %cst_278 : f32 to vector<16x1xf32>
    %675 = arith.addf %671, %674 : vector<16x1xf32>
    %676 = math.rsqrt %675 : vector<16x1xf32>
    %677 = vector.broadcast %676 : vector<16x1xf32> to vector<16x32xf32>
    %678 = arith.mulf %673, %677 : vector<16x32xf32>
    %679 = vector.broadcast %659 : vector<1x32xf32> to vector<16x32xf32>
    %680 = arith.mulf %678, %679 : vector<16x32xf32>
    %681 = vector.broadcast %660 : vector<1x32xf32> to vector<16x32xf32>
    %682 = arith.addf %680, %681 : vector<16x32xf32>
    %c3_279 = arith.constant 3 : index
    %c0_280 = arith.constant 0 : index
    %c0_281 = arith.constant 0 : index
    %683 = vector.load %arg12[%c3_279, %c0_280, %c0_281] : memref<4x32x32xf32, #tpu.memory_space<vmem>>, vector<1x32x32xf32>
    %684 = vector.shape_cast %683 : vector<1x32x32xf32> to vector<32x32xf32>
    %cst_282 = arith.constant dense<0.000000e+00> : vector<16x32xf32>
    %685 = tpu.matmul %682, %684, %cst_282 {dimension_numbers = #tpu.dot_dimension_numbers<[1], [0], [0], [1], [0, 0, 1, 1], [], []>} : vector<16x32xf32>, vector<32x32xf32>, vector<16x32xf32> -> vector<16x32xf32>
    %c3_283 = arith.constant 3 : index
    %c0_284 = arith.constant 0 : index
    %c0_285 = arith.constant 0 : index
    %686 = vector.load %arg13[%c3_283, %c0_284, %c0_285] : memref<4x1x32xf32, #tpu.memory_space<vmem>>, vector<1x1x32xf32>
    %687 = vector.shape_cast %686 : vector<1x1x32xf32> to vector<1x32xf32>
    %688 = vector.broadcast %687 : vector<1x32xf32> to vector<16x32xf32>
    %689 = arith.addf %685, %688 : vector<16x32xf32>
    %cst_286 = arith.constant 0.000000e+00 : f32
    %690 = vector.broadcast %cst_286 : f32 to vector<16x32xf32>
    %691 = arith.maximumf %689, %690 : vector<16x32xf32>
    %c3_287 = arith.constant 3 : index
    %c0_288 = arith.constant 0 : index
    %c0_289 = arith.constant 0 : index
    %692 = vector.load %arg14[%c3_287, %c0_288, %c0_289] : memref<4x32x32xf32, #tpu.memory_space<vmem>>, vector<1x32x32xf32>
    %693 = vector.shape_cast %692 : vector<1x32x32xf32> to vector<32x32xf32>
    %cst_290 = arith.constant dense<0.000000e+00> : vector<16x32xf32>
    %694 = tpu.matmul %691, %693, %cst_290 {dimension_numbers = #tpu.dot_dimension_numbers<[1], [0], [0], [1], [0, 0, 1, 1], [], []>} : vector<16x32xf32>, vector<32x32xf32>, vector<16x32xf32> -> vector<16x32xf32>
    %c3_291 = arith.constant 3 : index
    %c0_292 = arith.constant 0 : index
    %c0_293 = arith.constant 0 : index
    %695 = vector.load %arg15[%c3_291, %c0_292, %c0_293] : memref<4x1x32xf32, #tpu.memory_space<vmem>>, vector<1x1x32xf32>
    %696 = vector.shape_cast %695 : vector<1x1x32xf32> to vector<1x32xf32>
    %697 = vector.broadcast %696 : vector<1x32xf32> to vector<16x32xf32>
    %698 = arith.addf %694, %697 : vector<16x32xf32>
    %699 = arith.addf %682, %698 : vector<16x32xf32>
    %700 = vector.extract_strided_slice %657 {offsets = [2, 0], sizes = [1, 32], strides = [1, 1]} : vector<4x32xf32> to vector<1x32xf32>
    %701 = vector.extract_strided_slice %657 {offsets = [3, 0], sizes = [1, 32], strides = [1, 1]} : vector<4x32xf32> to vector<1x32xf32>
    %cst_294 = arith.constant dense<0.000000e+00> : vector<16xf32>
    %702 = vector.multi_reduction <add>, %699, %cst_294 [1] : vector<16x32xf32> to vector<16xf32>
    %703 = vector.shape_cast %702 : vector<16xf32> to vector<16x1xf32>
    %cst_295 = arith.constant 3.200000e+01 : f32
    %704 = vector.broadcast %cst_295 : f32 to vector<16x1xf32>
    %705 = arith.divf %703, %704 : vector<16x1xf32>
    %706 = vector.broadcast %705 : vector<16x1xf32> to vector<16x32xf32>
    %707 = arith.subf %699, %706 : vector<16x32xf32>
    %708 = arith.mulf %707, %707 : vector<16x32xf32>
    %cst_296 = arith.constant dense<0.000000e+00> : vector<16xf32>
    %709 = vector.multi_reduction <add>, %708, %cst_296 [1] : vector<16x32xf32> to vector<16xf32>
    %710 = vector.shape_cast %709 : vector<16xf32> to vector<16x1xf32>
    %cst_297 = arith.constant 3.200000e+01 : f32
    %711 = vector.broadcast %cst_297 : f32 to vector<16x1xf32>
    %712 = arith.divf %710, %711 : vector<16x1xf32>
    %713 = vector.broadcast %705 : vector<16x1xf32> to vector<16x32xf32>
    %714 = arith.subf %699, %713 : vector<16x32xf32>
    %cst_298 = arith.constant 9.99999974E-6 : f32
    %715 = vector.broadcast %cst_298 : f32 to vector<16x1xf32>
    %716 = arith.addf %712, %715 : vector<16x1xf32>
    %717 = math.rsqrt %716 : vector<16x1xf32>
    %718 = vector.broadcast %717 : vector<16x1xf32> to vector<16x32xf32>
    %719 = arith.mulf %714, %718 : vector<16x32xf32>
    %720 = vector.broadcast %700 : vector<1x32xf32> to vector<16x32xf32>
    %721 = arith.mulf %719, %720 : vector<16x32xf32>
    %722 = vector.broadcast %701 : vector<1x32xf32> to vector<16x32xf32>
    %723 = arith.addf %721, %722 : vector<16x32xf32>
    %724 = arith.addf %11, %723 : vector<16x32xf32>
    %c0_299 = arith.constant 0 : index
    %c0_300 = arith.constant 0 : index
    %725 = vector.load %arg16[%c0_299, %c0_300] : memref<32x16xf32, #tpu.memory_space<vmem>>, vector<32x16xf32>
    %cst_301 = arith.constant dense<0.000000e+00> : vector<16x16xf32>
    %726 = tpu.matmul %724, %725, %cst_301 {dimension_numbers = #tpu.dot_dimension_numbers<[1], [0], [0], [1], [0, 0, 1, 1], [], []>} : vector<16x32xf32>, vector<32x16xf32>, vector<16x16xf32> -> vector<16x16xf32>
    %c0_302 = arith.constant 0 : index
    %c0_303 = arith.constant 0 : index
    %727 = vector.load %arg17[%c0_302, %c0_303] : memref<1x16xf32, #tpu.memory_space<vmem>>, vector<1x16xf32>
    %728 = vector.broadcast %727 : vector<1x16xf32> to vector<16x16xf32>
    %729 = arith.addf %726, %728 : vector<16x16xf32>
    %730 = vector.shape_cast %729 : vector<16x16xf32> to vector<2x8x16xf32>
    %c0_304 = arith.constant 0 : index
    %c0_305 = arith.constant 0 : index
    %c0_306 = arith.constant 0 : index
    %731 = vector.load %arg18[%c0_304, %c0_305, %c0_306] : memref<2x8x16xf32, #tpu.memory_space<vmem>>, vector<2x8x16xf32>
    tpu.vector_store %arg18[%c0_304, %c0_305, %c0_306], %730 {strides = array<i32>} : memref<2x8x16xf32, #tpu.memory_space<vmem>>, vector<2x8x16xf32>,
    return
  }
}

</mosaic_0001>

<llo_original>
// kernel: host_img_transformer_encoder.1
$region0: #{host_img_transformer_encoder.1}
  #allocation0 [shape = 'u32[]', space=smem, size = 0x4, offset = 0x4, fixed_abs, tag = 'smem constant byte address 0x4 - core index']
  #allocation1 [shape = 'u32[144,128]{1,0:T(1,128)}', space=vmem, size = 0x12000, scoped, tag = 'internal scratch']
  %s0 = inlined_call_operand.vmem [shape: f32[2,16,48], index: 0, kind: input, shape index: {}]
  %s1 = inlined_call_operand.vmem [shape: f32[8,32], index: 1, kind: input, shape index: {}]
  %s2 = inlined_call_operand.vmem [shape: f32[48,32], index: 2, kind: input, shape index: {}]
  %s3 = inlined_call_operand.vmem [shape: f32[1,32], index: 3, kind: input, shape index: {}]
  %s4 = inlined_call_operand.vmem [shape: f32[16,32], index: 4, kind: input, shape index: {}]
  %s5 = inlined_call_operand.vmem [shape: f32[4,32,32], index: 5, kind: input, shape index: {}]
  %s6 = inlined_call_operand.vmem [shape: f32[4,1,32], index: 6, kind: input, shape index: {}]
  %s7 = inlined_call_operand.vmem [shape: f32[4,32,64], index: 7, kind: input, shape index: {}]
  %s8 = inlined_call_operand.vmem [shape: f32[4,1,64], index: 8, kind: input, shape index: {}]
  %s9 = inlined_call_operand.vmem [shape: f32[4,32,32], index: 9, kind: input, shape index: {}]
  %s10 = inlined_call_operand.vmem [shape: f32[4,1,32], index: 10, kind: input, shape index: {}]
  %s11 = inlined_call_operand.vmem [shape: f32[4,4,32], index: 11, kind: input, shape index: {}]
  %s12 = inlined_call_operand.vmem [shape: f32[4,32,32], index: 12, kind: input, shape index: {}]
  %s13 = inlined_call_operand.vmem [shape: f32[4,1,32], index: 13, kind: input, shape index: {}]
  %s14 = inlined_call_operand.vmem [shape: f32[4,32,32], index: 14, kind: input, shape index: {}]
  %s15 = inlined_call_operand.vmem [shape: f32[4,1,32], index: 15, kind: input, shape index: {}]
  %s16 = inlined_call_operand.vmem [shape: f32[32,16], index: 16, kind: input, shape index: {}]
  %s17 = inlined_call_operand.vmem [shape: f32[1,16], index: 17, kind: input, shape index: {}]
  %s18 = inlined_call_operand.hbm [shape: f32[2,8,16], index: 18, kind: output, shape index: {}]
  %s19 = sld [smem:[#allocation0]]
  $region82: #{host_img_transformer_encoder.1} parent=0
    _
  %s21 = ssub.s32 1, %s19
  %s22 = scalar_select 0, %s21, %s19
  $region1: #{host_img_transformer_encoder.1} parent=0
    #allocation2 [shape = 'u8[8192]{0}', space=vmem, size = 0x2000, scoped, tag = 'output window, operand 0, single buffered']
    #allocation3 [shape = 's32[1]{0}', space=sflag, size = 0x4, scoped, tag = 'scoped memory for host_img_transformer_encoder.1']
    %23 = vsyncpa [#allocation3], 0
    // Predicated region
    $region2: #{host_img_transformer_encoder.1} parent=1 // pred_check
      _
    $region3: #{host_img_transformer_encoder.1} parent=1 // pred_check_branch
      %25 = sbr.rel (0) target = $region5
    $region4: #{host_img_transformer_encoder.1} parent=1 // pred_region
      _
    $region5: #{host_img_transformer_encoder.1} parent=1 // pred_fallthru
      _
    // Predicated region
    $region6: #{host_img_transformer_encoder.1} parent=1 // pred_check
      _
    $region7: #{host_img_transformer_encoder.1} parent=1 // pred_check_branch
      %27 = sbr.rel (0) target = $region9
    $region8: #{host_img_transformer_encoder.1} parent=1 // pred_region
      _
    $region9: #{host_img_transformer_encoder.1} parent=1 // pred_fallthru
      _
    // Predicated region
    $region10: #{host_img_transformer_encoder.1} parent=1 // pred_check
      _
    $region11: #{host_img_transformer_encoder.1} parent=1 // pred_check_branch
      %29 = sbr.rel (0) target = $region13
    $region12: #{host_img_transformer_encoder.1} parent=1 // pred_region
      _
    $region13: #{host_img_transformer_encoder.1} parent=1 // pred_fallthru
      _
    // Predicated region
    $region14: #{host_img_transformer_encoder.1} parent=1 // pred_check
      _
    $region15: #{host_img_transformer_encoder.1} parent=1 // pred_check_branch
      %31 = sbr.rel (0) target = $region17
    $region16: #{host_img_transformer_encoder.1} parent=1 // pred_region
      _
    $region17: #{host_img_transformer_encoder.1} parent=1 // pred_fallthru
      _
    // Predicated region
    $region18: #{host_img_transformer_encoder.1} parent=1 // pred_check
      _
    $region19: #{host_img_transformer_encoder.1} parent=1 // pred_check_branch
      %33 = sbr.rel (0) target = $region21
    $region20: #{host_img_transformer_encoder.1} parent=1 // pred_region
      _
    $region21: #{host_img_transformer_encoder.1} parent=1 // pred_fallthru
      _
    // Predicated region
    $region22: #{host_img_transformer_encoder.1} parent=1 // pred_check
      _
    $region23: #{host_img_transformer_encoder.1} parent=1 // pred_check_branch
      %35 = sbr.rel (0) target = $region25
    $region24: #{host_img_transformer_encoder.1} parent=1 // pred_region
      _
    $region25: #{host_img_transformer_encoder.1} parent=1 // pred_fallthru
      _
    // Predicated region
    $region26: #{host_img_transformer_encoder.1} parent=1 // pred_check
      _
    $region27: #{host_img_transformer_encoder.1} parent=1 // pred_check_branch
      %37 = sbr.rel (0) target = $region29
    $region28: #{host_img_transformer_encoder.1} parent=1 // pred_region
      _
    $region29: #{host_img_transformer_encoder.1} parent=1 // pred_fallthru
      _
    // Predicated region
    $region30: #{host_img_transformer_encoder.1} parent=1 // pred_check
      _
    $region31: #{host_img_transformer_encoder.1} parent=1 // pred_check_branch
      %39 = sbr.rel (0) target = $region33
    $region32: #{host_img_transformer_encoder.1} parent=1 // pred_region
      _
    $region33: #{host_img_transformer_encoder.1} parent=1 // pred_fallthru
      _
    // Predicated region
    $region34: #{host_img_transformer_encoder.1} parent=1 // pred_check
      _
    $region35: #{host_img_transformer_encoder.1} parent=1 // pred_check_branch
      %41 = sbr.rel (0) target = $region37
    $region36: #{host_img_transformer_encoder.1} parent=1 // pred_region
      _
    $region37: #{host_img_transformer_encoder.1} parent=1 // pred_fallthru
      _
    // Predicated region
    $region38: #{host_img_transformer_encoder.1} parent=1 // pred_check
      _
    $region39: #{host_img_transformer_encoder.1} parent=1 // pred_check_branch
      %43 = sbr.rel (0) target = $region41
    $region40: #{host_img_transformer_encoder.1} parent=1 // pred_region
      _
    $region41: #{host_img_transformer_encoder.1} parent=1 // pred_fallthru
      _
    // Predicated region
    $region42: #{host_img_transformer_encoder.1} parent=1 // pred_check
      _
    $region43: #{host_img_transformer_encoder.1} parent=1 // pred_check_branch
      %45 = sbr.rel (0) target = $region45
    $region44: #{host_img_transformer_encoder.1} parent=1 // pred_region
      _
    $region45: #{host_img_transformer_encoder.1} parent=1 // pred_fallthru
      _
    // Predicated region
    $region46: #{host_img_transformer_encoder.1} parent=1 // pred_check
      _
    $region47: #{host_img_transformer_encoder.1} parent=1 // pred_check_branch
      %47 = sbr.rel (0) target = $region49
    $region48: #{host_img_transformer_encoder.1} parent=1 // pred_region
      _
    $region49: #{host_img_transformer_encoder.1} parent=1 // pred_fallthru
      _
    // Predicated region
    $region50: #{host_img_transformer_encoder.1} parent=1 // pred_check
      _
    $region51: #{host_img_transformer_encoder.1} parent=1 // pred_check_branch
      %49 = sbr.rel (0) target = $region53
    $region52: #{host_img_transformer_encoder.1} parent=1 // pred_region
      _
    $region53: #{host_img_transformer_encoder.1} parent=1 // pred_fallthru
      _
    // Predicated region
    $region54: #{host_img_transformer_encoder.1} parent=1 // pred_check
      _
    $region55: #{host_img_transformer_encoder.1} parent=1 // pred_check_branch
      %51 = sbr.rel (0) target = $region57
    $region56: #{host_img_transformer_encoder.1} parent=1 // pred_region
      _
    $region57: #{host_img_transformer_encoder.1} parent=1 // pred_fallthru
      _
    // Predicated region
    $region58: #{host_img_transformer_encoder.1} parent=1 // pred_check
      _
    $region59: #{host_img_transformer_encoder.1} parent=1 // pred_check_branch
      %53 = sbr.rel (0) target = $region61
    $region60: #{host_img_transformer_encoder.1} parent=1 // pred_region
      _
    $region61: #{host_img_transformer_encoder.1} parent=1 // pred_fallthru
      _
    // Predicated region
    $region62: #{host_img_transformer_encoder.1} parent=1 // pred_check
      _
    $region63: #{host_img_transformer_encoder.1} parent=1 // pred_check_branch
      %55 = sbr.rel (0) target = $region65
    $region64: #{host_img_transformer_encoder.1} parent=1 // pred_region
      _
    $region65: #{host_img_transformer_encoder.1} parent=1 // pred_fallthru
      _
    // Predicated region
    $region66: #{host_img_transformer_encoder.1} parent=1 // pred_check
      _
    $region67: #{host_img_transformer_encoder.1} parent=1 // pred_check_branch
      %57 = sbr.rel (0) target = $region69
    $region68: #{host_img_transformer_encoder.1} parent=1 // pred_region
      _
    $region69: #{host_img_transformer_encoder.1} parent=1 // pred_fallthru
      _
    // Predicated region
    $region70: #{host_img_transformer_encoder.1} parent=1 // pred_check
      _
    $region71: #{host_img_transformer_encoder.1} parent=1 // pred_check_branch
      %59 = sbr.rel (0) target = $region73
    $region72: #{host_img_transformer_encoder.1} parent=1 // pred_region
      _
    $region73: #{host_img_transformer_encoder.1} parent=1 // pred_fallthru
      _
    %v60 = vld [vmem:[%s0] sm:$0xff]
    %v61 = vld [vmem:[%s0 + $0x8] sm:$0xff]
    %v62 = vld [vmem:[%s0 + $0x10] sm:$0xff]
    %v63 = vld [vmem:[%s0 + $0x18] sm:$0xff]
    %v64 = vld [vmem:[%s2] sm:$0xff]
    %v65 = vld [vmem:[%s2 + $0x8] sm:$0xff]
    %v66 = vld [vmem:[%s2 + $0x10] sm:$0xff]
    %v67 = vld [vmem:[%s2 + $0x18] sm:$0xff]
    %v68 = vld [vmem:[%s2 + $0x20] sm:$0xff]
    %v69 = vld [vmem:[%s2 + $0x28] sm:$0xff]
    %v70 = vld [vmem:[%s3] sm:$0x1]
    %v72 = vlaneseq
    %v73 = vshrl.u32 %v72, 7
    %v74 = vsub.s32 0, %v73
    %v75 = vrot.slane %v70, %v74
    %vm77 = vcmask 392192
    %v79 = vsel %vm77, %v60, 0
    %v82 = vsel %vm77, %v61, 0
    %v85 = vsel %vm77, %v62, 0
    %v88 = vsel %vm77, %v63, 0
    %90 = vmatprep.subr.mxu0 0.0
    %91 = vmatpush1.msra.mxu0 0.0
    %92 = vmatprep.subr.mxu0 0.0
    %93 = vmatpush1.msra.mxu0 0.0
    %94 = vmatprep.subr.mxu0 0.0
    %95 = vmatpush1.msra.mxu0 0.0
    %96 = vmatprep.subr.mxu0 0.0
    %97 = vmatpush1.msra.mxu0 0.0
    %98 = vmatprep.subr.mxu0 0.0
    %99 = vmatpush1.msra.mxu0 0.0
    %100 = vmatprep.subr.mxu0 0.0
    %101 = vmatpush1.msra.mxu0 0.0
    %102 = vmatprep.subr.mxu0 0.0
    %103 = vmatpush1.msra.mxu0 0.0
    %104 = vmatprep.subr.mxu0 0.0
    %105 = vmatpush1.msra.mxu0 0.0
    %106 = vmatprep.subr.mxu0 0.0
    %107 = vmatpush1.msra.mxu0 0.0
    %108 = vmatprep.subr.mxu0 0.0
    %109 = vmatpush1.msra.mxu0 0.0
    %110 = vmatprep.subr.mxu0 0.0
    %111 = vmatpush1.msra.mxu0 %v69
    %112 = vmatprep.subr.mxu0 0.0
    %113 = vmatpush1.msra.mxu0 %v68
    %114 = vmatprep.subr.mxu0 0.0
    %115 = vmatpush1.msra.mxu0 %v67
    %116 = vmatprep.subr.mxu0 0.0
    %117 = vmatpush1.msra.mxu0 %v66
    %118 = vmatprep.subr.mxu0 0.0
    %119 = vmatpush1.msra.mxu0 %v65
    %120 = vmatprep.subr.mxu0 0.0
    %121 = vmatpush1.msra.mxu0 %v64
    %122 = vmatprep.subr.mxu0 0.0
    %123 = vmatpush2.msra.mxu0 0.0
    %124 = vmatprep.subr.mxu0 0.0
    %125 = vmatpush2.msra.mxu0 0.0
    %126 = vmatprep.subr.mxu0 0.0
    %127 = vmatpush2.msra.mxu0 0.0
    %128 = vmatprep.subr.mxu0 0.0
    %129 = vmatpush2.msra.mxu0 0.0
    %130 = vmatprep.subr.mxu0 0.0
    %131 = vmatpush2.msra.mxu0 0.0
    %132 = vmatprep.subr.mxu0 0.0
    %133 = vmatpush2.msra.mxu0 0.0
    %134 = vmatprep.subr.mxu0 0.0
    %135 = vmatpush2.msra.mxu0 0.0
    %136 = vmatprep.subr.mxu0 0.0
    %137 = vmatpush2.msra.mxu0 0.0
    %138 = vmatprep.subr.mxu0 0.0
    %139 = vmatpush2.msra.mxu0 0.0
    %140 = vmatprep.subr.mxu0 0.0
    %141 = vmatpush2.msra.mxu0 0.0
    %142 = vmatprep.subr.mxu0 0.0
    %143 = vmatpush2.msra.mxu0 0.0
    %144 = vmatprep.subr.mxu0 0.0
    %145 = vmatpush2.msra.mxu0 0.0
    %146 = vmatprep.subr.mxu0 0.0
    %147 = vmatpush2.msra.mxu0 0.0
    %148 = vmatprep.subr.mxu0 0.0
    %149 = vmatpush2.msra.mxu0 0.0
    %150 = vmatprep.subr.mxu0 0.0
    %151 = vmatpush2.msra.mxu0 0.0
    %152 = vmatprep.subr.mxu0 0.0
    %153 = vmatpush2.msra.mxu0 0.0
    %154 = vmatprep.mubr.f32.mxu0 0.0
    %155 = vmatmul.mubr.f32.gmra.mxu0 %v79
    %v156 = vpop.f32.mrf.mxu0
    %v157 = vadd.f32 %v75, %v156
    %v158 = vpop.f32.mrf.mxu0
    %159 = vmatprep.mubr.f32.mxu0 0.0
    %160 = vmatmul.mubr.f32.gmra.mxu0 %v82
    %v161 = vpop.f32.mrf.mxu0
    %v162 = vadd.f32 %v75, %v161
    %v163 = vpop.f32.mrf.mxu0
    %164 = vmatprep.mubr.f32.mxu0 0.0
    %165 = vmatmul.mubr.f32.gmra.mxu0 %v85
    %v166 = vpop.f32.mrf.mxu0
    %v167 = vadd.f32 %v75, %v166
    %v168 = vpop.f32.mrf.mxu0
    %169 = vmatprep.mubr.f32.mxu0 0.0
    %170 = vmatmul.mubr.f32.gmra.mxu0 %v88
    %v171 = vpop.f32.mrf.mxu0
    %v172 = vadd.f32 %v75, %v171
    %v173 = vpop.f32.mrf.mxu0
    %174 = vdwg.mxu0
    %v175 = vld [vmem:[%s4] sm:$0xff]
    %v176 = vld [vmem:[%s4 + $0x8] sm:$0xff]
    %v177 = vadd.f32 %v157, %v175
    %v178 = vadd.f32 %v162, %v176
    %v179 = vadd.f32 %v167, %v175
    %v180 = vadd.f32 %v172, %v176
    %v181 = vld [vmem:[%s1] sm:$0xff]
    %v182 = vld [vmem:[%s5] sm:$0xff]
    %v183 = vld [vmem:[%s5 + $0x8] sm:$0xff]
    %v184 = vld [vmem:[%s5 + $0x10] sm:$0xff]
    %v185 = vld [vmem:[%s5 + $0x18] sm:$0xff]
    %v186 = vld [vmem:[%s6] sm:$0x1]
    %v188 = vlaneseq
    %v189 = vshrl.u32 %v188, 7
    %v190 = vsub.s32 0, %v189
    %v191 = vrot.slane %v186, %v190
    %vm193 = vcmask 261120
    %v195 = vsel %vm193, %v181, 0
    %197 = vmatprep.subr.mxu0 0.0
    %198 = vmatpush1.msra.mxu0 0.0
    %199 = vmatprep.subr.mxu0 0.0
    %200 = vmatpush1.msra.mxu0 0.0
    %201 = vmatprep.subr.mxu0 0.0
    %202 = vmatpush1.msra.mxu0 0.0
    %203 = vmatprep.subr.mxu0 0.0
    %204 = vmatpush1.msra.mxu0 0.0
    %205 = vmatprep.subr.mxu0 0.0
    %206 = vmatpush1.msra.mxu0 0.0
    %207 = vmatprep.subr.mxu0 0.0
    %208 = vmatpush1.msra.mxu0 0.0
    %209 = vmatprep.subr.mxu0 0.0
    %210 = vmatpush1.msra.mxu0 0.0
    %211 = vmatprep.subr.mxu0 0.0
    %212 = vmatpush1.msra.mxu0 0.0
    %213 = vmatprep.subr.mxu0 0.0
    %214 = vmatpush1.msra.mxu0 0.0
    %215 = vmatprep.subr.mxu0 0.0
    %216 = vmatpush1.msra.mxu0 0.0
    %217 = vmatprep.subr.mxu0 0.0
    %218 = vmatpush1.msra.mxu0 0.0
    %219 = vmatprep.subr.mxu0 0.0
    %220 = vmatpush1.msra.mxu0 0.0
    %221 = vmatprep.subr.mxu0 0.0
    %222 = vmatpush1.msra.mxu0 %v185
    %223 = vmatprep.subr.mxu0 0.0
    %224 = vmatpush1.msra.mxu0 %v184
    %225 = vmatprep.subr.mxu0 0.0
    %226 = vmatpush1.msra.mxu0 %v183
    %227 = vmatprep.subr.mxu0 0.0
    %228 = vmatpush1.msra.mxu0 %v182
    %229 = vmatprep.subr.mxu0 0.0
    %230 = vmatpush2.msra.mxu0 0.0
    %231 = vmatprep.subr.mxu0 0.0
    %232 = vmatpush2.msra.mxu0 0.0
    %233 = vmatprep.subr.mxu0 0.0
    %234 = vmatpush2.msra.mxu0 0.0
    %235 = vmatprep.subr.mxu0 0.0
    %236 = vmatpush2.msra.mxu0 0.0
    %237 = vmatprep.subr.mxu0 0.0
    %238 = vmatpush2.msra.mxu0 0.0
    %239 = vmatprep.subr.mxu0 0.0
    %240 = vmatpush2.msra.mxu0 0.0
    %241 = vmatprep.subr.mxu0 0.0
    %242 = vmatpush2.msra.mxu0 0.0
    %243 = vmatprep.subr.mxu0 0.0
    %244 = vmatpush2.msra.mxu0 0.0
    %245 = vmatprep.subr.mxu0 0.0
    %246 = vmatpush2.msra.mxu0 0.0
    %247 = vmatprep.subr.mxu0 0.0
    %248 = vmatpush2.msra.mxu0 0.0
    %249 = vmatprep.subr.mxu0 0.0
    %250 = vmatpush2.msra.mxu0 0.0
    %251 = vmatprep.subr.mxu0 0.0
    %252 = vmatpush2.msra.mxu0 0.0
    %253 = vmatprep.subr.mxu0 0.0
    %254 = vmatpush2.msra.mxu0 0.0
    %255 = vmatprep.subr.mxu0 0.0
    %256 = vmatpush2.msra.mxu0 0.0
    %257 = vmatprep.subr.mxu0 0.0
    %258 = vmatpush2.msra.mxu0 0.0
    %259 = vmatprep.subr.mxu0 0.0
    %260 = vmatpush2.msra.mxu0 0.0
    %261 = vmatprep.mubr.f32.mxu0 0.0
    %262 = vmatmul.mubr.f32.gmra.mxu0 %v195
    %v263 = vpop.f32.mrf.mxu0
    %v264 = vadd.f32 %v191, %v263
    %v265 = vpop.f32.mrf.mxu0
    %266 = vmatprep.mubr.f32.mxu0 0.0
    %267 = vmatmul.mubr.f32.gmra.mxu0 %v195
    %v268 = vpop.f32.mrf.mxu0
    %v269 = vadd.f32 %v191, %v268
    %v270 = vpop.f32.mrf.mxu0
    %271 = vdwg.mxu0
    %v272 = vld [vmem:[%s7] sm:$0xff]
    %v273 = vld [vmem:[%s7 + $0x8] sm:$0xff]
    %v274 = vld [vmem:[%s7 + $0x10] sm:$0xff]
    %v275 = vld [vmem:[%s7 + $0x18] sm:$0xff]
    %v276 = vld [vmem:[%s8] sm:$0x1]
    %v278 = vlaneseq
    %v279 = vshrl.u32 %v278, 7
    %v280 = vsub.s32 0, %v279
    %v281 = vrot.slane %v276, %v280
    %v284 = vsel %vm193, %v177, 0
    %v287 = vsel %vm193, %v178, 0
    %v290 = vsel %vm193, %v179, 0
    %v293 = vsel %vm193, %v180, 0
    %295 = vmatprep.subr.mxu0 0.0
    %296 = vmatpush1.msra.mxu0 0.0
    %297 = vmatprep.subr.mxu0 0.0
    %298 = vmatpush1.msra.mxu0 0.0
    %299 = vmatprep.subr.mxu0 0.0
    %300 = vmatpush1.msra.mxu0 0.0
    %301 = vmatprep.subr.mxu0 0.0
    %302 = vmatpush1.msra.mxu0 0.0
    %303 = vmatprep.subr.mxu0 0.0
    %304 = vmatpush1.msra.mxu0 0.0
    %305 = vmatprep.subr.mxu0 0.0
    %306 = vmatpush1.msra.mxu0 0.0
    %307 = vmatprep.subr.mxu0 0.0
    %308 = vmatpush1.msra.mxu0 0.0
    %309 = vmatprep.subr.mxu0 0.0
    %310 = vmatpush1.msra.mxu0 0.0
    %311 = vmatprep.subr.mxu0 0.0
    %312 = vmatpush1.msra.mxu0 0.0
    %313 = vmatprep.subr.mxu0 0.0
    %314 = vmatpush1.msra.mxu0 0.0
    %315 = vmatprep.subr.mxu0 0.0
    %316 = vmatpush1.msra.mxu0 0.0
    %317 = vmatprep.subr.mxu0 0.0
    %318 = vmatpush1.msra.mxu0 0.0
    %319 = vmatprep.subr.mxu0 0.0
    %320 = vmatpush1.msra.mxu0 %v275
    %321 = vmatprep.subr.mxu0 0.0
    %322 = vmatpush1.msra.mxu0 %v274
    %323 = vmatprep.subr.mxu0 0.0
    %324 = vmatpush1.msra.mxu0 %v273
    %325 = vmatprep.subr.mxu0 0.0
    %326 = vmatpush1.msra.mxu0 %v272
    %327 = vmatprep.subr.mxu0 0.0
    %328 = vmatpush2.msra.mxu0 0.0
    %329 = vmatprep.subr.mxu0 0.0
    %330 = vmatpush2.msra.mxu0 0.0
    %331 = vmatprep.subr.mxu0 0.0
    %332 = vmatpush2.msra.mxu0 0.0
    %333 = vmatprep.subr.mxu0 0.0
    %334 = vmatpush2.msra.mxu0 0.0
    %335 = vmatprep.subr.mxu0 0.0
    %336 = vmatpush2.msra.mxu0 0.0
    %337 = vmatprep.subr.mxu0 0.0
    %338 = vmatpush2.msra.mxu0 0.0
    %339 = vmatprep.subr.mxu0 0.0
    %340 = vmatpush2.msra.mxu0 0.0
    %341 = vmatprep.subr.mxu0 0.0
    %342 = vmatpush2.msra.mxu0 0.0
    %343 = vmatprep.subr.mxu0 0.0
    %344 = vmatpush2.msra.mxu0 0.0
    %345 = vmatprep.subr.mxu0 0.0
    %346 = vmatpush2.msra.mxu0 0.0
    %347 = vmatprep.subr.mxu0 0.0
    %348 = vmatpush2.msra.mxu0 0.0
    %349 = vmatprep.subr.mxu0 0.0
    %350 = vmatpush2.msra.mxu0 0.0
    %351 = vmatprep.subr.mxu0 0.0
    %352 = vmatpush2.msra.mxu0 0.0
    %353 = vmatprep.subr.mxu0 0.0
    %354 = vmatpush2.msra.mxu0 0.0
    %355 = vmatprep.subr.mxu0 0.0
    %356 = vmatpush2.msra.mxu0 0.0
    %357 = vmatprep.subr.mxu0 0.0
    %358 = vmatpush2.msra.mxu0 0.0
    %359 = vmatprep.mubr.f32.mxu0 0.0
    %360 = vmatmul.mubr.f32.gmra.mxu0 %v284
    %v361 = vpop.f32.mrf.mxu0
    %v362 = vadd.f32 %v281, %v361
    %v363 = vpop.f32.mrf.mxu0
    %364 = vmatprep.mubr.f32.mxu0 0.0
    %365 = vmatmul.mubr.f32.gmra.mxu0 %v287
    %v366 = vpop.f32.mrf.mxu0
    %v367 = vadd.f32 %v281, %v366
    %v368 = vpop.f32.mrf.mxu0
    %369 = vmatprep.mubr.f32.mxu0 0.0
    %370 = vmatmul.mubr.f32.gmra.mxu0 %v290
    %v371 = vpop.f32.mrf.mxu0
    %v372 = vadd.f32 %v281, %v371
    %v373 = vpop.f32.mrf.mxu0
    %374 = vmatprep.mubr.f32.mxu0 0.0
    %375 = vmatmul.mubr.f32.gmra.mxu0 %v293
    %v376 = vpop.f32.mrf.mxu0
    %v377 = vadd.f32 %v281, %v376
    %v378 = vpop.f32.mrf.mxu0
    %379 = vdwg.mxu0
    %v380 = vld [vmem:[%s9] sm:$0xff]
    %v381 = vld [vmem:[%s9 + $0x8] sm:$0xff]
    %v382 = vld [vmem:[%s9 + $0x10] sm:$0xff]
    %v383 = vld [vmem:[%s9 + $0x18] sm:$0xff]
    %vm384 = vcmask 64512
    %v386 = vsel %vm384, %v264, 0
    %v389 = vsel %vm384, %v362, 0
    %v392 = vsel %vm384, %v367, 0
    %394 = vmatprep.subr.mxu0 0.0
    %395 = vmatpush1.xpose.msra.mxu0 0.0
    %396 = vmatprep.subr.mxu0 0.0
    %397 = vmatpush1.xpose.msra.mxu0 0.0
    %398 = vmatprep.subr.mxu0 0.0
    %399 = vmatpush1.xpose.msra.mxu0 0.0
    %400 = vmatprep.subr.mxu0 0.0
    %401 = vmatpush1.xpose.msra.mxu0 0.0
    %402 = vmatprep.subr.mxu0 0.0
    %403 = vmatpush1.xpose.msra.mxu0 0.0
    %404 = vmatprep.subr.mxu0 0.0
    %405 = vmatpush1.xpose.msra.mxu0 0.0
    %406 = vmatprep.subr.mxu0 0.0
    %407 = vmatpush1.xpose.msra.mxu0 0.0
    %408 = vmatprep.subr.mxu0 0.0
    %409 = vmatpush1.xpose.msra.mxu0 0.0
    %410 = vmatprep.subr.mxu0 0.0
    %411 = vmatpush1.xpose.msra.mxu0 0.0
    %412 = vmatprep.subr.mxu0 0.0
    %413 = vmatpush1.xpose.msra.mxu0 0.0
    %414 = vmatprep.subr.mxu0 0.0
    %415 = vmatpush1.xpose.msra.mxu0 0.0
    %416 = vmatprep.subr.mxu0 0.0
    %417 = vmatpush1.xpose.msra.mxu0 0.0
    %418 = vmatprep.subr.mxu0 0.0
    %419 = vmatpush1.xpose.msra.mxu0 0.0
    %420 = vmatprep.subr.mxu0 0.0
    %421 = vmatpush1.xpose.msra.mxu0 0.0
    %422 = vmatprep.subr.mxu0 0.0
    %423 = vmatpush1.xpose.msra.mxu0 %v392
    %424 = vmatprep.subr.mxu0 0.0
    %425 = vmatpush1.xpose.msra.mxu0 %v389
    %426 = vmatprep.subr.mxu0 0.0
    %427 = vmatpush2.xpose.msra.mxu0 0.0
    %428 = vmatprep.subr.mxu0 0.0
    %429 = vmatpush2.xpose.msra.mxu0 0.0
    %430 = vmatprep.subr.mxu0 0.0
    %431 = vmatpush2.xpose.msra.mxu0 0.0
    %432 = vmatprep.subr.mxu0 0.0
    %433 = vmatpush2.xpose.msra.mxu0 0.0
    %434 = vmatprep.subr.mxu0 0.0
    %435 = vmatpush2.xpose.msra.mxu0 0.0
    %436 = vmatprep.subr.mxu0 0.0
    %437 = vmatpush2.xpose.msra.mxu0 0.0
    %438 = vmatprep.subr.mxu0 0.0
    %439 = vmatpush2.xpose.msra.mxu0 0.0
    %440 = vmatprep.subr.mxu0 0.0
    %441 = vmatpush2.xpose.msra.mxu0 0.0
    %442 = vmatprep.subr.mxu0 0.0
    %443 = vmatpush2.xpose.msra.mxu0 0.0
    %444 = vmatprep.subr.mxu0 0.0
    %445 = vmatpush2.xpose.msra.mxu0 0.0
    %446 = vmatprep.subr.mxu0 0.0
    %447 = vmatpush2.xpose.msra.mxu0 0.0
    %448 = vmatprep.subr.mxu0 0.0
    %449 = vmatpush2.xpose.msra.mxu0 0.0
    %450 = vmatprep.subr.mxu0 0.0
    %451 = vmatpush2.xpose.msra.mxu0 0.0
    %452 = vmatprep.subr.mxu0 0.0
    %453 = vmatpush2.xpose.msra.mxu0 0.0
    %454 = vmatprep.subr.mxu0 0.0
    %455 = vmatpush2.xpose.msra.mxu0 0.0
    %456 = vmatprep.subr.mxu0 0.0
    %457 = vmatpush2.xpose.msra.mxu0 0.0
    %458 = vmatprep.mubr.f32.mxu0 0.0
    %459 = vmatmul.mubr.f32.gmra.mxu0 %v386
    %v460 = vpop.f32.mrf.mxu0
    %v461 = vadd.f32 0.0, %v460
    %v462 = vpop.f32.mrf.mxu0
    %463 = vdwg.mxu0
    %v465 = vsel %vm384, %v269, 0
    %v468 = vsel %vm384, %v372, 0
    %v471 = vsel %vm384, %v377, 0
    %473 = vmatprep.subr.mxu0 0.0
    %474 = vmatpush1.xpose.msra.mxu0 0.0
    %475 = vmatprep.subr.mxu0 0.0
    %476 = vmatpush1.xpose.msra.mxu0 0.0
    %477 = vmatprep.subr.mxu0 0.0
    %478 = vmatpush1.xpose.msra.mxu0 0.0
    %479 = vmatprep.subr.mxu0 0.0
    %480 = vmatpush1.xpose.msra.mxu0 0.0
    %481 = vmatprep.subr.mxu0 0.0
    %482 = vmatpush1.xpose.msra.mxu0 0.0
    %483 = vmatprep.subr.mxu0 0.0
    %484 = vmatpush1.xpose.msra.mxu0 0.0
    %485 = vmatprep.subr.mxu0 0.0
    %486 = vmatpush1.xpose.msra.mxu0 0.0
    %487 = vmatprep.subr.mxu0 0.0
    %488 = vmatpush1.xpose.msra.mxu0 0.0
    %489 = vmatprep.subr.mxu0 0.0
    %490 = vmatpush1.xpose.msra.mxu0 0.0
    %491 = vmatprep.subr.mxu0 0.0
    %492 = vmatpush1.xpose.msra.mxu0 0.0
    %493 = vmatprep.subr.mxu0 0.0
    %494 = vmatpush1.xpose.msra.mxu0 0.0
    %495 = vmatprep.subr.mxu0 0.0
    %496 = vmatpush1.xpose.msra.mxu0 0.0
    %497 = vmatprep.subr.mxu0 0.0
    %498 = vmatpush1.xpose.msra.mxu0 0.0
    %499 = vmatprep.subr.mxu0 0.0
    %500 = vmatpush1.xpose.msra.mxu0 0.0
    %501 = vmatprep.subr.mxu0 0.0
    %502 = vmatpush1.xpose.msra.mxu0 %v471
    %503 = vmatprep.subr.mxu0 0.0
    %504 = vmatpush1.xpose.msra.mxu0 %v468
    %505 = vmatprep.subr.mxu0 0.0
    %506 = vmatpush2.xpose.msra.mxu0 0.0
    %507 = vmatprep.subr.mxu0 0.0
    %508 = vmatpush2.xpose.msra.mxu0 0.0
    %509 = vmatprep.subr.mxu0 0.0
    %510 = vmatpush2.xpose.msra.mxu0 0.0
    %511 = vmatprep.subr.mxu0 0.0
    %512 = vmatpush2.xpose.msra.mxu0 0.0
    %513 = vmatprep.subr.mxu0 0.0
    %514 = vmatpush2.xpose.msra.mxu0 0.0
    %515 = vmatprep.subr.mxu0 0.0
    %516 = vmatpush2.xpose.msra.mxu0 0.0
    %517 = vmatprep.subr.mxu0 0.0
    %518 = vmatpush2.xpose.msra.mxu0 0.0
    %519 = vmatprep.subr.mxu0 0.0
    %520 = vmatpush2.xpose.msra.mxu0 0.0
    %521 = vmatprep.subr.mxu0 0.0
    %522 = vmatpush2.xpose.msra.mxu0 0.0
    %523 = vmatprep.subr.mxu0 0.0
    %524 = vmatpush2.xpose.msra.mxu0 0.0
    %525 = vmatprep.subr.mxu0 0.0
    %526 = vmatpush2.xpose.msra.mxu0 0.0
    %527 = vmatprep.subr.mxu0 0.0
    %528 = vmatpush2.xpose.msra.mxu0 0.0
    %529 = vmatprep.subr.mxu0 0.0
    %530 = vmatpush2.xpose.msra.mxu0 0.0
    %531 = vmatprep.subr.mxu0 0.0
    %532 = vmatpush2.xpose.msra.mxu0 0.0
    %533 = vmatprep.subr.mxu0 0.0
    %534 = vmatpush2.xpose.msra.mxu0 0.0
    %535 = vmatprep.subr.mxu0 0.0
    %536 = vmatpush2.xpose.msra.mxu0 0.0
    %537 = vmatprep.mubr.f32.mxu0 0.0
    %538 = vmatmul.mubr.f32.gmra.mxu0 %v465
    %v539 = vpop.f32.mrf.mxu0
    %v540 = vadd.f32 0.0, %v539
    %v541 = vpop.f32.mrf.mxu0
    %542 = vdwg.mxu0
    %v543 = vmul.f32 %v461, 0.35355338
    %v544 = vmul.f32 %v540, 0.35355338
    %vm545 = vcmask 130048
    %v546 = vsel %vm545, %v543, -inf
    %547 = vmax.xlane.f32.xlu0 %v546
    %v548 = vpop.xlane.xlu0 %547
    %v549 = vsel %vm545, %v544, -inf
    %550 = vmax.xlane.f32.xlu0 %v549
    %v551 = vpop.xlane.xlu0 %550
    %v552 = vsub.f32 %v543, %v548
    %v553 = vsub.f32 %v544, %v551
    %v554 = vmul.f32 %v552, 1.442695
    %v555 = vpow.pop %v554
    %v556 = vmul.f32 %v553, 1.442695
    %v557 = vpow.pop %v556
    %v558 = vsel %vm545, %v555, 0.0
    %559 = vadd.xlane.f32.xlu0 %v558
    %v560 = vpop.xlane.xlu0 %559
    %v561 = vsel %vm545, %v557, 0.0
    %562 = vadd.xlane.f32.xlu0 %v561
    %v563 = vpop.xlane.xlu0 %562
    %v564 = vrcp.pop %v560
    %v565 = vrcp.pop %v563
    %v566 = vmul.f32 %v555, %v564
    %v567 = vmul.f32 %v557, %v565
    %568 = vrot.lane.b32.xlu0 %v362, 96
    %v569 = vpop.permute.xlu0 %568
    %570 = vrot.lane.b32.xlu0 %v367, 96
    %v571 = vpop.permute.xlu0 %570
    %v575 = vsel %vm545, %v566, 0
    %577 = vmatprep.subr.mxu0 0.0
    %578 = vmatpush1.msra.mxu0 0.0
    %579 = vmatprep.subr.mxu0 0.0
    %580 = vmatpush1.msra.mxu0 0.0
    %581 = vmatprep.subr.mxu0 0.0
    %582 = vmatpush1.msra.mxu0 0.0
    %583 = vmatprep.subr.mxu0 0.0
    %584 = vmatpush1.msra.mxu0 0.0
    %585 = vmatprep.subr.mxu0 0.0
    %586 = vmatpush1.msra.mxu0 0.0
    %587 = vmatprep.subr.mxu0 0.0
    %588 = vmatpush1.msra.mxu0 0.0
    %589 = vmatprep.subr.mxu0 0.0
    %590 = vmatpush1.msra.mxu0 0.0
    %591 = vmatprep.subr.mxu0 0.0
    %592 = vmatpush1.msra.mxu0 0.0
    %593 = vmatprep.subr.mxu0 0.0
    %594 = vmatpush1.msra.mxu0 0.0
    %595 = vmatprep.subr.mxu0 0.0
    %596 = vmatpush1.msra.mxu0 0.0
    %597 = vmatprep.subr.mxu0 0.0
    %598 = vmatpush1.msra.mxu0 0.0
    %599 = vmatprep.subr.mxu0 0.0
    %600 = vmatpush1.msra.mxu0 0.0
    %601 = vmatprep.subr.mxu0 0.0
    %602 = vmatpush1.msra.mxu0 0.0
    %603 = vmatprep.subr.mxu0 0.0
    %604 = vmatpush1.msra.mxu0 0.0
    %605 = vmatprep.subr.mxu0 0.0
    %606 = vmatpush1.msra.mxu0 %v571
    %607 = vmatprep.subr.mxu0 0.0
    %608 = vmatpush1.msra.mxu0 %v569
    %609 = vmatprep.subr.mxu0 0.0
    %610 = vmatpush2.msra.mxu0 0.0
    %611 = vmatprep.subr.mxu0 0.0
    %612 = vmatpush2.msra.mxu0 0.0
    %613 = vmatprep.subr.mxu0 0.0
    %614 = vmatpush2.msra.mxu0 0.0
    %615 = vmatprep.subr.mxu0 0.0
    %616 = vmatpush2.msra.mxu0 0.0
    %617 = vmatprep.subr.mxu0 0.0
    %618 = vmatpush2.msra.mxu0 0.0
    %619 = vmatprep.subr.mxu0 0.0
    %620 = vmatpush2.msra.mxu0 0.0
    %621 = vmatprep.subr.mxu0 0.0
    %622 = vmatpush2.msra.mxu0 0.0
    %623 = vmatprep.subr.mxu0 0.0
    %624 = vmatpush2.msra.mxu0 0.0
    %625 = vmatprep.subr.mxu0 0.0
    %626 = vmatpush2.msra.mxu0 0.0
    %627 = vmatprep.subr.mxu0 0.0
    %628 = vmatpush2.msra.mxu0 0.0
    %629 = vmatprep.subr.mxu0 0.0
    %630 = vmatpush2.msra.mxu0 0.0
    %631 = vmatprep.subr.mxu0 0.0
    %632 = vmatpush2.msra.mxu0 0.0
    %633 = vmatprep.subr.mxu0 0.0
    %634 = vmatpush2.msra.mxu0 0.0
    %635 = vmatprep.subr.mxu0 0.0
    %636 = vmatpush2.msra.mxu0 0.0
    %637 = vmatprep.subr.mxu0 0.0
    %638 = vmatpush2.msra.mxu0 0.0
    %639 = vmatprep.subr.mxu0 0.0
    %640 = vmatpush2.msra.mxu0 0.0
    %641 = vmatprep.mubr.f32.mxu0 0.0
    %642 = vmatmul.mubr.f32.gmra.mxu0 %v575
    %v643 = vpop.f32.mrf.mxu0
    %v644 = vadd.f32 0.0, %v643
    %v645 = vpop.f32.mrf.mxu0
    %646 = vdwg.mxu0
    %647 = vrot.lane.b32.xlu0 %v372, 96
    %v648 = vpop.permute.xlu0 %647
    %649 = vrot.lane.b32.xlu0 %v377, 96
    %v650 = vpop.permute.xlu0 %649
    %v654 = vsel %vm545, %v567, 0
    %656 = vmatprep.subr.mxu0 0.0
    %657 = vmatpush1.msra.mxu0 0.0
    %658 = vmatprep.subr.mxu0 0.0
    %659 = vmatpush1.msra.mxu0 0.0
    %660 = vmatprep.subr.mxu0 0.0
    %661 = vmatpush1.msra.mxu0 0.0
    %662 = vmatprep.subr.mxu0 0.0
    %663 = vmatpush1.msra.mxu0 0.0
    %664 = vmatprep.subr.mxu0 0.0
    %665 = vmatpush1.msra.mxu0 0.0
    %666 = vmatprep.subr.mxu0 0.0
    %667 = vmatpush1.msra.mxu0 0.0
    %668 = vmatprep.subr.mxu0 0.0
    %669 = vmatpush1.msra.mxu0 0.0
    %670 = vmatprep.subr.mxu0 0.0
    %671 = vmatpush1.msra.mxu0 0.0
    %672 = vmatprep.subr.mxu0 0.0
    %673 = vmatpush1.msra.mxu0 0.0
    %674 = vmatprep.subr.mxu0 0.0
    %675 = vmatpush1.msra.mxu0 0.0
    %676 = vmatprep.subr.mxu0 0.0
    %677 = vmatpush1.msra.mxu0 0.0
    %678 = vmatprep.subr.mxu0 0.0
    %679 = vmatpush1.msra.mxu0 0.0
    %680 = vmatprep.subr.mxu0 0.0
    %681 = vmatpush1.msra.mxu0 0.0
    %682 = vmatprep.subr.mxu0 0.0
    %683 = vmatpush1.msra.mxu0 0.0
    %684 = vmatprep.subr.mxu0 0.0
    %685 = vmatpush1.msra.mxu0 %v650
    %686 = vmatprep.subr.mxu0 0.0
    %687 = vmatpush1.msra.mxu0 %v648
    %688 = vmatprep.subr.mxu0 0.0
    %689 = vmatpush2.msra.mxu0 0.0
    %690 = vmatprep.subr.mxu0 0.0
    %691 = vmatpush2.msra.mxu0 0.0
    %692 = vmatprep.subr.mxu0 0.0
    %693 = vmatpush2.msra.mxu0 0.0
    %694 = vmatprep.subr.mxu0 0.0
    %695 = vmatpush2.msra.mxu0 0.0
    %696 = vmatprep.subr.mxu0 0.0
    %697 = vmatpush2.msra.mxu0 0.0
    %698 = vmatprep.subr.mxu0 0.0
    %699 = vmatpush2.msra.mxu0 0.0
    %700 = vmatprep.subr.mxu0 0.0
    %701 = vmatpush2.msra.mxu0 0.0
    %702 = vmatprep.subr.mxu0 0.0
    %703 = vmatpush2.msra.mxu0 0.0
    %704 = vmatprep.subr.mxu0 0.0
    %705 = vmatpush2.msra.mxu0 0.0
    %706 = vmatprep.subr.mxu0 0.0
    %707 = vmatpush2.msra.mxu0 0.0
    %708 = vmatprep.subr.mxu0 0.0
    %709 = vmatpush2.msra.mxu0 0.0
    %710 = vmatprep.subr.mxu0 0.0
    %711 = vmatpush2.msra.mxu0 0.0
    %712 = vmatprep.subr.mxu0 0.0
    %713 = vmatpush2.msra.mxu0 0.0
    %714 = vmatprep.subr.mxu0 0.0
    %715 = vmatpush2.msra.mxu0 0.0
    %716 = vmatprep.subr.mxu0 0.0
    %717 = vmatpush2.msra.mxu0 0.0
    %718 = vmatprep.subr.mxu0 0.0
    %719 = vmatpush2.msra.mxu0 0.0
    %720 = vmatprep.mubr.f32.mxu0 0.0
    %721 = vmatmul.mubr.f32.gmra.mxu0 %v654
    %v722 = vpop.f32.mrf.mxu0
    %v723 = vadd.f32 0.0, %v722
    %v724 = vpop.f32.mrf.mxu0
    %725 = vdwg.mxu0
    %726 = vrot.lane.b32.xlu0 %v264, 120
    %v727 = vpop.permute.xlu0 %726
    %728 = vrot.lane.b32.xlu0 %v362, 120
    %v729 = vpop.permute.xlu0 %728
    %730 = vrot.lane.b32.xlu0 %v367, 120
    %v731 = vpop.permute.xlu0 %730
    %v732 = vsel %vm384, %v727, 0
    %v734 = vsel %vm384, %v729, 0
    %v736 = vsel %vm384, %v731, 0
    %738 = vmatprep.subr.mxu0 0.0
    %739 = vmatpush1.xpose.msra.mxu0 0.0
    %740 = vmatprep.subr.mxu0 0.0
    %741 = vmatpush1.xpose.msra.mxu0 0.0
    %742 = vmatprep.subr.mxu0 0.0
    %743 = vmatpush1.xpose.msra.mxu0 0.0
    %744 = vmatprep.subr.mxu0 0.0
    %745 = vmatpush1.xpose.msra.mxu0 0.0
    %746 = vmatprep.subr.mxu0 0.0
    %747 = vmatpush1.xpose.msra.mxu0 0.0
    %748 = vmatprep.subr.mxu0 0.0
    %749 = vmatpush1.xpose.msra.mxu0 0.0
    %750 = vmatprep.subr.mxu0 0.0
    %751 = vmatpush1.xpose.msra.mxu0 0.0
    %752 = vmatprep.subr.mxu0 0.0
    %753 = vmatpush1.xpose.msra.mxu0 0.0
    %754 = vmatprep.subr.mxu0 0.0
    %755 = vmatpush1.xpose.msra.mxu0 0.0
    %756 = vmatprep.subr.mxu0 0.0
    %757 = vmatpush1.xpose.msra.mxu0 0.0
    %758 = vmatprep.subr.mxu0 0.0
    %759 = vmatpush1.xpose.msra.mxu0 0.0
    %760 = vmatprep.subr.mxu0 0.0
    %761 = vmatpush1.xpose.msra.mxu0 0.0
    %762 = vmatprep.subr.mxu0 0.0
    %763 = vmatpush1.xpose.msra.mxu0 0.0
    %764 = vmatprep.subr.mxu0 0.0
    %765 = vmatpush1.xpose.msra.mxu0 0.0
    %766 = vmatprep.subr.mxu0 0.0
    %767 = vmatpush1.xpose.msra.mxu0 %v736
    %768 = vmatprep.subr.mxu0 0.0
    %769 = vmatpush1.xpose.msra.mxu0 %v734
    %770 = vmatprep.subr.mxu0 0.0
    %771 = vmatpush2.xpose.msra.mxu0 0.0
    %772 = vmatprep.subr.mxu0 0.0
    %773 = vmatpush2.xpose.msra.mxu0 0.0
    %774 = vmatprep.subr.mxu0 0.0
    %775 = vmatpush2.xpose.msra.mxu0 0.0
    %776 = vmatprep.subr.mxu0 0.0
    %777 = vmatpush2.xpose.msra.mxu0 0.0
    %778 = vmatprep.subr.mxu0 0.0
    %779 = vmatpush2.xpose.msra.mxu0 0.0
    %780 = vmatprep.subr.mxu0 0.0
    %781 = vmatpush2.xpose.msra.mxu0 0.0
    %782 = vmatprep.subr.mxu0 0.0
    %783 = vmatpush2.xpose.msra.mxu0 0.0
    %784 = vmatprep.subr.mxu0 0.0
    %785 = vmatpush2.xpose.msra.mxu0 0.0
    %786 = vmatprep.subr.mxu0 0.0
    %787 = vmatpush2.xpose.msra.mxu0 0.0
    %788 = vmatprep.subr.mxu0 0.0
    %789 = vmatpush2.xpose.msra.mxu0 0.0
    %790 = vmatprep.subr.mxu0 0.0
    %791 = vmatpush2.xpose.msra.mxu0 0.0
    %792 = vmatprep.subr.mxu0 0.0
    %793 = vmatpush2.xpose.msra.mxu0 0.0
    %794 = vmatprep.subr.mxu0 0.0
    %795 = vmatpush2.xpose.msra.mxu0 0.0
    %796 = vmatprep.subr.mxu0 0.0
    %797 = vmatpush2.xpose.msra.mxu0 0.0
    %798 = vmatprep.subr.mxu0 0.0
    %799 = vmatpush2.xpose.msra.mxu0 0.0
    %800 = vmatprep.subr.mxu0 0.0
    %801 = vmatpush2.xpose.msra.mxu0 0.0
    %802 = vmatprep.mubr.f32.mxu0 0.0
    %803 = vmatmul.mubr.f32.gmra.mxu0 %v732
    %v804 = vpop.f32.mrf.mxu0
    %v805 = vadd.f32 0.0, %v804
    %v806 = vpop.f32.mrf.mxu0
    %807 = vdwg.mxu0
    %808 = vrot.lane.b32.xlu0 %v269, 120
    %v809 = vpop.permute.xlu0 %808
    %810 = vrot.lane.b32.xlu0 %v372, 120
    %v811 = vpop.permute.xlu0 %810
    %812 = vrot.lane.b32.xlu0 %v377, 120
    %v813 = vpop.permute.xlu0 %812
    %v814 = vsel %vm384, %v809, 0
    %v816 = vsel %vm384, %v811, 0
    %v818 = vsel %vm384, %v813, 0
    %820 = vmatprep.subr.mxu0 0.0
    %821 = vmatpush1.xpose.msra.mxu0 0.0
    %822 = vmatprep.subr.mxu0 0.0
    %823 = vmatpush1.xpose.msra.mxu0 0.0
    %824 = vmatprep.subr.mxu0 0.0
    %825 = vmatpush1.xpose.msra.mxu0 0.0
    %826 = vmatprep.subr.mxu0 0.0
    %827 = vmatpush1.xpose.msra.mxu0 0.0
    %828 = vmatprep.subr.mxu0 0.0
    %829 = vmatpush1.xpose.msra.mxu0 0.0
    %830 = vmatprep.subr.mxu0 0.0
    %831 = vmatpush1.xpose.msra.mxu0 0.0
    %832 = vmatprep.subr.mxu0 0.0
    %833 = vmatpush1.xpose.msra.mxu0 0.0
    %834 = vmatprep.subr.mxu0 0.0
    %835 = vmatpush1.xpose.msra.mxu0 0.0
    %836 = vmatprep.subr.mxu0 0.0
    %837 = vmatpush1.xpose.msra.mxu0 0.0
    %838 = vmatprep.subr.mxu0 0.0
    %839 = vmatpush1.xpose.msra.mxu0 0.0
    %840 = vmatprep.subr.mxu0 0.0
    %841 = vmatpush1.xpose.msra.mxu0 0.0
    %842 = vmatprep.subr.mxu0 0.0
    %843 = vmatpush1.xpose.msra.mxu0 0.0
    %844 = vmatprep.subr.mxu0 0.0
    %845 = vmatpush1.xpose.msra.mxu0 0.0
    %846 = vmatprep.subr.mxu0 0.0
    %847 = vmatpush1.xpose.msra.mxu0 0.0
    %848 = vmatprep.subr.mxu0 0.0
    %849 = vmatpush1.xpose.msra.mxu0 %v818
    %850 = vmatprep.subr.mxu0 0.0
    %851 = vmatpush1.xpose.msra.mxu0 %v816
    %852 = vmatprep.subr.mxu0 0.0
    %853 = vmatpush2.xpose.msra.mxu0 0.0
    %854 = vmatprep.subr.mxu0 0.0
    %855 = vmatpush2.xpose.msra.mxu0 0.0
    %856 = vmatprep.subr.mxu0 0.0
    %857 = vmatpush2.xpose.msra.mxu0 0.0
    %858 = vmatprep.subr.mxu0 0.0
    %859 = vmatpush2.xpose.msra.mxu0 0.0
    %860 = vmatprep.subr.mxu0 0.0
    %861 = vmatpush2.xpose.msra.mxu0 0.0
    %862 = vmatprep.subr.mxu0 0.0
    %863 = vmatpush2.xpose.msra.mxu0 0.0
    %864 = vmatprep.subr.mxu0 0.0
    %865 = vmatpush2.xpose.msra.mxu0 0.0
    %866 = vmatprep.subr.mxu0 0.0
    %867 = vmatpush2.xpose.msra.mxu0 0.0
    %868 = vmatprep.subr.mxu0 0.0
    %869 = vmatpush2.xpose.msra.mxu0 0.0
    %870 = vmatprep.subr.mxu0 0.0
    %871 = vmatpush2.xpose.msra.mxu0 0.0
    %872 = vmatprep.subr.mxu0 0.0
    %873 = vmatpush2.xpose.msra.mxu0 0.0
    %874 = vmatprep.subr.mxu0 0.0
    %875 = vmatpush2.xpose.msra.mxu0 0.0
    %876 = vmatprep.subr.mxu0 0.0
    %877 = vmatpush2.xpose.msra.mxu0 0.0
    %878 = vmatprep.subr.mxu0 0.0
    %879 = vmatpush2.xpose.msra.mxu0 0.0
    %880 = vmatprep.subr.mxu0 0.0
    %881 = vmatpush2.xpose.msra.mxu0 0.0
    %882 = vmatprep.subr.mxu0 0.0
    %883 = vmatpush2.xpose.msra.mxu0 0.0
    %884 = vmatprep.mubr.f32.mxu0 0.0
    %885 = vmatmul.mubr.f32.gmra.mxu0 %v814
    %v886 = vpop.f32.mrf.mxu0
    %v887 = vadd.f32 0.0, %v886
    %v888 = vpop.f32.mrf.mxu0
    %889 = vdwg.mxu0
    %v890 = vmul.f32 %v805, 0.35355338
    %v891 = vmul.f32 %v887, 0.35355338
    %v892 = vsel %vm545, %v890, -inf
    %893 = vmax.xlane.f32.xlu0 %v892
    %v894 = vpop.xlane.xlu0 %893
    %v895 = vsel %vm545, %v891, -inf
    %896 = vmax.xlane.f32.xlu0 %v895
    %v897 = vpop.xlane.xlu0 %896
    %v898 = vsub.f32 %v890, %v894
    %v899 = vsub.f32 %v891, %v897
    %v900 = vmul.f32 %v898, 1.442695
    %v901 = vpow.pop %v900
    %v902 = vmul.f32 %v899, 1.442695
    %v903 = vpow.pop %v902
    %v904 = vsel %vm545, %v901, 0.0
    %905 = vadd.xlane.f32.xlu0 %v904
    %v906 = vpop.xlane.xlu0 %905
    %v907 = vsel %vm545, %v903, 0.0
    %908 = vadd.xlane.f32.xlu0 %v907
    %v909 = vpop.xlane.xlu0 %908
    %v910 = vrcp.pop %v906
    %v911 = vrcp.pop %v909
    %v912 = vmul.f32 %v901, %v910
    %v913 = vmul.f32 %v903, %v911
    %914 = vrot.lane.b32.xlu0 %v362, 88
    %v915 = vpop.permute.xlu0 %914
    %916 = vrot.lane.b32.xlu0 %v367, 88
    %v917 = vpop.permute.xlu0 %916
    %v921 = vsel %vm545, %v912, 0
    %923 = vmatprep.subr.mxu0 0.0
    %924 = vmatpush1.msra.mxu0 0.0
    %925 = vmatprep.subr.mxu0 0.0
    %926 = vmatpush1.msra.mxu0 0.0
    %927 = vmatprep.subr.mxu0 0.0
    %928 = vmatpush1.msra.mxu0 0.0
    %929 = vmatprep.subr.mxu0 0.0
    %930 = vmatpush1.msra.mxu0 0.0
    %931 = vmatprep.subr.mxu0 0.0
    %932 = vmatpush1.msra.mxu0 0.0
    %933 = vmatprep.subr.mxu0 0.0
    %934 = vmatpush1.msra.mxu0 0.0
    %935 = vmatprep.subr.mxu0 0.0
    %936 = vmatpush1.msra.mxu0 0.0
    %937 = vmatprep.subr.mxu0 0.0
    %938 = vmatpush1.msra.mxu0 0.0
    %939 = vmatprep.subr.mxu0 0.0
    %940 = vmatpush1.msra.mxu0 0.0
    %941 = vmatprep.subr.mxu0 0.0
    %942 = vmatpush1.msra.mxu0 0.0
    %943 = vmatprep.subr.mxu0 0.0
    %944 = vmatpush1.msra.mxu0 0.0
    %945 = vmatprep.subr.mxu0 0.0
    %946 = vmatpush1.msra.mxu0 0.0
    %947 = vmatprep.subr.mxu0 0.0
    %948 = vmatpush1.msra.mxu0 0.0
    %949 = vmatprep.subr.mxu0 0.0
    %950 = vmatpush1.msra.mxu0 0.0
    %951 = vmatprep.subr.mxu0 0.0
    %952 = vmatpush1.msra.mxu0 %v917
    %953 = vmatprep.subr.mxu0 0.0
    %954 = vmatpush1.msra.mxu0 %v915
    %955 = vmatprep.subr.mxu0 0.0
    %956 = vmatpush2.msra.mxu0 0.0
    %957 = vmatprep.subr.mxu0 0.0
    %958 = vmatpush2.msra.mxu0 0.0
    %959 = vmatprep.subr.mxu0 0.0
    %960 = vmatpush2.msra.mxu0 0.0
    %961 = vmatprep.subr.mxu0 0.0
    %962 = vmatpush2.msra.mxu0 0.0
    %963 = vmatprep.subr.mxu0 0.0
    %964 = vmatpush2.msra.mxu0 0.0
    %965 = vmatprep.subr.mxu0 0.0
    %966 = vmatpush2.msra.mxu0 0.0
    %967 = vmatprep.subr.mxu0 0.0
    %968 = vmatpush2.msra.mxu0 0.0
    %969 = vmatprep.subr.mxu0 0.0
    %970 = vmatpush2.msra.mxu0 0.0
    %971 = vmatprep.subr.mxu0 0.0
    %972 = vmatpush2.msra.mxu0 0.0
    %973 = vmatprep.subr.mxu0 0.0
    %974 = vmatpush2.msra.mxu0 0.0
    %975 = vmatprep.subr.mxu0 0.0
    %976 = vmatpush2.msra.mxu0 0.0
    %977 = vmatprep.subr.mxu0 0.0
    %978 = vmatpush2.msra.mxu0 0.0
    %979 = vmatprep.subr.mxu0 0.0
    %980 = vmatpush2.msra.mxu0 0.0
    %981 = vmatprep.subr.mxu0 0.0
    %982 = vmatpush2.msra.mxu0 0.0
    %983 = vmatprep.subr.mxu0 0.0
    %984 = vmatpush2.msra.mxu0 0.0
    %985 = vmatprep.subr.mxu0 0.0
    %986 = vmatpush2.msra.mxu0 0.0
    %987 = vmatprep.mubr.f32.mxu0 0.0
    %988 = vmatmul.mubr.f32.gmra.mxu0 %v921
    %v989 = vpop.f32.mrf.mxu0
    %v990 = vadd.f32 0.0, %v989
    %v991 = vpop.f32.mrf.mxu0
    %992 = vdwg.mxu0
    %993 = vrot.lane.b32.xlu0 %v372, 88
    %v994 = vpop.permute.xlu0 %993
    %995 = vrot.lane.b32.xlu0 %v377, 88
    %v996 = vpop.permute.xlu0 %995
    %v1000 = vsel %vm545, %v913, 0
    %1002 = vmatprep.subr.mxu0 0.0
    %1003 = vmatpush1.msra.mxu0 0.0
    %1004 = vmatprep.subr.mxu0 0.0
    %1005 = vmatpush1.msra.mxu0 0.0
    %1006 = vmatprep.subr.mxu0 0.0
    %1007 = vmatpush1.msra.mxu0 0.0
    %1008 = vmatprep.subr.mxu0 0.0
    %1009 = vmatpush1.msra.mxu0 0.0
    %1010 = vmatprep.subr.mxu0 0.0
    %1011 = vmatpush1.msra.mxu0 0.0
    %1012 = vmatprep.subr.mxu0 0.0
    %1013 = vmatpush1.msra.mxu0 0.0
    %1014 = vmatprep.subr.mxu0 0.0
    %1015 = vmatpush1.msra.mxu0 0.0
    %1016 = vmatprep.subr.mxu0 0.0
    %1017 = vmatpush1.msra.mxu0 0.0
    %1018 = vmatprep.subr.mxu0 0.0
    %1019 = vmatpush1.msra.mxu0 0.0
    %1020 = vmatprep.subr.mxu0 0.0
    %1021 = vmatpush1.msra.mxu0 0.0
    %1022 = vmatprep.subr.mxu0 0.0
    %1023 = vmatpush1.msra.mxu0 0.0
    %1024 = vmatprep.subr.mxu0 0.0
    %1025 = vmatpush1.msra.mxu0 0.0
    %1026 = vmatprep.subr.mxu0 0.0
    %1027 = vmatpush1.msra.mxu0 0.0
    %1028 = vmatprep.subr.mxu0 0.0
    %1029 = vmatpush1.msra.mxu0 0.0
    %1030 = vmatprep.subr.mxu0 0.0
    %1031 = vmatpush1.msra.mxu0 %v996
    %1032 = vmatprep.subr.mxu0 0.0
    %1033 = vmatpush1.msra.mxu0 %v994
    %1034 = vmatprep.subr.mxu0 0.0
    %1035 = vmatpush2.msra.mxu0 0.0
    %1036 = vmatprep.subr.mxu0 0.0
    %1037 = vmatpush2.msra.mxu0 0.0
    %1038 = vmatprep.subr.mxu0 0.0
    %1039 = vmatpush2.msra.mxu0 0.0
    %1040 = vmatprep.subr.mxu0 0.0
    %1041 = vmatpush2.msra.mxu0 0.0
    %1042 = vmatprep.subr.mxu0 0.0
    %1043 = vmatpush2.msra.mxu0 0.0
    %1044 = vmatprep.subr.mxu0 0.0
    %1045 = vmatpush2.msra.mxu0 0.0
    %1046 = vmatprep.subr.mxu0 0.0
    %1047 = vmatpush2.msra.mxu0 0.0
    %1048 = vmatprep.subr.mxu0 0.0
    %1049 = vmatpush2.msra.mxu0 0.0
    %1050 = vmatprep.subr.mxu0 0.0
    %1051 = vmatpush2.msra.mxu0 0.0
    %1052 = vmatprep.subr.mxu0 0.0
    %1053 = vmatpush2.msra.mxu0 0.0
    %1054 = vmatprep.subr.mxu0 0.0
    %1055 = vmatpush2.msra.mxu0 0.0
    %1056 = vmatprep.subr.mxu0 0.0
    %1057 = vmatpush2.msra.mxu0 0.0
    %1058 = vmatprep.subr.mxu0 0.0
    %1059 = vmatpush2.msra.mxu0 0.0
    %1060 = vmatprep.subr.mxu0 0.0
    %1061 = vmatpush2.msra.mxu0 0.0
    %1062 = vmatprep.subr.mxu0 0.0
    %1063 = vmatpush2.msra.mxu0 0.0
    %1064 = vmatprep.subr.mxu0 0.0
    %1065 = vmatpush2.msra.mxu0 0.0
    %1066 = vmatprep.mubr.f32.mxu0 0.0
    %1067 = vmatmul.mubr.f32.gmra.mxu0 %v1000
    %v1068 = vpop.f32.mrf.mxu0
    %v1069 = vadd.f32 0.0, %v1068
    %v1070 = vpop.f32.mrf.mxu0
    %1071 = vdwg.mxu0
    %v1073 = vsel %vm384, %v990, 0
    %v1076 = vsel %vm384, %v1069, 0
    %1078 = vmatprep.subr.mxu0 0.0
    %1079 = vmatpush1.msra.mxu0 0.0
    %1080 = vmatprep.subr.mxu0 0.0
    %1081 = vmatpush1.msra.mxu0 0.0
    %1082 = vmatprep.subr.mxu0 0.0
    %1083 = vmatpush1.msra.mxu0 0.0
    %1084 = vmatprep.subr.mxu0 0.0
    %1085 = vmatpush1.msra.mxu0 0.0
    %1086 = vmatprep.subr.mxu0 0.0
    %1087 = vmatpush1.msra.mxu0 0.0
    %1088 = vmatprep.subr.mxu0 0.0
    %1089 = vmatpush1.msra.mxu0 0.0
    %1090 = vmatprep.subr.mxu0 0.0
    %1091 = vmatpush1.msra.mxu0 0.0
    %1092 = vmatprep.subr.mxu0 0.0
    %1093 = vmatpush1.msra.mxu0 0.0
    %1094 = vmatprep.subr.mxu0 0.0
    %1095 = vmatpush1.msra.mxu0 0.0
    %1096 = vmatprep.subr.mxu0 0.0
    %1097 = vmatpush1.msra.mxu0 0.0
    %1098 = vmatprep.subr.mxu0 0.0
    %1099 = vmatpush1.msra.mxu0 0.0
    %1100 = vmatprep.subr.mxu0 0.0
    %1101 = vmatpush1.msra.mxu0 0.0
    %1102 = vmatprep.subr.mxu0 0.0
    %1103 = vmatpush1.msra.mxu0 0.0
    %1104 = vmatprep.subr.mxu0 0.0
    %1105 = vmatpush1.msra.mxu0 0.0
    %1106 = vmatprep.subr.mxu0 0.0
    %1107 = vmatpush1.msra.mxu0 0.0
    %1108 = vmatprep.subr.mxu0 0.0
    %1109 = vmatpush1.msra.mxu0 %v381
    %1110 = vmatprep.subr.mxu0 0.0
    %1111 = vmatpush2.msra.mxu0 0.0
    %1112 = vmatprep.subr.mxu0 0.0
    %1113 = vmatpush2.msra.mxu0 0.0
    %1114 = vmatprep.subr.mxu0 0.0
    %1115 = vmatpush2.msra.mxu0 0.0
    %1116 = vmatprep.subr.mxu0 0.0
    %1117 = vmatpush2.msra.mxu0 0.0
    %1118 = vmatprep.subr.mxu0 0.0
    %1119 = vmatpush2.msra.mxu0 0.0
    %1120 = vmatprep.subr.mxu0 0.0
    %1121 = vmatpush2.msra.mxu0 0.0
    %1122 = vmatprep.subr.mxu0 0.0
    %1123 = vmatpush2.msra.mxu0 0.0
    %1124 = vmatprep.subr.mxu0 0.0
    %1125 = vmatpush2.msra.mxu0 0.0
    %1126 = vmatprep.subr.mxu0 0.0
    %1127 = vmatpush2.msra.mxu0 0.0
    %1128 = vmatprep.subr.mxu0 0.0
    %1129 = vmatpush2.msra.mxu0 0.0
    %1130 = vmatprep.subr.mxu0 0.0
    %1131 = vmatpush2.msra.mxu0 0.0
    %1132 = vmatprep.subr.mxu0 0.0
    %1133 = vmatpush2.msra.mxu0 0.0
    %1134 = vmatprep.subr.mxu0 0.0
    %1135 = vmatpush2.msra.mxu0 0.0
    %1136 = vmatprep.subr.mxu0 0.0
    %1137 = vmatpush2.msra.mxu0 0.0
    %1138 = vmatprep.subr.mxu0 0.0
    %1139 = vmatpush2.msra.mxu0 0.0
    %1140 = vmatprep.subr.mxu0 0.0
    %1141 = vmatpush2.msra.mxu0 0.0
    %1142 = vmatprep.mubr.f32.mxu0 0.0
    %1143 = vmatmul.mubr.f32.gmra.mxu0 %v1073
    %v1144 = vpop.f32.mrf.mxu0
    %v1145 = vadd.f32 0.0, %v1144
    %v1146 = vpop.f32.mrf.mxu0
    %1147 = vmatprep.mubr.f32.mxu0 0.0
    %1148 = vmatmul.mubr.f32.gmra.mxu0 %v1076
    %v1149 = vpop.f32.mrf.mxu0
    %v1150 = vadd.f32 0.0, %v1149
    %v1151 = vpop.f32.mrf.mxu0
    %1152 = vdwg.mxu0
    %v1154 = vsel %vm384, %v644, 0
    %v1157 = vsel %vm384, %v723, 0
    %1159 = vmatprep.subr.mxu0 0.0
    %1160 = vmatpush1.msra.mxu0 0.0
    %1161 = vmatprep.subr.mxu0 0.0
    %1162 = vmatpush1.msra.mxu0 0.0
    %1163 = vmatprep.subr.mxu0 0.0
    %1164 = vmatpush1.msra.mxu0 0.0
    %1165 = vmatprep.subr.mxu0 0.0
    %1166 = vmatpush1.msra.mxu0 0.0
    %1167 = vmatprep.subr.mxu0 0.0
    %1168 = vmatpush1.msra.mxu0 0.0
    %1169 = vmatprep.subr.mxu0 0.0
    %1170 = vmatpush1.msra.mxu0 0.0
    %1171 = vmatprep.subr.mxu0 0.0
    %1172 = vmatpush1.msra.mxu0 0.0
    %1173 = vmatprep.subr.mxu0 0.0
    %1174 = vmatpush1.msra.mxu0 0.0
    %1175 = vmatprep.subr.mxu0 0.0
    %1176 = vmatpush1.msra.mxu0 0.0
    %1177 = vmatprep.subr.mxu0 0.0
    %1178 = vmatpush1.msra.mxu0 0.0
    %1179 = vmatprep.subr.mxu0 0.0
    %1180 = vmatpush1.msra.mxu0 0.0
    %1181 = vmatprep.subr.mxu0 0.0
    %1182 = vmatpush1.msra.mxu0 0.0
    %1183 = vmatprep.subr.mxu0 0.0
    %1184 = vmatpush1.msra.mxu0 0.0
    %1185 = vmatprep.subr.mxu0 0.0
    %1186 = vmatpush1.msra.mxu0 0.0
    %1187 = vmatprep.subr.mxu0 0.0
    %1188 = vmatpush1.msra.mxu0 0.0
    %1189 = vmatprep.subr.mxu0 0.0
    %1190 = vmatpush1.msra.mxu0 %v380
    %1191 = vmatprep.subr.mxu0 0.0
    %1192 = vmatpush2.msra.mxu0 0.0
    %1193 = vmatprep.subr.mxu0 0.0
    %1194 = vmatpush2.msra.mxu0 0.0
    %1195 = vmatprep.subr.mxu0 0.0
    %1196 = vmatpush2.msra.mxu0 0.0
    %1197 = vmatprep.subr.mxu0 0.0
    %1198 = vmatpush2.msra.mxu0 0.0
    %1199 = vmatprep.subr.mxu0 0.0
    %1200 = vmatpush2.msra.mxu0 0.0
    %1201 = vmatprep.subr.mxu0 0.0
    %1202 = vmatpush2.msra.mxu0 0.0
    %1203 = vmatprep.subr.mxu0 0.0
    %1204 = vmatpush2.msra.mxu0 0.0
    %1205 = vmatprep.subr.mxu0 0.0
    %1206 = vmatpush2.msra.mxu0 0.0
    %1207 = vmatprep.subr.mxu0 0.0
    %1208 = vmatpush2.msra.mxu0 0.0
    %1209 = vmatprep.subr.mxu0 0.0
    %1210 = vmatpush2.msra.mxu0 0.0
    %1211 = vmatprep.subr.mxu0 0.0
    %1212 = vmatpush2.msra.mxu0 0.0
    %1213 = vmatprep.subr.mxu0 0.0
    %1214 = vmatpush2.msra.mxu0 0.0
    %1215 = vmatprep.subr.mxu0 0.0
    %1216 = vmatpush2.msra.mxu0 0.0
    %1217 = vmatprep.subr.mxu0 0.0
    %1218 = vmatpush2.msra.mxu0 0.0
    %1219 = vmatprep.subr.mxu0 0.0
    %1220 = vmatpush2.msra.mxu0 0.0
    %1221 = vmatprep.subr.mxu0 0.0
    %1222 = vmatpush2.msra.mxu0 0.0
    %1223 = vmatprep.mubr.f32.mxu0 0.0
    %1224 = vmatmul.mubr.f32.gmra.mxu0 %v1154
    %v1225 = vpop.f32.mrf.mxu0
    %v1226 = vadd.f32 %v1145, %v1225
    %v1227 = vpop.f32.mrf.mxu0
    %1228 = vmatprep.mubr.f32.mxu0 0.0
    %1229 = vmatmul.mubr.f32.gmra.mxu0 %v1157
    %v1230 = vpop.f32.mrf.mxu0
    %v1231 = vadd.f32 %v1150, %v1230
    %v1232 = vpop.f32.mrf.mxu0
    %1233 = vdwg.mxu0
    %1234 = vrot.lane.b32.xlu0 %v264, 112
    %v1235 = vpop.permute.xlu0 %1234
    %1236 = vrot.lane.b32.xlu0 %v362, 112
    %v1237 = vpop.permute.xlu0 %1236
    %1238 = vrot.lane.b32.xlu0 %v367, 112
    %v1239 = vpop.permute.xlu0 %1238
    %v1240 = vsel %vm384, %v1235, 0
    %v1242 = vsel %vm384, %v1237, 0
    %v1244 = vsel %vm384, %v1239, 0
    %1246 = vmatprep.subr.mxu0 0.0
    %1247 = vmatpush1.xpose.msra.mxu0 0.0
    %1248 = vmatprep.subr.mxu0 0.0
    %1249 = vmatpush1.xpose.msra.mxu0 0.0
    %1250 = vmatprep.subr.mxu0 0.0
    %1251 = vmatpush1.xpose.msra.mxu0 0.0
    %1252 = vmatprep.subr.mxu0 0.0
    %1253 = vmatpush1.xpose.msra.mxu0 0.0
    %1254 = vmatprep.subr.mxu0 0.0
    %1255 = vmatpush1.xpose.msra.mxu0 0.0
    %1256 = vmatprep.subr.mxu0 0.0
    %1257 = vmatpush1.xpose.msra.mxu0 0.0
    %1258 = vmatprep.subr.mxu0 0.0
    %1259 = vmatpush1.xpose.msra.mxu0 0.0
    %1260 = vmatprep.subr.mxu0 0.0
    %1261 = vmatpush1.xpose.msra.mxu0 0.0
    %1262 = vmatprep.subr.mxu0 0.0
    %1263 = vmatpush1.xpose.msra.mxu0 0.0
    %1264 = vmatprep.subr.mxu0 0.0
    %1265 = vmatpush1.xpose.msra.mxu0 0.0
    %1266 = vmatprep.subr.mxu0 0.0
    %1267 = vmatpush1.xpose.msra.mxu0 0.0
    %1268 = vmatprep.subr.mxu0 0.0
    %1269 = vmatpush1.xpose.msra.mxu0 0.0
    %1270 = vmatprep.subr.mxu0 0.0
    %1271 = vmatpush1.xpose.msra.mxu0 0.0
    %1272 = vmatprep.subr.mxu0 0.0
    %1273 = vmatpush1.xpose.msra.mxu0 0.0
    %1274 = vmatprep.subr.mxu0 0.0
    %1275 = vmatpush1.xpose.msra.mxu0 %v1244
    %1276 = vmatprep.subr.mxu0 0.0
    %1277 = vmatpush1.xpose.msra.mxu0 %v1242
    %1278 = vmatprep.subr.mxu0 0.0
    %1279 = vmatpush2.xpose.msra.mxu0 0.0
    %1280 = vmatprep.subr.mxu0 0.0
    %1281 = vmatpush2.xpose.msra.mxu0 0.0
    %1282 = vmatprep.subr.mxu0 0.0
    %1283 = vmatpush2.xpose.msra.mxu0 0.0
    %1284 = vmatprep.subr.mxu0 0.0
    %1285 = vmatpush2.xpose.msra.mxu0 0.0
    %1286 = vmatprep.subr.mxu0 0.0
    %1287 = vmatpush2.xpose.msra.mxu0 0.0
    %1288 = vmatprep.subr.mxu0 0.0
    %1289 = vmatpush2.xpose.msra.mxu0 0.0
    %1290 = vmatprep.subr.mxu0 0.0
    %1291 = vmatpush2.xpose.msra.mxu0 0.0
    %1292 = vmatprep.subr.mxu0 0.0
    %1293 = vmatpush2.xpose.msra.mxu0 0.0
    %1294 = vmatprep.subr.mxu0 0.0
    %1295 = vmatpush2.xpose.msra.mxu0 0.0
    %1296 = vmatprep.subr.mxu0 0.0
    %1297 = vmatpush2.xpose.msra.mxu0 0.0
    %1298 = vmatprep.subr.mxu0 0.0
    %1299 = vmatpush2.xpose.msra.mxu0 0.0
    %1300 = vmatprep.subr.mxu0 0.0
    %1301 = vmatpush2.xpose.msra.mxu0 0.0
    %1302 = vmatprep.subr.mxu0 0.0
    %1303 = vmatpush2.xpose.msra.mxu0 0.0
    %1304 = vmatprep.subr.mxu0 0.0
    %1305 = vmatpush2.xpose.msra.mxu0 0.0
    %1306 = vmatprep.subr.mxu0 0.0
    %1307 = vmatpush2.xpose.msra.mxu0 0.0
    %1308 = vmatprep.subr.mxu0 0.0
    %1309 = vmatpush2.xpose.msra.mxu0 0.0
    %1310 = vmatprep.mubr.f32.mxu0 0.0
    %1311 = vmatmul.mubr.f32.gmra.mxu0 %v1240
    %v1312 = vpop.f32.mrf.mxu0
    %v1313 = vadd.f32 0.0, %v1312
    %v1314 = vpop.f32.mrf.mxu0
    %1315 = vdwg.mxu0
    %1316 = vrot.lane.b32.xlu0 %v269, 112
    %v1317 = vpop.permute.xlu0 %1316
    %1318 = vrot.lane.b32.xlu0 %v372, 112
    %v1319 = vpop.permute.xlu0 %1318
    %1320 = vrot.lane.b32.xlu0 %v377, 112
    %v1321 = vpop.permute.xlu0 %1320
    %v1322 = vsel %vm384, %v1317, 0
    %v1324 = vsel %vm384, %v1319, 0
    %v1326 = vsel %vm384, %v1321, 0
    %1328 = vmatprep.subr.mxu0 0.0
    %1329 = vmatpush1.xpose.msra.mxu0 0.0
    %1330 = vmatprep.subr.mxu0 0.0
    %1331 = vmatpush1.xpose.msra.mxu0 0.0
    %1332 = vmatprep.subr.mxu0 0.0
    %1333 = vmatpush1.xpose.msra.mxu0 0.0
    %1334 = vmatprep.subr.mxu0 0.0
    %1335 = vmatpush1.xpose.msra.mxu0 0.0
    %1336 = vmatprep.subr.mxu0 0.0
    %1337 = vmatpush1.xpose.msra.mxu0 0.0
    %1338 = vmatprep.subr.mxu0 0.0
    %1339 = vmatpush1.xpose.msra.mxu0 0.0
    %1340 = vmatprep.subr.mxu0 0.0
    %1341 = vmatpush1.xpose.msra.mxu0 0.0
    %1342 = vmatprep.subr.mxu0 0.0
    %1343 = vmatpush1.xpose.msra.mxu0 0.0
    %1344 = vmatprep.subr.mxu0 0.0
    %1345 = vmatpush1.xpose.msra.mxu0 0.0
    %1346 = vmatprep.subr.mxu0 0.0
    %1347 = vmatpush1.xpose.msra.mxu0 0.0
    %1348 = vmatprep.subr.mxu0 0.0
    %1349 = vmatpush1.xpose.msra.mxu0 0.0
    %1350 = vmatprep.subr.mxu0 0.0
    %1351 = vmatpush1.xpose.msra.mxu0 0.0
    %1352 = vmatprep.subr.mxu0 0.0
    %1353 = vmatpush1.xpose.msra.mxu0 0.0
    %1354 = vmatprep.subr.mxu0 0.0
    %1355 = vmatpush1.xpose.msra.mxu0 0.0
    %1356 = vmatprep.subr.mxu0 0.0
    %1357 = vmatpush1.xpose.msra.mxu0 %v1326
    %1358 = vmatprep.subr.mxu0 0.0
    %1359 = vmatpush1.xpose.msra.mxu0 %v1324
    %1360 = vmatprep.subr.mxu0 0.0
    %1361 = vmatpush2.xpose.msra.mxu0 0.0
    %1362 = vmatprep.subr.mxu0 0.0
    %1363 = vmatpush2.xpose.msra.mxu0 0.0
    %1364 = vmatprep.subr.mxu0 0.0
    %1365 = vmatpush2.xpose.msra.mxu0 0.0
    %1366 = vmatprep.subr.mxu0 0.0
    %1367 = vmatpush2.xpose.msra.mxu0 0.0
    %1368 = vmatprep.subr.mxu0 0.0
    %1369 = vmatpush2.xpose.msra.mxu0 0.0
    %1370 = vmatprep.subr.mxu0 0.0
    %1371 = vmatpush2.xpose.msra.mxu0 0.0
    %1372 = vmatprep.subr.mxu0 0.0
    %1373 = vmatpush2.xpose.msra.mxu0 0.0
    %1374 = vmatprep.subr.mxu0 0.0
    %1375 = vmatpush2.xpose.msra.mxu0 0.0
    %1376 = vmatprep.subr.mxu0 0.0
    %1377 = vmatpush2.xpose.msra.mxu0 0.0
    %1378 = vmatprep.subr.mxu0 0.0
    %1379 = vmatpush2.xpose.msra.mxu0 0.0
    %1380 = vmatprep.subr.mxu0 0.0
    %1381 = vmatpush2.xpose.msra.mxu0 0.0
    %1382 = vmatprep.subr.mxu0 0.0
    %1383 = vmatpush2.xpose.msra.mxu0 0.0
    %1384 = vmatprep.subr.mxu0 0.0
    %1385 = vmatpush2.xpose.msra.mxu0 0.0
    %1386 = vmatprep.subr.mxu0 0.0
    %1387 = vmatpush2.xpose.msra.mxu0 0.0
    %1388 = vmatprep.subr.mxu0 0.0
    %1389 = vmatpush2.xpose.msra.mxu0 0.0
    %1390 = vmatprep.subr.mxu0 0.0
    %1391 = vmatpush2.xpose.msra.mxu0 0.0
    %1392 = vmatprep.mubr.f32.mxu0 0.0
    %1393 = vmatmul.mubr.f32.gmra.mxu0 %v1322
    %v1394 = vpop.f32.mrf.mxu0
    %v1395 = vadd.f32 0.0, %v1394
    %v1396 = vpop.f32.mrf.mxu0
    %1397 = vdwg.mxu0
    %v1398 = vmul.f32 %v1313, 0.35355338
    %v1399 = vmul.f32 %v1395, 0.35355338
    %v1400 = vsel %vm545, %v1398, -inf
    %1401 = vmax.xlane.f32.xlu0 %v1400
    %v1402 = vpop.xlane.xlu0 %1401
    %v1403 = vsel %vm545, %v1399, -inf
    %1404 = vmax.xlane.f32.xlu0 %v1403
    %v1405 = vpop.xlane.xlu0 %1404
    %v1406 = vsub.f32 %v1398, %v1402
    %v1407 = vsub.f32 %v1399, %v1405
    %v1408 = vmul.f32 %v1406, 1.442695
    %v1409 = vpow.pop %v1408
    %v1410 = vmul.f32 %v1407, 1.442695
    %v1411 = vpow.pop %v1410
    %v1412 = vsel %vm545, %v1409, 0.0
    %1413 = vadd.xlane.f32.xlu0 %v1412
    %v1414 = vpop.xlane.xlu0 %1413
    %v1415 = vsel %vm545, %v1411, 0.0
    %1416 = vadd.xlane.f32.xlu0 %v1415
    %v1417 = vpop.xlane.xlu0 %1416
    %v1418 = vrcp.pop %v1414
    %v1419 = vrcp.pop %v1417
    %v1420 = vmul.f32 %v1409, %v1418
    %v1421 = vmul.f32 %v1411, %v1419
    %1422 = vrot.lane.b32.xlu0 %v362, 80
    %v1423 = vpop.permute.xlu0 %1422
    %1424 = vrot.lane.b32.xlu0 %v367, 80
    %v1425 = vpop.permute.xlu0 %1424
    %v1429 = vsel %vm545, %v1420, 0
    %1431 = vmatprep.subr.mxu0 0.0
    %1432 = vmatpush1.msra.mxu0 0.0
    %1433 = vmatprep.subr.mxu0 0.0
    %1434 = vmatpush1.msra.mxu0 0.0
    %1435 = vmatprep.subr.mxu0 0.0
    %1436 = vmatpush1.msra.mxu0 0.0
    %1437 = vmatprep.subr.mxu0 0.0
    %1438 = vmatpush1.msra.mxu0 0.0
    %1439 = vmatprep.subr.mxu0 0.0
    %1440 = vmatpush1.msra.mxu0 0.0
    %1441 = vmatprep.subr.mxu0 0.0
    %1442 = vmatpush1.msra.mxu0 0.0
    %1443 = vmatprep.subr.mxu0 0.0
    %1444 = vmatpush1.msra.mxu0 0.0
    %1445 = vmatprep.subr.mxu0 0.0
    %1446 = vmatpush1.msra.mxu0 0.0
    %1447 = vmatprep.subr.mxu0 0.0
    %1448 = vmatpush1.msra.mxu0 0.0
    %1449 = vmatprep.subr.mxu0 0.0
    %1450 = vmatpush1.msra.mxu0 0.0
    %1451 = vmatprep.subr.mxu0 0.0
    %1452 = vmatpush1.msra.mxu0 0.0
    %1453 = vmatprep.subr.mxu0 0.0
    %1454 = vmatpush1.msra.mxu0 0.0
    %1455 = vmatprep.subr.mxu0 0.0
    %1456 = vmatpush1.msra.mxu0 0.0
    %1457 = vmatprep.subr.mxu0 0.0
    %1458 = vmatpush1.msra.mxu0 0.0
    %1459 = vmatprep.subr.mxu0 0.0
    %1460 = vmatpush1.msra.mxu0 %v1425
    %1461 = vmatprep.subr.mxu0 0.0
    %1462 = vmatpush1.msra.mxu0 %v1423
    %1463 = vmatprep.subr.mxu0 0.0
    %1464 = vmatpush2.msra.mxu0 0.0
    %1465 = vmatprep.subr.mxu0 0.0
    %1466 = vmatpush2.msra.mxu0 0.0
    %1467 = vmatprep.subr.mxu0 0.0
    %1468 = vmatpush2.msra.mxu0 0.0
    %1469 = vmatprep.subr.mxu0 0.0
    %1470 = vmatpush2.msra.mxu0 0.0
    %1471 = vmatprep.subr.mxu0 0.0
    %1472 = vmatpush2.msra.mxu0 0.0
    %1473 = vmatprep.subr.mxu0 0.0
    %1474 = vmatpush2.msra.mxu0 0.0
    %1475 = vmatprep.subr.mxu0 0.0
    %1476 = vmatpush2.msra.mxu0 0.0
    %1477 = vmatprep.subr.mxu0 0.0
    %1478 = vmatpush2.msra.mxu0 0.0
    %1479 = vmatprep.subr.mxu0 0.0
    %1480 = vmatpush2.msra.mxu0 0.0
    %1481 = vmatprep.subr.mxu0 0.0
    %1482 = vmatpush2.msra.mxu0 0.0
    %1483 = vmatprep.subr.mxu0 0.0
    %1484 = vmatpush2.msra.mxu0 0.0
    %1485 = vmatprep.subr.mxu0 0.0
    %1486 = vmatpush2.msra.mxu0 0.0
    %1487 = vmatprep.subr.mxu0 0.0
    %1488 = vmatpush2.msra.mxu0 0.0
    %1489 = vmatprep.subr.mxu0 0.0
    %1490 = vmatpush2.msra.mxu0 0.0
    %1491 = vmatprep.subr.mxu0 0.0
    %1492 = vmatpush2.msra.mxu0 0.0
    %1493 = vmatprep.subr.mxu0 0.0
    %1494 = vmatpush2.msra.mxu0 0.0
    %1495 = vmatprep.mubr.f32.mxu0 0.0
    %1496 = vmatmul.mubr.f32.gmra.mxu0 %v1429
    %v1497 = vpop.f32.mrf.mxu0
    %v1498 = vadd.f32 0.0, %v1497
    %v1499 = vpop.f32.mrf.mxu0
    %1500 = vdwg.mxu0
    %1501 = vrot.lane.b32.xlu0 %v372, 80
    %v1502 = vpop.permute.xlu0 %1501
    %1503 = vrot.lane.b32.xlu0 %v377, 80
    %v1504 = vpop.permute.xlu0 %1503
    %v1508 = vsel %vm545, %v1421, 0
    %1510 = vmatprep.subr.mxu0 0.0
    %1511 = vmatpush1.msra.mxu0 0.0
    %1512 = vmatprep.subr.mxu0 0.0
    %1513 = vmatpush1.msra.mxu0 0.0
    %1514 = vmatprep.subr.mxu0 0.0
    %1515 = vmatpush1.msra.mxu0 0.0
    %1516 = vmatprep.subr.mxu0 0.0
    %1517 = vmatpush1.msra.mxu0 0.0
    %1518 = vmatprep.subr.mxu0 0.0
    %1519 = vmatpush1.msra.mxu0 0.0
    %1520 = vmatprep.subr.mxu0 0.0
    %1521 = vmatpush1.msra.mxu0 0.0
    %1522 = vmatprep.subr.mxu0 0.0
    %1523 = vmatpush1.msra.mxu0 0.0
    %1524 = vmatprep.subr.mxu0 0.0
    %1525 = vmatpush1.msra.mxu0 0.0
    %1526 = vmatprep.subr.mxu0 0.0
    %1527 = vmatpush1.msra.mxu0 0.0
    %1528 = vmatprep.subr.mxu0 0.0
    %1529 = vmatpush1.msra.mxu0 0.0
    %1530 = vmatprep.subr.mxu0 0.0
    %1531 = vmatpush1.msra.mxu0 0.0
    %1532 = vmatprep.subr.mxu0 0.0
    %1533 = vmatpush1.msra.mxu0 0.0
    %1534 = vmatprep.subr.mxu0 0.0
    %1535 = vmatpush1.msra.mxu0 0.0
    %1536 = vmatprep.subr.mxu0 0.0
    %1537 = vmatpush1.msra.mxu0 0.0
    %1538 = vmatprep.subr.mxu0 0.0
    %1539 = vmatpush1.msra.mxu0 %v1504
    %1540 = vmatprep.subr.mxu0 0.0
    %1541 = vmatpush1.msra.mxu0 %v1502
    %1542 = vmatprep.subr.mxu0 0.0
    %1543 = vmatpush2.msra.mxu0 0.0
    %1544 = vmatprep.subr.mxu0 0.0
    %1545 = vmatpush2.msra.mxu0 0.0
    %1546 = vmatprep.subr.mxu0 0.0
    %1547 = vmatpush2.msra.mxu0 0.0
    %1548 = vmatprep.subr.mxu0 0.0
    %1549 = vmatpush2.msra.mxu0 0.0
    %1550 = vmatprep.subr.mxu0 0.0
    %1551 = vmatpush2.msra.mxu0 0.0
    %1552 = vmatprep.subr.mxu0 0.0
    %1553 = vmatpush2.msra.mxu0 0.0
    %1554 = vmatprep.subr.mxu0 0.0
    %1555 = vmatpush2.msra.mxu0 0.0
    %1556 = vmatprep.subr.mxu0 0.0
    %1557 = vmatpush2.msra.mxu0 0.0
    %1558 = vmatprep.subr.mxu0 0.0
    %1559 = vmatpush2.msra.mxu0 0.0
    %1560 = vmatprep.subr.mxu0 0.0
    %1561 = vmatpush2.msra.mxu0 0.0
    %1562 = vmatprep.subr.mxu0 0.0
    %1563 = vmatpush2.msra.mxu0 0.0
    %1564 = vmatprep.subr.mxu0 0.0
    %1565 = vmatpush2.msra.mxu0 0.0
    %1566 = vmatprep.subr.mxu0 0.0
    %1567 = vmatpush2.msra.mxu0 0.0
    %1568 = vmatprep.subr.mxu0 0.0
    %1569 = vmatpush2.msra.mxu0 0.0
    %1570 = vmatprep.subr.mxu0 0.0
    %1571 = vmatpush2.msra.mxu0 0.0
    %1572 = vmatprep.subr.mxu0 0.0
    %1573 = vmatpush2.msra.mxu0 0.0
    %1574 = vmatprep.mubr.f32.mxu0 0.0
    %1575 = vmatmul.mubr.f32.gmra.mxu0 %v1508
    %v1576 = vpop.f32.mrf.mxu0
    %v1577 = vadd.f32 0.0, %v1576
    %v1578 = vpop.f32.mrf.mxu0
    %1579 = vdwg.mxu0
    %v1581 = vsel %vm384, %v1498, 0
    %v1584 = vsel %vm384, %v1577, 0
    %1586 = vmatprep.subr.mxu0 0.0
    %1587 = vmatpush1.msra.mxu0 0.0
    %1588 = vmatprep.subr.mxu0 0.0
    %1589 = vmatpush1.msra.mxu0 0.0
    %1590 = vmatprep.subr.mxu0 0.0
    %1591 = vmatpush1.msra.mxu0 0.0
    %1592 = vmatprep.subr.mxu0 0.0
    %1593 = vmatpush1.msra.mxu0 0.0
    %1594 = vmatprep.subr.mxu0 0.0
    %1595 = vmatpush1.msra.mxu0 0.0
    %1596 = vmatprep.subr.mxu0 0.0
    %1597 = vmatpush1.msra.mxu0 0.0
    %1598 = vmatprep.subr.mxu0 0.0
    %1599 = vmatpush1.msra.mxu0 0.0
    %1600 = vmatprep.subr.mxu0 0.0
    %1601 = vmatpush1.msra.mxu0 0.0
    %1602 = vmatprep.subr.mxu0 0.0
    %1603 = vmatpush1.msra.mxu0 0.0
    %1604 = vmatprep.subr.mxu0 0.0
    %1605 = vmatpush1.msra.mxu0 0.0
    %1606 = vmatprep.subr.mxu0 0.0
    %1607 = vmatpush1.msra.mxu0 0.0
    %1608 = vmatprep.subr.mxu0 0.0
    %1609 = vmatpush1.msra.mxu0 0.0
    %1610 = vmatprep.subr.mxu0 0.0
    %1611 = vmatpush1.msra.mxu0 0.0
    %1612 = vmatprep.subr.mxu0 0.0
    %1613 = vmatpush1.msra.mxu0 0.0
    %1614 = vmatprep.subr.mxu0 0.0
    %1615 = vmatpush1.msra.mxu0 0.0
    %1616 = vmatprep.subr.mxu0 0.0
    %1617 = vmatpush1.msra.mxu0 %v382
    %1618 = vmatprep.subr.mxu0 0.0
    %1619 = vmatpush2.msra.mxu0 0.0
    %1620 = vmatprep.subr.mxu0 0.0
    %1621 = vmatpush2.msra.mxu0 0.0
    %1622 = vmatprep.subr.mxu0 0.0
    %1623 = vmatpush2.msra.mxu0 0.0
    %1624 = vmatprep.subr.mxu0 0.0
    %1625 = vmatpush2.msra.mxu0 0.0
    %1626 = vmatprep.subr.mxu0 0.0
    %1627 = vmatpush2.msra.mxu0 0.0
    %1628 = vmatprep.subr.mxu0 0.0
    %1629 = vmatpush2.msra.mxu0 0.0
    %1630 = vmatprep.subr.mxu0 0.0
    %1631 = vmatpush2.msra.mxu0 0.0
    %1632 = vmatprep.subr.mxu0 0.0
    %1633 = vmatpush2.msra.mxu0 0.0
    %1634 = vmatprep.subr.mxu0 0.0
    %1635 = vmatpush2.msra.mxu0 0.0
    %1636 = vmatprep.subr.mxu0 0.0
    %1637 = vmatpush2.msra.mxu0 0.0
    %1638 = vmatprep.subr.mxu0 0.0
    %1639 = vmatpush2.msra.mxu0 0.0
    %1640 = vmatprep.subr.mxu0 0.0
    %1641 = vmatpush2.msra.mxu0 0.0
    %1642 = vmatprep.subr.mxu0 0.0
    %1643 = vmatpush2.msra.mxu0 0.0
    %1644 = vmatprep.subr.mxu0 0.0
    %1645 = vmatpush2.msra.mxu0 0.0
    %1646 = vmatprep.subr.mxu0 0.0
    %1647 = vmatpush2.msra.mxu0 0.0
    %1648 = vmatprep.subr.mxu0 0.0
    %1649 = vmatpush2.msra.mxu0 0.0
    %1650 = vmatprep.mubr.f32.mxu0 0.0
    %1651 = vmatmul.mubr.f32.gmra.mxu0 %v1581
    %v1652 = vpop.f32.mrf.mxu0
    %v1653 = vadd.f32 0.0, %v1652
    %v1654 = vpop.f32.mrf.mxu0
    %1655 = vmatprep.mubr.f32.mxu0 0.0
    %1656 = vmatmul.mubr.f32.gmra.mxu0 %v1584
    %v1657 = vpop.f32.mrf.mxu0
    %v1658 = vadd.f32 0.0, %v1657
    %v1659 = vpop.f32.mrf.mxu0
    %1660 = vdwg.mxu0
    %v1661 = vadd.f32 %v1226, %v1653
    %v1662 = vadd.f32 %v1231, %v1658
    %1663 = vrot.lane.b32.xlu0 %v264, 104
    %v1664 = vpop.permute.xlu0 %1663
    %1665 = vrot.lane.b32.xlu0 %v362, 104
    %v1666 = vpop.permute.xlu0 %1665
    %1667 = vrot.lane.b32.xlu0 %v367, 104
    %v1668 = vpop.permute.xlu0 %1667
    %v1669 = vsel %vm384, %v1664, 0
    %v1671 = vsel %vm384, %v1666, 0
    %v1673 = vsel %vm384, %v1668, 0
    %1675 = vmatprep.subr.mxu0 0.0
    %1676 = vmatpush1.xpose.msra.mxu0 0.0
    %1677 = vmatprep.subr.mxu0 0.0
    %1678 = vmatpush1.xpose.msra.mxu0 0.0
    %1679 = vmatprep.subr.mxu0 0.0
    %1680 = vmatpush1.xpose.msra.mxu0 0.0
    %1681 = vmatprep.subr.mxu0 0.0
    %1682 = vmatpush1.xpose.msra.mxu0 0.0
    %1683 = vmatprep.subr.mxu0 0.0
    %1684 = vmatpush1.xpose.msra.mxu0 0.0
    %1685 = vmatprep.subr.mxu0 0.0
    %1686 = vmatpush1.xpose.msra.mxu0 0.0
    %1687 = vmatprep.subr.mxu0 0.0
    %1688 = vmatpush1.xpose.msra.mxu0 0.0
    %1689 = vmatprep.subr.mxu0 0.0
    %1690 = vmatpush1.xpose.msra.mxu0 0.0
    %1691 = vmatprep.subr.mxu0 0.0
    %1692 = vmatpush1.xpose.msra.mxu0 0.0
    %1693 = vmatprep.subr.mxu0 0.0
    %1694 = vmatpush1.xpose.msra.mxu0 0.0
    %1695 = vmatprep.subr.mxu0 0.0
    %1696 = vmatpush1.xpose.msra.mxu0 0.0
    %1697 = vmatprep.subr.mxu0 0.0
    %1698 = vmatpush1.xpose.msra.mxu0 0.0
    %1699 = vmatprep.subr.mxu0 0.0
    %1700 = vmatpush1.xpose.msra.mxu0 0.0
    %1701 = vmatprep.subr.mxu0 0.0
    %1702 = vmatpush1.xpose.msra.mxu0 0.0
    %1703 = vmatprep.subr.mxu0 0.0
    %1704 = vmatpush1.xpose.msra.mxu0 %v1673
    %1705 = vmatprep.subr.mxu0 0.0
    %1706 = vmatpush1.xpose.msra.mxu0 %v1671
    %1707 = vmatprep.subr.mxu0 0.0
    %1708 = vmatpush2.xpose.msra.mxu0 0.0
    %1709 = vmatprep.subr.mxu0 0.0
    %1710 = vmatpush2.xpose.msra.mxu0 0.0
    %1711 = vmatprep.subr.mxu0 0.0
    %1712 = vmatpush2.xpose.msra.mxu0 0.0
    %1713 = vmatprep.subr.mxu0 0.0
    %1714 = vmatpush2.xpose.msra.mxu0 0.0
    %1715 = vmatprep.subr.mxu0 0.0
    %1716 = vmatpush2.xpose.msra.mxu0 0.0
    %1717 = vmatprep.subr.mxu0 0.0
    %1718 = vmatpush2.xpose.msra.mxu0 0.0
    %1719 = vmatprep.subr.mxu0 0.0
    %1720 = vmatpush2.xpose.msra.mxu0 0.0
    %1721 = vmatprep.subr.mxu0 0.0
    %1722 = vmatpush2.xpose.msra.mxu0 0.0
    %1723 = vmatprep.subr.mxu0 0.0
    %1724 = vmatpush2.xpose.msra.mxu0 0.0
    %1725 = vmatprep.subr.mxu0 0.0
    %1726 = vmatpush2.xpose.msra.mxu0 0.0
    %1727 = vmatprep.subr.mxu0 0.0
    %1728 = vmatpush2.xpose.msra.mxu0 0.0
    %1729 = vmatprep.subr.mxu0 0.0
    %1730 = vmatpush2.xpose.msra.mxu0 0.0
    %1731 = vmatprep.subr.mxu0 0.0
    %1732 = vmatpush2.xpose.msra.mxu0 0.0
    %1733 = vmatprep.subr.mxu0 0.0
    %1734 = vmatpush2.xpose.msra.mxu0 0.0
    %1735 = vmatprep.subr.mxu0 0.0
    %1736 = vmatpush2.xpose.msra.mxu0 0.0
    %1737 = vmatprep.subr.mxu0 0.0
    %1738 = vmatpush2.xpose.msra.mxu0 0.0
    %1739 = vmatprep.mubr.f32.mxu0 0.0
    %1740 = vmatmul.mubr.f32.gmra.mxu0 %v1669
    %v1741 = vpop.f32.mrf.mxu0
    %v1742 = vadd.f32 0.0, %v1741
    %v1743 = vpop.f32.mrf.mxu0
    %1744 = vdwg.mxu0
    %1745 = vrot.lane.b32.xlu0 %v269, 104
    %v1746 = vpop.permute.xlu0 %1745
    %1747 = vrot.lane.b32.xlu0 %v372, 104
    %v1748 = vpop.permute.xlu0 %1747
    %1749 = vrot.lane.b32.xlu0 %v377, 104
    %v1750 = vpop.permute.xlu0 %1749
    %v1751 = vsel %vm384, %v1746, 0
    %v1753 = vsel %vm384, %v1748, 0
    %v1755 = vsel %vm384, %v1750, 0
    %1757 = vmatprep.subr.mxu0 0.0
    %1758 = vmatpush1.xpose.msra.mxu0 0.0
    %1759 = vmatprep.subr.mxu0 0.0
    %1760 = vmatpush1.xpose.msra.mxu0 0.0
    %1761 = vmatprep.subr.mxu0 0.0
    %1762 = vmatpush1.xpose.msra.mxu0 0.0
    %1763 = vmatprep.subr.mxu0 0.0
    %1764 = vmatpush1.xpose.msra.mxu0 0.0
    %1765 = vmatprep.subr.mxu0 0.0
    %1766 = vmatpush1.xpose.msra.mxu0 0.0
    %1767 = vmatprep.subr.mxu0 0.0
    %1768 = vmatpush1.xpose.msra.mxu0 0.0
    %1769 = vmatprep.subr.mxu0 0.0
    %1770 = vmatpush1.xpose.msra.mxu0 0.0
    %1771 = vmatprep.subr.mxu0 0.0
    %1772 = vmatpush1.xpose.msra.mxu0 0.0
    %1773 = vmatprep.subr.mxu0 0.0
    %1774 = vmatpush1.xpose.msra.mxu0 0.0
    %1775 = vmatprep.subr.mxu0 0.0
    %1776 = vmatpush1.xpose.msra.mxu0 0.0
    %1777 = vmatprep.subr.mxu0 0.0
    %1778 = vmatpush1.xpose.msra.mxu0 0.0
    %1779 = vmatprep.subr.mxu0 0.0
    %1780 = vmatpush1.xpose.msra.mxu0 0.0
    %1781 = vmatprep.subr.mxu0 0.0
    %1782 = vmatpush1.xpose.msra.mxu0 0.0
    %1783 = vmatprep.subr.mxu0 0.0
    %1784 = vmatpush1.xpose.msra.mxu0 0.0
    %1785 = vmatprep.subr.mxu0 0.0
    %1786 = vmatpush1.xpose.msra.mxu0 %v1755
    %1787 = vmatprep.subr.mxu0 0.0
    %1788 = vmatpush1.xpose.msra.mxu0 %v1753
    %1789 = vmatprep.subr.mxu0 0.0
    %1790 = vmatpush2.xpose.msra.mxu0 0.0
    %1791 = vmatprep.subr.mxu0 0.0
    %1792 = vmatpush2.xpose.msra.mxu0 0.0
    %1793 = vmatprep.subr.mxu0 0.0
    %1794 = vmatpush2.xpose.msra.mxu0 0.0
    %1795 = vmatprep.subr.mxu0 0.0
    %1796 = vmatpush2.xpose.msra.mxu0 0.0
    %1797 = vmatprep.subr.mxu0 0.0
    %1798 = vmatpush2.xpose.msra.mxu0 0.0
    %1799 = vmatprep.subr.mxu0 0.0
    %1800 = vmatpush2.xpose.msra.mxu0 0.0
    %1801 = vmatprep.subr.mxu0 0.0
    %1802 = vmatpush2.xpose.msra.mxu0 0.0
    %1803 = vmatprep.subr.mxu0 0.0
    %1804 = vmatpush2.xpose.msra.mxu0 0.0
    %1805 = vmatprep.subr.mxu0 0.0
    %1806 = vmatpush2.xpose.msra.mxu0 0.0
    %1807 = vmatprep.subr.mxu0 0.0
    %1808 = vmatpush2.xpose.msra.mxu0 0.0
    %1809 = vmatprep.subr.mxu0 0.0
    %1810 = vmatpush2.xpose.msra.mxu0 0.0
    %1811 = vmatprep.subr.mxu0 0.0
    %1812 = vmatpush2.xpose.msra.mxu0 0.0
    %1813 = vmatprep.subr.mxu0 0.0
    %1814 = vmatpush2.xpose.msra.mxu0 0.0
    %1815 = vmatprep.subr.mxu0 0.0
    %1816 = vmatpush2.xpose.msra.mxu0 0.0
    %1817 = vmatprep.subr.mxu0 0.0
    %1818 = vmatpush2.xpose.msra.mxu0 0.0
    %1819 = vmatprep.subr.mxu0 0.0
    %1820 = vmatpush2.xpose.msra.mxu0 0.0
    %1821 = vmatprep.mubr.f32.mxu0 0.0
    %1822 = vmatmul.mubr.f32.gmra.mxu0 %v1751
    %v1823 = vpop.f32.mrf.mxu0
    %v1824 = vadd.f32 0.0, %v1823
    %v1825 = vpop.f32.mrf.mxu0
    %1826 = vdwg.mxu0
    %v1827 = vmul.f32 %v1742, 0.35355338
    %v1828 = vmul.f32 %v1824, 0.35355338
    %v1829 = vsel %vm545, %v1827, -inf
    %1830 = vmax.xlane.f32.xlu0 %v1829
    %v1831 = vpop.xlane.xlu0 %1830
    %v1832 = vsel %vm545, %v1828, -inf
    %1833 = vmax.xlane.f32.xlu0 %v1832
    %v1834 = vpop.xlane.xlu0 %1833
    %v1835 = vsub.f32 %v1827, %v1831
    %v1836 = vsub.f32 %v1828, %v1834
    %v1837 = vmul.f32 %v1835, 1.442695
    %v1838 = vpow.pop %v1837
    %v1839 = vmul.f32 %v1836, 1.442695
    %v1840 = vpow.pop %v1839
    %v1841 = vsel %vm545, %v1838, 0.0
    %1842 = vadd.xlane.f32.xlu0 %v1841
    %v1843 = vpop.xlane.xlu0 %1842
    %v1844 = vsel %vm545, %v1840, 0.0
    %1845 = vadd.xlane.f32.xlu0 %v1844
    %v1846 = vpop.xlane.xlu0 %1845
    %v1847 = vrcp.pop %v1843
    %v1848 = vrcp.pop %v1846
    %v1849 = vmul.f32 %v1838, %v1847
    %v1850 = vmul.f32 %v1840, %v1848
    %1851 = vrot.lane.b32.xlu0 %v362, 72
    %v1852 = vpop.permute.xlu0 %1851
    %1853 = vrot.lane.b32.xlu0 %v367, 72
    %v1854 = vpop.permute.xlu0 %1853
    %v1858 = vsel %vm545, %v1849, 0
    %1860 = vmatprep.subr.mxu0 0.0
    %1861 = vmatpush1.msra.mxu0 0.0
    %1862 = vmatprep.subr.mxu0 0.0
    %1863 = vmatpush1.msra.mxu0 0.0
    %1864 = vmatprep.subr.mxu0 0.0
    %1865 = vmatpush1.msra.mxu0 0.0
    %1866 = vmatprep.subr.mxu0 0.0
    %1867 = vmatpush1.msra.mxu0 0.0
    %1868 = vmatprep.subr.mxu0 0.0
    %1869 = vmatpush1.msra.mxu0 0.0
    %1870 = vmatprep.subr.mxu0 0.0
    %1871 = vmatpush1.msra.mxu0 0.0
    %1872 = vmatprep.subr.mxu0 0.0
    %1873 = vmatpush1.msra.mxu0 0.0
    %1874 = vmatprep.subr.mxu0 0.0
    %1875 = vmatpush1.msra.mxu0 0.0
    %1876 = vmatprep.subr.mxu0 0.0
    %1877 = vmatpush1.msra.mxu0 0.0
    %1878 = vmatprep.subr.mxu0 0.0
    %1879 = vmatpush1.msra.mxu0 0.0
    %1880 = vmatprep.subr.mxu0 0.0
    %1881 = vmatpush1.msra.mxu0 0.0
    %1882 = vmatprep.subr.mxu0 0.0
    %1883 = vmatpush1.msra.mxu0 0.0
    %1884 = vmatprep.subr.mxu0 0.0
    %1885 = vmatpush1.msra.mxu0 0.0
    %1886 = vmatprep.subr.mxu0 0.0
    %1887 = vmatpush1.msra.mxu0 0.0
    %1888 = vmatprep.subr.mxu0 0.0
    %1889 = vmatpush1.msra.mxu0 %v1854
    %1890 = vmatprep.subr.mxu0 0.0
    %1891 = vmatpush1.msra.mxu0 %v1852
    %1892 = vmatprep.subr.mxu0 0.0
    %1893 = vmatpush2.msra.mxu0 0.0
    %1894 = vmatprep.subr.mxu0 0.0
    %1895 = vmatpush2.msra.mxu0 0.0
    %1896 = vmatprep.subr.mxu0 0.0
    %1897 = vmatpush2.msra.mxu0 0.0
    %1898 = vmatprep.subr.mxu0 0.0
    %1899 = vmatpush2.msra.mxu0 0.0
    %1900 = vmatprep.subr.mxu0 0.0
    %1901 = vmatpush2.msra.mxu0 0.0
    %1902 = vmatprep.subr.mxu0 0.0
    %1903 = vmatpush2.msra.mxu0 0.0
    %1904 = vmatprep.subr.mxu0 0.0
    %1905 = vmatpush2.msra.mxu0 0.0
    %1906 = vmatprep.subr.mxu0 0.0
    %1907 = vmatpush2.msra.mxu0 0.0
    %1908 = vmatprep.subr.mxu0 0.0
    %1909 = vmatpush2.msra.mxu0 0.0
    %1910 = vmatprep.subr.mxu0 0.0
    %1911 = vmatpush2.msra.mxu0 0.0
    %1912 = vmatprep.subr.mxu0 0.0
    %1913 = vmatpush2.msra.mxu0 0.0
    %1914 = vmatprep.subr.mxu0 0.0
    %1915 = vmatpush2.msra.mxu0 0.0
    %1916 = vmatprep.subr.mxu0 0.0
    %1917 = vmatpush2.msra.mxu0 0.0
    %1918 = vmatprep.subr.mxu0 0.0
    %1919 = vmatpush2.msra.mxu0 0.0
    %1920 = vmatprep.subr.mxu0 0.0
    %1921 = vmatpush2.msra.mxu0 0.0
    %1922 = vmatprep.subr.mxu0 0.0
    %1923 = vmatpush2.msra.mxu0 0.0
    %1924 = vmatprep.mubr.f32.mxu0 0.0
    %1925 = vmatmul.mubr.f32.gmra.mxu0 %v1858
    %v1926 = vpop.f32.mrf.mxu0
    %v1927 = vadd.f32 0.0, %v1926
    %v1928 = vpop.f32.mrf.mxu0
    %1929 = vdwg.mxu0
    %1930 = vrot.lane.b32.xlu0 %v372, 72
    %v1931 = vpop.permute.xlu0 %1930
    %1932 = vrot.lane.b32.xlu0 %v377, 72
    %v1933 = vpop.permute.xlu0 %1932
    %v1937 = vsel %vm545, %v1850, 0
    %1939 = vmatprep.subr.mxu0 0.0
    %1940 = vmatpush1.msra.mxu0 0.0
    %1941 = vmatprep.subr.mxu0 0.0
    %1942 = vmatpush1.msra.mxu0 0.0
    %1943 = vmatprep.subr.mxu0 0.0
    %1944 = vmatpush1.msra.mxu0 0.0
    %1945 = vmatprep.subr.mxu0 0.0
    %1946 = vmatpush1.msra.mxu0 0.0
    %1947 = vmatprep.subr.mxu0 0.0
    %1948 = vmatpush1.msra.mxu0 0.0
    %1949 = vmatprep.subr.mxu0 0.0
    %1950 = vmatpush1.msra.mxu0 0.0
    %1951 = vmatprep.subr.mxu0 0.0
    %1952 = vmatpush1.msra.mxu0 0.0
    %1953 = vmatprep.subr.mxu0 0.0
    %1954 = vmatpush1.msra.mxu0 0.0
    %1955 = vmatprep.subr.mxu0 0.0
    %1956 = vmatpush1.msra.mxu0 0.0
    %1957 = vmatprep.subr.mxu0 0.0
    %1958 = vmatpush1.msra.mxu0 0.0
    %1959 = vmatprep.subr.mxu0 0.0
    %1960 = vmatpush1.msra.mxu0 0.0
    %1961 = vmatprep.subr.mxu0 0.0
    %1962 = vmatpush1.msra.mxu0 0.0
    %1963 = vmatprep.subr.mxu0 0.0
    %1964 = vmatpush1.msra.mxu0 0.0
    %1965 = vmatprep.subr.mxu0 0.0
    %1966 = vmatpush1.msra.mxu0 0.0
    %1967 = vmatprep.subr.mxu0 0.0
    %1968 = vmatpush1.msra.mxu0 %v1933
    %1969 = vmatprep.subr.mxu0 0.0
    %1970 = vmatpush1.msra.mxu0 %v1931
    %1971 = vmatprep.subr.mxu0 0.0
    %1972 = vmatpush2.msra.mxu0 0.0
    %1973 = vmatprep.subr.mxu0 0.0
    %1974 = vmatpush2.msra.mxu0 0.0
    %1975 = vmatprep.subr.mxu0 0.0
    %1976 = vmatpush2.msra.mxu0 0.0
    %1977 = vmatprep.subr.mxu0 0.0
    %1978 = vmatpush2.msra.mxu0 0.0
    %1979 = vmatprep.subr.mxu0 0.0
    %1980 = vmatpush2.msra.mxu0 0.0
    %1981 = vmatprep.subr.mxu0 0.0
    %1982 = vmatpush2.msra.mxu0 0.0
    %1983 = vmatprep.subr.mxu0 0.0
    %1984 = vmatpush2.msra.mxu0 0.0
    %1985 = vmatprep.subr.mxu0 0.0
    %1986 = vmatpush2.msra.mxu0 0.0
    %1987 = vmatprep.subr.mxu0 0.0
    %1988 = vmatpush2.msra.mxu0 0.0
    %1989 = vmatprep.subr.mxu0 0.0
    %1990 = vmatpush2.msra.mxu0 0.0
    %1991 = vmatprep.subr.mxu0 0.0
    %1992 = vmatpush2.msra.mxu0 0.0
    %1993 = vmatprep.subr.mxu0 0.0
    %1994 = vmatpush2.msra.mxu0 0.0
    %1995 = vmatprep.subr.mxu0 0.0
    %1996 = vmatpush2.msra.mxu0 0.0
    %1997 = vmatprep.subr.mxu0 0.0
    %1998 = vmatpush2.msra.mxu0 0.0
    %1999 = vmatprep.subr.mxu0 0.0
    %2000 = vmatpush2.msra.mxu0 0.0
    %2001 = vmatprep.subr.mxu0 0.0
    %2002 = vmatpush2.msra.mxu0 0.0
    %2003 = vmatprep.mubr.f32.mxu0 0.0
    %2004 = vmatmul.mubr.f32.gmra.mxu0 %v1937
    %v2005 = vpop.f32.mrf.mxu0
    %v2006 = vadd.f32 0.0, %v2005
    %v2007 = vpop.f32.mrf.mxu0
    %2008 = vdwg.mxu0
    %v2010 = vsel %vm384, %v1927, 0
    %v2013 = vsel %vm384, %v2006, 0
    %2015 = vmatprep.subr.mxu0 0.0
    %2016 = vmatpush1.msra.mxu0 0.0
    %2017 = vmatprep.subr.mxu0 0.0
    %2018 = vmatpush1.msra.mxu0 0.0
    %2019 = vmatprep.subr.mxu0 0.0
    %2020 = vmatpush1.msra.mxu0 0.0
    %2021 = vmatprep.subr.mxu0 0.0
    %2022 = vmatpush1.msra.mxu0 0.0
    %2023 = vmatprep.subr.mxu0 0.0
    %2024 = vmatpush1.msra.mxu0 0.0
    %2025 = vmatprep.subr.mxu0 0.0
    %2026 = vmatpush1.msra.mxu0 0.0
    %2027 = vmatprep.subr.mxu0 0.0
    %2028 = vmatpush1.msra.mxu0 0.0
    %2029 = vmatprep.subr.mxu0 0.0
    %2030 = vmatpush1.msra.mxu0 0.0
    %2031 = vmatprep.subr.mxu0 0.0
    %2032 = vmatpush1.msra.mxu0 0.0
    %2033 = vmatprep.subr.mxu0 0.0
    %2034 = vmatpush1.msra.mxu0 0.0
    %2035 = vmatprep.subr.mxu0 0.0
    %2036 = vmatpush1.msra.mxu0 0.0
    %2037 = vmatprep.subr.mxu0 0.0
    %2038 = vmatpush1.msra.mxu0 0.0
    %2039 = vmatprep.subr.mxu0 0.0
    %2040 = vmatpush1.msra.mxu0 0.0
    %2041 = vmatprep.subr.mxu0 0.0
    %2042 = vmatpush1.msra.mxu0 0.0
    %2043 = vmatprep.subr.mxu0 0.0
    %2044 = vmatpush1.msra.mxu0 0.0
    %2045 = vmatprep.subr.mxu0 0.0
    %2046 = vmatpush1.msra.mxu0 %v383
    %2047 = vmatprep.subr.mxu0 0.0
    %2048 = vmatpush2.msra.mxu0 0.0
    %2049 = vmatprep.subr.mxu0 0.0
    %2050 = vmatpush2.msra.mxu0 0.0
    %2051 = vmatprep.subr.mxu0 0.0
    %2052 = vmatpush2.msra.mxu0 0.0
    %2053 = vmatprep.subr.mxu0 0.0
    %2054 = vmatpush2.msra.mxu0 0.0
    %2055 = vmatprep.subr.mxu0 0.0
    %2056 = vmatpush2.msra.mxu0 0.0
    %2057 = vmatprep.subr.mxu0 0.0
    %2058 = vmatpush2.msra.mxu0 0.0
    %2059 = vmatprep.subr.mxu0 0.0
    %2060 = vmatpush2.msra.mxu0 0.0
    %2061 = vmatprep.subr.mxu0 0.0
    %2062 = vmatpush2.msra.mxu0 0.0
    %2063 = vmatprep.subr.mxu0 0.0
    %2064 = vmatpush2.msra.mxu0 0.0
    %2065 = vmatprep.subr.mxu0 0.0
    %2066 = vmatpush2.msra.mxu0 0.0
    %2067 = vmatprep.subr.mxu0 0.0
    %2068 = vmatpush2.msra.mxu0 0.0
    %2069 = vmatprep.subr.mxu0 0.0
    %2070 = vmatpush2.msra.mxu0 0.0
    %2071 = vmatprep.subr.mxu0 0.0
    %2072 = vmatpush2.msra.mxu0 0.0
    %2073 = vmatprep.subr.mxu0 0.0
    %2074 = vmatpush2.msra.mxu0 0.0
    %2075 = vmatprep.subr.mxu0 0.0
    %2076 = vmatpush2.msra.mxu0 0.0
    %2077 = vmatprep.subr.mxu0 0.0
    %2078 = vmatpush2.msra.mxu0 0.0
    %2079 = vmatprep.mubr.f32.mxu0 0.0
    %2080 = vmatmul.mubr.f32.gmra.mxu0 %v2010
    %v2081 = vpop.f32.mrf.mxu0
    %v2082 = vadd.f32 0.0, %v2081
    %v2083 = vpop.f32.mrf.mxu0
    %2084 = vmatprep.mubr.f32.mxu0 0.0
    %2085 = vmatmul.mubr.f32.gmra.mxu0 %v2013
    %v2086 = vpop.f32.mrf.mxu0
    %v2087 = vadd.f32 0.0, %v2086
    %v2088 = vpop.f32.mrf.mxu0
    %2089 = vdwg.mxu0
    %v2090 = vadd.f32 %v1661, %v2082
    %v2091 = vadd.f32 %v1662, %v2087
    %v2092 = vld [vmem:[%s10] sm:$0x1]
    %v2094 = vlaneseq
    %v2095 = vshrl.u32 %v2094, 7
    %v2096 = vsub.s32 0, %v2095
    %v2097 = vrot.slane %v2092, %v2096
    %v2099 = vadd.f32 %v2090, %v2097
    %v2100 = vadd.f32 %v2091, %v2097
    %v2101 = vld [vmem:[%s11] sm:$0xf]
    %v2102 = vadd.f32 %v181, %v2099
    %v2103 = vadd.f32 %v181, %v2100
    %v2104 = vsel %vm193, %v2102, 0.0
    %2105 = vadd.xlane.f32.xlu0 %v2104
    %v2106 = vpop.xlane.xlu0 %2105
    %v2107 = vsel %vm193, %v2103, 0.0
    %2108 = vadd.xlane.f32.xlu0 %v2107
    %v2109 = vpop.xlane.xlu0 %2108
    %v2110 = vrcp.pop 32.0
    %v2111 = vmul.f32 %v2106, %v2110
    %v2112 = vmul.f32 %v2109, %v2110
    %v2113 = vsub.f32 %v2102, %v2111
    %v2114 = vsub.f32 %v2103, %v2112
    %v2115 = vmul.f32 %v2113, %v2113
    %v2116 = vmul.f32 %v2114, %v2114
    %v2117 = vsel %vm193, %v2115, 0.0
    %2118 = vadd.xlane.f32.xlu0 %v2117
    %v2119 = vpop.xlane.xlu0 %2118
    %v2120 = vsel %vm193, %v2116, 0.0
    %2121 = vadd.xlane.f32.xlu0 %v2120
    %v2122 = vpop.xlane.xlu0 %2121
    %v2123 = vmul.f32 %v2119, %v2110
    %v2124 = vmul.f32 %v2122, %v2110
    %v2125 = vadd.f32 %v2123, 1e-05
    %v2126 = vadd.f32 %v2124, 1e-05
    %v2127 = vrsqrt.pop %v2125
    %v2128 = vrsqrt.pop %v2126
    %v2129 = vmul.f32 %v2113, %v2127
    %v2130 = vmul.f32 %v2114, %v2128
    %v2131 = vlaneseq
    %v2132 = vshrl.u32 %v2131, 7
    %v2133 = vsub.s32 0, %v2132
    %v2134 = vrot.slane %v2101, %v2133
    %v2135 = vmul.f32 %v2129, %v2134
    %v2136 = vmul.f32 %v2130, %v2134
    %v2137 = vlaneseq
    %v2138 = vshrl.u32 %v2137, 7
    %v2139 = vsub.s32 1, %v2138
    %v2140 = vrot.slane %v2101, %v2139
    %v2141 = vadd.f32 %v2135, %v2140
    %v2142 = vadd.f32 %v2136, %v2140
    %v2143 = vld [vmem:[%s12] sm:$0xff]
    %v2144 = vld [vmem:[%s12 + $0x8] sm:$0xff]
    %v2145 = vld [vmem:[%s12 + $0x10] sm:$0xff]
    %v2146 = vld [vmem:[%s12 + $0x18] sm:$0xff]
    %v2147 = vld [vmem:[%s13] sm:$0x1]
    %v2149 = vlaneseq
    %v2150 = vshrl.u32 %v2149, 7
    %v2151 = vsub.s32 0, %v2150
    %v2152 = vrot.slane %v2147, %v2151
    %v2155 = vsel %vm193, %v2141, 0
    %v2158 = vsel %vm193, %v2142, 0
    %2160 = vmatprep.subr.mxu0 0.0
    %2161 = vmatpush1.msra.mxu0 0.0
    %2162 = vmatprep.subr.mxu0 0.0
    %2163 = vmatpush1.msra.mxu0 0.0
    %2164 = vmatprep.subr.mxu0 0.0
    %2165 = vmatpush1.msra.mxu0 0.0
    %2166 = vmatprep.subr.mxu0 0.0
    %2167 = vmatpush1.msra.mxu0 0.0
    %2168 = vmatprep.subr.mxu0 0.0
    %2169 = vmatpush1.msra.mxu0 0.0
    %2170 = vmatprep.subr.mxu0 0.0
    %2171 = vmatpush1.msra.mxu0 0.0
    %2172 = vmatprep.subr.mxu0 0.0
    %2173 = vmatpush1.msra.mxu0 0.0
    %2174 = vmatprep.subr.mxu0 0.0
    %2175 = vmatpush1.msra.mxu0 0.0
    %2176 = vmatprep.subr.mxu0 0.0
    %2177 = vmatpush1.msra.mxu0 0.0
    %2178 = vmatprep.subr.mxu0 0.0
    %2179 = vmatpush1.msra.mxu0 0.0
    %2180 = vmatprep.subr.mxu0 0.0
    %2181 = vmatpush1.msra.mxu0 0.0
    %2182 = vmatprep.subr.mxu0 0.0
    %2183 = vmatpush1.msra.mxu0 0.0
    %2184 = vmatprep.subr.mxu0 0.0
    %2185 = vmatpush1.msra.mxu0 %v2146
    %2186 = vmatprep.subr.mxu0 0.0
    %2187 = vmatpush1.msra.mxu0 %v2145
    %2188 = vmatprep.subr.mxu0 0.0
    %2189 = vmatpush1.msra.mxu0 %v2144
    %2190 = vmatprep.subr.mxu0 0.0
    %2191 = vmatpush1.msra.mxu0 %v2143
    %2192 = vmatprep.subr.mxu0 0.0
    %2193 = vmatpush2.msra.mxu0 0.0
    %2194 = vmatprep.subr.mxu0 0.0
    %2195 = vmatpush2.msra.mxu0 0.0
    %2196 = vmatprep.subr.mxu0 0.0
    %2197 = vmatpush2.msra.mxu0 0.0
    %2198 = vmatprep.subr.mxu0 0.0
    %2199 = vmatpush2.msra.mxu0 0.0
    %2200 = vmatprep.subr.mxu0 0.0
    %2201 = vmatpush2.msra.mxu0 0.0
    %2202 = vmatprep.subr.mxu0 0.0
    %2203 = vmatpush2.msra.mxu0 0.0
    %2204 = vmatprep.subr.mxu0 0.0
    %2205 = vmatpush2.msra.mxu0 0.0
    %2206 = vmatprep.subr.mxu0 0.0
    %2207 = vmatpush2.msra.mxu0 0.0
    %2208 = vmatprep.subr.mxu0 0.0
    %2209 = vmatpush2.msra.mxu0 0.0
    %2210 = vmatprep.subr.mxu0 0.0
    %2211 = vmatpush2.msra.mxu0 0.0
    %2212 = vmatprep.subr.mxu0 0.0
    %2213 = vmatpush2.msra.mxu0 0.0
    %2214 = vmatprep.subr.mxu0 0.0
    %2215 = vmatpush2.msra.mxu0 0.0
    %2216 = vmatprep.subr.mxu0 0.0
    %2217 = vmatpush2.msra.mxu0 0.0
    %2218 = vmatprep.subr.mxu0 0.0
    %2219 = vmatpush2.msra.mxu0 0.0
    %2220 = vmatprep.subr.mxu0 0.0
    %2221 = vmatpush2.msra.mxu0 0.0
    %2222 = vmatprep.subr.mxu0 0.0
    %2223 = vmatpush2.msra.mxu0 0.0
    %2224 = vmatprep.mubr.f32.mxu0 0.0
    %2225 = vmatmul.mubr.f32.gmra.mxu0 %v2155
    %v2226 = vpop.f32.mrf.mxu0
    %v2227 = vadd.f32 %v2152, %v2226
    %v2228 = vpop.f32.mrf.mxu0
    %2229 = vmatprep.mubr.f32.mxu0 0.0
    %2230 = vmatmul.mubr.f32.gmra.mxu0 %v2158
    %v2231 = vpop.f32.mrf.mxu0
    %v2232 = vadd.f32 %v2152, %v2231
    %v2233 = vpop.f32.mrf.mxu0
    %2234 = vdwg.mxu0
    %v2235 = vmax.f32 %v2227, 0.0
    %v2236 = vmax.f32 %v2232, 0.0
    %v2237 = vld [vmem:[%s14] sm:$0xff]
    %v2238 = vld [vmem:[%s14 + $0x8] sm:$0xff]
    %v2239 = vld [vmem:[%s14 + $0x10] sm:$0xff]
    %v2240 = vld [vmem:[%s14 + $0x18] sm:$0xff]
    %v2241 = vld [vmem:[%s15] sm:$0x1]
    %v2243 = vlaneseq
    %v2244 = vshrl.u32 %v2243, 7
    %v2245 = vsub.s32 0, %v2244
    %v2246 = vrot.slane %v2241, %v2245
    %v2249 = vsel %vm193, %v2235, 0
    %v2252 = vsel %vm193, %v2236, 0
    %2254 = vmatprep.subr.mxu0 0.0
    %2255 = vmatpush1.msra.mxu0 0.0
    %2256 = vmatprep.subr.mxu0 0.0
    %2257 = vmatpush1.msra.mxu0 0.0
    %2258 = vmatprep.subr.mxu0 0.0
    %2259 = vmatpush1.msra.mxu0 0.0
    %2260 = vmatprep.subr.mxu0 0.0
    %2261 = vmatpush1.msra.mxu0 0.0
    %2262 = vmatprep.subr.mxu0 0.0
    %2263 = vmatpush1.msra.mxu0 0.0
    %2264 = vmatprep.subr.mxu0 0.0
    %2265 = vmatpush1.msra.mxu0 0.0
    %2266 = vmatprep.subr.mxu0 0.0
    %2267 = vmatpush1.msra.mxu0 0.0
    %2268 = vmatprep.subr.mxu0 0.0
    %2269 = vmatpush1.msra.mxu0 0.0
    %2270 = vmatprep.subr.mxu0 0.0
    %2271 = vmatpush1.msra.mxu0 0.0
    %2272 = vmatprep.subr.mxu0 0.0
    %2273 = vmatpush1.msra.mxu0 0.0
    %2274 = vmatprep.subr.mxu0 0.0
    %2275 = vmatpush1.msra.mxu0 0.0
    %2276 = vmatprep.subr.mxu0 0.0
    %2277 = vmatpush1.msra.mxu0 0.0
    %2278 = vmatprep.subr.mxu0 0.0
    %2279 = vmatpush1.msra.mxu0 %v2240
    %2280 = vmatprep.subr.mxu0 0.0
    %2281 = vmatpush1.msra.mxu0 %v2239
    %2282 = vmatprep.subr.mxu0 0.0
    %2283 = vmatpush1.msra.mxu0 %v2238
    %2284 = vmatprep.subr.mxu0 0.0
    %2285 = vmatpush1.msra.mxu0 %v2237
    %2286 = vmatprep.subr.mxu0 0.0
    %2287 = vmatpush2.msra.mxu0 0.0
    %2288 = vmatprep.subr.mxu0 0.0
    %2289 = vmatpush2.msra.mxu0 0.0
    %2290 = vmatprep.subr.mxu0 0.0
    %2291 = vmatpush2.msra.mxu0 0.0
    %2292 = vmatprep.subr.mxu0 0.0
    %2293 = vmatpush2.msra.mxu0 0.0
    %2294 = vmatprep.subr.mxu0 0.0
    %2295 = vmatpush2.msra.mxu0 0.0
    %2296 = vmatprep.subr.mxu0 0.0
    %2297 = vmatpush2.msra.mxu0 0.0
    %2298 = vmatprep.subr.mxu0 0.0
    %2299 = vmatpush2.msra.mxu0 0.0
    %2300 = vmatprep.subr.mxu0 0.0
    %2301 = vmatpush2.msra.mxu0 0.0
    %2302 = vmatprep.subr.mxu0 0.0
    %2303 = vmatpush2.msra.mxu0 0.0
    %2304 = vmatprep.subr.mxu0 0.0
    %2305 = vmatpush2.msra.mxu0 0.0
    %2306 = vmatprep.subr.mxu0 0.0
    %2307 = vmatpush2.msra.mxu0 0.0
    %2308 = vmatprep.subr.mxu0 0.0
    %2309 = vmatpush2.msra.mxu0 0.0
    %2310 = vmatprep.subr.mxu0 0.0
    %2311 = vmatpush2.msra.mxu0 0.0
    %2312 = vmatprep.subr.mxu0 0.0
    %2313 = vmatpush2.msra.mxu0 0.0
    %2314 = vmatprep.subr.mxu0 0.0
    %2315 = vmatpush2.msra.mxu0 0.0
    %2316 = vmatprep.subr.mxu0 0.0
    %2317 = vmatpush2.msra.mxu0 0.0
    %2318 = vmatprep.mubr.f32.mxu0 0.0
    %2319 = vmatmul.mubr.f32.gmra.mxu0 %v2249
    %v2320 = vpop.f32.mrf.mxu0
    %v2321 = vadd.f32 %v2246, %v2320
    %v2322 = vpop.f32.mrf.mxu0
    %2323 = vmatprep.mubr.f32.mxu0 0.0
    %2324 = vmatmul.mubr.f32.gmra.mxu0 %v2252
    %v2325 = vpop.f32.mrf.mxu0
    %v2326 = vadd.f32 %v2246, %v2325
    %v2327 = vpop.f32.mrf.mxu0
    %2328 = vdwg.mxu0
    %v2329 = vadd.f32 %v2141, %v2321
    %v2330 = vadd.f32 %v2142, %v2326
    %v2331 = vsel %vm193, %v2329, 0.0
    %2332 = vadd.xlane.f32.xlu0 %v2331
    %v2333 = vpop.xlane.xlu0 %2332
    %v2334 = vsel %vm193, %v2330, 0.0
    %2335 = vadd.xlane.f32.xlu0 %v2334
    %v2336 = vpop.xlane.xlu0 %2335
    %v2337 = vmul.f32 %v2333, %v2110
    %v2338 = vmul.f32 %v2336, %v2110
    %v2339 = vsub.f32 %v2329, %v2337
    %v2340 = vsub.f32 %v2330, %v2338
    %v2341 = vmul.f32 %v2339, %v2339
    %v2342 = vmul.f32 %v2340, %v2340
    %v2343 = vsel %vm193, %v2341, 0.0
    %2344 = vadd.xlane.f32.xlu0 %v2343
    %v2345 = vpop.xlane.xlu0 %2344
    %v2346 = vsel %vm193, %v2342, 0.0
    %2347 = vadd.xlane.f32.xlu0 %v2346
    %v2348 = vpop.xlane.xlu0 %2347
    %v2349 = vmul.f32 %v2345, %v2110
    %v2350 = vmul.f32 %v2348, %v2110
    %v2351 = vadd.f32 %v2349, 1e-05
    %v2352 = vadd.f32 %v2350, 1e-05
    %v2353 = vrsqrt.pop %v2351
    %v2354 = vrsqrt.pop %v2352
    %v2355 = vmul.f32 %v2339, %v2353
    %v2356 = vmul.f32 %v2340, %v2354
    %v2357 = vlaneseq
    %v2358 = vshrl.u32 %v2357, 7
    %v2359 = vsub.s32 2, %v2358
    %v2360 = vrot.slane %v2101, %v2359
    %v2361 = vmul.f32 %v2355, %v2360
    %v2362 = vmul.f32 %v2356, %v2360
    %v2363 = vlaneseq
    %v2364 = vshrl.u32 %v2363, 7
    %v2365 = vsub.s32 3, %v2364
    %v2366 = vrot.slane %v2101, %v2365
    %v2367 = vadd.f32 %v2361, %v2366
    %v2368 = vadd.f32 %v2362, %v2366
    %s2369 = scalar_lea.vmem %s5, 32
    %v2370 = vld [vmem:[%s2369] sm:$0xff]
    %v2371 = vld [vmem:[%s2369 + $0x8] sm:$0xff]
    %v2372 = vld [vmem:[%s2369 + $0x10] sm:$0xff]
    %v2373 = vld [vmem:[%s2369 + $0x18] sm:$0xff]
    %s2374 = scalar_lea.vmem %s6, 1
    %v2375 = vld [vmem:[%s2374] sm:$0x1]
    %v2377 = vlaneseq
    %v2378 = vshrl.u32 %v2377, 7
    %v2379 = vsub.s32 0, %v2378
    %v2380 = vrot.slane %v2375, %v2379
    %v2383 = vsel %vm193, %v2367, 0
    %v2386 = vsel %vm193, %v2368, 0
    %2388 = vmatprep.subr.mxu0 0.0
    %2389 = vmatpush1.msra.mxu0 0.0
    %2390 = vmatprep.subr.mxu0 0.0
    %2391 = vmatpush1.msra.mxu0 0.0
    %2392 = vmatprep.subr.mxu0 0.0
    %2393 = vmatpush1.msra.mxu0 0.0
    %2394 = vmatprep.subr.mxu0 0.0
    %2395 = vmatpush1.msra.mxu0 0.0
    %2396 = vmatprep.subr.mxu0 0.0
    %2397 = vmatpush1.msra.mxu0 0.0
    %2398 = vmatprep.subr.mxu0 0.0
    %2399 = vmatpush1.msra.mxu0 0.0
    %2400 = vmatprep.subr.mxu0 0.0
    %2401 = vmatpush1.msra.mxu0 0.0
    %2402 = vmatprep.subr.mxu0 0.0
    %2403 = vmatpush1.msra.mxu0 0.0
    %2404 = vmatprep.subr.mxu0 0.0
    %2405 = vmatpush1.msra.mxu0 0.0
    %2406 = vmatprep.subr.mxu0 0.0
    %2407 = vmatpush1.msra.mxu0 0.0
    %2408 = vmatprep.subr.mxu0 0.0
    %2409 = vmatpush1.msra.mxu0 0.0
    %2410 = vmatprep.subr.mxu0 0.0
    %2411 = vmatpush1.msra.mxu0 0.0
    %2412 = vmatprep.subr.mxu0 0.0
    %2413 = vmatpush1.msra.mxu0 %v2373
    %2414 = vmatprep.subr.mxu0 0.0
    %2415 = vmatpush1.msra.mxu0 %v2372
    %2416 = vmatprep.subr.mxu0 0.0
    %2417 = vmatpush1.msra.mxu0 %v2371
    %2418 = vmatprep.subr.mxu0 0.0
    %2419 = vmatpush1.msra.mxu0 %v2370
    %2420 = vmatprep.subr.mxu0 0.0
    %2421 = vmatpush2.msra.mxu0 0.0
    %2422 = vmatprep.subr.mxu0 0.0
    %2423 = vmatpush2.msra.mxu0 0.0
    %2424 = vmatprep.subr.mxu0 0.0
    %2425 = vmatpush2.msra.mxu0 0.0
    %2426 = vmatprep.subr.mxu0 0.0
    %2427 = vmatpush2.msra.mxu0 0.0
    %2428 = vmatprep.subr.mxu0 0.0
    %2429 = vmatpush2.msra.mxu0 0.0
    %2430 = vmatprep.subr.mxu0 0.0
    %2431 = vmatpush2.msra.mxu0 0.0
    %2432 = vmatprep.subr.mxu0 0.0
    %2433 = vmatpush2.msra.mxu0 0.0
    %2434 = vmatprep.subr.mxu0 0.0
    %2435 = vmatpush2.msra.mxu0 0.0
    %2436 = vmatprep.subr.mxu0 0.0
    %2437 = vmatpush2.msra.mxu0 0.0
    %2438 = vmatprep.subr.mxu0 0.0
    %2439 = vmatpush2.msra.mxu0 0.0
    %2440 = vmatprep.subr.mxu0 0.0
    %2441 = vmatpush2.msra.mxu0 0.0
    %2442 = vmatprep.subr.mxu0 0.0
    %2443 = vmatpush2.msra.mxu0 0.0
    %2444 = vmatprep.subr.mxu0 0.0
    %2445 = vmatpush2.msra.mxu0 0.0
    %2446 = vmatprep.subr.mxu0 0.0
    %2447 = vmatpush2.msra.mxu0 0.0
    %2448 = vmatprep.subr.mxu0 0.0
    %2449 = vmatpush2.msra.mxu0 0.0
    %2450 = vmatprep.subr.mxu0 0.0
    %2451 = vmatpush2.msra.mxu0 0.0
    %2452 = vmatprep.mubr.f32.mxu0 0.0
    %2453 = vmatmul.mubr.f32.gmra.mxu0 %v2383
    %v2454 = vpop.f32.mrf.mxu0
    %v2455 = vadd.f32 %v2380, %v2454
    %v2456 = vpop.f32.mrf.mxu0
    %2457 = vmatprep.mubr.f32.mxu0 0.0
    %2458 = vmatmul.mubr.f32.gmra.mxu0 %v2386
    %v2459 = vpop.f32.mrf.mxu0
    %v2460 = vadd.f32 %v2380, %v2459
    %v2461 = vpop.f32.mrf.mxu0
    %2462 = vdwg.mxu0
    %s2463 = scalar_lea.vmem %s7, 32
    %v2464 = vld [vmem:[%s2463] sm:$0xff]
    %v2465 = vld [vmem:[%s2463 + $0x8] sm:$0xff]
    %v2466 = vld [vmem:[%s2463 + $0x10] sm:$0xff]
    %v2467 = vld [vmem:[%s2463 + $0x18] sm:$0xff]
    %s2468 = scalar_lea.vmem %s8, 1
    %v2469 = vld [vmem:[%s2468] sm:$0x1]
    %v2471 = vlaneseq
    %v2472 = vshrl.u32 %v2471, 7
    %v2473 = vsub.s32 0, %v2472
    %v2474 = vrot.slane %v2469, %v2473
    %2476 = vmatprep.subr.mxu0 0.0
    %2477 = vmatpush1.msra.mxu0 0.0
    %2478 = vmatprep.subr.mxu0 0.0
    %2479 = vmatpush1.msra.mxu0 0.0
    %2480 = vmatprep.subr.mxu0 0.0
    %2481 = vmatpush1.msra.mxu0 0.0
    %2482 = vmatprep.subr.mxu0 0.0
    %2483 = vmatpush1.msra.mxu0 0.0
    %2484 = vmatprep.subr.mxu0 0.0
    %2485 = vmatpush1.msra.mxu0 0.0
    %2486 = vmatprep.subr.mxu0 0.0
    %2487 = vmatpush1.msra.mxu0 0.0
    %2488 = vmatprep.subr.mxu0 0.0
    %2489 = vmatpush1.msra.mxu0 0.0
    %2490 = vmatprep.subr.mxu0 0.0
    %2491 = vmatpush1.msra.mxu0 0.0
    %2492 = vmatprep.subr.mxu0 0.0
    %2493 = vmatpush1.msra.mxu0 0.0
    %2494 = vmatprep.subr.mxu0 0.0
    %2495 = vmatpush1.msra.mxu0 0.0
    %2496 = vmatprep.subr.mxu0 0.0
    %2497 = vmatpush1.msra.mxu0 0.0
    %2498 = vmatprep.subr.mxu0 0.0
    %2499 = vmatpush1.msra.mxu0 0.0
    %2500 = vmatprep.subr.mxu0 0.0
    %2501 = vmatpush1.msra.mxu0 %v2467
    %2502 = vmatprep.subr.mxu0 0.0
    %2503 = vmatpush1.msra.mxu0 %v2466
    %2504 = vmatprep.subr.mxu0 0.0
    %2505 = vmatpush1.msra.mxu0 %v2465
    %2506 = vmatprep.subr.mxu0 0.0
    %2507 = vmatpush1.msra.mxu0 %v2464
    %2508 = vmatprep.subr.mxu0 0.0
    %2509 = vmatpush2.msra.mxu0 0.0
    %2510 = vmatprep.subr.mxu0 0.0
    %2511 = vmatpush2.msra.mxu0 0.0
    %2512 = vmatprep.subr.mxu0 0.0
    %2513 = vmatpush2.msra.mxu0 0.0
    %2514 = vmatprep.subr.mxu0 0.0
    %2515 = vmatpush2.msra.mxu0 0.0
    %2516 = vmatprep.subr.mxu0 0.0
    %2517 = vmatpush2.msra.mxu0 0.0
    %2518 = vmatprep.subr.mxu0 0.0
    %2519 = vmatpush2.msra.mxu0 0.0
    %2520 = vmatprep.subr.mxu0 0.0
    %2521 = vmatpush2.msra.mxu0 0.0
    %2522 = vmatprep.subr.mxu0 0.0
    %2523 = vmatpush2.msra.mxu0 0.0
    %2524 = vmatprep.subr.mxu0 0.0
    %2525 = vmatpush2.msra.mxu0 0.0
    %2526 = vmatprep.subr.mxu0 0.0
    %2527 = vmatpush2.msra.mxu0 0.0
    %2528 = vmatprep.subr.mxu0 0.0
    %2529 = vmatpush2.msra.mxu0 0.0
    %2530 = vmatprep.subr.mxu0 0.0
    %2531 = vmatpush2.msra.mxu0 0.0
    %2532 = vmatprep.subr.mxu0 0.0
    %2533 = vmatpush2.msra.mxu0 0.0
    %2534 = vmatprep.subr.mxu0 0.0
    %2535 = vmatpush2.msra.mxu0 0.0
    %2536 = vmatprep.subr.mxu0 0.0
    %2537 = vmatpush2.msra.mxu0 0.0
    %2538 = vmatprep.subr.mxu0 0.0
    %2539 = vmatpush2.msra.mxu0 0.0
    %2540 = vmatprep.mubr.f32.mxu0 0.0
    %2541 = vmatmul.mubr.f32.gmra.mxu0 %v284
    %v2542 = vpop.f32.mrf.mxu0
    %v2543 = vadd.f32 %v2474, %v2542
    %v2544 = vpop.f32.mrf.mxu0
    %2545 = vmatprep.mubr.f32.mxu0 0.0
    %2546 = vmatmul.mubr.f32.gmra.mxu0 %v287
    %v2547 = vpop.f32.mrf.mxu0
    %v2548 = vadd.f32 %v2474, %v2547
    %v2549 = vpop.f32.mrf.mxu0
    %2550 = vmatprep.mubr.f32.mxu0 0.0
    %2551 = vmatmul.mubr.f32.gmra.mxu0 %v290
    %v2552 = vpop.f32.mrf.mxu0
    %v2553 = vadd.f32 %v2474, %v2552
    %v2554 = vpop.f32.mrf.mxu0
    %2555 = vmatprep.mubr.f32.mxu0 0.0
    %2556 = vmatmul.mubr.f32.gmra.mxu0 %v293
    %v2557 = vpop.f32.mrf.mxu0
    %v2558 = vadd.f32 %v2474, %v2557
    %v2559 = vpop.f32.mrf.mxu0
    %2560 = vdwg.mxu0
    %s2561 = scalar_lea.vmem %s9, 32
    %v2562 = vld [vmem:[%s2561] sm:$0xff]
    %v2563 = vld [vmem:[%s2561 + $0x8] sm:$0xff]
    %v2564 = vld [vmem:[%s2561 + $0x10] sm:$0xff]
    %v2565 = vld [vmem:[%s2561 + $0x18] sm:$0xff]
    %v2567 = vsel %vm384, %v2455, 0
    %v2570 = vsel %vm384, %v2543, 0
    %v2573 = vsel %vm384, %v2548, 0
    %2575 = vmatprep.subr.mxu0 0.0
    %2576 = vmatpush1.xpose.msra.mxu0 0.0
    %2577 = vmatprep.subr.mxu0 0.0
    %2578 = vmatpush1.xpose.msra.mxu0 0.0
    %2579 = vmatprep.subr.mxu0 0.0
    %2580 = vmatpush1.xpose.msra.mxu0 0.0
    %2581 = vmatprep.subr.mxu0 0.0
    %2582 = vmatpush1.xpose.msra.mxu0 0.0
    %2583 = vmatprep.subr.mxu0 0.0
    %2584 = vmatpush1.xpose.msra.mxu0 0.0
    %2585 = vmatprep.subr.mxu0 0.0
    %2586 = vmatpush1.xpose.msra.mxu0 0.0
    %2587 = vmatprep.subr.mxu0 0.0
    %2588 = vmatpush1.xpose.msra.mxu0 0.0
    %2589 = vmatprep.subr.mxu0 0.0
    %2590 = vmatpush1.xpose.msra.mxu0 0.0
    %2591 = vmatprep.subr.mxu0 0.0
    %2592 = vmatpush1.xpose.msra.mxu0 0.0
    %2593 = vmatprep.subr.mxu0 0.0
    %2594 = vmatpush1.xpose.msra.mxu0 0.0
    %2595 = vmatprep.subr.mxu0 0.0
    %2596 = vmatpush1.xpose.msra.mxu0 0.0
    %2597 = vmatprep.subr.mxu0 0.0
    %2598 = vmatpush1.xpose.msra.mxu0 0.0
    %2599 = vmatprep.subr.mxu0 0.0
    %2600 = vmatpush1.xpose.msra.mxu0 0.0
    %2601 = vmatprep.subr.mxu0 0.0
    %2602 = vmatpush1.xpose.msra.mxu0 0.0
    %2603 = vmatprep.subr.mxu0 0.0
    %2604 = vmatpush1.xpose.msra.mxu0 %v2573
    %2605 = vmatprep.subr.mxu0 0.0
    %2606 = vmatpush1.xpose.msra.mxu0 %v2570
    %2607 = vmatprep.subr.mxu0 0.0
    %2608 = vmatpush2.xpose.msra.mxu0 0.0
    %2609 = vmatprep.subr.mxu0 0.0
    %2610 = vmatpush2.xpose.msra.mxu0 0.0
    %2611 = vmatprep.subr.mxu0 0.0
    %2612 = vmatpush2.xpose.msra.mxu0 0.0
    %2613 = vmatprep.subr.mxu0 0.0
    %2614 = vmatpush2.xpose.msra.mxu0 0.0
    %2615 = vmatprep.subr.mxu0 0.0
    %2616 = vmatpush2.xpose.msra.mxu0 0.0
    %2617 = vmatprep.subr.mxu0 0.0
    %2618 = vmatpush2.xpose.msra.mxu0 0.0
    %2619 = vmatprep.subr.mxu0 0.0
    %2620 = vmatpush2.xpose.msra.mxu0 0.0
    %2621 = vmatprep.subr.mxu0 0.0
    %2622 = vmatpush2.xpose.msra.mxu0 0.0
    %2623 = vmatprep.subr.mxu0 0.0
    %2624 = vmatpush2.xpose.msra.mxu0 0.0
    %2625 = vmatprep.subr.mxu0 0.0
    %2626 = vmatpush2.xpose.msra.mxu0 0.0
    %2627 = vmatprep.subr.mxu0 0.0
    %2628 = vmatpush2.xpose.msra.mxu0 0.0
    %2629 = vmatprep.subr.mxu0 0.0
    %2630 = vmatpush2.xpose.msra.mxu0 0.0
    %2631 = vmatprep.subr.mxu0 0.0
    %2632 = vmatpush2.xpose.msra.mxu0 0.0
    %2633 = vmatprep.subr.mxu0 0.0
    %2634 = vmatpush2.xpose.msra.mxu0 0.0
    %2635 = vmatprep.subr.mxu0 0.0
    %2636 = vmatpush2.xpose.msra.mxu0 0.0
    %2637 = vmatprep.subr.mxu0 0.0
    %2638 = vmatpush2.xpose.msra.mxu0 0.0
    %2639 = vmatprep.mubr.f32.mxu0 0.0
    %2640 = vmatmul.mubr.f32.gmra.mxu0 %v2567
    %v2641 = vpop.f32.mrf.mxu0
    %v2642 = vadd.f32 0.0, %v2641
    %v2643 = vpop.f32.mrf.mxu0
    %2644 = vdwg.mxu0
    %v2646 = vsel %vm384, %v2460, 0
    %v2649 = vsel %vm384, %v2553, 0
    %v2652 = vsel %vm384, %v2558, 0
    %2654 = vmatprep.subr.mxu0 0.0
    %2655 = vmatpush1.xpose.msra.mxu0 0.0
    %2656 = vmatprep.subr.mxu0 0.0
    %2657 = vmatpush1.xpose.msra.mxu0 0.0
    %2658 = vmatprep.subr.mxu0 0.0
    %2659 = vmatpush1.xpose.msra.mxu0 0.0
    %2660 = vmatprep.subr.mxu0 0.0
    %2661 = vmatpush1.xpose.msra.mxu0 0.0
    %2662 = vmatprep.subr.mxu0 0.0
    %2663 = vmatpush1.xpose.msra.mxu0 0.0
    %2664 = vmatprep.subr.mxu0 0.0
    %2665 = vmatpush1.xpose.msra.mxu0 0.0
    %2666 = vmatprep.subr.mxu0 0.0
    %2667 = vmatpush1.xpose.msra.mxu0 0.0
    %2668 = vmatprep.subr.mxu0 0.0
    %2669 = vmatpush1.xpose.msra.mxu0 0.0
    %2670 = vmatprep.subr.mxu0 0.0
    %2671 = vmatpush1.xpose.msra.mxu0 0.0
    %2672 = vmatprep.subr.mxu0 0.0
    %2673 = vmatpush1.xpose.msra.mxu0 0.0
    %2674 = vmatprep.subr.mxu0 0.0
    %2675 = vmatpush1.xpose.msra.mxu0 0.0
    %2676 = vmatprep.subr.mxu0 0.0
    %2677 = vmatpush1.xpose.msra.mxu0 0.0
    %2678 = vmatprep.subr.mxu0 0.0
    %2679 = vmatpush1.xpose.msra.mxu0 0.0
    %2680 = vmatprep.subr.mxu0 0.0
    %2681 = vmatpush1.xpose.msra.mxu0 0.0
    %2682 = vmatprep.subr.mxu0 0.0
    %2683 = vmatpush1.xpose.msra.mxu0 %v2652
    %2684 = vmatprep.subr.mxu0 0.0
    %2685 = vmatpush1.xpose.msra.mxu0 %v2649
    %2686 = vmatprep.subr.mxu0 0.0
    %2687 = vmatpush2.xpose.msra.mxu0 0.0
    %2688 = vmatprep.subr.mxu0 0.0
    %2689 = vmatpush2.xpose.msra.mxu0 0.0
    %2690 = vmatprep.subr.mxu0 0.0
    %2691 = vmatpush2.xpose.msra.mxu0 0.0
    %2692 = vmatprep.subr.mxu0 0.0
    %2693 = vmatpush2.xpose.msra.mxu0 0.0
    %2694 = vmatprep.subr.mxu0 0.0
    %2695 = vmatpush2.xpose.msra.mxu0 0.0
    %2696 = vmatprep.subr.mxu0 0.0
    %2697 = vmatpush2.xpose.msra.mxu0 0.0
    %2698 = vmatprep.subr.mxu0 0.0
    %2699 = vmatpush2.xpose.msra.mxu0 0.0
    %2700 = vmatprep.subr.mxu0 0.0
    %2701 = vmatpush2.xpose.msra.mxu0 0.0
    %2702 = vmatprep.subr.mxu0 0.0
    %2703 = vmatpush2.xpose.msra.mxu0 0.0
    %2704 = vmatprep.subr.mxu0 0.0
    %2705 = vmatpush2.xpose.msra.mxu0 0.0
    %2706 = vmatprep.subr.mxu0 0.0
    %2707 = vmatpush2.xpose.msra.mxu0 0.0
    %2708 = vmatprep.subr.mxu0 0.0
    %2709 = vmatpush2.xpose.msra.mxu0 0.0
    %2710 = vmatprep.subr.mxu0 0.0
    %2711 = vmatpush2.xpose.msra.mxu0 0.0
    %2712 = vmatprep.subr.mxu0 0.0
    %2713 = vmatpush2.xpose.msra.mxu0 0.0
    %2714 = vmatprep.subr.mxu0 0.0
    %2715 = vmatpush2.xpose.msra.mxu0 0.0
    %2716 = vmatprep.subr.mxu0 0.0
    %2717 = vmatpush2.xpose.msra.mxu0 0.0
    %2718 = vmatprep.mubr.f32.mxu0 0.0
    %2719 = vmatmul.mubr.f32.gmra.mxu0 %v2646
    %v2720 = vpop.f32.mrf.mxu0
    %v2721 = vadd.f32 0.0, %v2720
    %v2722 = vpop.f32.mrf.mxu0
    %2723 = vdwg.mxu0
    %v2724 = vmul.f32 %v2642, 0.35355338
    %v2725 = vmul.f32 %v2721, 0.35355338
    %v2726 = vsel %vm545, %v2724, -inf
    %2727 = vmax.xlane.f32.xlu0 %v2726
    %v2728 = vpop.xlane.xlu0 %2727
    %v2729 = vsel %vm545, %v2725, -inf
    %2730 = vmax.xlane.f32.xlu0 %v2729
    %v2731 = vpop.xlane.xlu0 %2730
    %v2732 = vsub.f32 %v2724, %v2728
    %v2733 = vsub.f32 %v2725, %v2731
    %v2734 = vmul.f32 %v2732, 1.442695
    %v2735 = vpow.pop %v2734
    %v2736 = vmul.f32 %v2733, 1.442695
    %v2737 = vpow.pop %v2736
    %v2738 = vsel %vm545, %v2735, 0.0
    %2739 = vadd.xlane.f32.xlu0 %v2738
    %v2740 = vpop.xlane.xlu0 %2739
    %v2741 = vsel %vm545, %v2737, 0.0
    %2742 = vadd.xlane.f32.xlu0 %v2741
    %v2743 = vpop.xlane.xlu0 %2742
    %v2744 = vrcp.pop %v2740
    %v2745 = vrcp.pop %v2743
    %v2746 = vmul.f32 %v2735, %v2744
    %v2747 = vmul.f32 %v2737, %v2745
    %2748 = vrot.lane.b32.xlu0 %v2543, 96
    %v2749 = vpop.permute.xlu0 %2748
    %2750 = vrot.lane.b32.xlu0 %v2548, 96
    %v2751 = vpop.permute.xlu0 %2750
    %v2755 = vsel %vm545, %v2746, 0
    %2757 = vmatprep.subr.mxu0 0.0
    %2758 = vmatpush1.msra.mxu0 0.0
    %2759 = vmatprep.subr.mxu0 0.0
    %2760 = vmatpush1.msra.mxu0 0.0
    %2761 = vmatprep.subr.mxu0 0.0
    %2762 = vmatpush1.msra.mxu0 0.0
    %2763 = vmatprep.subr.mxu0 0.0
    %2764 = vmatpush1.msra.mxu0 0.0
    %2765 = vmatprep.subr.mxu0 0.0
    %2766 = vmatpush1.msra.mxu0 0.0
    %2767 = vmatprep.subr.mxu0 0.0
    %2768 = vmatpush1.msra.mxu0 0.0
    %2769 = vmatprep.subr.mxu0 0.0
    %2770 = vmatpush1.msra.mxu0 0.0
    %2771 = vmatprep.subr.mxu0 0.0
    %2772 = vmatpush1.msra.mxu0 0.0
    %2773 = vmatprep.subr.mxu0 0.0
    %2774 = vmatpush1.msra.mxu0 0.0
    %2775 = vmatprep.subr.mxu0 0.0
    %2776 = vmatpush1.msra.mxu0 0.0
    %2777 = vmatprep.subr.mxu0 0.0
    %2778 = vmatpush1.msra.mxu0 0.0
    %2779 = vmatprep.subr.mxu0 0.0
    %2780 = vmatpush1.msra.mxu0 0.0
    %2781 = vmatprep.subr.mxu0 0.0
    %2782 = vmatpush1.msra.mxu0 0.0
    %2783 = vmatprep.subr.mxu0 0.0
    %2784 = vmatpush1.msra.mxu0 0.0
    %2785 = vmatprep.subr.mxu0 0.0
    %2786 = vmatpush1.msra.mxu0 %v2751
    %2787 = vmatprep.subr.mxu0 0.0
    %2788 = vmatpush1.msra.mxu0 %v2749
    %2789 = vmatprep.subr.mxu0 0.0
    %2790 = vmatpush2.msra.mxu0 0.0
    %2791 = vmatprep.subr.mxu0 0.0
    %2792 = vmatpush2.msra.mxu0 0.0
    %2793 = vmatprep.subr.mxu0 0.0
    %2794 = vmatpush2.msra.mxu0 0.0
    %2795 = vmatprep.subr.mxu0 0.0
    %2796 = vmatpush2.msra.mxu0 0.0
    %2797 = vmatprep.subr.mxu0 0.0
    %2798 = vmatpush2.msra.mxu0 0.0
    %2799 = vmatprep.subr.mxu0 0.0
    %2800 = vmatpush2.msra.mxu0 0.0
    %2801 = vmatprep.subr.mxu0 0.0
    %2802 = vmatpush2.msra.mxu0 0.0
    %2803 = vmatprep.subr.mxu0 0.0
    %2804 = vmatpush2.msra.mxu0 0.0
    %2805 = vmatprep.subr.mxu0 0.0
    %2806 = vmatpush2.msra.mxu0 0.0
    %2807 = vmatprep.subr.mxu0 0.0
    %2808 = vmatpush2.msra.mxu0 0.0
    %2809 = vmatprep.subr.mxu0 0.0
    %2810 = vmatpush2.msra.mxu0 0.0
    %2811 = vmatprep.subr.mxu0 0.0
    %2812 = vmatpush2.msra.mxu0 0.0
    %2813 = vmatprep.subr.mxu0 0.0
    %2814 = vmatpush2.msra.mxu0 0.0
    %2815 = vmatprep.subr.mxu0 0.0
    %2816 = vmatpush2.msra.mxu0 0.0
    %2817 = vmatprep.subr.mxu0 0.0
    %2818 = vmatpush2.msra.mxu0 0.0
    %2819 = vmatprep.subr.mxu0 0.0
    %2820 = vmatpush2.msra.mxu0 0.0
    %2821 = vmatprep.mubr.f32.mxu0 0.0
    %2822 = vmatmul.mubr.f32.gmra.mxu0 %v2755
    %v2823 = vpop.f32.mrf.mxu0
    %v2824 = vadd.f32 0.0, %v2823
    %v2825 = vpop.f32.mrf.mxu0
    %2826 = vdwg.mxu0
    %2827 = vrot.lane.b32.xlu0 %v2553, 96
    %v2828 = vpop.permute.xlu0 %2827
    %2829 = vrot.lane.b32.xlu0 %v2558, 96
    %v2830 = vpop.permute.xlu0 %2829
    %v2834 = vsel %vm545, %v2747, 0
    %2836 = vmatprep.subr.mxu0 0.0
    %2837 = vmatpush1.msra.mxu0 0.0
    %2838 = vmatprep.subr.mxu0 0.0
    %2839 = vmatpush1.msra.mxu0 0.0
    %2840 = vmatprep.subr.mxu0 0.0
    %2841 = vmatpush1.msra.mxu0 0.0
    %2842 = vmatprep.subr.mxu0 0.0
    %2843 = vmatpush1.msra.mxu0 0.0
    %2844 = vmatprep.subr.mxu0 0.0
    %2845 = vmatpush1.msra.mxu0 0.0
    %2846 = vmatprep.subr.mxu0 0.0
    %2847 = vmatpush1.msra.mxu0 0.0
    %2848 = vmatprep.subr.mxu0 0.0
    %2849 = vmatpush1.msra.mxu0 0.0
    %2850 = vmatprep.subr.mxu0 0.0
    %2851 = vmatpush1.msra.mxu0 0.0
    %2852 = vmatprep.subr.mxu0 0.0
    %2853 = vmatpush1.msra.mxu0 0.0
    %2854 = vmatprep.subr.mxu0 0.0
    %2855 = vmatpush1.msra.mxu0 0.0
    %2856 = vmatprep.subr.mxu0 0.0
    %2857 = vmatpush1.msra.mxu0 0.0
    %2858 = vmatprep.subr.mxu0 0.0
    %2859 = vmatpush1.msra.mxu0 0.0
    %2860 = vmatprep.subr.mxu0 0.0
    %2861 = vmatpush1.msra.mxu0 0.0
    %2862 = vmatprep.subr.mxu0 0.0
    %2863 = vmatpush1.msra.mxu0 0.0
    %2864 = vmatprep.subr.mxu0 0.0
    %2865 = vmatpush1.msra.mxu0 %v2830
    %2866 = vmatprep.subr.mxu0 0.0
    %2867 = vmatpush1.msra.mxu0 %v2828
    %2868 = vmatprep.subr.mxu0 0.0
    %2869 = vmatpush2.msra.mxu0 0.0
    %2870 = vmatprep.subr.mxu0 0.0
    %2871 = vmatpush2.msra.mxu0 0.0
    %2872 = vmatprep.subr.mxu0 0.0
    %2873 = vmatpush2.msra.mxu0 0.0
    %2874 = vmatprep.subr.mxu0 0.0
    %2875 = vmatpush2.msra.mxu0 0.0
    %2876 = vmatprep.subr.mxu0 0.0
    %2877 = vmatpush2.msra.mxu0 0.0
    %2878 = vmatprep.subr.mxu0 0.0
    %2879 = vmatpush2.msra.mxu0 0.0
    %2880 = vmatprep.subr.mxu0 0.0
    %2881 = vmatpush2.msra.mxu0 0.0
    %2882 = vmatprep.subr.mxu0 0.0
    %2883 = vmatpush2.msra.mxu0 0.0
    %2884 = vmatprep.subr.mxu0 0.0
    %2885 = vmatpush2.msra.mxu0 0.0
    %2886 = vmatprep.subr.mxu0 0.0
    %2887 = vmatpush2.msra.mxu0 0.0
    %2888 = vmatprep.subr.mxu0 0.0
    %2889 = vmatpush2.msra.mxu0 0.0
    %2890 = vmatprep.subr.mxu0 0.0
    %2891 = vmatpush2.msra.mxu0 0.0
    %2892 = vmatprep.subr.mxu0 0.0
    %2893 = vmatpush2.msra.mxu0 0.0
    %2894 = vmatprep.subr.mxu0 0.0
    %2895 = vmatpush2.msra.mxu0 0.0
    %2896 = vmatprep.subr.mxu0 0.0
    %2897 = vmatpush2.msra.mxu0 0.0
    %2898 = vmatprep.subr.mxu0 0.0
    %2899 = vmatpush2.msra.mxu0 0.0
    %2900 = vmatprep.mubr.f32.mxu0 0.0
    %2901 = vmatmul.mubr.f32.gmra.mxu0 %v2834
    %v2902 = vpop.f32.mrf.mxu0
    %v2903 = vadd.f32 0.0, %v2902
    %v2904 = vpop.f32.mrf.mxu0
    %2905 = vdwg.mxu0
    %2906 = vrot.lane.b32.xlu0 %v2455, 120
    %v2907 = vpop.permute.xlu0 %2906
    %2908 = vrot.lane.b32.xlu0 %v2543, 120
    %v2909 = vpop.permute.xlu0 %2908
    %2910 = vrot.lane.b32.xlu0 %v2548, 120
    %v2911 = vpop.permute.xlu0 %2910
    %v2912 = vsel %vm384, %v2907, 0
    %v2914 = vsel %vm384, %v2909, 0
    %v2916 = vsel %vm384, %v2911, 0
    %2918 = vmatprep.subr.mxu0 0.0
    %2919 = vmatpush1.xpose.msra.mxu0 0.0
    %2920 = vmatprep.subr.mxu0 0.0
    %2921 = vmatpush1.xpose.msra.mxu0 0.0
    %2922 = vmatprep.subr.mxu0 0.0
    %2923 = vmatpush1.xpose.msra.mxu0 0.0
    %2924 = vmatprep.subr.mxu0 0.0
    %2925 = vmatpush1.xpose.msra.mxu0 0.0
    %2926 = vmatprep.subr.mxu0 0.0
    %2927 = vmatpush1.xpose.msra.mxu0 0.0
    %2928 = vmatprep.subr.mxu0 0.0
    %2929 = vmatpush1.xpose.msra.mxu0 0.0
    %2930 = vmatprep.subr.mxu0 0.0
    %2931 = vmatpush1.xpose.msra.mxu0 0.0
    %2932 = vmatprep.subr.mxu0 0.0
    %2933 = vmatpush1.xpose.msra.mxu0 0.0
    %2934 = vmatprep.subr.mxu0 0.0
    %2935 = vmatpush1.xpose.msra.mxu0 0.0
    %2936 = vmatprep.subr.mxu0 0.0
    %2937 = vmatpush1.xpose.msra.mxu0 0.0
    %2938 = vmatprep.subr.mxu0 0.0
    %2939 = vmatpush1.xpose.msra.mxu0 0.0
    %2940 = vmatprep.subr.mxu0 0.0
    %2941 = vmatpush1.xpose.msra.mxu0 0.0
    %2942 = vmatprep.subr.mxu0 0.0
    %2943 = vmatpush1.xpose.msra.mxu0 0.0
    %2944 = vmatprep.subr.mxu0 0.0
    %2945 = vmatpush1.xpose.msra.mxu0 0.0
    %2946 = vmatprep.subr.mxu0 0.0
    %2947 = vmatpush1.xpose.msra.mxu0 %v2916
    %2948 = vmatprep.subr.mxu0 0.0
    %2949 = vmatpush1.xpose.msra.mxu0 %v2914
    %2950 = vmatprep.subr.mxu0 0.0
    %2951 = vmatpush2.xpose.msra.mxu0 0.0
    %2952 = vmatprep.subr.mxu0 0.0
    %2953 = vmatpush2.xpose.msra.mxu0 0.0
    %2954 = vmatprep.subr.mxu0 0.0
    %2955 = vmatpush2.xpose.msra.mxu0 0.0
    %2956 = vmatprep.subr.mxu0 0.0
    %2957 = vmatpush2.xpose.msra.mxu0 0.0
    %2958 = vmatprep.subr.mxu0 0.0
    %2959 = vmatpush2.xpose.msra.mxu0 0.0
    %2960 = vmatprep.subr.mxu0 0.0
    %2961 = vmatpush2.xpose.msra.mxu0 0.0
    %2962 = vmatprep.subr.mxu0 0.0
    %2963 = vmatpush2.xpose.msra.mxu0 0.0
    %2964 = vmatprep.subr.mxu0 0.0
    %2965 = vmatpush2.xpose.msra.mxu0 0.0
    %2966 = vmatprep.subr.mxu0 0.0
    %2967 = vmatpush2.xpose.msra.mxu0 0.0
    %2968 = vmatprep.subr.mxu0 0.0
    %2969 = vmatpush2.xpose.msra.mxu0 0.0
    %2970 = vmatprep.subr.mxu0 0.0
    %2971 = vmatpush2.xpose.msra.mxu0 0.0
    %2972 = vmatprep.subr.mxu0 0.0
    %2973 = vmatpush2.xpose.msra.mxu0 0.0
    %2974 = vmatprep.subr.mxu0 0.0
    %2975 = vmatpush2.xpose.msra.mxu0 0.0
    %2976 = vmatprep.subr.mxu0 0.0
    %2977 = vmatpush2.xpose.msra.mxu0 0.0
    %2978 = vmatprep.subr.mxu0 0.0
    %2979 = vmatpush2.xpose.msra.mxu0 0.0
    %2980 = vmatprep.subr.mxu0 0.0
    %2981 = vmatpush2.xpose.msra.mxu0 0.0
    %2982 = vmatprep.mubr.f32.mxu0 0.0
    %2983 = vmatmul.mubr.f32.gmra.mxu0 %v2912
    %v2984 = vpop.f32.mrf.mxu0
    %v2985 = vadd.f32 0.0, %v2984
    %v2986 = vpop.f32.mrf.mxu0
    %2987 = vdwg.mxu0
    %2988 = vrot.lane.b32.xlu0 %v2460, 120
    %v2989 = vpop.permute.xlu0 %2988
    %2990 = vrot.lane.b32.xlu0 %v2553, 120
    %v2991 = vpop.permute.xlu0 %2990
    %2992 = vrot.lane.b32.xlu0 %v2558, 120
    %v2993 = vpop.permute.xlu0 %2992
    %v2994 = vsel %vm384, %v2989, 0
    %v2996 = vsel %vm384, %v2991, 0
    %v2998 = vsel %vm384, %v2993, 0
    %3000 = vmatprep.subr.mxu0 0.0
    %3001 = vmatpush1.xpose.msra.mxu0 0.0
    %3002 = vmatprep.subr.mxu0 0.0
    %3003 = vmatpush1.xpose.msra.mxu0 0.0
    %3004 = vmatprep.subr.mxu0 0.0
    %3005 = vmatpush1.xpose.msra.mxu0 0.0
    %3006 = vmatprep.subr.mxu0 0.0
    %3007 = vmatpush1.xpose.msra.mxu0 0.0
    %3008 = vmatprep.subr.mxu0 0.0
    %3009 = vmatpush1.xpose.msra.mxu0 0.0
    %3010 = vmatprep.subr.mxu0 0.0
    %3011 = vmatpush1.xpose.msra.mxu0 0.0
    %3012 = vmatprep.subr.mxu0 0.0
    %3013 = vmatpush1.xpose.msra.mxu0 0.0
    %3014 = vmatprep.subr.mxu0 0.0
    %3015 = vmatpush1.xpose.msra.mxu0 0.0
    %3016 = vmatprep.subr.mxu0 0.0
    %3017 = vmatpush1.xpose.msra.mxu0 0.0
    %3018 = vmatprep.subr.mxu0 0.0
    %3019 = vmatpush1.xpose.msra.mxu0 0.0
    %3020 = vmatprep.subr.mxu0 0.0
    %3021 = vmatpush1.xpose.msra.mxu0 0.0
    %3022 = vmatprep.subr.mxu0 0.0
    %3023 = vmatpush1.xpose.msra.mxu0 0.0
    %3024 = vmatprep.subr.mxu0 0.0
    %3025 = vmatpush1.xpose.msra.mxu0 0.0
    %3026 = vmatprep.subr.mxu0 0.0
    %3027 = vmatpush1.xpose.msra.mxu0 0.0
    %3028 = vmatprep.subr.mxu0 0.0
    %3029 = vmatpush1.xpose.msra.mxu0 %v2998
    %3030 = vmatprep.subr.mxu0 0.0
    %3031 = vmatpush1.xpose.msra.mxu0 %v2996
    %3032 = vmatprep.subr.mxu0 0.0
    %3033 = vmatpush2.xpose.msra.mxu0 0.0
    %3034 = vmatprep.subr.mxu0 0.0
    %3035 = vmatpush2.xpose.msra.mxu0 0.0
    %3036 = vmatprep.subr.mxu0 0.0
    %3037 = vmatpush2.xpose.msra.mxu0 0.0
    %3038 = vmatprep.subr.mxu0 0.0
    %3039 = vmatpush2.xpose.msra.mxu0 0.0
    %3040 = vmatprep.subr.mxu0 0.0
    %3041 = vmatpush2.xpose.msra.mxu0 0.0
    %3042 = vmatprep.subr.mxu0 0.0
    %3043 = vmatpush2.xpose.msra.mxu0 0.0
    %3044 = vmatprep.subr.mxu0 0.0
    %3045 = vmatpush2.xpose.msra.mxu0 0.0
    %3046 = vmatprep.subr.mxu0 0.0
    %3047 = vmatpush2.xpose.msra.mxu0 0.0
    %3048 = vmatprep.subr.mxu0 0.0
    %3049 = vmatpush2.xpose.msra.mxu0 0.0
    %3050 = vmatprep.subr.mxu0 0.0
    %3051 = vmatpush2.xpose.msra.mxu0 0.0
    %3052 = vmatprep.subr.mxu0 0.0
    %3053 = vmatpush2.xpose.msra.mxu0 0.0
    %3054 = vmatprep.subr.mxu0 0.0
    %3055 = vmatpush2.xpose.msra.mxu0 0.0
    %3056 = vmatprep.subr.mxu0 0.0
    %3057 = vmatpush2.xpose.msra.mxu0 0.0
    %3058 = vmatprep.subr.mxu0 0.0
    %3059 = vmatpush2.xpose.msra.mxu0 0.0
    %3060 = vmatprep.subr.mxu0 0.0
    %3061 = vmatpush2.xpose.msra.mxu0 0.0
    %3062 = vmatprep.subr.mxu0 0.0
    %3063 = vmatpush2.xpose.msra.mxu0 0.0
    %3064 = vmatprep.mubr.f32.mxu0 0.0
    %3065 = vmatmul.mubr.f32.gmra.mxu0 %v2994
    %v3066 = vpop.f32.mrf.mxu0
    %v3067 = vadd.f32 0.0, %v3066
    %v3068 = vpop.f32.mrf.mxu0
    %3069 = vdwg.mxu0
    %v3070 = vmul.f32 %v2985, 0.35355338
    %v3071 = vmul.f32 %v3067, 0.35355338
    %v3072 = vsel %vm545, %v3070, -inf
    %3073 = vmax.xlane.f32.xlu0 %v3072
    %v3074 = vpop.xlane.xlu0 %3073
    %v3075 = vsel %vm545, %v3071, -inf
    %3076 = vmax.xlane.f32.xlu0 %v3075
    %v3077 = vpop.xlane.xlu0 %3076
    %v3078 = vsub.f32 %v3070, %v3074
    %v3079 = vsub.f32 %v3071, %v3077
    %v3080 = vmul.f32 %v3078, 1.442695
    %v3081 = vpow.pop %v3080
    %v3082 = vmul.f32 %v3079, 1.442695
    %v3083 = vpow.pop %v3082
    %v3084 = vsel %vm545, %v3081, 0.0
    %3085 = vadd.xlane.f32.xlu0 %v3084
    %v3086 = vpop.xlane.xlu0 %3085
    %v3087 = vsel %vm545, %v3083, 0.0
    %3088 = vadd.xlane.f32.xlu0 %v3087
    %v3089 = vpop.xlane.xlu0 %3088
    %v3090 = vrcp.pop %v3086
    %v3091 = vrcp.pop %v3089
    %v3092 = vmul.f32 %v3081, %v3090
    %v3093 = vmul.f32 %v3083, %v3091
    %3094 = vrot.lane.b32.xlu0 %v2543, 88
    %v3095 = vpop.permute.xlu0 %3094
    %3096 = vrot.lane.b32.xlu0 %v2548, 88
    %v3097 = vpop.permute.xlu0 %3096
    %v3101 = vsel %vm545, %v3092, 0
    %3103 = vmatprep.subr.mxu0 0.0
    %3104 = vmatpush1.msra.mxu0 0.0
    %3105 = vmatprep.subr.mxu0 0.0
    %3106 = vmatpush1.msra.mxu0 0.0
    %3107 = vmatprep.subr.mxu0 0.0
    %3108 = vmatpush1.msra.mxu0 0.0
    %3109 = vmatprep.subr.mxu0 0.0
    %3110 = vmatpush1.msra.mxu0 0.0
    %3111 = vmatprep.subr.mxu0 0.0
    %3112 = vmatpush1.msra.mxu0 0.0
    %3113 = vmatprep.subr.mxu0 0.0
    %3114 = vmatpush1.msra.mxu0 0.0
    %3115 = vmatprep.subr.mxu0 0.0
    %3116 = vmatpush1.msra.mxu0 0.0
    %3117 = vmatprep.subr.mxu0 0.0
    %3118 = vmatpush1.msra.mxu0 0.0
    %3119 = vmatprep.subr.mxu0 0.0
    %3120 = vmatpush1.msra.mxu0 0.0
    %3121 = vmatprep.subr.mxu0 0.0
    %3122 = vmatpush1.msra.mxu0 0.0
    %3123 = vmatprep.subr.mxu0 0.0
    %3124 = vmatpush1.msra.mxu0 0.0
    %3125 = vmatprep.subr.mxu0 0.0
    %3126 = vmatpush1.msra.mxu0 0.0
    %3127 = vmatprep.subr.mxu0 0.0
    %3128 = vmatpush1.msra.mxu0 0.0
    %3129 = vmatprep.subr.mxu0 0.0
    %3130 = vmatpush1.msra.mxu0 0.0
    %3131 = vmatprep.subr.mxu0 0.0
    %3132 = vmatpush1.msra.mxu0 %v3097
    %3133 = vmatprep.subr.mxu0 0.0
    %3134 = vmatpush1.msra.mxu0 %v3095
    %3135 = vmatprep.subr.mxu0 0.0
    %3136 = vmatpush2.msra.mxu0 0.0
    %3137 = vmatprep.subr.mxu0 0.0
    %3138 = vmatpush2.msra.mxu0 0.0
    %3139 = vmatprep.subr.mxu0 0.0
    %3140 = vmatpush2.msra.mxu0 0.0
    %3141 = vmatprep.subr.mxu0 0.0
    %3142 = vmatpush2.msra.mxu0 0.0
    %3143 = vmatprep.subr.mxu0 0.0
    %3144 = vmatpush2.msra.mxu0 0.0
    %3145 = vmatprep.subr.mxu0 0.0
    %3146 = vmatpush2.msra.mxu0 0.0
    %3147 = vmatprep.subr.mxu0 0.0
    %3148 = vmatpush2.msra.mxu0 0.0
    %3149 = vmatprep.subr.mxu0 0.0
    %3150 = vmatpush2.msra.mxu0 0.0
    %3151 = vmatprep.subr.mxu0 0.0
    %3152 = vmatpush2.msra.mxu0 0.0
    %3153 = vmatprep.subr.mxu0 0.0
    %3154 = vmatpush2.msra.mxu0 0.0
    %3155 = vmatprep.subr.mxu0 0.0
    %3156 = vmatpush2.msra.mxu0 0.0
    %3157 = vmatprep.subr.mxu0 0.0
    %3158 = vmatpush2.msra.mxu0 0.0
    %3159 = vmatprep.subr.mxu0 0.0
    %3160 = vmatpush2.msra.mxu0 0.0
    %3161 = vmatprep.subr.mxu0 0.0
    %3162 = vmatpush2.msra.mxu0 0.0
    %3163 = vmatprep.subr.mxu0 0.0
    %3164 = vmatpush2.msra.mxu0 0.0
    %3165 = vmatprep.subr.mxu0 0.0
    %3166 = vmatpush2.msra.mxu0 0.0
    %3167 = vmatprep.mubr.f32.mxu0 0.0
    %3168 = vmatmul.mubr.f32.gmra.mxu0 %v3101
    %v3169 = vpop.f32.mrf.mxu0
    %v3170 = vadd.f32 0.0, %v3169
    %v3171 = vpop.f32.mrf.mxu0
    %3172 = vdwg.mxu0
    %3173 = vrot.lane.b32.xlu0 %v2553, 88
    %v3174 = vpop.permute.xlu0 %3173
    %3175 = vrot.lane.b32.xlu0 %v2558, 88
    %v3176 = vpop.permute.xlu0 %3175
    %v3180 = vsel %vm545, %v3093, 0
    %3182 = vmatprep.subr.mxu0 0.0
    %3183 = vmatpush1.msra.mxu0 0.0
    %3184 = vmatprep.subr.mxu0 0.0
    %3185 = vmatpush1.msra.mxu0 0.0
    %3186 = vmatprep.subr.mxu0 0.0
    %3187 = vmatpush1.msra.mxu0 0.0
    %3188 = vmatprep.subr.mxu0 0.0
    %3189 = vmatpush1.msra.mxu0 0.0
    %3190 = vmatprep.subr.mxu0 0.0
    %3191 = vmatpush1.msra.mxu0 0.0
    %3192 = vmatprep.subr.mxu0 0.0
    %3193 = vmatpush1.msra.mxu0 0.0
    %3194 = vmatprep.subr.mxu0 0.0
    %3195 = vmatpush1.msra.mxu0 0.0
    %3196 = vmatprep.subr.mxu0 0.0
    %3197 = vmatpush1.msra.mxu0 0.0
    %3198 = vmatprep.subr.mxu0 0.0
    %3199 = vmatpush1.msra.mxu0 0.0
    %3200 = vmatprep.subr.mxu0 0.0
    %3201 = vmatpush1.msra.mxu0 0.0
    %3202 = vmatprep.subr.mxu0 0.0
    %3203 = vmatpush1.msra.mxu0 0.0
    %3204 = vmatprep.subr.mxu0 0.0
    %3205 = vmatpush1.msra.mxu0 0.0
    %3206 = vmatprep.subr.mxu0 0.0
    %3207 = vmatpush1.msra.mxu0 0.0
    %3208 = vmatprep.subr.mxu0 0.0
    %3209 = vmatpush1.msra.mxu0 0.0
    %3210 = vmatprep.subr.mxu0 0.0
    %3211 = vmatpush1.msra.mxu0 %v3176
    %3212 = vmatprep.subr.mxu0 0.0
    %3213 = vmatpush1.msra.mxu0 %v3174
    %3214 = vmatprep.subr.mxu0 0.0
    %3215 = vmatpush2.msra.mxu0 0.0
    %3216 = vmatprep.subr.mxu0 0.0
    %3217 = vmatpush2.msra.mxu0 0.0
    %3218 = vmatprep.subr.mxu0 0.0
    %3219 = vmatpush2.msra.mxu0 0.0
    %3220 = vmatprep.subr.mxu0 0.0
    %3221 = vmatpush2.msra.mxu0 0.0
    %3222 = vmatprep.subr.mxu0 0.0
    %3223 = vmatpush2.msra.mxu0 0.0
    %3224 = vmatprep.subr.mxu0 0.0
    %3225 = vmatpush2.msra.mxu0 0.0
    %3226 = vmatprep.subr.mxu0 0.0
    %3227 = vmatpush2.msra.mxu0 0.0
    %3228 = vmatprep.subr.mxu0 0.0
    %3229 = vmatpush2.msra.mxu0 0.0
    %3230 = vmatprep.subr.mxu0 0.0
    %3231 = vmatpush2.msra.mxu0 0.0
    %3232 = vmatprep.subr.mxu0 0.0
    %3233 = vmatpush2.msra.mxu0 0.0
    %3234 = vmatprep.subr.mxu0 0.0
    %3235 = vmatpush2.msra.mxu0 0.0
    %3236 = vmatprep.subr.mxu0 0.0
    %3237 = vmatpush2.msra.mxu0 0.0
    %3238 = vmatprep.subr.mxu0 0.0
    %3239 = vmatpush2.msra.mxu0 0.0
    %3240 = vmatprep.subr.mxu0 0.0
    %3241 = vmatpush2.msra.mxu0 0.0
    %3242 = vmatprep.subr.mxu0 0.0
    %3243 = vmatpush2.msra.mxu0 0.0
    %3244 = vmatprep.subr.mxu0 0.0
    %3245 = vmatpush2.msra.mxu0 0.0
    %3246 = vmatprep.mubr.f32.mxu0 0.0
    %3247 = vmatmul.mubr.f32.gmra.mxu0 %v3180
    %v3248 = vpop.f32.mrf.mxu0
    %v3249 = vadd.f32 0.0, %v3248
    %v3250 = vpop.f32.mrf.mxu0
    %3251 = vdwg.mxu0
    %v3253 = vsel %vm384, %v3170, 0
    %v3256 = vsel %vm384, %v3249, 0
    %3258 = vmatprep.subr.mxu0 0.0
    %3259 = vmatpush1.msra.mxu0 0.0
    %3260 = vmatprep.subr.mxu0 0.0
    %3261 = vmatpush1.msra.mxu0 0.0
    %3262 = vmatprep.subr.mxu0 0.0
    %3263 = vmatpush1.msra.mxu0 0.0
    %3264 = vmatprep.subr.mxu0 0.0
    %3265 = vmatpush1.msra.mxu0 0.0
    %3266 = vmatprep.subr.mxu0 0.0
    %3267 = vmatpush1.msra.mxu0 0.0
    %3268 = vmatprep.subr.mxu0 0.0
    %3269 = vmatpush1.msra.mxu0 0.0
    %3270 = vmatprep.subr.mxu0 0.0
    %3271 = vmatpush1.msra.mxu0 0.0
    %3272 = vmatprep.subr.mxu0 0.0
    %3273 = vmatpush1.msra.mxu0 0.0
    %3274 = vmatprep.subr.mxu0 0.0
    %3275 = vmatpush1.msra.mxu0 0.0
    %3276 = vmatprep.subr.mxu0 0.0
    %3277 = vmatpush1.msra.mxu0 0.0
    %3278 = vmatprep.subr.mxu0 0.0
    %3279 = vmatpush1.msra.mxu0 0.0
    %3280 = vmatprep.subr.mxu0 0.0
    %3281 = vmatpush1.msra.mxu0 0.0
    %3282 = vmatprep.subr.mxu0 0.0
    %3283 = vmatpush1.msra.mxu0 0.0
    %3284 = vmatprep.subr.mxu0 0.0
    %3285 = vmatpush1.msra.mxu0 0.0
    %3286 = vmatprep.subr.mxu0 0.0
    %3287 = vmatpush1.msra.mxu0 0.0
    %3288 = vmatprep.subr.mxu0 0.0
    %3289 = vmatpush1.msra.mxu0 %v2563
    %3290 = vmatprep.subr.mxu0 0.0
    %3291 = vmatpush2.msra.mxu0 0.0
    %3292 = vmatprep.subr.mxu0 0.0
    %3293 = vmatpush2.msra.mxu0 0.0
    %3294 = vmatprep.subr.mxu0 0.0
    %3295 = vmatpush2.msra.mxu0 0.0
    %3296 = vmatprep.subr.mxu0 0.0
    %3297 = vmatpush2.msra.mxu0 0.0
    %3298 = vmatprep.subr.mxu0 0.0
    %3299 = vmatpush2.msra.mxu0 0.0
    %3300 = vmatprep.subr.mxu0 0.0
    %3301 = vmatpush2.msra.mxu0 0.0
    %3302 = vmatprep.subr.mxu0 0.0
    %3303 = vmatpush2.msra.mxu0 0.0
    %3304 = vmatprep.subr.mxu0 0.0
    %3305 = vmatpush2.msra.mxu0 0.0
    %3306 = vmatprep.subr.mxu0 0.0
    %3307 = vmatpush2.msra.mxu0 0.0
    %3308 = vmatprep.subr.mxu0 0.0
    %3309 = vmatpush2.msra.mxu0 0.0
    %3310 = vmatprep.subr.mxu0 0.0
    %3311 = vmatpush2.msra.mxu0 0.0
    %3312 = vmatprep.subr.mxu0 0.0
    %3313 = vmatpush2.msra.mxu0 0.0
    %3314 = vmatprep.subr.mxu0 0.0
    %3315 = vmatpush2.msra.mxu0 0.0
    %3316 = vmatprep.subr.mxu0 0.0
    %3317 = vmatpush2.msra.mxu0 0.0
    %3318 = vmatprep.subr.mxu0 0.0
    %3319 = vmatpush2.msra.mxu0 0.0
    %3320 = vmatprep.subr.mxu0 0.0
    %3321 = vmatpush2.msra.mxu0 0.0
    %3322 = vmatprep.mubr.f32.mxu0 0.0
    %3323 = vmatmul.mubr.f32.gmra.mxu0 %v3253
    %v3324 = vpop.f32.mrf.mxu0
    %v3325 = vadd.f32 0.0, %v3324
    %v3326 = vpop.f32.mrf.mxu0
    %3327 = vmatprep.mubr.f32.mxu0 0.0
    %3328 = vmatmul.mubr.f32.gmra.mxu0 %v3256
    %v3329 = vpop.f32.mrf.mxu0
    %v3330 = vadd.f32 0.0, %v3329
    %v3331 = vpop.f32.mrf.mxu0
    %3332 = vdwg.mxu0
    %v3334 = vsel %vm384, %v2824, 0
    %v3337 = vsel %vm384, %v2903, 0
    %3339 = vmatprep.subr.mxu0 0.0
    %3340 = vmatpush1.msra.mxu0 0.0
    %3341 = vmatprep.subr.mxu0 0.0
    %3342 = vmatpush1.msra.mxu0 0.0
    %3343 = vmatprep.subr.mxu0 0.0
    %3344 = vmatpush1.msra.mxu0 0.0
    %3345 = vmatprep.subr.mxu0 0.0
    %3346 = vmatpush1.msra.mxu0 0.0
    %3347 = vmatprep.subr.mxu0 0.0
    %3348 = vmatpush1.msra.mxu0 0.0
    %3349 = vmatprep.subr.mxu0 0.0
    %3350 = vmatpush1.msra.mxu0 0.0
    %3351 = vmatprep.subr.mxu0 0.0
    %3352 = vmatpush1.msra.mxu0 0.0
    %3353 = vmatprep.subr.mxu0 0.0
    %3354 = vmatpush1.msra.mxu0 0.0
    %3355 = vmatprep.subr.mxu0 0.0
    %3356 = vmatpush1.msra.mxu0 0.0
    %3357 = vmatprep.subr.mxu0 0.0
    %3358 = vmatpush1.msra.mxu0 0.0
    %3359 = vmatprep.subr.mxu0 0.0
    %3360 = vmatpush1.msra.mxu0 0.0
    %3361 = vmatprep.subr.mxu0 0.0
    %3362 = vmatpush1.msra.mxu0 0.0
    %3363 = vmatprep.subr.mxu0 0.0
    %3364 = vmatpush1.msra.mxu0 0.0
    %3365 = vmatprep.subr.mxu0 0.0
    %3366 = vmatpush1.msra.mxu0 0.0
    %3367 = vmatprep.subr.mxu0 0.0
    %3368 = vmatpush1.msra.mxu0 0.0
    %3369 = vmatprep.subr.mxu0 0.0
    %3370 = vmatpush1.msra.mxu0 %v2562
    %3371 = vmatprep.subr.mxu0 0.0
    %3372 = vmatpush2.msra.mxu0 0.0
    %3373 = vmatprep.subr.mxu0 0.0
    %3374 = vmatpush2.msra.mxu0 0.0
    %3375 = vmatprep.subr.mxu0 0.0
    %3376 = vmatpush2.msra.mxu0 0.0
    %3377 = vmatprep.subr.mxu0 0.0
    %3378 = vmatpush2.msra.mxu0 0.0
    %3379 = vmatprep.subr.mxu0 0.0
    %3380 = vmatpush2.msra.mxu0 0.0
    %3381 = vmatprep.subr.mxu0 0.0
    %3382 = vmatpush2.msra.mxu0 0.0
    %3383 = vmatprep.subr.mxu0 0.0
    %3384 = vmatpush2.msra.mxu0 0.0
    %3385 = vmatprep.subr.mxu0 0.0
    %3386 = vmatpush2.msra.mxu0 0.0
    %3387 = vmatprep.subr.mxu0 0.0
    %3388 = vmatpush2.msra.mxu0 0.0
    %3389 = vmatprep.subr.mxu0 0.0
    %3390 = vmatpush2.msra.mxu0 0.0
    %3391 = vmatprep.subr.mxu0 0.0
    %3392 = vmatpush2.msra.mxu0 0.0
    %3393 = vmatprep.subr.mxu0 0.0
    %3394 = vmatpush2.msra.mxu0 0.0
    %3395 = vmatprep.subr.mxu0 0.0
    %3396 = vmatpush2.msra.mxu0 0.0
    %3397 = vmatprep.subr.mxu0 0.0
    %3398 = vmatpush2.msra.mxu0 0.0
    %3399 = vmatprep.subr.mxu0 0.0
    %3400 = vmatpush2.msra.mxu0 0.0
    %3401 = vmatprep.subr.mxu0 0.0
    %3402 = vmatpush2.msra.mxu0 0.0
    %3403 = vmatprep.mubr.f32.mxu0 0.0
    %3404 = vmatmul.mubr.f32.gmra.mxu0 %v3334
    %v3405 = vpop.f32.mrf.mxu0
    %v3406 = vadd.f32 %v3325, %v3405
    %v3407 = vpop.f32.mrf.mxu0
    %3408 = vmatprep.mubr.f32.mxu0 0.0
    %3409 = vmatmul.mubr.f32.gmra.mxu0 %v3337
    %v3410 = vpop.f32.mrf.mxu0
    %v3411 = vadd.f32 %v3330, %v3410
    %v3412 = vpop.f32.mrf.mxu0
    %3413 = vdwg.mxu0
    %3414 = vrot.lane.b32.xlu0 %v2455, 112
    %v3415 = vpop.permute.xlu0 %3414
    %3416 = vrot.lane.b32.xlu0 %v2543, 112
    %v3417 = vpop.permute.xlu0 %3416
    %3418 = vrot.lane.b32.xlu0 %v2548, 112
    %v3419 = vpop.permute.xlu0 %3418
    %v3420 = vsel %vm384, %v3415, 0
    %v3422 = vsel %vm384, %v3417, 0
    %v3424 = vsel %vm384, %v3419, 0
    %3426 = vmatprep.subr.mxu0 0.0
    %3427 = vmatpush1.xpose.msra.mxu0 0.0
    %3428 = vmatprep.subr.mxu0 0.0
    %3429 = vmatpush1.xpose.msra.mxu0 0.0
    %3430 = vmatprep.subr.mxu0 0.0
    %3431 = vmatpush1.xpose.msra.mxu0 0.0
    %3432 = vmatprep.subr.mxu0 0.0
    %3433 = vmatpush1.xpose.msra.mxu0 0.0
    %3434 = vmatprep.subr.mxu0 0.0
    %3435 = vmatpush1.xpose.msra.mxu0 0.0
    %3436 = vmatprep.subr.mxu0 0.0
    %3437 = vmatpush1.xpose.msra.mxu0 0.0
    %3438 = vmatprep.subr.mxu0 0.0
    %3439 = vmatpush1.xpose.msra.mxu0 0.0
    %3440 = vmatprep.subr.mxu0 0.0
    %3441 = vmatpush1.xpose.msra.mxu0 0.0
    %3442 = vmatprep.subr.mxu0 0.0
    %3443 = vmatpush1.xpose.msra.mxu0 0.0
    %3444 = vmatprep.subr.mxu0 0.0
    %3445 = vmatpush1.xpose.msra.mxu0 0.0
    %3446 = vmatprep.subr.mxu0 0.0
    %3447 = vmatpush1.xpose.msra.mxu0 0.0
    %3448 = vmatprep.subr.mxu0 0.0
    %3449 = vmatpush1.xpose.msra.mxu0 0.0
    %3450 = vmatprep.subr.mxu0 0.0
    %3451 = vmatpush1.xpose.msra.mxu0 0.0
    %3452 = vmatprep.subr.mxu0 0.0
    %3453 = vmatpush1.xpose.msra.mxu0 0.0
    %3454 = vmatprep.subr.mxu0 0.0
    %3455 = vmatpush1.xpose.msra.mxu0 %v3424
    %3456 = vmatprep.subr.mxu0 0.0
    %3457 = vmatpush1.xpose.msra.mxu0 %v3422
    %3458 = vmatprep.subr.mxu0 0.0
    %3459 = vmatpush2.xpose.msra.mxu0 0.0
    %3460 = vmatprep.subr.mxu0 0.0
    %3461 = vmatpush2.xpose.msra.mxu0 0.0
    %3462 = vmatprep.subr.mxu0 0.0
    %3463 = vmatpush2.xpose.msra.mxu0 0.0
    %3464 = vmatprep.subr.mxu0 0.0
    %3465 = vmatpush2.xpose.msra.mxu0 0.0
    %3466 = vmatprep.subr.mxu0 0.0
    %3467 = vmatpush2.xpose.msra.mxu0 0.0
    %3468 = vmatprep.subr.mxu0 0.0
    %3469 = vmatpush2.xpose.msra.mxu0 0.0
    %3470 = vmatprep.subr.mxu0 0.0
    %3471 = vmatpush2.xpose.msra.mxu0 0.0
    %3472 = vmatprep.subr.mxu0 0.0
    %3473 = vmatpush2.xpose.msra.mxu0 0.0
    %3474 = vmatprep.subr.mxu0 0.0
    %3475 = vmatpush2.xpose.msra.mxu0 0.0
    %3476 = vmatprep.subr.mxu0 0.0
    %3477 = vmatpush2.xpose.msra.mxu0 0.0
    %3478 = vmatprep.subr.mxu0 0.0
    %3479 = vmatpush2.xpose.msra.mxu0 0.0
    %3480 = vmatprep.subr.mxu0 0.0
    %3481 = vmatpush2.xpose.msra.mxu0 0.0
    %3482 = vmatprep.subr.mxu0 0.0
    %3483 = vmatpush2.xpose.msra.mxu0 0.0
    %3484 = vmatprep.subr.mxu0 0.0
    %3485 = vmatpush2.xpose.msra.mxu0 0.0
    %3486 = vmatprep.subr.mxu0 0.0
    %3487 = vmatpush2.xpose.msra.mxu0 0.0
    %3488 = vmatprep.subr.mxu0 0.0
    %3489 = vmatpush2.xpose.msra.mxu0 0.0
    %3490 = vmatprep.mubr.f32.mxu0 0.0
    %3491 = vmatmul.mubr.f32.gmra.mxu0 %v3420
    %v3492 = vpop.f32.mrf.mxu0
    %v3493 = vadd.f32 0.0, %v3492
    %v3494 = vpop.f32.mrf.mxu0
    %3495 = vdwg.mxu0
    %3496 = vrot.lane.b32.xlu0 %v2460, 112
    %v3497 = vpop.permute.xlu0 %3496
    %3498 = vrot.lane.b32.xlu0 %v2553, 112
    %v3499 = vpop.permute.xlu0 %3498
    %3500 = vrot.lane.b32.xlu0 %v2558, 112
    %v3501 = vpop.permute.xlu0 %3500
    %v3502 = vsel %vm384, %v3497, 0
    %v3504 = vsel %vm384, %v3499, 0
    %v3506 = vsel %vm384, %v3501, 0
    %3508 = vmatprep.subr.mxu0 0.0
    %3509 = vmatpush1.xpose.msra.mxu0 0.0
    %3510 = vmatprep.subr.mxu0 0.0
    %3511 = vmatpush1.xpose.msra.mxu0 0.0
    %3512 = vmatprep.subr.mxu0 0.0
    %3513 = vmatpush1.xpose.msra.mxu0 0.0
    %3514 = vmatprep.subr.mxu0 0.0
    %3515 = vmatpush1.xpose.msra.mxu0 0.0
    %3516 = vmatprep.subr.mxu0 0.0
    %3517 = vmatpush1.xpose.msra.mxu0 0.0
    %3518 = vmatprep.subr.mxu0 0.0
    %3519 = vmatpush1.xpose.msra.mxu0 0.0
    %3520 = vmatprep.subr.mxu0 0.0
    %3521 = vmatpush1.xpose.msra.mxu0 0.0
    %3522 = vmatprep.subr.mxu0 0.0
    %3523 = vmatpush1.xpose.msra.mxu0 0.0
    %3524 = vmatprep.subr.mxu0 0.0
    %3525 = vmatpush1.xpose.msra.mxu0 0.0
    %3526 = vmatprep.subr.mxu0 0.0
    %3527 = vmatpush1.xpose.msra.mxu0 0.0
    %3528 = vmatprep.subr.mxu0 0.0
    %3529 = vmatpush1.xpose.msra.mxu0 0.0
    %3530 = vmatprep.subr.mxu0 0.0
    %3531 = vmatpush1.xpose.msra.mxu0 0.0
    %3532 = vmatprep.subr.mxu0 0.0
    %3533 = vmatpush1.xpose.msra.mxu0 0.0
    %3534 = vmatprep.subr.mxu0 0.0
    %3535 = vmatpush1.xpose.msra.mxu0 0.0
    %3536 = vmatprep.subr.mxu0 0.0
    %3537 = vmatpush1.xpose.msra.mxu0 %v3506
    %3538 = vmatprep.subr.mxu0 0.0
    %3539 = vmatpush1.xpose.msra.mxu0 %v3504
    %3540 = vmatprep.subr.mxu0 0.0
    %3541 = vmatpush2.xpose.msra.mxu0 0.0
    %3542 = vmatprep.subr.mxu0 0.0
    %3543 = vmatpush2.xpose.msra.mxu0 0.0
    %3544 = vmatprep.subr.mxu0 0.0
    %3545 = vmatpush2.xpose.msra.mxu0 0.0
    %3546 = vmatprep.subr.mxu0 0.0
    %3547 = vmatpush2.xpose.msra.mxu0 0.0
    %3548 = vmatprep.subr.mxu0 0.0
    %3549 = vmatpush2.xpose.msra.mxu0 0.0
    %3550 = vmatprep.subr.mxu0 0.0
    %3551 = vmatpush2.xpose.msra.mxu0 0.0
    %3552 = vmatprep.subr.mxu0 0.0
    %3553 = vmatpush2.xpose.msra.mxu0 0.0
    %3554 = vmatprep.subr.mxu0 0.0
    %3555 = vmatpush2.xpose.msra.mxu0 0.0
    %3556 = vmatprep.subr.mxu0 0.0
    %3557 = vmatpush2.xpose.msra.mxu0 0.0
    %3558 = vmatprep.subr.mxu0 0.0
    %3559 = vmatpush2.xpose.msra.mxu0 0.0
    %3560 = vmatprep.subr.mxu0 0.0
    %3561 = vmatpush2.xpose.msra.mxu0 0.0
    %3562 = vmatprep.subr.mxu0 0.0
    %3563 = vmatpush2.xpose.msra.mxu0 0.0
    %3564 = vmatprep.subr.mxu0 0.0
    %3565 = vmatpush2.xpose.msra.mxu0 0.0
    %3566 = vmatprep.subr.mxu0 0.0
    %3567 = vmatpush2.xpose.msra.mxu0 0.0
    %3568 = vmatprep.subr.mxu0 0.0
    %3569 = vmatpush2.xpose.msra.mxu0 0.0
    %3570 = vmatprep.subr.mxu0 0.0
    %3571 = vmatpush2.xpose.msra.mxu0 0.0
    %3572 = vmatprep.mubr.f32.mxu0 0.0
    %3573 = vmatmul.mubr.f32.gmra.mxu0 %v3502
    %v3574 = vpop.f32.mrf.mxu0
    %v3575 = vadd.f32 0.0, %v3574
    %v3576 = vpop.f32.mrf.mxu0
    %3577 = vdwg.mxu0
    %v3578 = vmul.f32 %v3493, 0.35355338
    %v3579 = vmul.f32 %v3575, 0.35355338
    %v3580 = vsel %vm545, %v3578, -inf
    %3581 = vmax.xlane.f32.xlu0 %v3580
    %v3582 = vpop.xlane.xlu0 %3581
    %v3583 = vsel %vm545, %v3579, -inf
    %3584 = vmax.xlane.f32.xlu0 %v3583
    %v3585 = vpop.xlane.xlu0 %3584
    %v3586 = vsub.f32 %v3578, %v3582
    %v3587 = vsub.f32 %v3579, %v3585
    %v3588 = vmul.f32 %v3586, 1.442695
    %v3589 = vpow.pop %v3588
    %v3590 = vmul.f32 %v3587, 1.442695
    %v3591 = vpow.pop %v3590
    %v3592 = vsel %vm545, %v3589, 0.0
    %3593 = vadd.xlane.f32.xlu0 %v3592
    %v3594 = vpop.xlane.xlu0 %3593
    %v3595 = vsel %vm545, %v3591, 0.0
    %3596 = vadd.xlane.f32.xlu0 %v3595
    %v3597 = vpop.xlane.xlu0 %3596
    %v3598 = vrcp.pop %v3594
    %v3599 = vrcp.pop %v3597
    %v3600 = vmul.f32 %v3589, %v3598
    %v3601 = vmul.f32 %v3591, %v3599
    %3602 = vrot.lane.b32.xlu0 %v2543, 80
    %v3603 = vpop.permute.xlu0 %3602
    %3604 = vrot.lane.b32.xlu0 %v2548, 80
    %v3605 = vpop.permute.xlu0 %3604
    %v3609 = vsel %vm545, %v3600, 0
    %3611 = vmatprep.subr.mxu0 0.0
    %3612 = vmatpush1.msra.mxu0 0.0
    %3613 = vmatprep.subr.mxu0 0.0
    %3614 = vmatpush1.msra.mxu0 0.0
    %3615 = vmatprep.subr.mxu0 0.0
    %3616 = vmatpush1.msra.mxu0 0.0
    %3617 = vmatprep.subr.mxu0 0.0
    %3618 = vmatpush1.msra.mxu0 0.0
    %3619 = vmatprep.subr.mxu0 0.0
    %3620 = vmatpush1.msra.mxu0 0.0
    %3621 = vmatprep.subr.mxu0 0.0
    %3622 = vmatpush1.msra.mxu0 0.0
    %3623 = vmatprep.subr.mxu0 0.0
    %3624 = vmatpush1.msra.mxu0 0.0
    %3625 = vmatprep.subr.mxu0 0.0
    %3626 = vmatpush1.msra.mxu0 0.0
    %3627 = vmatprep.subr.mxu0 0.0
    %3628 = vmatpush1.msra.mxu0 0.0
    %3629 = vmatprep.subr.mxu0 0.0
    %3630 = vmatpush1.msra.mxu0 0.0
    %3631 = vmatprep.subr.mxu0 0.0
    %3632 = vmatpush1.msra.mxu0 0.0
    %3633 = vmatprep.subr.mxu0 0.0
    %3634 = vmatpush1.msra.mxu0 0.0
    %3635 = vmatprep.subr.mxu0 0.0
    %3636 = vmatpush1.msra.mxu0 0.0
    %3637 = vmatprep.subr.mxu0 0.0
    %3638 = vmatpush1.msra.mxu0 0.0
    %3639 = vmatprep.subr.mxu0 0.0
    %3640 = vmatpush1.msra.mxu0 %v3605
    %3641 = vmatprep.subr.mxu0 0.0
    %3642 = vmatpush1.msra.mxu0 %v3603
    %3643 = vmatprep.subr.mxu0 0.0
    %3644 = vmatpush2.msra.mxu0 0.0
    %3645 = vmatprep.subr.mxu0 0.0
    %3646 = vmatpush2.msra.mxu0 0.0
    %3647 = vmatprep.subr.mxu0 0.0
    %3648 = vmatpush2.msra.mxu0 0.0
    %3649 = vmatprep.subr.mxu0 0.0
    %3650 = vmatpush2.msra.mxu0 0.0
    %3651 = vmatprep.subr.mxu0 0.0
    %3652 = vmatpush2.msra.mxu0 0.0
    %3653 = vmatprep.subr.mxu0 0.0
    %3654 = vmatpush2.msra.mxu0 0.0
    %3655 = vmatprep.subr.mxu0 0.0
    %3656 = vmatpush2.msra.mxu0 0.0
    %3657 = vmatprep.subr.mxu0 0.0
    %3658 = vmatpush2.msra.mxu0 0.0
    %3659 = vmatprep.subr.mxu0 0.0
    %3660 = vmatpush2.msra.mxu0 0.0
    %3661 = vmatprep.subr.mxu0 0.0
    %3662 = vmatpush2.msra.mxu0 0.0
    %3663 = vmatprep.subr.mxu0 0.0
    %3664 = vmatpush2.msra.mxu0 0.0
    %3665 = vmatprep.subr.mxu0 0.0
    %3666 = vmatpush2.msra.mxu0 0.0
    %3667 = vmatprep.subr.mxu0 0.0
    %3668 = vmatpush2.msra.mxu0 0.0
    %3669 = vmatprep.subr.mxu0 0.0
    %3670 = vmatpush2.msra.mxu0 0.0
    %3671 = vmatprep.subr.mxu0 0.0
    %3672 = vmatpush2.msra.mxu0 0.0
    %3673 = vmatprep.subr.mxu0 0.0
    %3674 = vmatpush2.msra.mxu0 0.0
    %3675 = vmatprep.mubr.f32.mxu0 0.0
    %3676 = vmatmul.mubr.f32.gmra.mxu0 %v3609
    %v3677 = vpop.f32.mrf.mxu0
    %v3678 = vadd.f32 0.0, %v3677
    %v3679 = vpop.f32.mrf.mxu0
    %3680 = vdwg.mxu0
    %3681 = vrot.lane.b32.xlu0 %v2553, 80
    %v3682 = vpop.permute.xlu0 %3681
    %3683 = vrot.lane.b32.xlu0 %v2558, 80
    %v3684 = vpop.permute.xlu0 %3683
    %v3688 = vsel %vm545, %v3601, 0
    %3690 = vmatprep.subr.mxu0 0.0
    %3691 = vmatpush1.msra.mxu0 0.0
    %3692 = vmatprep.subr.mxu0 0.0
    %3693 = vmatpush1.msra.mxu0 0.0
    %3694 = vmatprep.subr.mxu0 0.0
    %3695 = vmatpush1.msra.mxu0 0.0
    %3696 = vmatprep.subr.mxu0 0.0
    %3697 = vmatpush1.msra.mxu0 0.0
    %3698 = vmatprep.subr.mxu0 0.0
    %3699 = vmatpush1.msra.mxu0 0.0
    %3700 = vmatprep.subr.mxu0 0.0
    %3701 = vmatpush1.msra.mxu0 0.0
    %3702 = vmatprep.subr.mxu0 0.0
    %3703 = vmatpush1.msra.mxu0 0.0
    %3704 = vmatprep.subr.mxu0 0.0
    %3705 = vmatpush1.msra.mxu0 0.0
    %3706 = vmatprep.subr.mxu0 0.0
    %3707 = vmatpush1.msra.mxu0 0.0
    %3708 = vmatprep.subr.mxu0 0.0
    %3709 = vmatpush1.msra.mxu0 0.0
    %3710 = vmatprep.subr.mxu0 0.0
    %3711 = vmatpush1.msra.mxu0 0.0
    %3712 = vmatprep.subr.mxu0 0.0
    %3713 = vmatpush1.msra.mxu0 0.0
    %3714 = vmatprep.subr.mxu0 0.0
    %3715 = vmatpush1.msra.mxu0 0.0
    %3716 = vmatprep.subr.mxu0 0.0
    %3717 = vmatpush1.msra.mxu0 0.0
    %3718 = vmatprep.subr.mxu0 0.0
    %3719 = vmatpush1.msra.mxu0 %v3684
    %3720 = vmatprep.subr.mxu0 0.0
    %3721 = vmatpush1.msra.mxu0 %v3682
    %3722 = vmatprep.subr.mxu0 0.0
    %3723 = vmatpush2.msra.mxu0 0.0
    %3724 = vmatprep.subr.mxu0 0.0
    %3725 = vmatpush2.msra.mxu0 0.0
    %3726 = vmatprep.subr.mxu0 0.0
    %3727 = vmatpush2.msra.mxu0 0.0
    %3728 = vmatprep.subr.mxu0 0.0
    %3729 = vmatpush2.msra.mxu0 0.0
    %3730 = vmatprep.subr.mxu0 0.0
    %3731 = vmatpush2.msra.mxu0 0.0
    %3732 = vmatprep.subr.mxu0 0.0
    %3733 = vmatpush2.msra.mxu0 0.0
    %3734 = vmatprep.subr.mxu0 0.0
    %3735 = vmatpush2.msra.mxu0 0.0
    %3736 = vmatprep.subr.mxu0 0.0
    %3737 = vmatpush2.msra.mxu0 0.0
    %3738 = vmatprep.subr.mxu0 0.0
    %3739 = vmatpush2.msra.mxu0 0.0
    %3740 = vmatprep.subr.mxu0 0.0
    %3741 = vmatpush2.msra.mxu0 0.0
    %3742 = vmatprep.subr.mxu0 0.0
    %3743 = vmatpush2.msra.mxu0 0.0
    %3744 = vmatprep.subr.mxu0 0.0
    %3745 = vmatpush2.msra.mxu0 0.0
    %3746 = vmatprep.subr.mxu0 0.0
    %3747 = vmatpush2.msra.mxu0 0.0
    %3748 = vmatprep.subr.mxu0 0.0
    %3749 = vmatpush2.msra.mxu0 0.0
    %3750 = vmatprep.subr.mxu0 0.0
    %3751 = vmatpush2.msra.mxu0 0.0
    %3752 = vmatprep.subr.mxu0 0.0
    %3753 = vmatpush2.msra.mxu0 0.0
    %3754 = vmatprep.mubr.f32.mxu0 0.0
    %3755 = vmatmul.mubr.f32.gmra.mxu0 %v3688
    %v3756 = vpop.f32.mrf.mxu0
    %v3757 = vadd.f32 0.0, %v3756
    %v3758 = vpop.f32.mrf.mxu0
    %3759 = vdwg.mxu0
    %v3761 = vsel %vm384, %v3678, 0
    %v3764 = vsel %vm384, %v3757, 0
    %3766 = vmatprep.subr.mxu0 0.0
    %3767 = vmatpush1.msra.mxu0 0.0
    %3768 = vmatprep.subr.mxu0 0.0
    %3769 = vmatpush1.msra.mxu0 0.0
    %3770 = vmatprep.subr.mxu0 0.0
    %3771 = vmatpush1.msra.mxu0 0.0
    %3772 = vmatprep.subr.mxu0 0.0
    %3773 = vmatpush1.msra.mxu0 0.0
    %3774 = vmatprep.subr.mxu0 0.0
    %3775 = vmatpush1.msra.mxu0 0.0
    %3776 = vmatprep.subr.mxu0 0.0
    %3777 = vmatpush1.msra.mxu0 0.0
    %3778 = vmatprep.subr.mxu0 0.0
    %3779 = vmatpush1.msra.mxu0 0.0
    %3780 = vmatprep.subr.mxu0 0.0
    %3781 = vmatpush1.msra.mxu0 0.0
    %3782 = vmatprep.subr.mxu0 0.0
    %3783 = vmatpush1.msra.mxu0 0.0
    %3784 = vmatprep.subr.mxu0 0.0
    %3785 = vmatpush1.msra.mxu0 0.0
    %3786 = vmatprep.subr.mxu0 0.0
    %3787 = vmatpush1.msra.mxu0 0.0
    %3788 = vmatprep.subr.mxu0 0.0
    %3789 = vmatpush1.msra.mxu0 0.0
    %3790 = vmatprep.subr.mxu0 0.0
    %3791 = vmatpush1.msra.mxu0 0.0
    %3792 = vmatprep.subr.mxu0 0.0
    %3793 = vmatpush1.msra.mxu0 0.0
    %3794 = vmatprep.subr.mxu0 0.0
    %3795 = vmatpush1.msra.mxu0 0.0
    %3796 = vmatprep.subr.mxu0 0.0
    %3797 = vmatpush1.msra.mxu0 %v2564
    %3798 = vmatprep.subr.mxu0 0.0
    %3799 = vmatpush2.msra.mxu0 0.0
    %3800 = vmatprep.subr.mxu0 0.0
    %3801 = vmatpush2.msra.mxu0 0.0
    %3802 = vmatprep.subr.mxu0 0.0
    %3803 = vmatpush2.msra.mxu0 0.0
    %3804 = vmatprep.subr.mxu0 0.0
    %3805 = vmatpush2.msra.mxu0 0.0
    %3806 = vmatprep.subr.mxu0 0.0
    %3807 = vmatpush2.msra.mxu0 0.0
    %3808 = vmatprep.subr.mxu0 0.0
    %3809 = vmatpush2.msra.mxu0 0.0
    %3810 = vmatprep.subr.mxu0 0.0
    %3811 = vmatpush2.msra.mxu0 0.0
    %3812 = vmatprep.subr.mxu0 0.0
    %3813 = vmatpush2.msra.mxu0 0.0
    %3814 = vmatprep.subr.mxu0 0.0
    %3815 = vmatpush2.msra.mxu0 0.0
    %3816 = vmatprep.subr.mxu0 0.0
    %3817 = vmatpush2.msra.mxu0 0.0
    %3818 = vmatprep.subr.mxu0 0.0
    %3819 = vmatpush2.msra.mxu0 0.0
    %3820 = vmatprep.subr.mxu0 0.0
    %3821 = vmatpush2.msra.mxu0 0.0
    %3822 = vmatprep.subr.mxu0 0.0
    %3823 = vmatpush2.msra.mxu0 0.0
    %3824 = vmatprep.subr.mxu0 0.0
    %3825 = vmatpush2.msra.mxu0 0.0
    %3826 = vmatprep.subr.mxu0 0.0
    %3827 = vmatpush2.msra.mxu0 0.0
    %3828 = vmatprep.subr.mxu0 0.0
    %3829 = vmatpush2.msra.mxu0 0.0
    %3830 = vmatprep.mubr.f32.mxu0 0.0
    %3831 = vmatmul.mubr.f32.gmra.mxu0 %v3761
    %v3832 = vpop.f32.mrf.mxu0
    %v3833 = vadd.f32 0.0, %v3832
    %v3834 = vpop.f32.mrf.mxu0
    %3835 = vmatprep.mubr.f32.mxu0 0.0
    %3836 = vmatmul.mubr.f32.gmra.mxu0 %v3764
    %v3837 = vpop.f32.mrf.mxu0
    %v3838 = vadd.f32 0.0, %v3837
    %v3839 = vpop.f32.mrf.mxu0
    %3840 = vdwg.mxu0
    %v3841 = vadd.f32 %v3406, %v3833
    %v3842 = vadd.f32 %v3411, %v3838
    %3843 = vrot.lane.b32.xlu0 %v2455, 104
    %v3844 = vpop.permute.xlu0 %3843
    %3845 = vrot.lane.b32.xlu0 %v2543, 104
    %v3846 = vpop.permute.xlu0 %3845
    %3847 = vrot.lane.b32.xlu0 %v2548, 104
    %v3848 = vpop.permute.xlu0 %3847
    %v3849 = vsel %vm384, %v3844, 0
    %v3851 = vsel %vm384, %v3846, 0
    %v3853 = vsel %vm384, %v3848, 0
    %3855 = vmatprep.subr.mxu0 0.0
    %3856 = vmatpush1.xpose.msra.mxu0 0.0
    %3857 = vmatprep.subr.mxu0 0.0
    %3858 = vmatpush1.xpose.msra.mxu0 0.0
    %3859 = vmatprep.subr.mxu0 0.0
    %3860 = vmatpush1.xpose.msra.mxu0 0.0
    %3861 = vmatprep.subr.mxu0 0.0
    %3862 = vmatpush1.xpose.msra.mxu0 0.0
    %3863 = vmatprep.subr.mxu0 0.0
    %3864 = vmatpush1.xpose.msra.mxu0 0.0
    %3865 = vmatprep.subr.mxu0 0.0
    %3866 = vmatpush1.xpose.msra.mxu0 0.0
    %3867 = vmatprep.subr.mxu0 0.0
    %3868 = vmatpush1.xpose.msra.mxu0 0.0
    %3869 = vmatprep.subr.mxu0 0.0
    %3870 = vmatpush1.xpose.msra.mxu0 0.0
    %3871 = vmatprep.subr.mxu0 0.0
    %3872 = vmatpush1.xpose.msra.mxu0 0.0
    %3873 = vmatprep.subr.mxu0 0.0
    %3874 = vmatpush1.xpose.msra.mxu0 0.0
    %3875 = vmatprep.subr.mxu0 0.0
    %3876 = vmatpush1.xpose.msra.mxu0 0.0
    %3877 = vmatprep.subr.mxu0 0.0
    %3878 = vmatpush1.xpose.msra.mxu0 0.0
    %3879 = vmatprep.subr.mxu0 0.0
    %3880 = vmatpush1.xpose.msra.mxu0 0.0
    %3881 = vmatprep.subr.mxu0 0.0
    %3882 = vmatpush1.xpose.msra.mxu0 0.0
    %3883 = vmatprep.subr.mxu0 0.0
    %3884 = vmatpush1.xpose.msra.mxu0 %v3853
    %3885 = vmatprep.subr.mxu0 0.0
    %3886 = vmatpush1.xpose.msra.mxu0 %v3851
    %3887 = vmatprep.subr.mxu0 0.0
    %3888 = vmatpush2.xpose.msra.mxu0 0.0
    %3889 = vmatprep.subr.mxu0 0.0
    %3890 = vmatpush2.xpose.msra.mxu0 0.0
    %3891 = vmatprep.subr.mxu0 0.0
    %3892 = vmatpush2.xpose.msra.mxu0 0.0
    %3893 = vmatprep.subr.mxu0 0.0
    %3894 = vmatpush2.xpose.msra.mxu0 0.0
    %3895 = vmatprep.subr.mxu0 0.0
    %3896 = vmatpush2.xpose.msra.mxu0 0.0
    %3897 = vmatprep.subr.mxu0 0.0
    %3898 = vmatpush2.xpose.msra.mxu0 0.0
    %3899 = vmatprep.subr.mxu0 0.0
    %3900 = vmatpush2.xpose.msra.mxu0 0.0
    %3901 = vmatprep.subr.mxu0 0.0
    %3902 = vmatpush2.xpose.msra.mxu0 0.0
    %3903 = vmatprep.subr.mxu0 0.0
    %3904 = vmatpush2.xpose.msra.mxu0 0.0
    %3905 = vmatprep.subr.mxu0 0.0
    %3906 = vmatpush2.xpose.msra.mxu0 0.0
    %3907 = vmatprep.subr.mxu0 0.0
    %3908 = vmatpush2.xpose.msra.mxu0 0.0
    %3909 = vmatprep.subr.mxu0 0.0
    %3910 = vmatpush2.xpose.msra.mxu0 0.0
    %3911 = vmatprep.subr.mxu0 0.0
    %3912 = vmatpush2.xpose.msra.mxu0 0.0
    %3913 = vmatprep.subr.mxu0 0.0
    %3914 = vmatpush2.xpose.msra.mxu0 0.0
    %3915 = vmatprep.subr.mxu0 0.0
    %3916 = vmatpush2.xpose.msra.mxu0 0.0
    %3917 = vmatprep.subr.mxu0 0.0
    %3918 = vmatpush2.xpose.msra.mxu0 0.0
    %3919 = vmatprep.mubr.f32.mxu0 0.0
    %3920 = vmatmul.mubr.f32.gmra.mxu0 %v3849
    %v3921 = vpop.f32.mrf.mxu0
    %v3922 = vadd.f32 0.0, %v3921
    %v3923 = vpop.f32.mrf.mxu0
    %3924 = vdwg.mxu0
    %3925 = vrot.lane.b32.xlu0 %v2460, 104
    %v3926 = vpop.permute.xlu0 %3925
    %3927 = vrot.lane.b32.xlu0 %v2553, 104
    %v3928 = vpop.permute.xlu0 %3927
    %3929 = vrot.lane.b32.xlu0 %v2558, 104
    %v3930 = vpop.permute.xlu0 %3929
    %v3931 = vsel %vm384, %v3926, 0
    %v3933 = vsel %vm384, %v3928, 0
    %v3935 = vsel %vm384, %v3930, 0
    %3937 = vmatprep.subr.mxu0 0.0
    %3938 = vmatpush1.xpose.msra.mxu0 0.0
    %3939 = vmatprep.subr.mxu0 0.0
    %3940 = vmatpush1.xpose.msra.mxu0 0.0
    %3941 = vmatprep.subr.mxu0 0.0
    %3942 = vmatpush1.xpose.msra.mxu0 0.0
    %3943 = vmatprep.subr.mxu0 0.0
    %3944 = vmatpush1.xpose.msra.mxu0 0.0
    %3945 = vmatprep.subr.mxu0 0.0
    %3946 = vmatpush1.xpose.msra.mxu0 0.0
    %3947 = vmatprep.subr.mxu0 0.0
    %3948 = vmatpush1.xpose.msra.mxu0 0.0
    %3949 = vmatprep.subr.mxu0 0.0
    %3950 = vmatpush1.xpose.msra.mxu0 0.0
    %3951 = vmatprep.subr.mxu0 0.0
    %3952 = vmatpush1.xpose.msra.mxu0 0.0
    %3953 = vmatprep.subr.mxu0 0.0
    %3954 = vmatpush1.xpose.msra.mxu0 0.0
    %3955 = vmatprep.subr.mxu0 0.0
    %3956 = vmatpush1.xpose.msra.mxu0 0.0
    %3957 = vmatprep.subr.mxu0 0.0
    %3958 = vmatpush1.xpose.msra.mxu0 0.0
    %3959 = vmatprep.subr.mxu0 0.0
    %3960 = vmatpush1.xpose.msra.mxu0 0.0
    %3961 = vmatprep.subr.mxu0 0.0
    %3962 = vmatpush1.xpose.msra.mxu0 0.0
    %3963 = vmatprep.subr.mxu0 0.0
    %3964 = vmatpush1.xpose.msra.mxu0 0.0
    %3965 = vmatprep.subr.mxu0 0.0
    %3966 = vmatpush1.xpose.msra.mxu0 %v3935
    %3967 = vmatprep.subr.mxu0 0.0
    %3968 = vmatpush1.xpose.msra.mxu0 %v3933
    %3969 = vmatprep.subr.mxu0 0.0
    %3970 = vmatpush2.xpose.msra.mxu0 0.0
    %3971 = vmatprep.subr.mxu0 0.0
    %3972 = vmatpush2.xpose.msra.mxu0 0.0
    %3973 = vmatprep.subr.mxu0 0.0
    %3974 = vmatpush2.xpose.msra.mxu0 0.0
    %3975 = vmatprep.subr.mxu0 0.0
    %3976 = vmatpush2.xpose.msra.mxu0 0.0
    %3977 = vmatprep.subr.mxu0 0.0
    %3978 = vmatpush2.xpose.msra.mxu0 0.0
    %3979 = vmatprep.subr.mxu0 0.0
    %3980 = vmatpush2.xpose.msra.mxu0 0.0
    %3981 = vmatprep.subr.mxu0 0.0
    %3982 = vmatpush2.xpose.msra.mxu0 0.0
    %3983 = vmatprep.subr.mxu0 0.0
    %3984 = vmatpush2.xpose.msra.mxu0 0.0
    %3985 = vmatprep.subr.mxu0 0.0
    %3986 = vmatpush2.xpose.msra.mxu0 0.0
    %3987 = vmatprep.subr.mxu0 0.0
    %3988 = vmatpush2.xpose.msra.mxu0 0.0
    %3989 = vmatprep.subr.mxu0 0.0
    %3990 = vmatpush2.xpose.msra.mxu0 0.0
    %3991 = vmatprep.subr.mxu0 0.0
    %3992 = vmatpush2.xpose.msra.mxu0 0.0
    %3993 = vmatprep.subr.mxu0 0.0
    %3994 = vmatpush2.xpose.msra.mxu0 0.0
    %3995 = vmatprep.subr.mxu0 0.0
    %3996 = vmatpush2.xpose.msra.mxu0 0.0
    %3997 = vmatprep.subr.mxu0 0.0
    %3998 = vmatpush2.xpose.msra.mxu0 0.0
    %3999 = vmatprep.subr.mxu0 0.0
    %4000 = vmatpush2.xpose.msra.mxu0 0.0
    %4001 = vmatprep.mubr.f32.mxu0 0.0
    %4002 = vmatmul.mubr.f32.gmra.mxu0 %v3931
    %v4003 = vpop.f32.mrf.mxu0
    %v4004 = vadd.f32 0.0, %v4003
    %v4005 = vpop.f32.mrf.mxu0
    %4006 = vdwg.mxu0
    %v4007 = vmul.f32 %v3922, 0.35355338
    %v4008 = vmul.f32 %v4004, 0.35355338
    %v4009 = vsel %vm545, %v4007, -inf
    %4010 = vmax.xlane.f32.xlu0 %v4009
    %v4011 = vpop.xlane.xlu0 %4010
    %v4012 = vsel %vm545, %v4008, -inf
    %4013 = vmax.xlane.f32.xlu0 %v4012
    %v4014 = vpop.xlane.xlu0 %4013
    %v4015 = vsub.f32 %v4007, %v4011
    %v4016 = vsub.f32 %v4008, %v4014
    %v4017 = vmul.f32 %v4015, 1.442695
    %v4018 = vpow.pop %v4017
    %v4019 = vmul.f32 %v4016, 1.442695
    %v4020 = vpow.pop %v4019
    %v4021 = vsel %vm545, %v4018, 0.0
    %4022 = vadd.xlane.f32.xlu0 %v4021
    %v4023 = vpop.xlane.xlu0 %4022
    %v4024 = vsel %vm545, %v4020, 0.0
    %4025 = vadd.xlane.f32.xlu0 %v4024
    %v4026 = vpop.xlane.xlu0 %4025
    %v4027 = vrcp.pop %v4023
    %v4028 = vrcp.pop %v4026
    %v4029 = vmul.f32 %v4018, %v4027
    %v4030 = vmul.f32 %v4020, %v4028
    %4031 = vrot.lane.b32.xlu0 %v2543, 72
    %v4032 = vpop.permute.xlu0 %4031
    %4033 = vrot.lane.b32.xlu0 %v2548, 72
    %v4034 = vpop.permute.xlu0 %4033
    %v4038 = vsel %vm545, %v4029, 0
    %4040 = vmatprep.subr.mxu0 0.0
    %4041 = vmatpush1.msra.mxu0 0.0
    %4042 = vmatprep.subr.mxu0 0.0
    %4043 = vmatpush1.msra.mxu0 0.0
    %4044 = vmatprep.subr.mxu0 0.0
    %4045 = vmatpush1.msra.mxu0 0.0
    %4046 = vmatprep.subr.mxu0 0.0
    %4047 = vmatpush1.msra.mxu0 0.0
    %4048 = vmatprep.subr.mxu0 0.0
    %4049 = vmatpush1.msra.mxu0 0.0
    %4050 = vmatprep.subr.mxu0 0.0
    %4051 = vmatpush1.msra.mxu0 0.0
    %4052 = vmatprep.subr.mxu0 0.0
    %4053 = vmatpush1.msra.mxu0 0.0
    %4054 = vmatprep.subr.mxu0 0.0
    %4055 = vmatpush1.msra.mxu0 0.0
    %4056 = vmatprep.subr.mxu0 0.0
    %4057 = vmatpush1.msra.mxu0 0.0
    %4058 = vmatprep.subr.mxu0 0.0
    %4059 = vmatpush1.msra.mxu0 0.0
    %4060 = vmatprep.subr.mxu0 0.0
    %4061 = vmatpush1.msra.mxu0 0.0
    %4062 = vmatprep.subr.mxu0 0.0
    %4063 = vmatpush1.msra.mxu0 0.0
    %4064 = vmatprep.subr.mxu0 0.0
    %4065 = vmatpush1.msra.mxu0 0.0
    %4066 = vmatprep.subr.mxu0 0.0
    %4067 = vmatpush1.msra.mxu0 0.0
    %4068 = vmatprep.subr.mxu0 0.0
    %4069 = vmatpush1.msra.mxu0 %v4034
    %4070 = vmatprep.subr.mxu0 0.0
    %4071 = vmatpush1.msra.mxu0 %v4032
    %4072 = vmatprep.subr.mxu0 0.0
    %4073 = vmatpush2.msra.mxu0 0.0
    %4074 = vmatprep.subr.mxu0 0.0
    %4075 = vmatpush2.msra.mxu0 0.0
    %4076 = vmatprep.subr.mxu0 0.0
    %4077 = vmatpush2.msra.mxu0 0.0
    %4078 = vmatprep.subr.mxu0 0.0
    %4079 = vmatpush2.msra.mxu0 0.0
    %4080 = vmatprep.subr.mxu0 0.0
    %4081 = vmatpush2.msra.mxu0 0.0
    %4082 = vmatprep.subr.mxu0 0.0
    %4083 = vmatpush2.msra.mxu0 0.0
    %4084 = vmatprep.subr.mxu0 0.0
    %4085 = vmatpush2.msra.mxu0 0.0
    %4086 = vmatprep.subr.mxu0 0.0
    %4087 = vmatpush2.msra.mxu0 0.0
    %4088 = vmatprep.subr.mxu0 0.0
    %4089 = vmatpush2.msra.mxu0 0.0
    %4090 = vmatprep.subr.mxu0 0.0
    %4091 = vmatpush2.msra.mxu0 0.0
    %4092 = vmatprep.subr.mxu0 0.0
    %4093 = vmatpush2.msra.mxu0 0.0
    %4094 = vmatprep.subr.mxu0 0.0
    %4095 = vmatpush2.msra.mxu0 0.0
    %4096 = vmatprep.subr.mxu0 0.0
    %4097 = vmatpush2.msra.mxu0 0.0
    %4098 = vmatprep.subr.mxu0 0.0
    %4099 = vmatpush2.msra.mxu0 0.0
    %4100 = vmatprep.subr.mxu0 0.0
    %4101 = vmatpush2.msra.mxu0 0.0
    %4102 = vmatprep.subr.mxu0 0.0
    %4103 = vmatpush2.msra.mxu0 0.0
    %4104 = vmatprep.mubr.f32.mxu0 0.0
    %4105 = vmatmul.mubr.f32.gmra.mxu0 %v4038
    %v4106 = vpop.f32.mrf.mxu0
    %v4107 = vadd.f32 0.0, %v4106
    %v4108 = vpop.f32.mrf.mxu0
    %4109 = vdwg.mxu0
    %4110 = vrot.lane.b32.xlu0 %v2553, 72
    %v4111 = vpop.permute.xlu0 %4110
    %4112 = vrot.lane.b32.xlu0 %v2558, 72
    %v4113 = vpop.permute.xlu0 %4112
    %v4117 = vsel %vm545, %v4030, 0
    %4119 = vmatprep.subr.mxu0 0.0
    %4120 = vmatpush1.msra.mxu0 0.0
    %4121 = vmatprep.subr.mxu0 0.0
    %4122 = vmatpush1.msra.mxu0 0.0
    %4123 = vmatprep.subr.mxu0 0.0
    %4124 = vmatpush1.msra.mxu0 0.0
    %4125 = vmatprep.subr.mxu0 0.0
    %4126 = vmatpush1.msra.mxu0 0.0
    %4127 = vmatprep.subr.mxu0 0.0
    %4128 = vmatpush1.msra.mxu0 0.0
    %4129 = vmatprep.subr.mxu0 0.0
    %4130 = vmatpush1.msra.mxu0 0.0
    %4131 = vmatprep.subr.mxu0 0.0
    %4132 = vmatpush1.msra.mxu0 0.0
    %4133 = vmatprep.subr.mxu0 0.0
    %4134 = vmatpush1.msra.mxu0 0.0
    %4135 = vmatprep.subr.mxu0 0.0
    %4136 = vmatpush1.msra.mxu0 0.0
    %4137 = vmatprep.subr.mxu0 0.0
    %4138 = vmatpush1.msra.mxu0 0.0
    %4139 = vmatprep.subr.mxu0 0.0
    %4140 = vmatpush1.msra.mxu0 0.0
    %4141 = vmatprep.subr.mxu0 0.0
    %4142 = vmatpush1.msra.mxu0 0.0
    %4143 = vmatprep.subr.mxu0 0.0
    %4144 = vmatpush1.msra.mxu0 0.0
    %4145 = vmatprep.subr.mxu0 0.0
    %4146 = vmatpush1.msra.mxu0 0.0
    %4147 = vmatprep.subr.mxu0 0.0
    %4148 = vmatpush1.msra.mxu0 %v4113
    %4149 = vmatprep.subr.mxu0 0.0
    %4150 = vmatpush1.msra.mxu0 %v4111
    %4151 = vmatprep.subr.mxu0 0.0
    %4152 = vmatpush2.msra.mxu0 0.0
    %4153 = vmatprep.subr.mxu0 0.0
    %4154 = vmatpush2.msra.mxu0 0.0
    %4155 = vmatprep.subr.mxu0 0.0
    %4156 = vmatpush2.msra.mxu0 0.0
    %4157 = vmatprep.subr.mxu0 0.0
    %4158 = vmatpush2.msra.mxu0 0.0
    %4159 = vmatprep.subr.mxu0 0.0
    %4160 = vmatpush2.msra.mxu0 0.0
    %4161 = vmatprep.subr.mxu0 0.0
    %4162 = vmatpush2.msra.mxu0 0.0
    %4163 = vmatprep.subr.mxu0 0.0
    %4164 = vmatpush2.msra.mxu0 0.0
    %4165 = vmatprep.subr.mxu0 0.0
    %4166 = vmatpush2.msra.mxu0 0.0
    %4167 = vmatprep.subr.mxu0 0.0
    %4168 = vmatpush2.msra.mxu0 0.0
    %4169 = vmatprep.subr.mxu0 0.0
    %4170 = vmatpush2.msra.mxu0 0.0
    %4171 = vmatprep.subr.mxu0 0.0
    %4172 = vmatpush2.msra.mxu0 0.0
    %4173 = vmatprep.subr.mxu0 0.0
    %4174 = vmatpush2.msra.mxu0 0.0
    %4175 = vmatprep.subr.mxu0 0.0
    %4176 = vmatpush2.msra.mxu0 0.0
    %4177 = vmatprep.subr.mxu0 0.0
    %4178 = vmatpush2.msra.mxu0 0.0
    %4179 = vmatprep.subr.mxu0 0.0
    %4180 = vmatpush2.msra.mxu0 0.0
    %4181 = vmatprep.subr.mxu0 0.0
    %4182 = vmatpush2.msra.mxu0 0.0
    %4183 = vmatprep.mubr.f32.mxu0 0.0
    %4184 = vmatmul.mubr.f32.gmra.mxu0 %v4117
    %v4185 = vpop.f32.mrf.mxu0
    %v4186 = vadd.f32 0.0, %v4185
    %v4187 = vpop.f32.mrf.mxu0
    %4188 = vdwg.mxu0
    %v4190 = vsel %vm384, %v4107, 0
    %v4193 = vsel %vm384, %v4186, 0
    %4195 = vmatprep.subr.mxu0 0.0
    %4196 = vmatpush1.msra.mxu0 0.0
    %4197 = vmatprep.subr.mxu0 0.0
    %4198 = vmatpush1.msra.mxu0 0.0
    %4199 = vmatprep.subr.mxu0 0.0
    %4200 = vmatpush1.msra.mxu0 0.0
    %4201 = vmatprep.subr.mxu0 0.0
    %4202 = vmatpush1.msra.mxu0 0.0
    %4203 = vmatprep.subr.mxu0 0.0
    %4204 = vmatpush1.msra.mxu0 0.0
    %4205 = vmatprep.subr.mxu0 0.0
    %4206 = vmatpush1.msra.mxu0 0.0
    %4207 = vmatprep.subr.mxu0 0.0
    %4208 = vmatpush1.msra.mxu0 0.0
    %4209 = vmatprep.subr.mxu0 0.0
    %4210 = vmatpush1.msra.mxu0 0.0
    %4211 = vmatprep.subr.mxu0 0.0
    %4212 = vmatpush1.msra.mxu0 0.0
    %4213 = vmatprep.subr.mxu0 0.0
    %4214 = vmatpush1.msra.mxu0 0.0
    %4215 = vmatprep.subr.mxu0 0.0
    %4216 = vmatpush1.msra.mxu0 0.0
    %4217 = vmatprep.subr.mxu0 0.0
    %4218 = vmatpush1.msra.mxu0 0.0
    %4219 = vmatprep.subr.mxu0 0.0
    %4220 = vmatpush1.msra.mxu0 0.0
    %4221 = vmatprep.subr.mxu0 0.0
    %4222 = vmatpush1.msra.mxu0 0.0
    %4223 = vmatprep.subr.mxu0 0.0
    %4224 = vmatpush1.msra.mxu0 0.0
    %4225 = vmatprep.subr.mxu0 0.0
    %4226 = vmatpush1.msra.mxu0 %v2565
    %4227 = vmatprep.subr.mxu0 0.0
    %4228 = vmatpush2.msra.mxu0 0.0
    %4229 = vmatprep.subr.mxu0 0.0
    %4230 = vmatpush2.msra.mxu0 0.0
    %4231 = vmatprep.subr.mxu0 0.0
    %4232 = vmatpush2.msra.mxu0 0.0
    %4233 = vmatprep.subr.mxu0 0.0
    %4234 = vmatpush2.msra.mxu0 0.0
    %4235 = vmatprep.subr.mxu0 0.0
    %4236 = vmatpush2.msra.mxu0 0.0
    %4237 = vmatprep.subr.mxu0 0.0
    %4238 = vmatpush2.msra.mxu0 0.0
    %4239 = vmatprep.subr.mxu0 0.0
    %4240 = vmatpush2.msra.mxu0 0.0
    %4241 = vmatprep.subr.mxu0 0.0
    %4242 = vmatpush2.msra.mxu0 0.0
    %4243 = vmatprep.subr.mxu0 0.0
    %4244 = vmatpush2.msra.mxu0 0.0
    %4245 = vmatprep.subr.mxu0 0.0
    %4246 = vmatpush2.msra.mxu0 0.0
    %4247 = vmatprep.subr.mxu0 0.0
    %4248 = vmatpush2.msra.mxu0 0.0
    %4249 = vmatprep.subr.mxu0 0.0
    %4250 = vmatpush2.msra.mxu0 0.0
    %4251 = vmatprep.subr.mxu0 0.0
    %4252 = vmatpush2.msra.mxu0 0.0
    %4253 = vmatprep.subr.mxu0 0.0
    %4254 = vmatpush2.msra.mxu0 0.0
    %4255 = vmatprep.subr.mxu0 0.0
    %4256 = vmatpush2.msra.mxu0 0.0
    %4257 = vmatprep.subr.mxu0 0.0
    %4258 = vmatpush2.msra.mxu0 0.0
    %4259 = vmatprep.mubr.f32.mxu0 0.0
    %4260 = vmatmul.mubr.f32.gmra.mxu0 %v4190
    %v4261 = vpop.f32.mrf.mxu0
    %v4262 = vadd.f32 0.0, %v4261
    %v4263 = vpop.f32.mrf.mxu0
    %4264 = vmatprep.mubr.f32.mxu0 0.0
    %4265 = vmatmul.mubr.f32.gmra.mxu0 %v4193
    %v4266 = vpop.f32.mrf.mxu0
    %v4267 = vadd.f32 0.0, %v4266
    %v4268 = vpop.f32.mrf.mxu0
    %4269 = vdwg.mxu0
    %v4270 = vadd.f32 %v3841, %v4262
    %v4271 = vadd.f32 %v3842, %v4267
    %s4272 = scalar_lea.vmem %s10, 1
    %v4273 = vld [vmem:[%s4272] sm:$0x1]
    %v4275 = vlaneseq
    %v4276 = vshrl.u32 %v4275, 7
    %v4277 = vsub.s32 0, %v4276
    %v4278 = vrot.slane %v4273, %v4277
    %v4280 = vadd.f32 %v4270, %v4278
    %v4281 = vadd.f32 %v4271, %v4278
    %s4282 = scalar_lea.vmem %s11, 4
    %v4283 = vld [vmem:[%s4282] sm:$0xf]
    %v4284 = vadd.f32 %v2367, %v4280
    %v4285 = vadd.f32 %v2368, %v4281
    %v4286 = vsel %vm193, %v4284, 0.0
    %4287 = vadd.xlane.f32.xlu0 %v4286
    %v4288 = vpop.xlane.xlu0 %4287
    %v4289 = vsel %vm193, %v4285, 0.0
    %4290 = vadd.xlane.f32.xlu0 %v4289
    %v4291 = vpop.xlane.xlu0 %4290
    %v4292 = vmul.f32 %v4288, %v2110
    %v4293 = vmul.f32 %v4291, %v2110
    %v4294 = vsub.f32 %v4284, %v4292
    %v4295 = vsub.f32 %v4285, %v4293
    %v4296 = vmul.f32 %v4294, %v4294
    %v4297 = vmul.f32 %v4295, %v4295
    %v4298 = vsel %vm193, %v4296, 0.0
    %4299 = vadd.xlane.f32.xlu0 %v4298
    %v4300 = vpop.xlane.xlu0 %4299
    %v4301 = vsel %vm193, %v4297, 0.0
    %4302 = vadd.xlane.f32.xlu0 %v4301
    %v4303 = vpop.xlane.xlu0 %4302
    %v4304 = vmul.f32 %v4300, %v2110
    %v4305 = vmul.f32 %v4303, %v2110
    %v4306 = vadd.f32 %v4304, 1e-05
    %v4307 = vadd.f32 %v4305, 1e-05
    %v4308 = vrsqrt.pop %v4306
    %v4309 = vrsqrt.pop %v4307
    %v4310 = vmul.f32 %v4294, %v4308
    %v4311 = vmul.f32 %v4295, %v4309
    %v4312 = vlaneseq
    %v4313 = vshrl.u32 %v4312, 7
    %v4314 = vsub.s32 0, %v4313
    %v4315 = vrot.slane %v4283, %v4314
    %v4316 = vmul.f32 %v4310, %v4315
    %v4317 = vmul.f32 %v4311, %v4315
    %v4318 = vlaneseq
    %v4319 = vshrl.u32 %v4318, 7
    %v4320 = vsub.s32 1, %v4319
    %v4321 = vrot.slane %v4283, %v4320
    %v4322 = vadd.f32 %v4316, %v4321
    %v4323 = vadd.f32 %v4317, %v4321
    %s4324 = scalar_lea.vmem %s12, 32
    %v4325 = vld [vmem:[%s4324] sm:$0xff]
    %v4326 = vld [vmem:[%s4324 + $0x8] sm:$0xff]
    %v4327 = vld [vmem:[%s4324 + $0x10] sm:$0xff]
    %v4328 = vld [vmem:[%s4324 + $0x18] sm:$0xff]
    %s4329 = scalar_lea.vmem %s13, 1
    %v4330 = vld [vmem:[%s4329] sm:$0x1]
    %v4332 = vlaneseq
    %v4333 = vshrl.u32 %v4332, 7
    %v4334 = vsub.s32 0, %v4333
    %v4335 = vrot.slane %v4330, %v4334
    %v4338 = vsel %vm193, %v4322, 0
    %v4341 = vsel %vm193, %v4323, 0
    %4343 = vmatprep.subr.mxu0 0.0
    %4344 = vmatpush1.msra.mxu0 0.0
    %4345 = vmatprep.subr.mxu0 0.0
    %4346 = vmatpush1.msra.mxu0 0.0
    %4347 = vmatprep.subr.mxu0 0.0
    %4348 = vmatpush1.msra.mxu0 0.0
    %4349 = vmatprep.subr.mxu0 0.0
    %4350 = vmatpush1.msra.mxu0 0.0
    %4351 = vmatprep.subr.mxu0 0.0
    %4352 = vmatpush1.msra.mxu0 0.0
    %4353 = vmatprep.subr.mxu0 0.0
    %4354 = vmatpush1.msra.mxu0 0.0
    %4355 = vmatprep.subr.mxu0 0.0
    %4356 = vmatpush1.msra.mxu0 0.0
    %4357 = vmatprep.subr.mxu0 0.0
    %4358 = vmatpush1.msra.mxu0 0.0
    %4359 = vmatprep.subr.mxu0 0.0
    %4360 = vmatpush1.msra.mxu0 0.0
    %4361 = vmatprep.subr.mxu0 0.0
    %4362 = vmatpush1.msra.mxu0 0.0
    %4363 = vmatprep.subr.mxu0 0.0
    %4364 = vmatpush1.msra.mxu0 0.0
    %4365 = vmatprep.subr.mxu0 0.0
    %4366 = vmatpush1.msra.mxu0 0.0
    %4367 = vmatprep.subr.mxu0 0.0
    %4368 = vmatpush1.msra.mxu0 %v4328
    %4369 = vmatprep.subr.mxu0 0.0
    %4370 = vmatpush1.msra.mxu0 %v4327
    %4371 = vmatprep.subr.mxu0 0.0
    %4372 = vmatpush1.msra.mxu0 %v4326
    %4373 = vmatprep.subr.mxu0 0.0
    %4374 = vmatpush1.msra.mxu0 %v4325
    %4375 = vmatprep.subr.mxu0 0.0
    %4376 = vmatpush2.msra.mxu0 0.0
    %4377 = vmatprep.subr.mxu0 0.0
    %4378 = vmatpush2.msra.mxu0 0.0
    %4379 = vmatprep.subr.mxu0 0.0
    %4380 = vmatpush2.msra.mxu0 0.0
    %4381 = vmatprep.subr.mxu0 0.0
    %4382 = vmatpush2.msra.mxu0 0.0
    %4383 = vmatprep.subr.mxu0 0.0
    %4384 = vmatpush2.msra.mxu0 0.0
    %4385 = vmatprep.subr.mxu0 0.0
    %4386 = vmatpush2.msra.mxu0 0.0
    %4387 = vmatprep.subr.mxu0 0.0
    %4388 = vmatpush2.msra.mxu0 0.0
    %4389 = vmatprep.subr.mxu0 0.0
    %4390 = vmatpush2.msra.mxu0 0.0
    %4391 = vmatprep.subr.mxu0 0.0
    %4392 = vmatpush2.msra.mxu0 0.0
    %4393 = vmatprep.subr.mxu0 0.0
    %4394 = vmatpush2.msra.mxu0 0.0
    %4395 = vmatprep.subr.mxu0 0.0
    %4396 = vmatpush2.msra.mxu0 0.0
    %4397 = vmatprep.subr.mxu0 0.0
    %4398 = vmatpush2.msra.mxu0 0.0
    %4399 = vmatprep.subr.mxu0 0.0
    %4400 = vmatpush2.msra.mxu0 0.0
    %4401 = vmatprep.subr.mxu0 0.0
    %4402 = vmatpush2.msra.mxu0 0.0
    %4403 = vmatprep.subr.mxu0 0.0
    %4404 = vmatpush2.msra.mxu0 0.0
    %4405 = vmatprep.subr.mxu0 0.0
    %4406 = vmatpush2.msra.mxu0 0.0
    %4407 = vmatprep.mubr.f32.mxu0 0.0
    %4408 = vmatmul.mubr.f32.gmra.mxu0 %v4338
    %v4409 = vpop.f32.mrf.mxu0
    %v4410 = vadd.f32 %v4335, %v4409
    %v4411 = vpop.f32.mrf.mxu0
    %4412 = vmatprep.mubr.f32.mxu0 0.0
    %4413 = vmatmul.mubr.f32.gmra.mxu0 %v4341
    %v4414 = vpop.f32.mrf.mxu0
    %v4415 = vadd.f32 %v4335, %v4414
    %v4416 = vpop.f32.mrf.mxu0
    %4417 = vdwg.mxu0
    %v4418 = vmax.f32 %v4410, 0.0
    %v4419 = vmax.f32 %v4415, 0.0
    %s4420 = scalar_lea.vmem %s14, 32
    %v4421 = vld [vmem:[%s4420] sm:$0xff]
    %v4422 = vld [vmem:[%s4420 + $0x8] sm:$0xff]
    %v4423 = vld [vmem:[%s4420 + $0x10] sm:$0xff]
    %v4424 = vld [vmem:[%s4420 + $0x18] sm:$0xff]
    %s4425 = scalar_lea.vmem %s15, 1
    %v4426 = vld [vmem:[%s4425] sm:$0x1]
    %v4428 = vlaneseq
    %v4429 = vshrl.u32 %v4428, 7
    %v4430 = vsub.s32 0, %v4429
    %v4431 = vrot.slane %v4426, %v4430
    %v4434 = vsel %vm193, %v4418, 0
    %v4437 = vsel %vm193, %v4419, 0
    %4439 = vmatprep.subr.mxu0 0.0
    %4440 = vmatpush1.msra.mxu0 0.0
    %4441 = vmatprep.subr.mxu0 0.0
    %4442 = vmatpush1.msra.mxu0 0.0
    %4443 = vmatprep.subr.mxu0 0.0
    %4444 = vmatpush1.msra.mxu0 0.0
    %4445 = vmatprep.subr.mxu0 0.0
    %4446 = vmatpush1.msra.mxu0 0.0
    %4447 = vmatprep.subr.mxu0 0.0
    %4448 = vmatpush1.msra.mxu0 0.0
    %4449 = vmatprep.subr.mxu0 0.0
    %4450 = vmatpush1.msra.mxu0 0.0
    %4451 = vmatprep.subr.mxu0 0.0
    %4452 = vmatpush1.msra.mxu0 0.0
    %4453 = vmatprep.subr.mxu0 0.0
    %4454 = vmatpush1.msra.mxu0 0.0
    %4455 = vmatprep.subr.mxu0 0.0
    %4456 = vmatpush1.msra.mxu0 0.0
    %4457 = vmatprep.subr.mxu0 0.0
    %4458 = vmatpush1.msra.mxu0 0.0
    %4459 = vmatprep.subr.mxu0 0.0
    %4460 = vmatpush1.msra.mxu0 0.0
    %4461 = vmatprep.subr.mxu0 0.0
    %4462 = vmatpush1.msra.mxu0 0.0
    %4463 = vmatprep.subr.mxu0 0.0
    %4464 = vmatpush1.msra.mxu0 %v4424
    %4465 = vmatprep.subr.mxu0 0.0
    %4466 = vmatpush1.msra.mxu0 %v4423
    %4467 = vmatprep.subr.mxu0 0.0
    %4468 = vmatpush1.msra.mxu0 %v4422
    %4469 = vmatprep.subr.mxu0 0.0
    %4470 = vmatpush1.msra.mxu0 %v4421
    %4471 = vmatprep.subr.mxu0 0.0
    %4472 = vmatpush2.msra.mxu0 0.0
    %4473 = vmatprep.subr.mxu0 0.0
    %4474 = vmatpush2.msra.mxu0 0.0
    %4475 = vmatprep.subr.mxu0 0.0
    %4476 = vmatpush2.msra.mxu0 0.0
    %4477 = vmatprep.subr.mxu0 0.0
    %4478 = vmatpush2.msra.mxu0 0.0
    %4479 = vmatprep.subr.mxu0 0.0
    %4480 = vmatpush2.msra.mxu0 0.0
    %4481 = vmatprep.subr.mxu0 0.0
    %4482 = vmatpush2.msra.mxu0 0.0
    %4483 = vmatprep.subr.mxu0 0.0
    %4484 = vmatpush2.msra.mxu0 0.0
    %4485 = vmatprep.subr.mxu0 0.0
    %4486 = vmatpush2.msra.mxu0 0.0
    %4487 = vmatprep.subr.mxu0 0.0
    %4488 = vmatpush2.msra.mxu0 0.0
    %4489 = vmatprep.subr.mxu0 0.0
    %4490 = vmatpush2.msra.mxu0 0.0
    %4491 = vmatprep.subr.mxu0 0.0
    %4492 = vmatpush2.msra.mxu0 0.0
    %4493 = vmatprep.subr.mxu0 0.0
    %4494 = vmatpush2.msra.mxu0 0.0
    %4495 = vmatprep.subr.mxu0 0.0
    %4496 = vmatpush2.msra.mxu0 0.0
    %4497 = vmatprep.subr.mxu0 0.0
    %4498 = vmatpush2.msra.mxu0 0.0
    %4499 = vmatprep.subr.mxu0 0.0
    %4500 = vmatpush2.msra.mxu0 0.0
    %4501 = vmatprep.subr.mxu0 0.0
    %4502 = vmatpush2.msra.mxu0 0.0
    %4503 = vmatprep.mubr.f32.mxu0 0.0
    %4504 = vmatmul.mubr.f32.gmra.mxu0 %v4434
    %v4505 = vpop.f32.mrf.mxu0
    %v4506 = vadd.f32 %v4431, %v4505
    %v4507 = vpop.f32.mrf.mxu0
    %4508 = vmatprep.mubr.f32.mxu0 0.0
    %4509 = vmatmul.mubr.f32.gmra.mxu0 %v4437
    %v4510 = vpop.f32.mrf.mxu0
    %v4511 = vadd.f32 %v4431, %v4510
    %v4512 = vpop.f32.mrf.mxu0
    %4513 = vdwg.mxu0
    %v4514 = vadd.f32 %v4322, %v4506
    %v4515 = vadd.f32 %v4323, %v4511
    %v4516 = vsel %vm193, %v4514, 0.0
    %4517 = vadd.xlane.f32.xlu0 %v4516
    %v4518 = vpop.xlane.xlu0 %4517
    %v4519 = vsel %vm193, %v4515, 0.0
    %4520 = vadd.xlane.f32.xlu0 %v4519
    %v4521 = vpop.xlane.xlu0 %4520
    %v4522 = vmul.f32 %v4518, %v2110
    %v4523 = vmul.f32 %v4521, %v2110
    %v4524 = vsub.f32 %v4514, %v4522
    %v4525 = vsub.f32 %v4515, %v4523
    %v4526 = vmul.f32 %v4524, %v4524
    %v4527 = vmul.f32 %v4525, %v4525
    %v4528 = vsel %vm193, %v4526, 0.0
    %4529 = vadd.xlane.f32.xlu0 %v4528
    %v4530 = vpop.xlane.xlu0 %4529
    %v4531 = vsel %vm193, %v4527, 0.0
    %4532 = vadd.xlane.f32.xlu0 %v4531
    %v4533 = vpop.xlane.xlu0 %4532
    %v4534 = vmul.f32 %v4530, %v2110
    %v4535 = vmul.f32 %v4533, %v2110
    %v4536 = vadd.f32 %v4534, 1e-05
    %v4537 = vadd.f32 %v4535, 1e-05
    %v4538 = vrsqrt.pop %v4536
    %v4539 = vrsqrt.pop %v4537
    %v4540 = vmul.f32 %v4524, %v4538
    %v4541 = vmul.f32 %v4525, %v4539
    %v4542 = vlaneseq
    %v4543 = vshrl.u32 %v4542, 7
    %v4544 = vsub.s32 2, %v4543
    %v4545 = vrot.slane %v4283, %v4544
    %v4546 = vmul.f32 %v4540, %v4545
    %v4547 = vmul.f32 %v4541, %v4545
    %v4548 = vlaneseq
    %v4549 = vshrl.u32 %v4548, 7
    %v4550 = vsub.s32 3, %v4549
    %v4551 = vrot.slane %v4283, %v4550
    %v4552 = vadd.f32 %v4546, %v4551
    %v4553 = vadd.f32 %v4547, %v4551
    %s4554 = scalar_lea.vmem %s5, 64
    %v4555 = vld [vmem:[%s4554] sm:$0xff]
    %v4556 = vld [vmem:[%s4554 + $0x8] sm:$0xff]
    %v4557 = vld [vmem:[%s4554 + $0x10] sm:$0xff]
    %v4558 = vld [vmem:[%s4554 + $0x18] sm:$0xff]
    %s4559 = scalar_lea.vmem %s6, 2
    %v4560 = vld [vmem:[%s4559] sm:$0x1]
    %v4562 = vlaneseq
    %v4563 = vshrl.u32 %v4562, 7
    %v4564 = vsub.s32 0, %v4563
    %v4565 = vrot.slane %v4560, %v4564
    %v4568 = vsel %vm193, %v4552, 0
    %v4571 = vsel %vm193, %v4553, 0
    %4573 = vmatprep.subr.mxu0 0.0
    %4574 = vmatpush1.msra.mxu0 0.0
    %4575 = vmatprep.subr.mxu0 0.0
    %4576 = vmatpush1.msra.mxu0 0.0
    %4577 = vmatprep.subr.mxu0 0.0
    %4578 = vmatpush1.msra.mxu0 0.0
    %4579 = vmatprep.subr.mxu0 0.0
    %4580 = vmatpush1.msra.mxu0 0.0
    %4581 = vmatprep.subr.mxu0 0.0
    %4582 = vmatpush1.msra.mxu0 0.0
    %4583 = vmatprep.subr.mxu0 0.0
    %4584 = vmatpush1.msra.mxu0 0.0
    %4585 = vmatprep.subr.mxu0 0.0
    %4586 = vmatpush1.msra.mxu0 0.0
    %4587 = vmatprep.subr.mxu0 0.0
    %4588 = vmatpush1.msra.mxu0 0.0
    %4589 = vmatprep.subr.mxu0 0.0
    %4590 = vmatpush1.msra.mxu0 0.0
    %4591 = vmatprep.subr.mxu0 0.0
    %4592 = vmatpush1.msra.mxu0 0.0
    %4593 = vmatprep.subr.mxu0 0.0
    %4594 = vmatpush1.msra.mxu0 0.0
    %4595 = vmatprep.subr.mxu0 0.0
    %4596 = vmatpush1.msra.mxu0 0.0
    %4597 = vmatprep.subr.mxu0 0.0
    %4598 = vmatpush1.msra.mxu0 %v4558
    %4599 = vmatprep.subr.mxu0 0.0
    %4600 = vmatpush1.msra.mxu0 %v4557
    %4601 = vmatprep.subr.mxu0 0.0
    %4602 = vmatpush1.msra.mxu0 %v4556
    %4603 = vmatprep.subr.mxu0 0.0
    %4604 = vmatpush1.msra.mxu0 %v4555
    %4605 = vmatprep.subr.mxu0 0.0
    %4606 = vmatpush2.msra.mxu0 0.0
    %4607 = vmatprep.subr.mxu0 0.0
    %4608 = vmatpush2.msra.mxu0 0.0
    %4609 = vmatprep.subr.mxu0 0.0
    %4610 = vmatpush2.msra.mxu0 0.0
    %4611 = vmatprep.subr.mxu0 0.0
    %4612 = vmatpush2.msra.mxu0 0.0
    %4613 = vmatprep.subr.mxu0 0.0
    %4614 = vmatpush2.msra.mxu0 0.0
    %4615 = vmatprep.subr.mxu0 0.0
    %4616 = vmatpush2.msra.mxu0 0.0
    %4617 = vmatprep.subr.mxu0 0.0
    %4618 = vmatpush2.msra.mxu0 0.0
    %4619 = vmatprep.subr.mxu0 0.0
    %4620 = vmatpush2.msra.mxu0 0.0
    %4621 = vmatprep.subr.mxu0 0.0
    %4622 = vmatpush2.msra.mxu0 0.0
    %4623 = vmatprep.subr.mxu0 0.0
    %4624 = vmatpush2.msra.mxu0 0.0
    %4625 = vmatprep.subr.mxu0 0.0
    %4626 = vmatpush2.msra.mxu0 0.0
    %4627 = vmatprep.subr.mxu0 0.0
    %4628 = vmatpush2.msra.mxu0 0.0
    %4629 = vmatprep.subr.mxu0 0.0
    %4630 = vmatpush2.msra.mxu0 0.0
    %4631 = vmatprep.subr.mxu0 0.0
    %4632 = vmatpush2.msra.mxu0 0.0
    %4633 = vmatprep.subr.mxu0 0.0
    %4634 = vmatpush2.msra.mxu0 0.0
    %4635 = vmatprep.subr.mxu0 0.0
    %4636 = vmatpush2.msra.mxu0 0.0
    %4637 = vmatprep.mubr.f32.mxu0 0.0
    %4638 = vmatmul.mubr.f32.gmra.mxu0 %v4568
    %v4639 = vpop.f32.mrf.mxu0
    %v4640 = vadd.f32 %v4565, %v4639
    %v4641 = vpop.f32.mrf.mxu0
    %4642 = vmatprep.mubr.f32.mxu0 0.0
    %4643 = vmatmul.mubr.f32.gmra.mxu0 %v4571
    %v4644 = vpop.f32.mrf.mxu0
    %v4645 = vadd.f32 %v4565, %v4644
    %v4646 = vpop.f32.mrf.mxu0
    %4647 = vdwg.mxu0
    %s4648 = scalar_lea.vmem %s7, 64
    %v4649 = vld [vmem:[%s4648] sm:$0xff]
    %v4650 = vld [vmem:[%s4648 + $0x8] sm:$0xff]
    %v4651 = vld [vmem:[%s4648 + $0x10] sm:$0xff]
    %v4652 = vld [vmem:[%s4648 + $0x18] sm:$0xff]
    %s4653 = scalar_lea.vmem %s8, 2
    %v4654 = vld [vmem:[%s4653] sm:$0x1]
    %v4656 = vlaneseq
    %v4657 = vshrl.u32 %v4656, 7
    %v4658 = vsub.s32 0, %v4657
    %v4659 = vrot.slane %v4654, %v4658
    %4661 = vmatprep.subr.mxu0 0.0
    %4662 = vmatpush1.msra.mxu0 0.0
    %4663 = vmatprep.subr.mxu0 0.0
    %4664 = vmatpush1.msra.mxu0 0.0
    %4665 = vmatprep.subr.mxu0 0.0
    %4666 = vmatpush1.msra.mxu0 0.0
    %4667 = vmatprep.subr.mxu0 0.0
    %4668 = vmatpush1.msra.mxu0 0.0
    %4669 = vmatprep.subr.mxu0 0.0
    %4670 = vmatpush1.msra.mxu0 0.0
    %4671 = vmatprep.subr.mxu0 0.0
    %4672 = vmatpush1.msra.mxu0 0.0
    %4673 = vmatprep.subr.mxu0 0.0
    %4674 = vmatpush1.msra.mxu0 0.0
    %4675 = vmatprep.subr.mxu0 0.0
    %4676 = vmatpush1.msra.mxu0 0.0
    %4677 = vmatprep.subr.mxu0 0.0
    %4678 = vmatpush1.msra.mxu0 0.0
    %4679 = vmatprep.subr.mxu0 0.0
    %4680 = vmatpush1.msra.mxu0 0.0
    %4681 = vmatprep.subr.mxu0 0.0
    %4682 = vmatpush1.msra.mxu0 0.0
    %4683 = vmatprep.subr.mxu0 0.0
    %4684 = vmatpush1.msra.mxu0 0.0
    %4685 = vmatprep.subr.mxu0 0.0
    %4686 = vmatpush1.msra.mxu0 %v4652
    %4687 = vmatprep.subr.mxu0 0.0
    %4688 = vmatpush1.msra.mxu0 %v4651
    %4689 = vmatprep.subr.mxu0 0.0
    %4690 = vmatpush1.msra.mxu0 %v4650
    %4691 = vmatprep.subr.mxu0 0.0
    %4692 = vmatpush1.msra.mxu0 %v4649
    %4693 = vmatprep.subr.mxu0 0.0
    %4694 = vmatpush2.msra.mxu0 0.0
    %4695 = vmatprep.subr.mxu0 0.0
    %4696 = vmatpush2.msra.mxu0 0.0
    %4697 = vmatprep.subr.mxu0 0.0
    %4698 = vmatpush2.msra.mxu0 0.0
    %4699 = vmatprep.subr.mxu0 0.0
    %4700 = vmatpush2.msra.mxu0 0.0
    %4701 = vmatprep.subr.mxu0 0.0
    %4702 = vmatpush2.msra.mxu0 0.0
    %4703 = vmatprep.subr.mxu0 0.0
    %4704 = vmatpush2.msra.mxu0 0.0
    %4705 = vmatprep.subr.mxu0 0.0
    %4706 = vmatpush2.msra.mxu0 0.0
    %4707 = vmatprep.subr.mxu0 0.0
    %4708 = vmatpush2.msra.mxu0 0.0
    %4709 = vmatprep.subr.mxu0 0.0
    %4710 = vmatpush2.msra.mxu0 0.0
    %4711 = vmatprep.subr.mxu0 0.0
    %4712 = vmatpush2.msra.mxu0 0.0
    %4713 = vmatprep.subr.mxu0 0.0
    %4714 = vmatpush2.msra.mxu0 0.0
    %4715 = vmatprep.subr.mxu0 0.0
    %4716 = vmatpush2.msra.mxu0 0.0
    %4717 = vmatprep.subr.mxu0 0.0
    %4718 = vmatpush2.msra.mxu0 0.0
    %4719 = vmatprep.subr.mxu0 0.0
    %4720 = vmatpush2.msra.mxu0 0.0
    %4721 = vmatprep.subr.mxu0 0.0
    %4722 = vmatpush2.msra.mxu0 0.0
    %4723 = vmatprep.subr.mxu0 0.0
    %4724 = vmatpush2.msra.mxu0 0.0
    %4725 = vmatprep.mubr.f32.mxu0 0.0
    %4726 = vmatmul.mubr.f32.gmra.mxu0 %v284
    %v4727 = vpop.f32.mrf.mxu0
    %v4728 = vadd.f32 %v4659, %v4727
    %v4729 = vpop.f32.mrf.mxu0
    %4730 = vmatprep.mubr.f32.mxu0 0.0
    %4731 = vmatmul.mubr.f32.gmra.mxu0 %v287
    %v4732 = vpop.f32.mrf.mxu0
    %v4733 = vadd.f32 %v4659, %v4732
    %v4734 = vpop.f32.mrf.mxu0
    %4735 = vmatprep.mubr.f32.mxu0 0.0
    %4736 = vmatmul.mubr.f32.gmra.mxu0 %v290
    %v4737 = vpop.f32.mrf.mxu0
    %v4738 = vadd.f32 %v4659, %v4737
    %v4739 = vpop.f32.mrf.mxu0
    %4740 = vmatprep.mubr.f32.mxu0 0.0
    %4741 = vmatmul.mubr.f32.gmra.mxu0 %v293
    %v4742 = vpop.f32.mrf.mxu0
    %v4743 = vadd.f32 %v4659, %v4742
    %v4744 = vpop.f32.mrf.mxu0
    %4745 = vdwg.mxu0
    %s4746 = scalar_lea.vmem %s9, 64
    %v4747 = vld [vmem:[%s4746] sm:$0xff]
    %v4748 = vld [vmem:[%s4746 + $0x8] sm:$0xff]
    %v4749 = vld [vmem:[%s4746 + $0x10] sm:$0xff]
    %v4750 = vld [vmem:[%s4746 + $0x18] sm:$0xff]
    %v4752 = vsel %vm384, %v4640, 0
    %v4755 = vsel %vm384, %v4728, 0
    %v4758 = vsel %vm384, %v4733, 0
    %4760 = vmatprep.subr.mxu0 0.0
    %4761 = vmatpush1.xpose.msra.mxu0 0.0
    %4762 = vmatprep.subr.mxu0 0.0
    %4763 = vmatpush1.xpose.msra.mxu0 0.0
    %4764 = vmatprep.subr.mxu0 0.0
    %4765 = vmatpush1.xpose.msra.mxu0 0.0
    %4766 = vmatprep.subr.mxu0 0.0
    %4767 = vmatpush1.xpose.msra.mxu0 0.0
    %4768 = vmatprep.subr.mxu0 0.0
    %4769 = vmatpush1.xpose.msra.mxu0 0.0
    %4770 = vmatprep.subr.mxu0 0.0
    %4771 = vmatpush1.xpose.msra.mxu0 0.0
    %4772 = vmatprep.subr.mxu0 0.0
    %4773 = vmatpush1.xpose.msra.mxu0 0.0
    %4774 = vmatprep.subr.mxu0 0.0
    %4775 = vmatpush1.xpose.msra.mxu0 0.0
    %4776 = vmatprep.subr.mxu0 0.0
    %4777 = vmatpush1.xpose.msra.mxu0 0.0
    %4778 = vmatprep.subr.mxu0 0.0
    %4779 = vmatpush1.xpose.msra.mxu0 0.0
    %4780 = vmatprep.subr.mxu0 0.0
    %4781 = vmatpush1.xpose.msra.mxu0 0.0
    %4782 = vmatprep.subr.mxu0 0.0
    %4783 = vmatpush1.xpose.msra.mxu0 0.0
    %4784 = vmatprep.subr.mxu0 0.0
    %4785 = vmatpush1.xpose.msra.mxu0 0.0
    %4786 = vmatprep.subr.mxu0 0.0
    %4787 = vmatpush1.xpose.msra.mxu0 0.0
    %4788 = vmatprep.subr.mxu0 0.0
    %4789 = vmatpush1.xpose.msra.mxu0 %v4758
    %4790 = vmatprep.subr.mxu0 0.0
    %4791 = vmatpush1.xpose.msra.mxu0 %v4755
    %4792 = vmatprep.subr.mxu0 0.0
    %4793 = vmatpush2.xpose.msra.mxu0 0.0
    %4794 = vmatprep.subr.mxu0 0.0
    %4795 = vmatpush2.xpose.msra.mxu0 0.0
    %4796 = vmatprep.subr.mxu0 0.0
    %4797 = vmatpush2.xpose.msra.mxu0 0.0
    %4798 = vmatprep.subr.mxu0 0.0
    %4799 = vmatpush2.xpose.msra.mxu0 0.0
    %4800 = vmatprep.subr.mxu0 0.0
    %4801 = vmatpush2.xpose.msra.mxu0 0.0
    %4802 = vmatprep.subr.mxu0 0.0
    %4803 = vmatpush2.xpose.msra.mxu0 0.0
    %4804 = vmatprep.subr.mxu0 0.0
    %4805 = vmatpush2.xpose.msra.mxu0 0.0
    %4806 = vmatprep.subr.mxu0 0.0
    %4807 = vmatpush2.xpose.msra.mxu0 0.0
    %4808 = vmatprep.subr.mxu0 0.0
    %4809 = vmatpush2.xpose.msra.mxu0 0.0
    %4810 = vmatprep.subr.mxu0 0.0
    %4811 = vmatpush2.xpose.msra.mxu0 0.0
    %4812 = vmatprep.subr.mxu0 0.0
    %4813 = vmatpush2.xpose.msra.mxu0 0.0
    %4814 = vmatprep.subr.mxu0 0.0
    %4815 = vmatpush2.xpose.msra.mxu0 0.0
    %4816 = vmatprep.subr.mxu0 0.0
    %4817 = vmatpush2.xpose.msra.mxu0 0.0
    %4818 = vmatprep.subr.mxu0 0.0
    %4819 = vmatpush2.xpose.msra.mxu0 0.0
    %4820 = vmatprep.subr.mxu0 0.0
    %4821 = vmatpush2.xpose.msra.mxu0 0.0
    %4822 = vmatprep.subr.mxu0 0.0
    %4823 = vmatpush2.xpose.msra.mxu0 0.0
    %4824 = vmatprep.mubr.f32.mxu0 0.0
    %4825 = vmatmul.mubr.f32.gmra.mxu0 %v4752
    %v4826 = vpop.f32.mrf.mxu0
    %v4827 = vadd.f32 0.0, %v4826
    %v4828 = vpop.f32.mrf.mxu0
    %4829 = vdwg.mxu0
    %v4831 = vsel %vm384, %v4645, 0
    %v4834 = vsel %vm384, %v4738, 0
    %v4837 = vsel %vm384, %v4743, 0
    %4839 = vmatprep.subr.mxu0 0.0
    %4840 = vmatpush1.xpose.msra.mxu0 0.0
    %4841 = vmatprep.subr.mxu0 0.0
    %4842 = vmatpush1.xpose.msra.mxu0 0.0
    %4843 = vmatprep.subr.mxu0 0.0
    %4844 = vmatpush1.xpose.msra.mxu0 0.0
    %4845 = vmatprep.subr.mxu0 0.0
    %4846 = vmatpush1.xpose.msra.mxu0 0.0
    %4847 = vmatprep.subr.mxu0 0.0
    %4848 = vmatpush1.xpose.msra.mxu0 0.0
    %4849 = vmatprep.subr.mxu0 0.0
    %4850 = vmatpush1.xpose.msra.mxu0 0.0
    %4851 = vmatprep.subr.mxu0 0.0
    %4852 = vmatpush1.xpose.msra.mxu0 0.0
    %4853 = vmatprep.subr.mxu0 0.0
    %4854 = vmatpush1.xpose.msra.mxu0 0.0
    %4855 = vmatprep.subr.mxu0 0.0
    %4856 = vmatpush1.xpose.msra.mxu0 0.0
    %4857 = vmatprep.subr.mxu0 0.0
    %4858 = vmatpush1.xpose.msra.mxu0 0.0
    %4859 = vmatprep.subr.mxu0 0.0
    %4860 = vmatpush1.xpose.msra.mxu0 0.0
    %4861 = vmatprep.subr.mxu0 0.0
    %4862 = vmatpush1.xpose.msra.mxu0 0.0
    %4863 = vmatprep.subr.mxu0 0.0
    %4864 = vmatpush1.xpose.msra.mxu0 0.0
    %4865 = vmatprep.subr.mxu0 0.0
    %4866 = vmatpush1.xpose.msra.mxu0 0.0
    %4867 = vmatprep.subr.mxu0 0.0
    %4868 = vmatpush1.xpose.msra.mxu0 %v4837
    %4869 = vmatprep.subr.mxu0 0.0
    %4870 = vmatpush1.xpose.msra.mxu0 %v4834
    %4871 = vmatprep.subr.mxu0 0.0
    %4872 = vmatpush2.xpose.msra.mxu0 0.0
    %4873 = vmatprep.subr.mxu0 0.0
    %4874 = vmatpush2.xpose.msra.mxu0 0.0
    %4875 = vmatprep.subr.mxu0 0.0
    %4876 = vmatpush2.xpose.msra.mxu0 0.0
    %4877 = vmatprep.subr.mxu0 0.0
    %4878 = vmatpush2.xpose.msra.mxu0 0.0
    %4879 = vmatprep.subr.mxu0 0.0
    %4880 = vmatpush2.xpose.msra.mxu0 0.0
    %4881 = vmatprep.subr.mxu0 0.0
    %4882 = vmatpush2.xpose.msra.mxu0 0.0
    %4883 = vmatprep.subr.mxu0 0.0
    %4884 = vmatpush2.xpose.msra.mxu0 0.0
    %4885 = vmatprep.subr.mxu0 0.0
    %4886 = vmatpush2.xpose.msra.mxu0 0.0
    %4887 = vmatprep.subr.mxu0 0.0
    %4888 = vmatpush2.xpose.msra.mxu0 0.0
    %4889 = vmatprep.subr.mxu0 0.0
    %4890 = vmatpush2.xpose.msra.mxu0 0.0
    %4891 = vmatprep.subr.mxu0 0.0
    %4892 = vmatpush2.xpose.msra.mxu0 0.0
    %4893 = vmatprep.subr.mxu0 0.0
    %4894 = vmatpush2.xpose.msra.mxu0 0.0
    %4895 = vmatprep.subr.mxu0 0.0
    %4896 = vmatpush2.xpose.msra.mxu0 0.0
    %4897 = vmatprep.subr.mxu0 0.0
    %4898 = vmatpush2.xpose.msra.mxu0 0.0
    %4899 = vmatprep.subr.mxu0 0.0
    %4900 = vmatpush2.xpose.msra.mxu0 0.0
    %4901 = vmatprep.subr.mxu0 0.0
    %4902 = vmatpush2.xpose.msra.mxu0 0.0
    %4903 = vmatprep.mubr.f32.mxu0 0.0
    %4904 = vmatmul.mubr.f32.gmra.mxu0 %v4831
    %v4905 = vpop.f32.mrf.mxu0
    %v4906 = vadd.f32 0.0, %v4905
    %v4907 = vpop.f32.mrf.mxu0
    %4908 = vdwg.mxu0
    %v4909 = vmul.f32 %v4827, 0.35355338
    %v4910 = vmul.f32 %v4906, 0.35355338
    %v4911 = vsel %vm545, %v4909, -inf
    %4912 = vmax.xlane.f32.xlu0 %v4911
    %v4913 = vpop.xlane.xlu0 %4912
    %v4914 = vsel %vm545, %v4910, -inf
    %4915 = vmax.xlane.f32.xlu0 %v4914
    %v4916 = vpop.xlane.xlu0 %4915
    %v4917 = vsub.f32 %v4909, %v4913
    %v4918 = vsub.f32 %v4910, %v4916
    %v4919 = vmul.f32 %v4917, 1.442695
    %v4920 = vpow.pop %v4919
    %v4921 = vmul.f32 %v4918, 1.442695
    %v4922 = vpow.pop %v4921
    %v4923 = vsel %vm545, %v4920, 0.0
    %4924 = vadd.xlane.f32.xlu0 %v4923
    %v4925 = vpop.xlane.xlu0 %4924
    %v4926 = vsel %vm545, %v4922, 0.0
    %4927 = vadd.xlane.f32.xlu0 %v4926
    %v4928 = vpop.xlane.xlu0 %4927
    %v4929 = vrcp.pop %v4925
    %v4930 = vrcp.pop %v4928
    %v4931 = vmul.f32 %v4920, %v4929
    %v4932 = vmul.f32 %v4922, %v4930
    %4933 = vrot.lane.b32.xlu0 %v4728, 96
    %v4934 = vpop.permute.xlu0 %4933
    %4935 = vrot.lane.b32.xlu0 %v4733, 96
    %v4936 = vpop.permute.xlu0 %4935
    %v4940 = vsel %vm545, %v4931, 0
    %4942 = vmatprep.subr.mxu0 0.0
    %4943 = vmatpush1.msra.mxu0 0.0
    %4944 = vmatprep.subr.mxu0 0.0
    %4945 = vmatpush1.msra.mxu0 0.0
    %4946 = vmatprep.subr.mxu0 0.0
    %4947 = vmatpush1.msra.mxu0 0.0
    %4948 = vmatprep.subr.mxu0 0.0
    %4949 = vmatpush1.msra.mxu0 0.0
    %4950 = vmatprep.subr.mxu0 0.0
    %4951 = vmatpush1.msra.mxu0 0.0
    %4952 = vmatprep.subr.mxu0 0.0
    %4953 = vmatpush1.msra.mxu0 0.0
    %4954 = vmatprep.subr.mxu0 0.0
    %4955 = vmatpush1.msra.mxu0 0.0
    %4956 = vmatprep.subr.mxu0 0.0
    %4957 = vmatpush1.msra.mxu0 0.0
    %4958 = vmatprep.subr.mxu0 0.0
    %4959 = vmatpush1.msra.mxu0 0.0
    %4960 = vmatprep.subr.mxu0 0.0
    %4961 = vmatpush1.msra.mxu0 0.0
    %4962 = vmatprep.subr.mxu0 0.0
    %4963 = vmatpush1.msra.mxu0 0.0
    %4964 = vmatprep.subr.mxu0 0.0
    %4965 = vmatpush1.msra.mxu0 0.0
    %4966 = vmatprep.subr.mxu0 0.0
    %4967 = vmatpush1.msra.mxu0 0.0
    %4968 = vmatprep.subr.mxu0 0.0
    %4969 = vmatpush1.msra.mxu0 0.0
    %4970 = vmatprep.subr.mxu0 0.0
    %4971 = vmatpush1.msra.mxu0 %v4936
    %4972 = vmatprep.subr.mxu0 0.0
    %4973 = vmatpush1.msra.mxu0 %v4934
    %4974 = vmatprep.subr.mxu0 0.0
    %4975 = vmatpush2.msra.mxu0 0.0
    %4976 = vmatprep.subr.mxu0 0.0
    %4977 = vmatpush2.msra.mxu0 0.0
    %4978 = vmatprep.subr.mxu0 0.0
    %4979 = vmatpush2.msra.mxu0 0.0
    %4980 = vmatprep.subr.mxu0 0.0
    %4981 = vmatpush2.msra.mxu0 0.0
    %4982 = vmatprep.subr.mxu0 0.0
    %4983 = vmatpush2.msra.mxu0 0.0
    %4984 = vmatprep.subr.mxu0 0.0
    %4985 = vmatpush2.msra.mxu0 0.0
    %4986 = vmatprep.subr.mxu0 0.0
    %4987 = vmatpush2.msra.mxu0 0.0
    %4988 = vmatprep.subr.mxu0 0.0
    %4989 = vmatpush2.msra.mxu0 0.0
    %4990 = vmatprep.subr.mxu0 0.0
    %4991 = vmatpush2.msra.mxu0 0.0
    %4992 = vmatprep.subr.mxu0 0.0
    %4993 = vmatpush2.msra.mxu0 0.0
    %4994 = vmatprep.subr.mxu0 0.0
    %4995 = vmatpush2.msra.mxu0 0.0
    %4996 = vmatprep.subr.mxu0 0.0
    %4997 = vmatpush2.msra.mxu0 0.0
    %4998 = vmatprep.subr.mxu0 0.0
    %4999 = vmatpush2.msra.mxu0 0.0
    %5000 = vmatprep.subr.mxu0 0.0
    %5001 = vmatpush2.msra.mxu0 0.0
    %5002 = vmatprep.subr.mxu0 0.0
    %5003 = vmatpush2.msra.mxu0 0.0
    %5004 = vmatprep.subr.mxu0 0.0
    %5005 = vmatpush2.msra.mxu0 0.0
    %5006 = vmatprep.mubr.f32.mxu0 0.0
    %5007 = vmatmul.mubr.f32.gmra.mxu0 %v4940
    %v5008 = vpop.f32.mrf.mxu0
    %v5009 = vadd.f32 0.0, %v5008
    %v5010 = vpop.f32.mrf.mxu0
    %5011 = vdwg.mxu0
    %5012 = vrot.lane.b32.xlu0 %v4738, 96
    %v5013 = vpop.permute.xlu0 %5012
    %5014 = vrot.lane.b32.xlu0 %v4743, 96
    %v5015 = vpop.permute.xlu0 %5014
    %v5019 = vsel %vm545, %v4932, 0
    %5021 = vmatprep.subr.mxu0 0.0
    %5022 = vmatpush1.msra.mxu0 0.0
    %5023 = vmatprep.subr.mxu0 0.0
    %5024 = vmatpush1.msra.mxu0 0.0
    %5025 = vmatprep.subr.mxu0 0.0
    %5026 = vmatpush1.msra.mxu0 0.0
    %5027 = vmatprep.subr.mxu0 0.0
    %5028 = vmatpush1.msra.mxu0 0.0
    %5029 = vmatprep.subr.mxu0 0.0
    %5030 = vmatpush1.msra.mxu0 0.0
    %5031 = vmatprep.subr.mxu0 0.0
    %5032 = vmatpush1.msra.mxu0 0.0
    %5033 = vmatprep.subr.mxu0 0.0
    %5034 = vmatpush1.msra.mxu0 0.0
    %5035 = vmatprep.subr.mxu0 0.0
    %5036 = vmatpush1.msra.mxu0 0.0
    %5037 = vmatprep.subr.mxu0 0.0
    %5038 = vmatpush1.msra.mxu0 0.0
    %5039 = vmatprep.subr.mxu0 0.0
    %5040 = vmatpush1.msra.mxu0 0.0
    %5041 = vmatprep.subr.mxu0 0.0
    %5042 = vmatpush1.msra.mxu0 0.0
    %5043 = vmatprep.subr.mxu0 0.0
    %5044 = vmatpush1.msra.mxu0 0.0
    %5045 = vmatprep.subr.mxu0 0.0
    %5046 = vmatpush1.msra.mxu0 0.0
    %5047 = vmatprep.subr.mxu0 0.0
    %5048 = vmatpush1.msra.mxu0 0.0
    %5049 = vmatprep.subr.mxu0 0.0
    %5050 = vmatpush1.msra.mxu0 %v5015
    %5051 = vmatprep.subr.mxu0 0.0
    %5052 = vmatpush1.msra.mxu0 %v5013
    %5053 = vmatprep.subr.mxu0 0.0
    %5054 = vmatpush2.msra.mxu0 0.0
    %5055 = vmatprep.subr.mxu0 0.0
    %5056 = vmatpush2.msra.mxu0 0.0
    %5057 = vmatprep.subr.mxu0 0.0
    %5058 = vmatpush2.msra.mxu0 0.0
    %5059 = vmatprep.subr.mxu0 0.0
    %5060 = vmatpush2.msra.mxu0 0.0
    %5061 = vmatprep.subr.mxu0 0.0
    %5062 = vmatpush2.msra.mxu0 0.0
    %5063 = vmatprep.subr.mxu0 0.0
    %5064 = vmatpush2.msra.mxu0 0.0
    %5065 = vmatprep.subr.mxu0 0.0
    %5066 = vmatpush2.msra.mxu0 0.0
    %5067 = vmatprep.subr.mxu0 0.0
    %5068 = vmatpush2.msra.mxu0 0.0
    %5069 = vmatprep.subr.mxu0 0.0
    %5070 = vmatpush2.msra.mxu0 0.0
    %5071 = vmatprep.subr.mxu0 0.0
    %5072 = vmatpush2.msra.mxu0 0.0
    %5073 = vmatprep.subr.mxu0 0.0
    %5074 = vmatpush2.msra.mxu0 0.0
    %5075 = vmatprep.subr.mxu0 0.0
    %5076 = vmatpush2.msra.mxu0 0.0
    %5077 = vmatprep.subr.mxu0 0.0
    %5078 = vmatpush2.msra.mxu0 0.0
    %5079 = vmatprep.subr.mxu0 0.0
    %5080 = vmatpush2.msra.mxu0 0.0
    %5081 = vmatprep.subr.mxu0 0.0
    %5082 = vmatpush2.msra.mxu0 0.0
    %5083 = vmatprep.subr.mxu0 0.0
    %5084 = vmatpush2.msra.mxu0 0.0
    %5085 = vmatprep.mubr.f32.mxu0 0.0
    %5086 = vmatmul.mubr.f32.gmra.mxu0 %v5019
    %v5087 = vpop.f32.mrf.mxu0
    %v5088 = vadd.f32 0.0, %v5087
    %v5089 = vpop.f32.mrf.mxu0
    %5090 = vdwg.mxu0
    %5091 = vrot.lane.b32.xlu0 %v4640, 120
    %v5092 = vpop.permute.xlu0 %5091
    %5093 = vrot.lane.b32.xlu0 %v4728, 120
    %v5094 = vpop.permute.xlu0 %5093
    %5095 = vrot.lane.b32.xlu0 %v4733, 120
    %v5096 = vpop.permute.xlu0 %5095
    %v5097 = vsel %vm384, %v5092, 0
    %v5099 = vsel %vm384, %v5094, 0
    %v5101 = vsel %vm384, %v5096, 0
    %5103 = vmatprep.subr.mxu0 0.0
    %5104 = vmatpush1.xpose.msra.mxu0 0.0
    %5105 = vmatprep.subr.mxu0 0.0
    %5106 = vmatpush1.xpose.msra.mxu0 0.0
    %5107 = vmatprep.subr.mxu0 0.0
    %5108 = vmatpush1.xpose.msra.mxu0 0.0
    %5109 = vmatprep.subr.mxu0 0.0
    %5110 = vmatpush1.xpose.msra.mxu0 0.0
    %5111 = vmatprep.subr.mxu0 0.0
    %5112 = vmatpush1.xpose.msra.mxu0 0.0
    %5113 = vmatprep.subr.mxu0 0.0
    %5114 = vmatpush1.xpose.msra.mxu0 0.0
    %5115 = vmatprep.subr.mxu0 0.0
    %5116 = vmatpush1.xpose.msra.mxu0 0.0
    %5117 = vmatprep.subr.mxu0 0.0
    %5118 = vmatpush1.xpose.msra.mxu0 0.0
    %5119 = vmatprep.subr.mxu0 0.0
    %5120 = vmatpush1.xpose.msra.mxu0 0.0
    %5121 = vmatprep.subr.mxu0 0.0
    %5122 = vmatpush1.xpose.msra.mxu0 0.0
    %5123 = vmatprep.subr.mxu0 0.0
    %5124 = vmatpush1.xpose.msra.mxu0 0.0
    %5125 = vmatprep.subr.mxu0 0.0
    %5126 = vmatpush1.xpose.msra.mxu0 0.0
    %5127 = vmatprep.subr.mxu0 0.0
    %5128 = vmatpush1.xpose.msra.mxu0 0.0
    %5129 = vmatprep.subr.mxu0 0.0
    %5130 = vmatpush1.xpose.msra.mxu0 0.0
    %5131 = vmatprep.subr.mxu0 0.0
    %5132 = vmatpush1.xpose.msra.mxu0 %v5101
    %5133 = vmatprep.subr.mxu0 0.0
    %5134 = vmatpush1.xpose.msra.mxu0 %v5099
    %5135 = vmatprep.subr.mxu0 0.0
    %5136 = vmatpush2.xpose.msra.mxu0 0.0
    %5137 = vmatprep.subr.mxu0 0.0
    %5138 = vmatpush2.xpose.msra.mxu0 0.0
    %5139 = vmatprep.subr.mxu0 0.0
    %5140 = vmatpush2.xpose.msra.mxu0 0.0
    %5141 = vmatprep.subr.mxu0 0.0
    %5142 = vmatpush2.xpose.msra.mxu0 0.0
    %5143 = vmatprep.subr.mxu0 0.0
    %5144 = vmatpush2.xpose.msra.mxu0 0.0
    %5145 = vmatprep.subr.mxu0 0.0
    %5146 = vmatpush2.xpose.msra.mxu0 0.0
    %5147 = vmatprep.subr.mxu0 0.0
    %5148 = vmatpush2.xpose.msra.mxu0 0.0
    %5149 = vmatprep.subr.mxu0 0.0
    %5150 = vmatpush2.xpose.msra.mxu0 0.0
    %5151 = vmatprep.subr.mxu0 0.0
    %5152 = vmatpush2.xpose.msra.mxu0 0.0
    %5153 = vmatprep.subr.mxu0 0.0
    %5154 = vmatpush2.xpose.msra.mxu0 0.0
    %5155 = vmatprep.subr.mxu0 0.0
    %5156 = vmatpush2.xpose.msra.mxu0 0.0
    %5157 = vmatprep.subr.mxu0 0.0
    %5158 = vmatpush2.xpose.msra.mxu0 0.0
    %5159 = vmatprep.subr.mxu0 0.0
    %5160 = vmatpush2.xpose.msra.mxu0 0.0
    %5161 = vmatprep.subr.mxu0 0.0
    %5162 = vmatpush2.xpose.msra.mxu0 0.0
    %5163 = vmatprep.subr.mxu0 0.0
    %5164 = vmatpush2.xpose.msra.mxu0 0.0
    %5165 = vmatprep.subr.mxu0 0.0
    %5166 = vmatpush2.xpose.msra.mxu0 0.0
    %5167 = vmatprep.mubr.f32.mxu0 0.0
    %5168 = vmatmul.mubr.f32.gmra.mxu0 %v5097
    %v5169 = vpop.f32.mrf.mxu0
    %v5170 = vadd.f32 0.0, %v5169
    %v5171 = vpop.f32.mrf.mxu0
    %5172 = vdwg.mxu0
    %5173 = vrot.lane.b32.xlu0 %v4645, 120
    %v5174 = vpop.permute.xlu0 %5173
    %5175 = vrot.lane.b32.xlu0 %v4738, 120
    %v5176 = vpop.permute.xlu0 %5175
    %5177 = vrot.lane.b32.xlu0 %v4743, 120
    %v5178 = vpop.permute.xlu0 %5177
    %v5179 = vsel %vm384, %v5174, 0
    %v5181 = vsel %vm384, %v5176, 0
    %v5183 = vsel %vm384, %v5178, 0
    %5185 = vmatprep.subr.mxu0 0.0
    %5186 = vmatpush1.xpose.msra.mxu0 0.0
    %5187 = vmatprep.subr.mxu0 0.0
    %5188 = vmatpush1.xpose.msra.mxu0 0.0
    %5189 = vmatprep.subr.mxu0 0.0
    %5190 = vmatpush1.xpose.msra.mxu0 0.0
    %5191 = vmatprep.subr.mxu0 0.0
    %5192 = vmatpush1.xpose.msra.mxu0 0.0
    %5193 = vmatprep.subr.mxu0 0.0
    %5194 = vmatpush1.xpose.msra.mxu0 0.0
    %5195 = vmatprep.subr.mxu0 0.0
    %5196 = vmatpush1.xpose.msra.mxu0 0.0
    %5197 = vmatprep.subr.mxu0 0.0
    %5198 = vmatpush1.xpose.msra.mxu0 0.0
    %5199 = vmatprep.subr.mxu0 0.0
    %5200 = vmatpush1.xpose.msra.mxu0 0.0
    %5201 = vmatprep.subr.mxu0 0.0
    %5202 = vmatpush1.xpose.msra.mxu0 0.0
    %5203 = vmatprep.subr.mxu0 0.0
    %5204 = vmatpush1.xpose.msra.mxu0 0.0
    %5205 = vmatprep.subr.mxu0 0.0
    %5206 = vmatpush1.xpose.msra.mxu0 0.0
    %5207 = vmatprep.subr.mxu0 0.0
    %5208 = vmatpush1.xpose.msra.mxu0 0.0
    %5209 = vmatprep.subr.mxu0 0.0
    %5210 = vmatpush1.xpose.msra.mxu0 0.0
    %5211 = vmatprep.subr.mxu0 0.0
    %5212 = vmatpush1.xpose.msra.mxu0 0.0
    %5213 = vmatprep.subr.mxu0 0.0
    %5214 = vmatpush1.xpose.msra.mxu0 %v5183
    %5215 = vmatprep.subr.mxu0 0.0
    %5216 = vmatpush1.xpose.msra.mxu0 %v5181
    %5217 = vmatprep.subr.mxu0 0.0
    %5218 = vmatpush2.xpose.msra.mxu0 0.0
    %5219 = vmatprep.subr.mxu0 0.0
    %5220 = vmatpush2.xpose.msra.mxu0 0.0
    %5221 = vmatprep.subr.mxu0 0.0
    %5222 = vmatpush2.xpose.msra.mxu0 0.0
    %5223 = vmatprep.subr.mxu0 0.0
    %5224 = vmatpush2.xpose.msra.mxu0 0.0
    %5225 = vmatprep.subr.mxu0 0.0
    %5226 = vmatpush2.xpose.msra.mxu0 0.0
    %5227 = vmatprep.subr.mxu0 0.0
    %5228 = vmatpush2.xpose.msra.mxu0 0.0
    %5229 = vmatprep.subr.mxu0 0.0
    %5230 = vmatpush2.xpose.msra.mxu0 0.0
    %5231 = vmatprep.subr.mxu0 0.0
    %5232 = vmatpush2.xpose.msra.mxu0 0.0
    %5233 = vmatprep.subr.mxu0 0.0
    %5234 = vmatpush2.xpose.msra.mxu0 0.0
    %5235 = vmatprep.subr.mxu0 0.0
    %5236 = vmatpush2.xpose.msra.mxu0 0.0
    %5237 = vmatprep.subr.mxu0 0.0
    %5238 = vmatpush2.xpose.msra.mxu0 0.0
    %5239 = vmatprep.subr.mxu0 0.0
    %5240 = vmatpush2.xpose.msra.mxu0 0.0
    %5241 = vmatprep.subr.mxu0 0.0
    %5242 = vmatpush2.xpose.msra.mxu0 0.0
    %5243 = vmatprep.subr.mxu0 0.0
    %5244 = vmatpush2.xpose.msra.mxu0 0.0
    %5245 = vmatprep.subr.mxu0 0.0
    %5246 = vmatpush2.xpose.msra.mxu0 0.0
    %5247 = vmatprep.subr.mxu0 0.0
    %5248 = vmatpush2.xpose.msra.mxu0 0.0
    %5249 = vmatprep.mubr.f32.mxu0 0.0
    %5250 = vmatmul.mubr.f32.gmra.mxu0 %v5179
    %v5251 = vpop.f32.mrf.mxu0
    %v5252 = vadd.f32 0.0, %v5251
    %v5253 = vpop.f32.mrf.mxu0
    %5254 = vdwg.mxu0
    %v5255 = vmul.f32 %v5170, 0.35355338
    %v5256 = vmul.f32 %v5252, 0.35355338
    %v5257 = vsel %vm545, %v5255, -inf
    %5258 = vmax.xlane.f32.xlu0 %v5257
    %v5259 = vpop.xlane.xlu0 %5258
    %v5260 = vsel %vm545, %v5256, -inf
    %5261 = vmax.xlane.f32.xlu0 %v5260
    %v5262 = vpop.xlane.xlu0 %5261
    %v5263 = vsub.f32 %v5255, %v5259
    %v5264 = vsub.f32 %v5256, %v5262
    %v5265 = vmul.f32 %v5263, 1.442695
    %v5266 = vpow.pop %v5265
    %v5267 = vmul.f32 %v5264, 1.442695
    %v5268 = vpow.pop %v5267
    %v5269 = vsel %vm545, %v5266, 0.0
    %5270 = vadd.xlane.f32.xlu0 %v5269
    %v5271 = vpop.xlane.xlu0 %5270
    %v5272 = vsel %vm545, %v5268, 0.0
    %5273 = vadd.xlane.f32.xlu0 %v5272
    %v5274 = vpop.xlane.xlu0 %5273
    %v5275 = vrcp.pop %v5271
    %v5276 = vrcp.pop %v5274
    %v5277 = vmul.f32 %v5266, %v5275
    %v5278 = vmul.f32 %v5268, %v5276
    %5279 = vrot.lane.b32.xlu0 %v4728, 88
    %v5280 = vpop.permute.xlu0 %5279
    %5281 = vrot.lane.b32.xlu0 %v4733, 88
    %v5282 = vpop.permute.xlu0 %5281
    %v5286 = vsel %vm545, %v5277, 0
    %5288 = vmatprep.subr.mxu0 0.0
    %5289 = vmatpush1.msra.mxu0 0.0
    %5290 = vmatprep.subr.mxu0 0.0
    %5291 = vmatpush1.msra.mxu0 0.0
    %5292 = vmatprep.subr.mxu0 0.0
    %5293 = vmatpush1.msra.mxu0 0.0
    %5294 = vmatprep.subr.mxu0 0.0
    %5295 = vmatpush1.msra.mxu0 0.0
    %5296 = vmatprep.subr.mxu0 0.0
    %5297 = vmatpush1.msra.mxu0 0.0
    %5298 = vmatprep.subr.mxu0 0.0
    %5299 = vmatpush1.msra.mxu0 0.0
    %5300 = vmatprep.subr.mxu0 0.0
    %5301 = vmatpush1.msra.mxu0 0.0
    %5302 = vmatprep.subr.mxu0 0.0
    %5303 = vmatpush1.msra.mxu0 0.0
    %5304 = vmatprep.subr.mxu0 0.0
    %5305 = vmatpush1.msra.mxu0 0.0
    %5306 = vmatprep.subr.mxu0 0.0
    %5307 = vmatpush1.msra.mxu0 0.0
    %5308 = vmatprep.subr.mxu0 0.0
    %5309 = vmatpush1.msra.mxu0 0.0
    %5310 = vmatprep.subr.mxu0 0.0
    %5311 = vmatpush1.msra.mxu0 0.0
    %5312 = vmatprep.subr.mxu0 0.0
    %5313 = vmatpush1.msra.mxu0 0.0
    %5314 = vmatprep.subr.mxu0 0.0
    %5315 = vmatpush1.msra.mxu0 0.0
    %5316 = vmatprep.subr.mxu0 0.0
    %5317 = vmatpush1.msra.mxu0 %v5282
    %5318 = vmatprep.subr.mxu0 0.0
    %5319 = vmatpush1.msra.mxu0 %v5280
    %5320 = vmatprep.subr.mxu0 0.0
    %5321 = vmatpush2.msra.mxu0 0.0
    %5322 = vmatprep.subr.mxu0 0.0
    %5323 = vmatpush2.msra.mxu0 0.0
    %5324 = vmatprep.subr.mxu0 0.0
    %5325 = vmatpush2.msra.mxu0 0.0
    %5326 = vmatprep.subr.mxu0 0.0
    %5327 = vmatpush2.msra.mxu0 0.0
    %5328 = vmatprep.subr.mxu0 0.0
    %5329 = vmatpush2.msra.mxu0 0.0
    %5330 = vmatprep.subr.mxu0 0.0
    %5331 = vmatpush2.msra.mxu0 0.0
    %5332 = vmatprep.subr.mxu0 0.0
    %5333 = vmatpush2.msra.mxu0 0.0
    %5334 = vmatprep.subr.mxu0 0.0
    %5335 = vmatpush2.msra.mxu0 0.0
    %5336 = vmatprep.subr.mxu0 0.0
    %5337 = vmatpush2.msra.mxu0 0.0
    %5338 = vmatprep.subr.mxu0 0.0
    %5339 = vmatpush2.msra.mxu0 0.0
    %5340 = vmatprep.subr.mxu0 0.0
    %5341 = vmatpush2.msra.mxu0 0.0
    %5342 = vmatprep.subr.mxu0 0.0
    %5343 = vmatpush2.msra.mxu0 0.0
    %5344 = vmatprep.subr.mxu0 0.0
    %5345 = vmatpush2.msra.mxu0 0.0
    %5346 = vmatprep.subr.mxu0 0.0
    %5347 = vmatpush2.msra.mxu0 0.0
    %5348 = vmatprep.subr.mxu0 0.0
    %5349 = vmatpush2.msra.mxu0 0.0
    %5350 = vmatprep.subr.mxu0 0.0
    %5351 = vmatpush2.msra.mxu0 0.0
    %5352 = vmatprep.mubr.f32.mxu0 0.0
    %5353 = vmatmul.mubr.f32.gmra.mxu0 %v5286
    %v5354 = vpop.f32.mrf.mxu0
    %v5355 = vadd.f32 0.0, %v5354
    %v5356 = vpop.f32.mrf.mxu0
    %5357 = vdwg.mxu0
    %5358 = vrot.lane.b32.xlu0 %v4738, 88
    %v5359 = vpop.permute.xlu0 %5358
    %5360 = vrot.lane.b32.xlu0 %v4743, 88
    %v5361 = vpop.permute.xlu0 %5360
    %v5365 = vsel %vm545, %v5278, 0
    %5367 = vmatprep.subr.mxu0 0.0
    %5368 = vmatpush1.msra.mxu0 0.0
    %5369 = vmatprep.subr.mxu0 0.0
    %5370 = vmatpush1.msra.mxu0 0.0
    %5371 = vmatprep.subr.mxu0 0.0
    %5372 = vmatpush1.msra.mxu0 0.0
    %5373 = vmatprep.subr.mxu0 0.0
    %5374 = vmatpush1.msra.mxu0 0.0
    %5375 = vmatprep.subr.mxu0 0.0
    %5376 = vmatpush1.msra.mxu0 0.0
    %5377 = vmatprep.subr.mxu0 0.0
    %5378 = vmatpush1.msra.mxu0 0.0
    %5379 = vmatprep.subr.mxu0 0.0
    %5380 = vmatpush1.msra.mxu0 0.0
    %5381 = vmatprep.subr.mxu0 0.0
    %5382 = vmatpush1.msra.mxu0 0.0
    %5383 = vmatprep.subr.mxu0 0.0
    %5384 = vmatpush1.msra.mxu0 0.0
    %5385 = vmatprep.subr.mxu0 0.0
    %5386 = vmatpush1.msra.mxu0 0.0
    %5387 = vmatprep.subr.mxu0 0.0
    %5388 = vmatpush1.msra.mxu0 0.0
    %5389 = vmatprep.subr.mxu0 0.0
    %5390 = vmatpush1.msra.mxu0 0.0
    %5391 = vmatprep.subr.mxu0 0.0
    %5392 = vmatpush1.msra.mxu0 0.0
    %5393 = vmatprep.subr.mxu0 0.0
    %5394 = vmatpush1.msra.mxu0 0.0
    %5395 = vmatprep.subr.mxu0 0.0
    %5396 = vmatpush1.msra.mxu0 %v5361
    %5397 = vmatprep.subr.mxu0 0.0
    %5398 = vmatpush1.msra.mxu0 %v5359
    %5399 = vmatprep.subr.mxu0 0.0
    %5400 = vmatpush2.msra.mxu0 0.0
    %5401 = vmatprep.subr.mxu0 0.0
    %5402 = vmatpush2.msra.mxu0 0.0
    %5403 = vmatprep.subr.mxu0 0.0
    %5404 = vmatpush2.msra.mxu0 0.0
    %5405 = vmatprep.subr.mxu0 0.0
    %5406 = vmatpush2.msra.mxu0 0.0
    %5407 = vmatprep.subr.mxu0 0.0
    %5408 = vmatpush2.msra.mxu0 0.0
    %5409 = vmatprep.subr.mxu0 0.0
    %5410 = vmatpush2.msra.mxu0 0.0
    %5411 = vmatprep.subr.mxu0 0.0
    %5412 = vmatpush2.msra.mxu0 0.0
    %5413 = vmatprep.subr.mxu0 0.0
    %5414 = vmatpush2.msra.mxu0 0.0
    %5415 = vmatprep.subr.mxu0 0.0
    %5416 = vmatpush2.msra.mxu0 0.0
    %5417 = vmatprep.subr.mxu0 0.0
    %5418 = vmatpush2.msra.mxu0 0.0
    %5419 = vmatprep.subr.mxu0 0.0
    %5420 = vmatpush2.msra.mxu0 0.0
    %5421 = vmatprep.subr.mxu0 0.0
    %5422 = vmatpush2.msra.mxu0 0.0
    %5423 = vmatprep.subr.mxu0 0.0
    %5424 = vmatpush2.msra.mxu0 0.0
    %5425 = vmatprep.subr.mxu0 0.0
    %5426 = vmatpush2.msra.mxu0 0.0
    %5427 = vmatprep.subr.mxu0 0.0
    %5428 = vmatpush2.msra.mxu0 0.0
    %5429 = vmatprep.subr.mxu0 0.0
    %5430 = vmatpush2.msra.mxu0 0.0
    %5431 = vmatprep.mubr.f32.mxu0 0.0
    %5432 = vmatmul.mubr.f32.gmra.mxu0 %v5365
    %v5433 = vpop.f32.mrf.mxu0
    %v5434 = vadd.f32 0.0, %v5433
    %v5435 = vpop.f32.mrf.mxu0
    %5436 = vdwg.mxu0
    %v5438 = vsel %vm384, %v5355, 0
    %v5441 = vsel %vm384, %v5434, 0
    %5443 = vmatprep.subr.mxu0 0.0
    %5444 = vmatpush1.msra.mxu0 0.0
    %5445 = vmatprep.subr.mxu0 0.0
    %5446 = vmatpush1.msra.mxu0 0.0
    %5447 = vmatprep.subr.mxu0 0.0
    %5448 = vmatpush1.msra.mxu0 0.0
    %5449 = vmatprep.subr.mxu0 0.0
    %5450 = vmatpush1.msra.mxu0 0.0
    %5451 = vmatprep.subr.mxu0 0.0
    %5452 = vmatpush1.msra.mxu0 0.0
    %5453 = vmatprep.subr.mxu0 0.0
    %5454 = vmatpush1.msra.mxu0 0.0
    %5455 = vmatprep.subr.mxu0 0.0
    %5456 = vmatpush1.msra.mxu0 0.0
    %5457 = vmatprep.subr.mxu0 0.0
    %5458 = vmatpush1.msra.mxu0 0.0
    %5459 = vmatprep.subr.mxu0 0.0
    %5460 = vmatpush1.msra.mxu0 0.0
    %5461 = vmatprep.subr.mxu0 0.0
    %5462 = vmatpush1.msra.mxu0 0.0
    %5463 = vmatprep.subr.mxu0 0.0
    %5464 = vmatpush1.msra.mxu0 0.0
    %5465 = vmatprep.subr.mxu0 0.0
    %5466 = vmatpush1.msra.mxu0 0.0
    %5467 = vmatprep.subr.mxu0 0.0
    %5468 = vmatpush1.msra.mxu0 0.0
    %5469 = vmatprep.subr.mxu0 0.0
    %5470 = vmatpush1.msra.mxu0 0.0
    %5471 = vmatprep.subr.mxu0 0.0
    %5472 = vmatpush1.msra.mxu0 0.0
    %5473 = vmatprep.subr.mxu0 0.0
    %5474 = vmatpush1.msra.mxu0 %v4748
    %5475 = vmatprep.subr.mxu0 0.0
    %5476 = vmatpush2.msra.mxu0 0.0
    %5477 = vmatprep.subr.mxu0 0.0
    %5478 = vmatpush2.msra.mxu0 0.0
    %5479 = vmatprep.subr.mxu0 0.0
    %5480 = vmatpush2.msra.mxu0 0.0
    %5481 = vmatprep.subr.mxu0 0.0
    %5482 = vmatpush2.msra.mxu0 0.0
    %5483 = vmatprep.subr.mxu0 0.0
    %5484 = vmatpush2.msra.mxu0 0.0
    %5485 = vmatprep.subr.mxu0 0.0
    %5486 = vmatpush2.msra.mxu0 0.0
    %5487 = vmatprep.subr.mxu0 0.0
    %5488 = vmatpush2.msra.mxu0 0.0
    %5489 = vmatprep.subr.mxu0 0.0
    %5490 = vmatpush2.msra.mxu0 0.0
    %5491 = vmatprep.subr.mxu0 0.0
    %5492 = vmatpush2.msra.mxu0 0.0
    %5493 = vmatprep.subr.mxu0 0.0
    %5494 = vmatpush2.msra.mxu0 0.0
    %5495 = vmatprep.subr.mxu0 0.0
    %5496 = vmatpush2.msra.mxu0 0.0
    %5497 = vmatprep.subr.mxu0 0.0
    %5498 = vmatpush2.msra.mxu0 0.0
    %5499 = vmatprep.subr.mxu0 0.0
    %5500 = vmatpush2.msra.mxu0 0.0
    %5501 = vmatprep.subr.mxu0 0.0
    %5502 = vmatpush2.msra.mxu0 0.0
    %5503 = vmatprep.subr.mxu0 0.0
    %5504 = vmatpush2.msra.mxu0 0.0
    %5505 = vmatprep.subr.mxu0 0.0
    %5506 = vmatpush2.msra.mxu0 0.0
    %5507 = vmatprep.mubr.f32.mxu0 0.0
    %5508 = vmatmul.mubr.f32.gmra.mxu0 %v5438
    %v5509 = vpop.f32.mrf.mxu0
    %v5510 = vadd.f32 0.0, %v5509
    %v5511 = vpop.f32.mrf.mxu0
    %5512 = vmatprep.mubr.f32.mxu0 0.0
    %5513 = vmatmul.mubr.f32.gmra.mxu0 %v5441
    %v5514 = vpop.f32.mrf.mxu0
    %v5515 = vadd.f32 0.0, %v5514
    %v5516 = vpop.f32.mrf.mxu0
    %5517 = vdwg.mxu0
    %v5519 = vsel %vm384, %v5009, 0
    %v5522 = vsel %vm384, %v5088, 0
    %5524 = vmatprep.subr.mxu0 0.0
    %5525 = vmatpush1.msra.mxu0 0.0
    %5526 = vmatprep.subr.mxu0 0.0
    %5527 = vmatpush1.msra.mxu0 0.0
    %5528 = vmatprep.subr.mxu0 0.0
    %5529 = vmatpush1.msra.mxu0 0.0
    %5530 = vmatprep.subr.mxu0 0.0
    %5531 = vmatpush1.msra.mxu0 0.0
    %5532 = vmatprep.subr.mxu0 0.0
    %5533 = vmatpush1.msra.mxu0 0.0
    %5534 = vmatprep.subr.mxu0 0.0
    %5535 = vmatpush1.msra.mxu0 0.0
    %5536 = vmatprep.subr.mxu0 0.0
    %5537 = vmatpush1.msra.mxu0 0.0
    %5538 = vmatprep.subr.mxu0 0.0
    %5539 = vmatpush1.msra.mxu0 0.0
    %5540 = vmatprep.subr.mxu0 0.0
    %5541 = vmatpush1.msra.mxu0 0.0
    %5542 = vmatprep.subr.mxu0 0.0
    %5543 = vmatpush1.msra.mxu0 0.0
    %5544 = vmatprep.subr.mxu0 0.0
    %5545 = vmatpush1.msra.mxu0 0.0
    %5546 = vmatprep.subr.mxu0 0.0
    %5547 = vmatpush1.msra.mxu0 0.0
    %5548 = vmatprep.subr.mxu0 0.0
    %5549 = vmatpush1.msra.mxu0 0.0
    %5550 = vmatprep.subr.mxu0 0.0
    %5551 = vmatpush1.msra.mxu0 0.0
    %5552 = vmatprep.subr.mxu0 0.0
    %5553 = vmatpush1.msra.mxu0 0.0
    %5554 = vmatprep.subr.mxu0 0.0
    %5555 = vmatpush1.msra.mxu0 %v4747
    %5556 = vmatprep.subr.mxu0 0.0
    %5557 = vmatpush2.msra.mxu0 0.0
    %5558 = vmatprep.subr.mxu0 0.0
    %5559 = vmatpush2.msra.mxu0 0.0
    %5560 = vmatprep.subr.mxu0 0.0
    %5561 = vmatpush2.msra.mxu0 0.0
    %5562 = vmatprep.subr.mxu0 0.0
    %5563 = vmatpush2.msra.mxu0 0.0
    %5564 = vmatprep.subr.mxu0 0.0
    %5565 = vmatpush2.msra.mxu0 0.0
    %5566 = vmatprep.subr.mxu0 0.0
    %5567 = vmatpush2.msra.mxu0 0.0
    %5568 = vmatprep.subr.mxu0 0.0
    %5569 = vmatpush2.msra.mxu0 0.0
    %5570 = vmatprep.subr.mxu0 0.0
    %5571 = vmatpush2.msra.mxu0 0.0
    %5572 = vmatprep.subr.mxu0 0.0
    %5573 = vmatpush2.msra.mxu0 0.0
    %5574 = vmatprep.subr.mxu0 0.0
    %5575 = vmatpush2.msra.mxu0 0.0
    %5576 = vmatprep.subr.mxu0 0.0
    %5577 = vmatpush2.msra.mxu0 0.0
    %5578 = vmatprep.subr.mxu0 0.0
    %5579 = vmatpush2.msra.mxu0 0.0
    %5580 = vmatprep.subr.mxu0 0.0
    %5581 = vmatpush2.msra.mxu0 0.0
    %5582 = vmatprep.subr.mxu0 0.0
    %5583 = vmatpush2.msra.mxu0 0.0
    %5584 = vmatprep.subr.mxu0 0.0
    %5585 = vmatpush2.msra.mxu0 0.0
    %5586 = vmatprep.subr.mxu0 0.0
    %5587 = vmatpush2.msra.mxu0 0.0
    %5588 = vmatprep.mubr.f32.mxu0 0.0
    %5589 = vmatmul.mubr.f32.gmra.mxu0 %v5519
    %v5590 = vpop.f32.mrf.mxu0
    %v5591 = vadd.f32 %v5510, %v5590
    %v5592 = vpop.f32.mrf.mxu0
    %5593 = vmatprep.mubr.f32.mxu0 0.0
    %5594 = vmatmul.mubr.f32.gmra.mxu0 %v5522
    %v5595 = vpop.f32.mrf.mxu0
    %v5596 = vadd.f32 %v5515, %v5595
    %v5597 = vpop.f32.mrf.mxu0
    %5598 = vdwg.mxu0
    %5599 = vrot.lane.b32.xlu0 %v4640, 112
    %v5600 = vpop.permute.xlu0 %5599
    %5601 = vrot.lane.b32.xlu0 %v4728, 112
    %v5602 = vpop.permute.xlu0 %5601
    %5603 = vrot.lane.b32.xlu0 %v4733, 112
    %v5604 = vpop.permute.xlu0 %5603
    %v5605 = vsel %vm384, %v5600, 0
    %v5607 = vsel %vm384, %v5602, 0
    %v5609 = vsel %vm384, %v5604, 0
    %5611 = vmatprep.subr.mxu0 0.0
    %5612 = vmatpush1.xpose.msra.mxu0 0.0
    %5613 = vmatprep.subr.mxu0 0.0
    %5614 = vmatpush1.xpose.msra.mxu0 0.0
    %5615 = vmatprep.subr.mxu0 0.0
    %5616 = vmatpush1.xpose.msra.mxu0 0.0
    %5617 = vmatprep.subr.mxu0 0.0
    %5618 = vmatpush1.xpose.msra.mxu0 0.0
    %5619 = vmatprep.subr.mxu0 0.0
    %5620 = vmatpush1.xpose.msra.mxu0 0.0
    %5621 = vmatprep.subr.mxu0 0.0
    %5622 = vmatpush1.xpose.msra.mxu0 0.0
    %5623 = vmatprep.subr.mxu0 0.0
    %5624 = vmatpush1.xpose.msra.mxu0 0.0
    %5625 = vmatprep.subr.mxu0 0.0
    %5626 = vmatpush1.xpose.msra.mxu0 0.0
    %5627 = vmatprep.subr.mxu0 0.0
    %5628 = vmatpush1.xpose.msra.mxu0 0.0
    %5629 = vmatprep.subr.mxu0 0.0
    %5630 = vmatpush1.xpose.msra.mxu0 0.0
    %5631 = vmatprep.subr.mxu0 0.0
    %5632 = vmatpush1.xpose.msra.mxu0 0.0
    %5633 = vmatprep.subr.mxu0 0.0
    %5634 = vmatpush1.xpose.msra.mxu0 0.0
    %5635 = vmatprep.subr.mxu0 0.0
    %5636 = vmatpush1.xpose.msra.mxu0 0.0
    %5637 = vmatprep.subr.mxu0 0.0
    %5638 = vmatpush1.xpose.msra.mxu0 0.0
    %5639 = vmatprep.subr.mxu0 0.0
    %5640 = vmatpush1.xpose.msra.mxu0 %v5609
    %5641 = vmatprep.subr.mxu0 0.0
    %5642 = vmatpush1.xpose.msra.mxu0 %v5607
    %5643 = vmatprep.subr.mxu0 0.0
    %5644 = vmatpush2.xpose.msra.mxu0 0.0
    %5645 = vmatprep.subr.mxu0 0.0
    %5646 = vmatpush2.xpose.msra.mxu0 0.0
    %5647 = vmatprep.subr.mxu0 0.0
    %5648 = vmatpush2.xpose.msra.mxu0 0.0
    %5649 = vmatprep.subr.mxu0 0.0
    %5650 = vmatpush2.xpose.msra.mxu0 0.0
    %5651 = vmatprep.subr.mxu0 0.0
    %5652 = vmatpush2.xpose.msra.mxu0 0.0
    %5653 = vmatprep.subr.mxu0 0.0
    %5654 = vmatpush2.xpose.msra.mxu0 0.0
    %5655 = vmatprep.subr.mxu0 0.0
    %5656 = vmatpush2.xpose.msra.mxu0 0.0
    %5657 = vmatprep.subr.mxu0 0.0
    %5658 = vmatpush2.xpose.msra.mxu0 0.0
    %5659 = vmatprep.subr.mxu0 0.0
    %5660 = vmatpush2.xpose.msra.mxu0 0.0
    %5661 = vmatprep.subr.mxu0 0.0
    %5662 = vmatpush2.xpose.msra.mxu0 0.0
    %5663 = vmatprep.subr.mxu0 0.0
    %5664 = vmatpush2.xpose.msra.mxu0 0.0
    %5665 = vmatprep.subr.mxu0 0.0
    %5666 = vmatpush2.xpose.msra.mxu0 0.0
    %5667 = vmatprep.subr.mxu0 0.0
    %5668 = vmatpush2.xpose.msra.mxu0 0.0
    %5669 = vmatprep.subr.mxu0 0.0
    %5670 = vmatpush2.xpose.msra.mxu0 0.0
    %5671 = vmatprep.subr.mxu0 0.0
    %5672 = vmatpush2.xpose.msra.mxu0 0.0
    %5673 = vmatprep.subr.mxu0 0.0
    %5674 = vmatpush2.xpose.msra.mxu0 0.0
    %5675 = vmatprep.mubr.f32.mxu0 0.0
    %5676 = vmatmul.mubr.f32.gmra.mxu0 %v5605
    %v5677 = vpop.f32.mrf.mxu0
    %v5678 = vadd.f32 0.0, %v5677
    %v5679 = vpop.f32.mrf.mxu0
    %5680 = vdwg.mxu0
    %5681 = vrot.lane.b32.xlu0 %v4645, 112
    %v5682 = vpop.permute.xlu0 %5681
    %5683 = vrot.lane.b32.xlu0 %v4738, 112
    %v5684 = vpop.permute.xlu0 %5683
    %5685 = vrot.lane.b32.xlu0 %v4743, 112
    %v5686 = vpop.permute.xlu0 %5685
    %v5687 = vsel %vm384, %v5682, 0
    %v5689 = vsel %vm384, %v5684, 0
    %v5691 = vsel %vm384, %v5686, 0
    %5693 = vmatprep.subr.mxu0 0.0
    %5694 = vmatpush1.xpose.msra.mxu0 0.0
    %5695 = vmatprep.subr.mxu0 0.0
    %5696 = vmatpush1.xpose.msra.mxu0 0.0
    %5697 = vmatprep.subr.mxu0 0.0
    %5698 = vmatpush1.xpose.msra.mxu0 0.0
    %5699 = vmatprep.subr.mxu0 0.0
    %5700 = vmatpush1.xpose.msra.mxu0 0.0
    %5701 = vmatprep.subr.mxu0 0.0
    %5702 = vmatpush1.xpose.msra.mxu0 0.0
    %5703 = vmatprep.subr.mxu0 0.0
    %5704 = vmatpush1.xpose.msra.mxu0 0.0
    %5705 = vmatprep.subr.mxu0 0.0
    %5706 = vmatpush1.xpose.msra.mxu0 0.0
    %5707 = vmatprep.subr.mxu0 0.0
    %5708 = vmatpush1.xpose.msra.mxu0 0.0
    %5709 = vmatprep.subr.mxu0 0.0
    %5710 = vmatpush1.xpose.msra.mxu0 0.0
    %5711 = vmatprep.subr.mxu0 0.0
    %5712 = vmatpush1.xpose.msra.mxu0 0.0
    %5713 = vmatprep.subr.mxu0 0.0
    %5714 = vmatpush1.xpose.msra.mxu0 0.0
    %5715 = vmatprep.subr.mxu0 0.0
    %5716 = vmatpush1.xpose.msra.mxu0 0.0
    %5717 = vmatprep.subr.mxu0 0.0
    %5718 = vmatpush1.xpose.msra.mxu0 0.0
    %5719 = vmatprep.subr.mxu0 0.0
    %5720 = vmatpush1.xpose.msra.mxu0 0.0
    %5721 = vmatprep.subr.mxu0 0.0
    %5722 = vmatpush1.xpose.msra.mxu0 %v5691
    %5723 = vmatprep.subr.mxu0 0.0
    %5724 = vmatpush1.xpose.msra.mxu0 %v5689
    %5725 = vmatprep.subr.mxu0 0.0
    %5726 = vmatpush2.xpose.msra.mxu0 0.0
    %5727 = vmatprep.subr.mxu0 0.0
    %5728 = vmatpush2.xpose.msra.mxu0 0.0
    %5729 = vmatprep.subr.mxu0 0.0
    %5730 = vmatpush2.xpose.msra.mxu0 0.0
    %5731 = vmatprep.subr.mxu0 0.0
    %5732 = vmatpush2.xpose.msra.mxu0 0.0
    %5733 = vmatprep.subr.mxu0 0.0
    %5734 = vmatpush2.xpose.msra.mxu0 0.0
    %5735 = vmatprep.subr.mxu0 0.0
    %5736 = vmatpush2.xpose.msra.mxu0 0.0
    %5737 = vmatprep.subr.mxu0 0.0
    %5738 = vmatpush2.xpose.msra.mxu0 0.0
    %5739 = vmatprep.subr.mxu0 0.0
    %5740 = vmatpush2.xpose.msra.mxu0 0.0
    %5741 = vmatprep.subr.mxu0 0.0
    %5742 = vmatpush2.xpose.msra.mxu0 0.0
    %5743 = vmatprep.subr.mxu0 0.0
    %5744 = vmatpush2.xpose.msra.mxu0 0.0
    %5745 = vmatprep.subr.mxu0 0.0
    %5746 = vmatpush2.xpose.msra.mxu0 0.0
    %5747 = vmatprep.subr.mxu0 0.0
    %5748 = vmatpush2.xpose.msra.mxu0 0.0
    %5749 = vmatprep.subr.mxu0 0.0
    %5750 = vmatpush2.xpose.msra.mxu0 0.0
    %5751 = vmatprep.subr.mxu0 0.0
    %5752 = vmatpush2.xpose.msra.mxu0 0.0
    %5753 = vmatprep.subr.mxu0 0.0
    %5754 = vmatpush2.xpose.msra.mxu0 0.0
    %5755 = vmatprep.subr.mxu0 0.0
    %5756 = vmatpush2.xpose.msra.mxu0 0.0
    %5757 = vmatprep.mubr.f32.mxu0 0.0
    %5758 = vmatmul.mubr.f32.gmra.mxu0 %v5687
    %v5759 = vpop.f32.mrf.mxu0
    %v5760 = vadd.f32 0.0, %v5759
    %v5761 = vpop.f32.mrf.mxu0
    %5762 = vdwg.mxu0
    %v5763 = vmul.f32 %v5678, 0.35355338
    %v5764 = vmul.f32 %v5760, 0.35355338
    %v5765 = vsel %vm545, %v5763, -inf
    %5766 = vmax.xlane.f32.xlu0 %v5765
    %v5767 = vpop.xlane.xlu0 %5766
    %v5768 = vsel %vm545, %v5764, -inf
    %5769 = vmax.xlane.f32.xlu0 %v5768
    %v5770 = vpop.xlane.xlu0 %5769
    %v5771 = vsub.f32 %v5763, %v5767
    %v5772 = vsub.f32 %v5764, %v5770
    %v5773 = vmul.f32 %v5771, 1.442695
    %v5774 = vpow.pop %v5773
    %v5775 = vmul.f32 %v5772, 1.442695
    %v5776 = vpow.pop %v5775
    %v5777 = vsel %vm545, %v5774, 0.0
    %5778 = vadd.xlane.f32.xlu0 %v5777
    %v5779 = vpop.xlane.xlu0 %5778
    %v5780 = vsel %vm545, %v5776, 0.0
    %5781 = vadd.xlane.f32.xlu0 %v5780
    %v5782 = vpop.xlane.xlu0 %5781
    %v5783 = vrcp.pop %v5779
    %v5784 = vrcp.pop %v5782
    %v5785 = vmul.f32 %v5774, %v5783
    %v5786 = vmul.f32 %v5776, %v5784
    %5787 = vrot.lane.b32.xlu0 %v4728, 80
    %v5788 = vpop.permute.xlu0 %5787
    %5789 = vrot.lane.b32.xlu0 %v4733, 80
    %v5790 = vpop.permute.xlu0 %5789
    %v5794 = vsel %vm545, %v5785, 0
    %5796 = vmatprep.subr.mxu0 0.0
    %5797 = vmatpush1.msra.mxu0 0.0
    %5798 = vmatprep.subr.mxu0 0.0
    %5799 = vmatpush1.msra.mxu0 0.0
    %5800 = vmatprep.subr.mxu0 0.0
    %5801 = vmatpush1.msra.mxu0 0.0
    %5802 = vmatprep.subr.mxu0 0.0
    %5803 = vmatpush1.msra.mxu0 0.0
    %5804 = vmatprep.subr.mxu0 0.0
    %5805 = vmatpush1.msra.mxu0 0.0
    %5806 = vmatprep.subr.mxu0 0.0
    %5807 = vmatpush1.msra.mxu0 0.0
    %5808 = vmatprep.subr.mxu0 0.0
    %5809 = vmatpush1.msra.mxu0 0.0
    %5810 = vmatprep.subr.mxu0 0.0
    %5811 = vmatpush1.msra.mxu0 0.0
    %5812 = vmatprep.subr.mxu0 0.0
    %5813 = vmatpush1.msra.mxu0 0.0
    %5814 = vmatprep.subr.mxu0 0.0
    %5815 = vmatpush1.msra.mxu0 0.0
    %5816 = vmatprep.subr.mxu0 0.0
    %5817 = vmatpush1.msra.mxu0 0.0
    %5818 = vmatprep.subr.mxu0 0.0
    %5819 = vmatpush1.msra.mxu0 0.0
    %5820 = vmatprep.subr.mxu0 0.0
    %5821 = vmatpush1.msra.mxu0 0.0
    %5822 = vmatprep.subr.mxu0 0.0
    %5823 = vmatpush1.msra.mxu0 0.0
    %5824 = vmatprep.subr.mxu0 0.0
    %5825 = vmatpush1.msra.mxu0 %v5790
    %5826 = vmatprep.subr.mxu0 0.0
    %5827 = vmatpush1.msra.mxu0 %v5788
    %5828 = vmatprep.subr.mxu0 0.0
    %5829 = vmatpush2.msra.mxu0 0.0
    %5830 = vmatprep.subr.mxu0 0.0
    %5831 = vmatpush2.msra.mxu0 0.0
    %5832 = vmatprep.subr.mxu0 0.0
    %5833 = vmatpush2.msra.mxu0 0.0
    %5834 = vmatprep.subr.mxu0 0.0
    %5835 = vmatpush2.msra.mxu0 0.0
    %5836 = vmatprep.subr.mxu0 0.0
    %5837 = vmatpush2.msra.mxu0 0.0
    %5838 = vmatprep.subr.mxu0 0.0
    %5839 = vmatpush2.msra.mxu0 0.0
    %5840 = vmatprep.subr.mxu0 0.0
    %5841 = vmatpush2.msra.mxu0 0.0
    %5842 = vmatprep.subr.mxu0 0.0
    %5843 = vmatpush2.msra.mxu0 0.0
    %5844 = vmatprep.subr.mxu0 0.0
    %5845 = vmatpush2.msra.mxu0 0.0
    %5846 = vmatprep.subr.mxu0 0.0
    %5847 = vmatpush2.msra.mxu0 0.0
    %5848 = vmatprep.subr.mxu0 0.0
    %5849 = vmatpush2.msra.mxu0 0.0
    %5850 = vmatprep.subr.mxu0 0.0
    %5851 = vmatpush2.msra.mxu0 0.0
    %5852 = vmatprep.subr.mxu0 0.0
    %5853 = vmatpush2.msra.mxu0 0.0
    %5854 = vmatprep.subr.mxu0 0.0
    %5855 = vmatpush2.msra.mxu0 0.0
    %5856 = vmatprep.subr.mxu0 0.0
    %5857 = vmatpush2.msra.mxu0 0.0
    %5858 = vmatprep.subr.mxu0 0.0
    %5859 = vmatpush2.msra.mxu0 0.0
    %5860 = vmatprep.mubr.f32.mxu0 0.0
    %5861 = vmatmul.mubr.f32.gmra.mxu0 %v5794
    %v5862 = vpop.f32.mrf.mxu0
    %v5863 = vadd.f32 0.0, %v5862
    %v5864 = vpop.f32.mrf.mxu0
    %5865 = vdwg.mxu0
    %5866 = vrot.lane.b32.xlu0 %v4738, 80
    %v5867 = vpop.permute.xlu0 %5866
    %5868 = vrot.lane.b32.xlu0 %v4743, 80
    %v5869 = vpop.permute.xlu0 %5868
    %v5873 = vsel %vm545, %v5786, 0
    %5875 = vmatprep.subr.mxu0 0.0
    %5876 = vmatpush1.msra.mxu0 0.0
    %5877 = vmatprep.subr.mxu0 0.0
    %5878 = vmatpush1.msra.mxu0 0.0
    %5879 = vmatprep.subr.mxu0 0.0
    %5880 = vmatpush1.msra.mxu0 0.0
    %5881 = vmatprep.subr.mxu0 0.0
    %5882 = vmatpush1.msra.mxu0 0.0
    %5883 = vmatprep.subr.mxu0 0.0
    %5884 = vmatpush1.msra.mxu0 0.0
    %5885 = vmatprep.subr.mxu0 0.0
    %5886 = vmatpush1.msra.mxu0 0.0
    %5887 = vmatprep.subr.mxu0 0.0
    %5888 = vmatpush1.msra.mxu0 0.0
    %5889 = vmatprep.subr.mxu0 0.0
    %5890 = vmatpush1.msra.mxu0 0.0
    %5891 = vmatprep.subr.mxu0 0.0
    %5892 = vmatpush1.msra.mxu0 0.0
    %5893 = vmatprep.subr.mxu0 0.0
    %5894 = vmatpush1.msra.mxu0 0.0
    %5895 = vmatprep.subr.mxu0 0.0
    %5896 = vmatpush1.msra.mxu0 0.0
    %5897 = vmatprep.subr.mxu0 0.0
    %5898 = vmatpush1.msra.mxu0 0.0
    %5899 = vmatprep.subr.mxu0 0.0
    %5900 = vmatpush1.msra.mxu0 0.0
    %5901 = vmatprep.subr.mxu0 0.0
    %5902 = vmatpush1.msra.mxu0 0.0
    %5903 = vmatprep.subr.mxu0 0.0
    %5904 = vmatpush1.msra.mxu0 %v5869
    %5905 = vmatprep.subr.mxu0 0.0
    %5906 = vmatpush1.msra.mxu0 %v5867
    %5907 = vmatprep.subr.mxu0 0.0
    %5908 = vmatpush2.msra.mxu0 0.0
    %5909 = vmatprep.subr.mxu0 0.0
    %5910 = vmatpush2.msra.mxu0 0.0
    %5911 = vmatprep.subr.mxu0 0.0
    %5912 = vmatpush2.msra.mxu0 0.0
    %5913 = vmatprep.subr.mxu0 0.0
    %5914 = vmatpush2.msra.mxu0 0.0
    %5915 = vmatprep.subr.mxu0 0.0
    %5916 = vmatpush2.msra.mxu0 0.0
    %5917 = vmatprep.subr.mxu0 0.0
    %5918 = vmatpush2.msra.mxu0 0.0
    %5919 = vmatprep.subr.mxu0 0.0
    %5920 = vmatpush2.msra.mxu0 0.0
    %5921 = vmatprep.subr.mxu0 0.0
    %5922 = vmatpush2.msra.mxu0 0.0
    %5923 = vmatprep.subr.mxu0 0.0
    %5924 = vmatpush2.msra.mxu0 0.0
    %5925 = vmatprep.subr.mxu0 0.0
    %5926 = vmatpush2.msra.mxu0 0.0
    %5927 = vmatprep.subr.mxu0 0.0
    %5928 = vmatpush2.msra.mxu0 0.0
    %5929 = vmatprep.subr.mxu0 0.0
    %5930 = vmatpush2.msra.mxu0 0.0
    %5931 = vmatprep.subr.mxu0 0.0
    %5932 = vmatpush2.msra.mxu0 0.0
    %5933 = vmatprep.subr.mxu0 0.0
    %5934 = vmatpush2.msra.mxu0 0.0
    %5935 = vmatprep.subr.mxu0 0.0
    %5936 = vmatpush2.msra.mxu0 0.0
    %5937 = vmatprep.subr.mxu0 0.0
    %5938 = vmatpush2.msra.mxu0 0.0
    %5939 = vmatprep.mubr.f32.mxu0 0.0
    %5940 = vmatmul.mubr.f32.gmra.mxu0 %v5873
    %v5941 = vpop.f32.mrf.mxu0
    %v5942 = vadd.f32 0.0, %v5941
    %v5943 = vpop.f32.mrf.mxu0
    %5944 = vdwg.mxu0
    %v5946 = vsel %vm384, %v5863, 0
    %v5949 = vsel %vm384, %v5942, 0
    %5951 = vmatprep.subr.mxu0 0.0
    %5952 = vmatpush1.msra.mxu0 0.0
    %5953 = vmatprep.subr.mxu0 0.0
    %5954 = vmatpush1.msra.mxu0 0.0
    %5955 = vmatprep.subr.mxu0 0.0
    %5956 = vmatpush1.msra.mxu0 0.0
    %5957 = vmatprep.subr.mxu0 0.0
    %5958 = vmatpush1.msra.mxu0 0.0
    %5959 = vmatprep.subr.mxu0 0.0
    %5960 = vmatpush1.msra.mxu0 0.0
    %5961 = vmatprep.subr.mxu0 0.0
    %5962 = vmatpush1.msra.mxu0 0.0
    %5963 = vmatprep.subr.mxu0 0.0
    %5964 = vmatpush1.msra.mxu0 0.0
    %5965 = vmatprep.subr.mxu0 0.0
    %5966 = vmatpush1.msra.mxu0 0.0
    %5967 = vmatprep.subr.mxu0 0.0
    %5968 = vmatpush1.msra.mxu0 0.0
    %5969 = vmatprep.subr.mxu0 0.0
    %5970 = vmatpush1.msra.mxu0 0.0
    %5971 = vmatprep.subr.mxu0 0.0
    %5972 = vmatpush1.msra.mxu0 0.0
    %5973 = vmatprep.subr.mxu0 0.0
    %5974 = vmatpush1.msra.mxu0 0.0
    %5975 = vmatprep.subr.mxu0 0.0
    %5976 = vmatpush1.msra.mxu0 0.0
    %5977 = vmatprep.subr.mxu0 0.0
    %5978 = vmatpush1.msra.mxu0 0.0
    %5979 = vmatprep.subr.mxu0 0.0
    %5980 = vmatpush1.msra.mxu0 0.0
    %5981 = vmatprep.subr.mxu0 0.0
    %5982 = vmatpush1.msra.mxu0 %v4749
    %5983 = vmatprep.subr.mxu0 0.0
    %5984 = vmatpush2.msra.mxu0 0.0
    %5985 = vmatprep.subr.mxu0 0.0
    %5986 = vmatpush2.msra.mxu0 0.0
    %5987 = vmatprep.subr.mxu0 0.0
    %5988 = vmatpush2.msra.mxu0 0.0
    %5989 = vmatprep.subr.mxu0 0.0
    %5990 = vmatpush2.msra.mxu0 0.0
    %5991 = vmatprep.subr.mxu0 0.0
    %5992 = vmatpush2.msra.mxu0 0.0
    %5993 = vmatprep.subr.mxu0 0.0
    %5994 = vmatpush2.msra.mxu0 0.0
    %5995 = vmatprep.subr.mxu0 0.0
    %5996 = vmatpush2.msra.mxu0 0.0
    %5997 = vmatprep.subr.mxu0 0.0
    %5998 = vmatpush2.msra.mxu0 0.0
    %5999 = vmatprep.subr.mxu0 0.0
    %6000 = vmatpush2.msra.mxu0 0.0
    %6001 = vmatprep.subr.mxu0 0.0
    %6002 = vmatpush2.msra.mxu0 0.0
    %6003 = vmatprep.subr.mxu0 0.0
    %6004 = vmatpush2.msra.mxu0 0.0
    %6005 = vmatprep.subr.mxu0 0.0
    %6006 = vmatpush2.msra.mxu0 0.0
    %6007 = vmatprep.subr.mxu0 0.0
    %6008 = vmatpush2.msra.mxu0 0.0
    %6009 = vmatprep.subr.mxu0 0.0
    %6010 = vmatpush2.msra.mxu0 0.0
    %6011 = vmatprep.subr.mxu0 0.0
    %6012 = vmatpush2.msra.mxu0 0.0
    %6013 = vmatprep.subr.mxu0 0.0
    %6014 = vmatpush2.msra.mxu0 0.0
    %6015 = vmatprep.mubr.f32.mxu0 0.0
    %6016 = vmatmul.mubr.f32.gmra.mxu0 %v5946
    %v6017 = vpop.f32.mrf.mxu0
    %v6018 = vadd.f32 0.0, %v6017
    %v6019 = vpop.f32.mrf.mxu0
    %6020 = vmatprep.mubr.f32.mxu0 0.0
    %6021 = vmatmul.mubr.f32.gmra.mxu0 %v5949
    %v6022 = vpop.f32.mrf.mxu0
    %v6023 = vadd.f32 0.0, %v6022
    %v6024 = vpop.f32.mrf.mxu0
    %6025 = vdwg.mxu0
    %v6026 = vadd.f32 %v5591, %v6018
    %v6027 = vadd.f32 %v5596, %v6023
    %6028 = vrot.lane.b32.xlu0 %v4640, 104
    %v6029 = vpop.permute.xlu0 %6028
    %6030 = vrot.lane.b32.xlu0 %v4728, 104
    %v6031 = vpop.permute.xlu0 %6030
    %6032 = vrot.lane.b32.xlu0 %v4733, 104
    %v6033 = vpop.permute.xlu0 %6032
    %v6034 = vsel %vm384, %v6029, 0
    %v6036 = vsel %vm384, %v6031, 0
    %v6038 = vsel %vm384, %v6033, 0
    %6040 = vmatprep.subr.mxu0 0.0
    %6041 = vmatpush1.xpose.msra.mxu0 0.0
    %6042 = vmatprep.subr.mxu0 0.0
    %6043 = vmatpush1.xpose.msra.mxu0 0.0
    %6044 = vmatprep.subr.mxu0 0.0
    %6045 = vmatpush1.xpose.msra.mxu0 0.0
    %6046 = vmatprep.subr.mxu0 0.0
    %6047 = vmatpush1.xpose.msra.mxu0 0.0
    %6048 = vmatprep.subr.mxu0 0.0
    %6049 = vmatpush1.xpose.msra.mxu0 0.0
    %6050 = vmatprep.subr.mxu0 0.0
    %6051 = vmatpush1.xpose.msra.mxu0 0.0
    %6052 = vmatprep.subr.mxu0 0.0
    %6053 = vmatpush1.xpose.msra.mxu0 0.0
    %6054 = vmatprep.subr.mxu0 0.0
    %6055 = vmatpush1.xpose.msra.mxu0 0.0
    %6056 = vmatprep.subr.mxu0 0.0
    %6057 = vmatpush1.xpose.msra.mxu0 0.0
    %6058 = vmatprep.subr.mxu0 0.0
    %6059 = vmatpush1.xpose.msra.mxu0 0.0
    %6060 = vmatprep.subr.mxu0 0.0
    %6061 = vmatpush1.xpose.msra.mxu0 0.0
    %6062 = vmatprep.subr.mxu0 0.0
    %6063 = vmatpush1.xpose.msra.mxu0 0.0
    %6064 = vmatprep.subr.mxu0 0.0
    %6065 = vmatpush1.xpose.msra.mxu0 0.0
    %6066 = vmatprep.subr.mxu0 0.0
    %6067 = vmatpush1.xpose.msra.mxu0 0.0
    %6068 = vmatprep.subr.mxu0 0.0
    %6069 = vmatpush1.xpose.msra.mxu0 %v6038
    %6070 = vmatprep.subr.mxu0 0.0
    %6071 = vmatpush1.xpose.msra.mxu0 %v6036
    %6072 = vmatprep.subr.mxu0 0.0
    %6073 = vmatpush2.xpose.msra.mxu0 0.0
    %6074 = vmatprep.subr.mxu0 0.0
    %6075 = vmatpush2.xpose.msra.mxu0 0.0
    %6076 = vmatprep.subr.mxu0 0.0
    %6077 = vmatpush2.xpose.msra.mxu0 0.0
    %6078 = vmatprep.subr.mxu0 0.0
    %6079 = vmatpush2.xpose.msra.mxu0 0.0
    %6080 = vmatprep.subr.mxu0 0.0
    %6081 = vmatpush2.xpose.msra.mxu0 0.0
    %6082 = vmatprep.subr.mxu0 0.0
    %6083 = vmatpush2.xpose.msra.mxu0 0.0
    %6084 = vmatprep.subr.mxu0 0.0
    %6085 = vmatpush2.xpose.msra.mxu0 0.0
    %6086 = vmatprep.subr.mxu0 0.0
    %6087 = vmatpush2.xpose.msra.mxu0 0.0
    %6088 = vmatprep.subr.mxu0 0.0
    %6089 = vmatpush2.xpose.msra.mxu0 0.0
    %6090 = vmatprep.subr.mxu0 0.0
    %6091 = vmatpush2.xpose.msra.mxu0 0.0
    %6092 = vmatprep.subr.mxu0 0.0
    %6093 = vmatpush2.xpose.msra.mxu0 0.0
    %6094 = vmatprep.subr.mxu0 0.0
    %6095 = vmatpush2.xpose.msra.mxu0 0.0
    %6096 = vmatprep.subr.mxu0 0.0
    %6097 = vmatpush2.xpose.msra.mxu0 0.0
    %6098 = vmatprep.subr.mxu0 0.0
    %6099 = vmatpush2.xpose.msra.mxu0 0.0
    %6100 = vmatprep.subr.mxu0 0.0
    %6101 = vmatpush2.xpose.msra.mxu0 0.0
    %6102 = vmatprep.subr.mxu0 0.0
    %6103 = vmatpush2.xpose.msra.mxu0 0.0
    %6104 = vmatprep.mubr.f32.mxu0 0.0
    %6105 = vmatmul.mubr.f32.gmra.mxu0 %v6034
    %v6106 = vpop.f32.mrf.mxu0
    %v6107 = vadd.f32 0.0, %v6106
    %v6108 = vpop.f32.mrf.mxu0
    %6109 = vdwg.mxu0
    %6110 = vrot.lane.b32.xlu0 %v4645, 104
    %v6111 = vpop.permute.xlu0 %6110
    %6112 = vrot.lane.b32.xlu0 %v4738, 104
    %v6113 = vpop.permute.xlu0 %6112
    %6114 = vrot.lane.b32.xlu0 %v4743, 104
    %v6115 = vpop.permute.xlu0 %6114
    %v6116 = vsel %vm384, %v6111, 0
    %v6118 = vsel %vm384, %v6113, 0
    %v6120 = vsel %vm384, %v6115, 0
    %6122 = vmatprep.subr.mxu0 0.0
    %6123 = vmatpush1.xpose.msra.mxu0 0.0
    %6124 = vmatprep.subr.mxu0 0.0
    %6125 = vmatpush1.xpose.msra.mxu0 0.0
    %6126 = vmatprep.subr.mxu0 0.0
    %6127 = vmatpush1.xpose.msra.mxu0 0.0
    %6128 = vmatprep.subr.mxu0 0.0
    %6129 = vmatpush1.xpose.msra.mxu0 0.0
    %6130 = vmatprep.subr.mxu0 0.0
    %6131 = vmatpush1.xpose.msra.mxu0 0.0
    %6132 = vmatprep.subr.mxu0 0.0
    %6133 = vmatpush1.xpose.msra.mxu0 0.0
    %6134 = vmatprep.subr.mxu0 0.0
    %6135 = vmatpush1.xpose.msra.mxu0 0.0
    %6136 = vmatprep.subr.mxu0 0.0
    %6137 = vmatpush1.xpose.msra.mxu0 0.0
    %6138 = vmatprep.subr.mxu0 0.0
    %6139 = vmatpush1.xpose.msra.mxu0 0.0
    %6140 = vmatprep.subr.mxu0 0.0
    %6141 = vmatpush1.xpose.msra.mxu0 0.0
    %6142 = vmatprep.subr.mxu0 0.0
    %6143 = vmatpush1.xpose.msra.mxu0 0.0
    %6144 = vmatprep.subr.mxu0 0.0
    %6145 = vmatpush1.xpose.msra.mxu0 0.0
    %6146 = vmatprep.subr.mxu0 0.0
    %6147 = vmatpush1.xpose.msra.mxu0 0.0
    %6148 = vmatprep.subr.mxu0 0.0
    %6149 = vmatpush1.xpose.msra.mxu0 0.0
    %6150 = vmatprep.subr.mxu0 0.0
    %6151 = vmatpush1.xpose.msra.mxu0 %v6120
    %6152 = vmatprep.subr.mxu0 0.0
    %6153 = vmatpush1.xpose.msra.mxu0 %v6118
    %6154 = vmatprep.subr.mxu0 0.0
    %6155 = vmatpush2.xpose.msra.mxu0 0.0
    %6156 = vmatprep.subr.mxu0 0.0
    %6157 = vmatpush2.xpose.msra.mxu0 0.0
    %6158 = vmatprep.subr.mxu0 0.0
    %6159 = vmatpush2.xpose.msra.mxu0 0.0
    %6160 = vmatprep.subr.mxu0 0.0
    %6161 = vmatpush2.xpose.msra.mxu0 0.0
    %6162 = vmatprep.subr.mxu0 0.0
    %6163 = vmatpush2.xpose.msra.mxu0 0.0
    %6164 = vmatprep.subr.mxu0 0.0
    %6165 = vmatpush2.xpose.msra.mxu0 0.0
    %6166 = vmatprep.subr.mxu0 0.0
    %6167 = vmatpush2.xpose.msra.mxu0 0.0
    %6168 = vmatprep.subr.mxu0 0.0
    %6169 = vmatpush2.xpose.msra.mxu0 0.0
    %6170 = vmatprep.subr.mxu0 0.0
    %6171 = vmatpush2.xpose.msra.mxu0 0.0
    %6172 = vmatprep.subr.mxu0 0.0
    %6173 = vmatpush2.xpose.msra.mxu0 0.0
    %6174 = vmatprep.subr.mxu0 0.0
    %6175 = vmatpush2.xpose.msra.mxu0 0.0
    %6176 = vmatprep.subr.mxu0 0.0
    %6177 = vmatpush2.xpose.msra.mxu0 0.0
    %6178 = vmatprep.subr.mxu0 0.0
    %6179 = vmatpush2.xpose.msra.mxu0 0.0
    %6180 = vmatprep.subr.mxu0 0.0
    %6181 = vmatpush2.xpose.msra.mxu0 0.0
    %6182 = vmatprep.subr.mxu0 0.0
    %6183 = vmatpush2.xpose.msra.mxu0 0.0
    %6184 = vmatprep.subr.mxu0 0.0
    %6185 = vmatpush2.xpose.msra.mxu0 0.0
    %6186 = vmatprep.mubr.f32.mxu0 0.0
    %6187 = vmatmul.mubr.f32.gmra.mxu0 %v6116
    %v6188 = vpop.f32.mrf.mxu0
    %v6189 = vadd.f32 0.0, %v6188
    %v6190 = vpop.f32.mrf.mxu0
    %6191 = vdwg.mxu0
    %v6192 = vmul.f32 %v6107, 0.35355338
    %v6193 = vmul.f32 %v6189, 0.35355338
    %v6194 = vsel %vm545, %v6192, -inf
    %6195 = vmax.xlane.f32.xlu0 %v6194
    %v6196 = vpop.xlane.xlu0 %6195
    %v6197 = vsel %vm545, %v6193, -inf
    %6198 = vmax.xlane.f32.xlu0 %v6197
    %v6199 = vpop.xlane.xlu0 %6198
    %v6200 = vsub.f32 %v6192, %v6196
    %v6201 = vsub.f32 %v6193, %v6199
    %v6202 = vmul.f32 %v6200, 1.442695
    %v6203 = vpow.pop %v6202
    %v6204 = vmul.f32 %v6201, 1.442695
    %v6205 = vpow.pop %v6204
    %v6206 = vsel %vm545, %v6203, 0.0
    %6207 = vadd.xlane.f32.xlu0 %v6206
    %v6208 = vpop.xlane.xlu0 %6207
    %v6209 = vsel %vm545, %v6205, 0.0
    %6210 = vadd.xlane.f32.xlu0 %v6209
    %v6211 = vpop.xlane.xlu0 %6210
    %v6212 = vrcp.pop %v6208
    %v6213 = vrcp.pop %v6211
    %v6214 = vmul.f32 %v6203, %v6212
    %v6215 = vmul.f32 %v6205, %v6213
    %6216 = vrot.lane.b32.xlu0 %v4728, 72
    %v6217 = vpop.permute.xlu0 %6216
    %6218 = vrot.lane.b32.xlu0 %v4733, 72
    %v6219 = vpop.permute.xlu0 %6218
    %v6223 = vsel %vm545, %v6214, 0
    %6225 = vmatprep.subr.mxu0 0.0
    %6226 = vmatpush1.msra.mxu0 0.0
    %6227 = vmatprep.subr.mxu0 0.0
    %6228 = vmatpush1.msra.mxu0 0.0
    %6229 = vmatprep.subr.mxu0 0.0
    %6230 = vmatpush1.msra.mxu0 0.0
    %6231 = vmatprep.subr.mxu0 0.0
    %6232 = vmatpush1.msra.mxu0 0.0
    %6233 = vmatprep.subr.mxu0 0.0
    %6234 = vmatpush1.msra.mxu0 0.0
    %6235 = vmatprep.subr.mxu0 0.0
    %6236 = vmatpush1.msra.mxu0 0.0
    %6237 = vmatprep.subr.mxu0 0.0
    %6238 = vmatpush1.msra.mxu0 0.0
    %6239 = vmatprep.subr.mxu0 0.0
    %6240 = vmatpush1.msra.mxu0 0.0
    %6241 = vmatprep.subr.mxu0 0.0
    %6242 = vmatpush1.msra.mxu0 0.0
    %6243 = vmatprep.subr.mxu0 0.0
    %6244 = vmatpush1.msra.mxu0 0.0
    %6245 = vmatprep.subr.mxu0 0.0
    %6246 = vmatpush1.msra.mxu0 0.0
    %6247 = vmatprep.subr.mxu0 0.0
    %6248 = vmatpush1.msra.mxu0 0.0
    %6249 = vmatprep.subr.mxu0 0.0
    %6250 = vmatpush1.msra.mxu0 0.0
    %6251 = vmatprep.subr.mxu0 0.0
    %6252 = vmatpush1.msra.mxu0 0.0
    %6253 = vmatprep.subr.mxu0 0.0
    %6254 = vmatpush1.msra.mxu0 %v6219
    %6255 = vmatprep.subr.mxu0 0.0
    %6256 = vmatpush1.msra.mxu0 %v6217
    %6257 = vmatprep.subr.mxu0 0.0
    %6258 = vmatpush2.msra.mxu0 0.0
    %6259 = vmatprep.subr.mxu0 0.0
    %6260 = vmatpush2.msra.mxu0 0.0
    %6261 = vmatprep.subr.mxu0 0.0
    %6262 = vmatpush2.msra.mxu0 0.0
    %6263 = vmatprep.subr.mxu0 0.0
    %6264 = vmatpush2.msra.mxu0 0.0
    %6265 = vmatprep.subr.mxu0 0.0
    %6266 = vmatpush2.msra.mxu0 0.0
    %6267 = vmatprep.subr.mxu0 0.0
    %6268 = vmatpush2.msra.mxu0 0.0
    %6269 = vmatprep.subr.mxu0 0.0
    %6270 = vmatpush2.msra.mxu0 0.0
    %6271 = vmatprep.subr.mxu0 0.0
    %6272 = vmatpush2.msra.mxu0 0.0
    %6273 = vmatprep.subr.mxu0 0.0
    %6274 = vmatpush2.msra.mxu0 0.0
    %6275 = vmatprep.subr.mxu0 0.0
    %6276 = vmatpush2.msra.mxu0 0.0
    %6277 = vmatprep.subr.mxu0 0.0
    %6278 = vmatpush2.msra.mxu0 0.0
    %6279 = vmatprep.subr.mxu0 0.0
    %6280 = vmatpush2.msra.mxu0 0.0
    %6281 = vmatprep.subr.mxu0 0.0
    %6282 = vmatpush2.msra.mxu0 0.0
    %6283 = vmatprep.subr.mxu0 0.0
    %6284 = vmatpush2.msra.mxu0 0.0
    %6285 = vmatprep.subr.mxu0 0.0
    %6286 = vmatpush2.msra.mxu0 0.0
    %6287 = vmatprep.subr.mxu0 0.0
    %6288 = vmatpush2.msra.mxu0 0.0
    %6289 = vmatprep.mubr.f32.mxu0 0.0
    %6290 = vmatmul.mubr.f32.gmra.mxu0 %v6223
    %v6291 = vpop.f32.mrf.mxu0
    %v6292 = vadd.f32 0.0, %v6291
    %v6293 = vpop.f32.mrf.mxu0
    %6294 = vdwg.mxu0
    %6295 = vrot.lane.b32.xlu0 %v4738, 72
    %v6296 = vpop.permute.xlu0 %6295
    %6297 = vrot.lane.b32.xlu0 %v4743, 72
    %v6298 = vpop.permute.xlu0 %6297
    %v6302 = vsel %vm545, %v6215, 0
    %6304 = vmatprep.subr.mxu0 0.0
    %6305 = vmatpush1.msra.mxu0 0.0
    %6306 = vmatprep.subr.mxu0 0.0
    %6307 = vmatpush1.msra.mxu0 0.0
    %6308 = vmatprep.subr.mxu0 0.0
    %6309 = vmatpush1.msra.mxu0 0.0
    %6310 = vmatprep.subr.mxu0 0.0
    %6311 = vmatpush1.msra.mxu0 0.0
    %6312 = vmatprep.subr.mxu0 0.0
    %6313 = vmatpush1.msra.mxu0 0.0
    %6314 = vmatprep.subr.mxu0 0.0
    %6315 = vmatpush1.msra.mxu0 0.0
    %6316 = vmatprep.subr.mxu0 0.0
    %6317 = vmatpush1.msra.mxu0 0.0
    %6318 = vmatprep.subr.mxu0 0.0
    %6319 = vmatpush1.msra.mxu0 0.0
    %6320 = vmatprep.subr.mxu0 0.0
    %6321 = vmatpush1.msra.mxu0 0.0
    %6322 = vmatprep.subr.mxu0 0.0
    %6323 = vmatpush1.msra.mxu0 0.0
    %6324 = vmatprep.subr.mxu0 0.0
    %6325 = vmatpush1.msra.mxu0 0.0
    %6326 = vmatprep.subr.mxu0 0.0
    %6327 = vmatpush1.msra.mxu0 0.0
    %6328 = vmatprep.subr.mxu0 0.0
    %6329 = vmatpush1.msra.mxu0 0.0
    %6330 = vmatprep.subr.mxu0 0.0
    %6331 = vmatpush1.msra.mxu0 0.0
    %6332 = vmatprep.subr.mxu0 0.0
    %6333 = vmatpush1.msra.mxu0 %v6298
    %6334 = vmatprep.subr.mxu0 0.0
    %6335 = vmatpush1.msra.mxu0 %v6296
    %6336 = vmatprep.subr.mxu0 0.0
    %6337 = vmatpush2.msra.mxu0 0.0
    %6338 = vmatprep.subr.mxu0 0.0
    %6339 = vmatpush2.msra.mxu0 0.0
    %6340 = vmatprep.subr.mxu0 0.0
    %6341 = vmatpush2.msra.mxu0 0.0
    %6342 = vmatprep.subr.mxu0 0.0
    %6343 = vmatpush2.msra.mxu0 0.0
    %6344 = vmatprep.subr.mxu0 0.0
    %6345 = vmatpush2.msra.mxu0 0.0
    %6346 = vmatprep.subr.mxu0 0.0
    %6347 = vmatpush2.msra.mxu0 0.0
    %6348 = vmatprep.subr.mxu0 0.0
    %6349 = vmatpush2.msra.mxu0 0.0
    %6350 = vmatprep.subr.mxu0 0.0
    %6351 = vmatpush2.msra.mxu0 0.0
    %6352 = vmatprep.subr.mxu0 0.0
    %6353 = vmatpush2.msra.mxu0 0.0
    %6354 = vmatprep.subr.mxu0 0.0
    %6355 = vmatpush2.msra.mxu0 0.0
    %6356 = vmatprep.subr.mxu0 0.0
    %6357 = vmatpush2.msra.mxu0 0.0
    %6358 = vmatprep.subr.mxu0 0.0
    %6359 = vmatpush2.msra.mxu0 0.0
    %6360 = vmatprep.subr.mxu0 0.0
    %6361 = vmatpush2.msra.mxu0 0.0
    %6362 = vmatprep.subr.mxu0 0.0
    %6363 = vmatpush2.msra.mxu0 0.0
    %6364 = vmatprep.subr.mxu0 0.0
    %6365 = vmatpush2.msra.mxu0 0.0
    %6366 = vmatprep.subr.mxu0 0.0
    %6367 = vmatpush2.msra.mxu0 0.0
    %6368 = vmatprep.mubr.f32.mxu0 0.0
    %6369 = vmatmul.mubr.f32.gmra.mxu0 %v6302
    %v6370 = vpop.f32.mrf.mxu0
    %v6371 = vadd.f32 0.0, %v6370
    %v6372 = vpop.f32.mrf.mxu0
    %6373 = vdwg.mxu0
    %v6375 = vsel %vm384, %v6292, 0
    %v6378 = vsel %vm384, %v6371, 0
    %6380 = vmatprep.subr.mxu0 0.0
    %6381 = vmatpush1.msra.mxu0 0.0
    %6382 = vmatprep.subr.mxu0 0.0
    %6383 = vmatpush1.msra.mxu0 0.0
    %6384 = vmatprep.subr.mxu0 0.0
    %6385 = vmatpush1.msra.mxu0 0.0
    %6386 = vmatprep.subr.mxu0 0.0
    %6387 = vmatpush1.msra.mxu0 0.0
    %6388 = vmatprep.subr.mxu0 0.0
    %6389 = vmatpush1.msra.mxu0 0.0
    %6390 = vmatprep.subr.mxu0 0.0
    %6391 = vmatpush1.msra.mxu0 0.0
    %6392 = vmatprep.subr.mxu0 0.0
    %6393 = vmatpush1.msra.mxu0 0.0
    %6394 = vmatprep.subr.mxu0 0.0
    %6395 = vmatpush1.msra.mxu0 0.0
    %6396 = vmatprep.subr.mxu0 0.0
    %6397 = vmatpush1.msra.mxu0 0.0
    %6398 = vmatprep.subr.mxu0 0.0
    %6399 = vmatpush1.msra.mxu0 0.0
    %6400 = vmatprep.subr.mxu0 0.0
    %6401 = vmatpush1.msra.mxu0 0.0
    %6402 = vmatprep.subr.mxu0 0.0
    %6403 = vmatpush1.msra.mxu0 0.0
    %6404 = vmatprep.subr.mxu0 0.0
    %6405 = vmatpush1.msra.mxu0 0.0
    %6406 = vmatprep.subr.mxu0 0.0
    %6407 = vmatpush1.msra.mxu0 0.0
    %6408 = vmatprep.subr.mxu0 0.0
    %6409 = vmatpush1.msra.mxu0 0.0
    %6410 = vmatprep.subr.mxu0 0.0
    %6411 = vmatpush1.msra.mxu0 %v4750
    %6412 = vmatprep.subr.mxu0 0.0
    %6413 = vmatpush2.msra.mxu0 0.0
    %6414 = vmatprep.subr.mxu0 0.0
    %6415 = vmatpush2.msra.mxu0 0.0
    %6416 = vmatprep.subr.mxu0 0.0
    %6417 = vmatpush2.msra.mxu0 0.0
    %6418 = vmatprep.subr.mxu0 0.0
    %6419 = vmatpush2.msra.mxu0 0.0
    %6420 = vmatprep.subr.mxu0 0.0
    %6421 = vmatpush2.msra.mxu0 0.0
    %6422 = vmatprep.subr.mxu0 0.0
    %6423 = vmatpush2.msra.mxu0 0.0
    %6424 = vmatprep.subr.mxu0 0.0
    %6425 = vmatpush2.msra.mxu0 0.0
    %6426 = vmatprep.subr.mxu0 0.0
    %6427 = vmatpush2.msra.mxu0 0.0
    %6428 = vmatprep.subr.mxu0 0.0
    %6429 = vmatpush2.msra.mxu0 0.0
    %6430 = vmatprep.subr.mxu0 0.0
    %6431 = vmatpush2.msra.mxu0 0.0
    %6432 = vmatprep.subr.mxu0 0.0
    %6433 = vmatpush2.msra.mxu0 0.0
    %6434 = vmatprep.subr.mxu0 0.0
    %6435 = vmatpush2.msra.mxu0 0.0
    %6436 = vmatprep.subr.mxu0 0.0
    %6437 = vmatpush2.msra.mxu0 0.0
    %6438 = vmatprep.subr.mxu0 0.0
    %6439 = vmatpush2.msra.mxu0 0.0
    %6440 = vmatprep.subr.mxu0 0.0
    %6441 = vmatpush2.msra.mxu0 0.0
    %6442 = vmatprep.subr.mxu0 0.0
    %6443 = vmatpush2.msra.mxu0 0.0
    %6444 = vmatprep.mubr.f32.mxu0 0.0
    %6445 = vmatmul.mubr.f32.gmra.mxu0 %v6375
    %v6446 = vpop.f32.mrf.mxu0
    %v6447 = vadd.f32 0.0, %v6446
    %v6448 = vpop.f32.mrf.mxu0
    %6449 = vmatprep.mubr.f32.mxu0 0.0
    %6450 = vmatmul.mubr.f32.gmra.mxu0 %v6378
    %v6451 = vpop.f32.mrf.mxu0
    %v6452 = vadd.f32 0.0, %v6451
    %v6453 = vpop.f32.mrf.mxu0
    %6454 = vdwg.mxu0
    %v6455 = vadd.f32 %v6026, %v6447
    %v6456 = vadd.f32 %v6027, %v6452
    %s6457 = scalar_lea.vmem %s10, 2
    %v6458 = vld [vmem:[%s6457] sm:$0x1]
    %v6460 = vlaneseq
    %v6461 = vshrl.u32 %v6460, 7
    %v6462 = vsub.s32 0, %v6461
    %v6463 = vrot.slane %v6458, %v6462
    %v6465 = vadd.f32 %v6455, %v6463
    %v6466 = vadd.f32 %v6456, %v6463
    %s6467 = scalar_lea.vmem %s11, 8
    %v6468 = vld [vmem:[%s6467] sm:$0xf]
    %v6469 = vadd.f32 %v4552, %v6465
    %v6470 = vadd.f32 %v4553, %v6466
    %v6471 = vsel %vm193, %v6469, 0.0
    %6472 = vadd.xlane.f32.xlu0 %v6471
    %v6473 = vpop.xlane.xlu0 %6472
    %v6474 = vsel %vm193, %v6470, 0.0
    %6475 = vadd.xlane.f32.xlu0 %v6474
    %v6476 = vpop.xlane.xlu0 %6475
    %v6477 = vmul.f32 %v6473, %v2110
    %v6478 = vmul.f32 %v6476, %v2110
    %v6479 = vsub.f32 %v6469, %v6477
    %v6480 = vsub.f32 %v6470, %v6478
    %v6481 = vmul.f32 %v6479, %v6479
    %v6482 = vmul.f32 %v6480, %v6480
    %v6483 = vsel %vm193, %v6481, 0.0
    %6484 = vadd.xlane.f32.xlu0 %v6483
    %v6485 = vpop.xlane.xlu0 %6484
    %v6486 = vsel %vm193, %v6482, 0.0
    %6487 = vadd.xlane.f32.xlu0 %v6486
    %v6488 = vpop.xlane.xlu0 %6487
    %v6489 = vmul.f32 %v6485, %v2110
    %v6490 = vmul.f32 %v6488, %v2110
    %v6491 = vadd.f32 %v6489, 1e-05
    %v6492 = vadd.f32 %v6490, 1e-05
    %v6493 = vrsqrt.pop %v6491
    %v6494 = vrsqrt.pop %v6492
    %v6495 = vmul.f32 %v6479, %v6493
    %v6496 = vmul.f32 %v6480, %v6494
    %v6497 = vlaneseq
    %v6498 = vshrl.u32 %v6497, 7
    %v6499 = vsub.s32 0, %v6498
    %v6500 = vrot.slane %v6468, %v6499
    %v6501 = vmul.f32 %v6495, %v6500
    %v6502 = vmul.f32 %v6496, %v6500
    %v6503 = vlaneseq
    %v6504 = vshrl.u32 %v6503, 7
    %v6505 = vsub.s32 1, %v6504
    %v6506 = vrot.slane %v6468, %v6505
    %v6507 = vadd.f32 %v6501, %v6506
    %v6508 = vadd.f32 %v6502, %v6506
    %s6509 = scalar_lea.vmem %s12, 64
    %v6510 = vld [vmem:[%s6509] sm:$0xff]
    %v6511 = vld [vmem:[%s6509 + $0x8] sm:$0xff]
    %v6512 = vld [vmem:[%s6509 + $0x10] sm:$0xff]
    %v6513 = vld [vmem:[%s6509 + $0x18] sm:$0xff]
    %s6514 = scalar_lea.vmem %s13, 2
    %v6515 = vld [vmem:[%s6514] sm:$0x1]
    %v6517 = vlaneseq
    %v6518 = vshrl.u32 %v6517, 7
    %v6519 = vsub.s32 0, %v6518
    %v6520 = vrot.slane %v6515, %v6519
    %v6523 = vsel %vm193, %v6507, 0
    %v6526 = vsel %vm193, %v6508, 0
    %6528 = vmatprep.subr.mxu0 0.0
    %6529 = vmatpush1.msra.mxu0 0.0
    %6530 = vmatprep.subr.mxu0 0.0
    %6531 = vmatpush1.msra.mxu0 0.0
    %6532 = vmatprep.subr.mxu0 0.0
    %6533 = vmatpush1.msra.mxu0 0.0
    %6534 = vmatprep.subr.mxu0 0.0
    %6535 = vmatpush1.msra.mxu0 0.0
    %6536 = vmatprep.subr.mxu0 0.0
    %6537 = vmatpush1.msra.mxu0 0.0
    %6538 = vmatprep.subr.mxu0 0.0
    %6539 = vmatpush1.msra.mxu0 0.0
    %6540 = vmatprep.subr.mxu0 0.0
    %6541 = vmatpush1.msra.mxu0 0.0
    %6542 = vmatprep.subr.mxu0 0.0
    %6543 = vmatpush1.msra.mxu0 0.0
    %6544 = vmatprep.subr.mxu0 0.0
    %6545 = vmatpush1.msra.mxu0 0.0
    %6546 = vmatprep.subr.mxu0 0.0
    %6547 = vmatpush1.msra.mxu0 0.0
    %6548 = vmatprep.subr.mxu0 0.0
    %6549 = vmatpush1.msra.mxu0 0.0
    %6550 = vmatprep.subr.mxu0 0.0
    %6551 = vmatpush1.msra.mxu0 0.0
    %6552 = vmatprep.subr.mxu0 0.0
    %6553 = vmatpush1.msra.mxu0 %v6513
    %6554 = vmatprep.subr.mxu0 0.0
    %6555 = vmatpush1.msra.mxu0 %v6512
    %6556 = vmatprep.subr.mxu0 0.0
    %6557 = vmatpush1.msra.mxu0 %v6511
    %6558 = vmatprep.subr.mxu0 0.0
    %6559 = vmatpush1.msra.mxu0 %v6510
    %6560 = vmatprep.subr.mxu0 0.0
    %6561 = vmatpush2.msra.mxu0 0.0
    %6562 = vmatprep.subr.mxu0 0.0
    %6563 = vmatpush2.msra.mxu0 0.0
    %6564 = vmatprep.subr.mxu0 0.0
    %6565 = vmatpush2.msra.mxu0 0.0
    %6566 = vmatprep.subr.mxu0 0.0
    %6567 = vmatpush2.msra.mxu0 0.0
    %6568 = vmatprep.subr.mxu0 0.0
    %6569 = vmatpush2.msra.mxu0 0.0
    %6570 = vmatprep.subr.mxu0 0.0
    %6571 = vmatpush2.msra.mxu0 0.0
    %6572 = vmatprep.subr.mxu0 0.0
    %6573 = vmatpush2.msra.mxu0 0.0
    %6574 = vmatprep.subr.mxu0 0.0
    %6575 = vmatpush2.msra.mxu0 0.0
    %6576 = vmatprep.subr.mxu0 0.0
    %6577 = vmatpush2.msra.mxu0 0.0
    %6578 = vmatprep.subr.mxu0 0.0
    %6579 = vmatpush2.msra.mxu0 0.0
    %6580 = vmatprep.subr.mxu0 0.0
    %6581 = vmatpush2.msra.mxu0 0.0
    %6582 = vmatprep.subr.mxu0 0.0
    %6583 = vmatpush2.msra.mxu0 0.0
    %6584 = vmatprep.subr.mxu0 0.0
    %6585 = vmatpush2.msra.mxu0 0.0
    %6586 = vmatprep.subr.mxu0 0.0
    %6587 = vmatpush2.msra.mxu0 0.0
    %6588 = vmatprep.subr.mxu0 0.0
    %6589 = vmatpush2.msra.mxu0 0.0
    %6590 = vmatprep.subr.mxu0 0.0
    %6591 = vmatpush2.msra.mxu0 0.0
    %6592 = vmatprep.mubr.f32.mxu0 0.0
    %6593 = vmatmul.mubr.f32.gmra.mxu0 %v6523
    %v6594 = vpop.f32.mrf.mxu0
    %v6595 = vadd.f32 %v6520, %v6594
    %v6596 = vpop.f32.mrf.mxu0
    %6597 = vmatprep.mubr.f32.mxu0 0.0
    %6598 = vmatmul.mubr.f32.gmra.mxu0 %v6526
    %v6599 = vpop.f32.mrf.mxu0
    %v6600 = vadd.f32 %v6520, %v6599
    %v6601 = vpop.f32.mrf.mxu0
    %6602 = vdwg.mxu0
    %v6603 = vmax.f32 %v6595, 0.0
    %v6604 = vmax.f32 %v6600, 0.0
    %s6605 = scalar_lea.vmem %s14, 64
    %v6606 = vld [vmem:[%s6605] sm:$0xff]
    %v6607 = vld [vmem:[%s6605 + $0x8] sm:$0xff]
    %v6608 = vld [vmem:[%s6605 + $0x10] sm:$0xff]
    %v6609 = vld [vmem:[%s6605 + $0x18] sm:$0xff]
    %s6610 = scalar_lea.vmem %s15, 2
    %v6611 = vld [vmem:[%s6610] sm:$0x1]
    %v6613 = vlaneseq
    %v6614 = vshrl.u32 %v6613, 7
    %v6615 = vsub.s32 0, %v6614
    %v6616 = vrot.slane %v6611, %v6615
    %v6619 = vsel %vm193, %v6603, 0
    %v6622 = vsel %vm193, %v6604, 0
    %6624 = vmatprep.subr.mxu0 0.0
    %6625 = vmatpush1.msra.mxu0 0.0
    %6626 = vmatprep.subr.mxu0 0.0
    %6627 = vmatpush1.msra.mxu0 0.0
    %6628 = vmatprep.subr.mxu0 0.0
    %6629 = vmatpush1.msra.mxu0 0.0
    %6630 = vmatprep.subr.mxu0 0.0
    %6631 = vmatpush1.msra.mxu0 0.0
    %6632 = vmatprep.subr.mxu0 0.0
    %6633 = vmatpush1.msra.mxu0 0.0
    %6634 = vmatprep.subr.mxu0 0.0
    %6635 = vmatpush1.msra.mxu0 0.0
    %6636 = vmatprep.subr.mxu0 0.0
    %6637 = vmatpush1.msra.mxu0 0.0
    %6638 = vmatprep.subr.mxu0 0.0
    %6639 = vmatpush1.msra.mxu0 0.0
    %6640 = vmatprep.subr.mxu0 0.0
    %6641 = vmatpush1.msra.mxu0 0.0
    %6642 = vmatprep.subr.mxu0 0.0
    %6643 = vmatpush1.msra.mxu0 0.0
    %6644 = vmatprep.subr.mxu0 0.0
    %6645 = vmatpush1.msra.mxu0 0.0
    %6646 = vmatprep.subr.mxu0 0.0
    %6647 = vmatpush1.msra.mxu0 0.0
    %6648 = vmatprep.subr.mxu0 0.0
    %6649 = vmatpush1.msra.mxu0 %v6609
    %6650 = vmatprep.subr.mxu0 0.0
    %6651 = vmatpush1.msra.mxu0 %v6608
    %6652 = vmatprep.subr.mxu0 0.0
    %6653 = vmatpush1.msra.mxu0 %v6607
    %6654 = vmatprep.subr.mxu0 0.0
    %6655 = vmatpush1.msra.mxu0 %v6606
    %6656 = vmatprep.subr.mxu0 0.0
    %6657 = vmatpush2.msra.mxu0 0.0
    %6658 = vmatprep.subr.mxu0 0.0
    %6659 = vmatpush2.msra.mxu0 0.0
    %6660 = vmatprep.subr.mxu0 0.0
    %6661 = vmatpush2.msra.mxu0 0.0
    %6662 = vmatprep.subr.mxu0 0.0
    %6663 = vmatpush2.msra.mxu0 0.0
    %6664 = vmatprep.subr.mxu0 0.0
    %6665 = vmatpush2.msra.mxu0 0.0
    %6666 = vmatprep.subr.mxu0 0.0
    %6667 = vmatpush2.msra.mxu0 0.0
    %6668 = vmatprep.subr.mxu0 0.0
    %6669 = vmatpush2.msra.mxu0 0.0
    %6670 = vmatprep.subr.mxu0 0.0
    %6671 = vmatpush2.msra.mxu0 0.0
    %6672 = vmatprep.subr.mxu0 0.0
    %6673 = vmatpush2.msra.mxu0 0.0
    %6674 = vmatprep.subr.mxu0 0.0
    %6675 = vmatpush2.msra.mxu0 0.0
    %6676 = vmatprep.subr.mxu0 0.0
    %6677 = vmatpush2.msra.mxu0 0.0
    %6678 = vmatprep.subr.mxu0 0.0
    %6679 = vmatpush2.msra.mxu0 0.0
    %6680 = vmatprep.subr.mxu0 0.0
    %6681 = vmatpush2.msra.mxu0 0.0
    %6682 = vmatprep.subr.mxu0 0.0
    %6683 = vmatpush2.msra.mxu0 0.0
    %6684 = vmatprep.subr.mxu0 0.0
    %6685 = vmatpush2.msra.mxu0 0.0
    %6686 = vmatprep.subr.mxu0 0.0
    %6687 = vmatpush2.msra.mxu0 0.0
    %6688 = vmatprep.mubr.f32.mxu0 0.0
    %6689 = vmatmul.mubr.f32.gmra.mxu0 %v6619
    %v6690 = vpop.f32.mrf.mxu0
    %v6691 = vadd.f32 %v6616, %v6690
    %v6692 = vpop.f32.mrf.mxu0
    %6693 = vmatprep.mubr.f32.mxu0 0.0
    %6694 = vmatmul.mubr.f32.gmra.mxu0 %v6622
    %v6695 = vpop.f32.mrf.mxu0
    %v6696 = vadd.f32 %v6616, %v6695
    %v6697 = vpop.f32.mrf.mxu0
    %6698 = vdwg.mxu0
    %v6699 = vadd.f32 %v6507, %v6691
    %v6700 = vadd.f32 %v6508, %v6696
    %v6701 = vsel %vm193, %v6699, 0.0
    %6702 = vadd.xlane.f32.xlu0 %v6701
    %v6703 = vpop.xlane.xlu0 %6702
    %v6704 = vsel %vm193, %v6700, 0.0
    %6705 = vadd.xlane.f32.xlu0 %v6704
    %v6706 = vpop.xlane.xlu0 %6705
    %v6707 = vmul.f32 %v6703, %v2110
    %v6708 = vmul.f32 %v6706, %v2110
    %v6709 = vsub.f32 %v6699, %v6707
    %v6710 = vsub.f32 %v6700, %v6708
    %v6711 = vmul.f32 %v6709, %v6709
    %v6712 = vmul.f32 %v6710, %v6710
    %v6713 = vsel %vm193, %v6711, 0.0
    %6714 = vadd.xlane.f32.xlu0 %v6713
    %v6715 = vpop.xlane.xlu0 %6714
    %v6716 = vsel %vm193, %v6712, 0.0
    %6717 = vadd.xlane.f32.xlu0 %v6716
    %v6718 = vpop.xlane.xlu0 %6717
    %v6719 = vmul.f32 %v6715, %v2110
    %v6720 = vmul.f32 %v6718, %v2110
    %v6721 = vadd.f32 %v6719, 1e-05
    %v6722 = vadd.f32 %v6720, 1e-05
    %v6723 = vrsqrt.pop %v6721
    %v6724 = vrsqrt.pop %v6722
    %v6725 = vmul.f32 %v6709, %v6723
    %v6726 = vmul.f32 %v6710, %v6724
    %v6727 = vlaneseq
    %v6728 = vshrl.u32 %v6727, 7
    %v6729 = vsub.s32 2, %v6728
    %v6730 = vrot.slane %v6468, %v6729
    %v6731 = vmul.f32 %v6725, %v6730
    %v6732 = vmul.f32 %v6726, %v6730
    %v6733 = vlaneseq
    %v6734 = vshrl.u32 %v6733, 7
    %v6735 = vsub.s32 3, %v6734
    %v6736 = vrot.slane %v6468, %v6735
    %v6737 = vadd.f32 %v6731, %v6736
    %v6738 = vadd.f32 %v6732, %v6736
    %s6739 = scalar_lea.vmem %s5, 96
    %v6740 = vld [vmem:[%s6739] sm:$0xff]
    %v6741 = vld [vmem:[%s6739 + $0x8] sm:$0xff]
    %v6742 = vld [vmem:[%s6739 + $0x10] sm:$0xff]
    %v6743 = vld [vmem:[%s6739 + $0x18] sm:$0xff]
    %s6744 = scalar_lea.vmem %s6, 3
    %v6745 = vld [vmem:[%s6744] sm:$0x1]
    %v6747 = vlaneseq
    %v6748 = vshrl.u32 %v6747, 7
    %v6749 = vsub.s32 0, %v6748
    %v6750 = vrot.slane %v6745, %v6749
    %v6753 = vsel %vm193, %v6737, 0
    %v6756 = vsel %vm193, %v6738, 0
    %6758 = vmatprep.subr.mxu0 0.0
    %6759 = vmatpush1.msra.mxu0 0.0
    %6760 = vmatprep.subr.mxu0 0.0
    %6761 = vmatpush1.msra.mxu0 0.0
    %6762 = vmatprep.subr.mxu0 0.0
    %6763 = vmatpush1.msra.mxu0 0.0
    %6764 = vmatprep.subr.mxu0 0.0
    %6765 = vmatpush1.msra.mxu0 0.0
    %6766 = vmatprep.subr.mxu0 0.0
    %6767 = vmatpush1.msra.mxu0 0.0
    %6768 = vmatprep.subr.mxu0 0.0
    %6769 = vmatpush1.msra.mxu0 0.0
    %6770 = vmatprep.subr.mxu0 0.0
    %6771 = vmatpush1.msra.mxu0 0.0
    %6772 = vmatprep.subr.mxu0 0.0
    %6773 = vmatpush1.msra.mxu0 0.0
    %6774 = vmatprep.subr.mxu0 0.0
    %6775 = vmatpush1.msra.mxu0 0.0
    %6776 = vmatprep.subr.mxu0 0.0
    %6777 = vmatpush1.msra.mxu0 0.0
    %6778 = vmatprep.subr.mxu0 0.0
    %6779 = vmatpush1.msra.mxu0 0.0
    %6780 = vmatprep.subr.mxu0 0.0
    %6781 = vmatpush1.msra.mxu0 0.0
    %6782 = vmatprep.subr.mxu0 0.0
    %6783 = vmatpush1.msra.mxu0 %v6743
    %6784 = vmatprep.subr.mxu0 0.0
    %6785 = vmatpush1.msra.mxu0 %v6742
    %6786 = vmatprep.subr.mxu0 0.0
    %6787 = vmatpush1.msra.mxu0 %v6741
    %6788 = vmatprep.subr.mxu0 0.0
    %6789 = vmatpush1.msra.mxu0 %v6740
    %6790 = vmatprep.subr.mxu0 0.0
    %6791 = vmatpush2.msra.mxu0 0.0
    %6792 = vmatprep.subr.mxu0 0.0
    %6793 = vmatpush2.msra.mxu0 0.0
    %6794 = vmatprep.subr.mxu0 0.0
    %6795 = vmatpush2.msra.mxu0 0.0
    %6796 = vmatprep.subr.mxu0 0.0
    %6797 = vmatpush2.msra.mxu0 0.0
    %6798 = vmatprep.subr.mxu0 0.0
    %6799 = vmatpush2.msra.mxu0 0.0
    %6800 = vmatprep.subr.mxu0 0.0
    %6801 = vmatpush2.msra.mxu0 0.0
    %6802 = vmatprep.subr.mxu0 0.0
    %6803 = vmatpush2.msra.mxu0 0.0
    %6804 = vmatprep.subr.mxu0 0.0
    %6805 = vmatpush2.msra.mxu0 0.0
    %6806 = vmatprep.subr.mxu0 0.0
    %6807 = vmatpush2.msra.mxu0 0.0
    %6808 = vmatprep.subr.mxu0 0.0
    %6809 = vmatpush2.msra.mxu0 0.0
    %6810 = vmatprep.subr.mxu0 0.0
    %6811 = vmatpush2.msra.mxu0 0.0
    %6812 = vmatprep.subr.mxu0 0.0
    %6813 = vmatpush2.msra.mxu0 0.0
    %6814 = vmatprep.subr.mxu0 0.0
    %6815 = vmatpush2.msra.mxu0 0.0
    %6816 = vmatprep.subr.mxu0 0.0
    %6817 = vmatpush2.msra.mxu0 0.0
    %6818 = vmatprep.subr.mxu0 0.0
    %6819 = vmatpush2.msra.mxu0 0.0
    %6820 = vmatprep.subr.mxu0 0.0
    %6821 = vmatpush2.msra.mxu0 0.0
    %6822 = vmatprep.mubr.f32.mxu0 0.0
    %6823 = vmatmul.mubr.f32.gmra.mxu0 %v6753
    %v6824 = vpop.f32.mrf.mxu0
    %v6825 = vadd.f32 %v6750, %v6824
    %v6826 = vpop.f32.mrf.mxu0
    %6827 = vmatprep.mubr.f32.mxu0 0.0
    %6828 = vmatmul.mubr.f32.gmra.mxu0 %v6756
    %v6829 = vpop.f32.mrf.mxu0
    %v6830 = vadd.f32 %v6750, %v6829
    %v6831 = vpop.f32.mrf.mxu0
    %6832 = vdwg.mxu0
    %s6833 = scalar_lea.vmem %s7, 96
    %v6834 = vld [vmem:[%s6833] sm:$0xff]
    %v6835 = vld [vmem:[%s6833 + $0x8] sm:$0xff]
    %v6836 = vld [vmem:[%s6833 + $0x10] sm:$0xff]
    %v6837 = vld [vmem:[%s6833 + $0x18] sm:$0xff]
    %s6838 = scalar_lea.vmem %s8, 3
    %v6839 = vld [vmem:[%s6838] sm:$0x1]
    %v6841 = vlaneseq
    %v6842 = vshrl.u32 %v6841, 7
    %v6843 = vsub.s32 0, %v6842
    %v6844 = vrot.slane %v6839, %v6843
    %6846 = vmatprep.subr.mxu0 0.0
    %6847 = vmatpush1.msra.mxu0 0.0
    %6848 = vmatprep.subr.mxu0 0.0
    %6849 = vmatpush1.msra.mxu0 0.0
    %6850 = vmatprep.subr.mxu0 0.0
    %6851 = vmatpush1.msra.mxu0 0.0
    %6852 = vmatprep.subr.mxu0 0.0
    %6853 = vmatpush1.msra.mxu0 0.0
    %6854 = vmatprep.subr.mxu0 0.0
    %6855 = vmatpush1.msra.mxu0 0.0
    %6856 = vmatprep.subr.mxu0 0.0
    %6857 = vmatpush1.msra.mxu0 0.0
    %6858 = vmatprep.subr.mxu0 0.0
    %6859 = vmatpush1.msra.mxu0 0.0
    %6860 = vmatprep.subr.mxu0 0.0
    %6861 = vmatpush1.msra.mxu0 0.0
    %6862 = vmatprep.subr.mxu0 0.0
    %6863 = vmatpush1.msra.mxu0 0.0
    %6864 = vmatprep.subr.mxu0 0.0
    %6865 = vmatpush1.msra.mxu0 0.0
    %6866 = vmatprep.subr.mxu0 0.0
    %6867 = vmatpush1.msra.mxu0 0.0
    %6868 = vmatprep.subr.mxu0 0.0
    %6869 = vmatpush1.msra.mxu0 0.0
    %6870 = vmatprep.subr.mxu0 0.0
    %6871 = vmatpush1.msra.mxu0 %v6837
    %6872 = vmatprep.subr.mxu0 0.0
    %6873 = vmatpush1.msra.mxu0 %v6836
    %6874 = vmatprep.subr.mxu0 0.0
    %6875 = vmatpush1.msra.mxu0 %v6835
    %6876 = vmatprep.subr.mxu0 0.0
    %6877 = vmatpush1.msra.mxu0 %v6834
    %6878 = vmatprep.subr.mxu0 0.0
    %6879 = vmatpush2.msra.mxu0 0.0
    %6880 = vmatprep.subr.mxu0 0.0
    %6881 = vmatpush2.msra.mxu0 0.0
    %6882 = vmatprep.subr.mxu0 0.0
    %6883 = vmatpush2.msra.mxu0 0.0
    %6884 = vmatprep.subr.mxu0 0.0
    %6885 = vmatpush2.msra.mxu0 0.0
    %6886 = vmatprep.subr.mxu0 0.0
    %6887 = vmatpush2.msra.mxu0 0.0
    %6888 = vmatprep.subr.mxu0 0.0
    %6889 = vmatpush2.msra.mxu0 0.0
    %6890 = vmatprep.subr.mxu0 0.0
    %6891 = vmatpush2.msra.mxu0 0.0
    %6892 = vmatprep.subr.mxu0 0.0
    %6893 = vmatpush2.msra.mxu0 0.0
    %6894 = vmatprep.subr.mxu0 0.0
    %6895 = vmatpush2.msra.mxu0 0.0
    %6896 = vmatprep.subr.mxu0 0.0
    %6897 = vmatpush2.msra.mxu0 0.0
    %6898 = vmatprep.subr.mxu0 0.0
    %6899 = vmatpush2.msra.mxu0 0.0
    %6900 = vmatprep.subr.mxu0 0.0
    %6901 = vmatpush2.msra.mxu0 0.0
    %6902 = vmatprep.subr.mxu0 0.0
    %6903 = vmatpush2.msra.mxu0 0.0
    %6904 = vmatprep.subr.mxu0 0.0
    %6905 = vmatpush2.msra.mxu0 0.0
    %6906 = vmatprep.subr.mxu0 0.0
    %6907 = vmatpush2.msra.mxu0 0.0
    %6908 = vmatprep.subr.mxu0 0.0
    %6909 = vmatpush2.msra.mxu0 0.0
    %6910 = vmatprep.mubr.f32.mxu0 0.0
    %6911 = vmatmul.mubr.f32.gmra.mxu0 %v284
    %v6912 = vpop.f32.mrf.mxu0
    %v6913 = vadd.f32 %v6844, %v6912
    %v6914 = vpop.f32.mrf.mxu0
    %6915 = vmatprep.mubr.f32.mxu0 0.0
    %6916 = vmatmul.mubr.f32.gmra.mxu0 %v287
    %v6917 = vpop.f32.mrf.mxu0
    %v6918 = vadd.f32 %v6844, %v6917
    %v6919 = vpop.f32.mrf.mxu0
    %6920 = vmatprep.mubr.f32.mxu0 0.0
    %6921 = vmatmul.mubr.f32.gmra.mxu0 %v290
    %v6922 = vpop.f32.mrf.mxu0
    %v6923 = vadd.f32 %v6844, %v6922
    %v6924 = vpop.f32.mrf.mxu0
    %6925 = vmatprep.mubr.f32.mxu0 0.0
    %6926 = vmatmul.mubr.f32.gmra.mxu0 %v293
    %v6927 = vpop.f32.mrf.mxu0
    %v6928 = vadd.f32 %v6844, %v6927
    %v6929 = vpop.f32.mrf.mxu0
    %6930 = vdwg.mxu0
    %s6931 = scalar_lea.vmem %s9, 96
    %v6932 = vld [vmem:[%s6931] sm:$0xff]
    %v6933 = vld [vmem:[%s6931 + $0x8] sm:$0xff]
    %v6934 = vld [vmem:[%s6931 + $0x10] sm:$0xff]
    %v6935 = vld [vmem:[%s6931 + $0x18] sm:$0xff]
    %v6937 = vsel %vm384, %v6825, 0
    %v6940 = vsel %vm384, %v6913, 0
    %v6943 = vsel %vm384, %v6918, 0
    %6945 = vmatprep.subr.mxu0 0.0
    %6946 = vmatpush1.xpose.msra.mxu0 0.0
    %6947 = vmatprep.subr.mxu0 0.0
    %6948 = vmatpush1.xpose.msra.mxu0 0.0
    %6949 = vmatprep.subr.mxu0 0.0
    %6950 = vmatpush1.xpose.msra.mxu0 0.0
    %6951 = vmatprep.subr.mxu0 0.0
    %6952 = vmatpush1.xpose.msra.mxu0 0.0
    %6953 = vmatprep.subr.mxu0 0.0
    %6954 = vmatpush1.xpose.msra.mxu0 0.0
    %6955 = vmatprep.subr.mxu0 0.0
    %6956 = vmatpush1.xpose.msra.mxu0 0.0
    %6957 = vmatprep.subr.mxu0 0.0
    %6958 = vmatpush1.xpose.msra.mxu0 0.0
    %6959 = vmatprep.subr.mxu0 0.0
    %6960 = vmatpush1.xpose.msra.mxu0 0.0
    %6961 = vmatprep.subr.mxu0 0.0
    %6962 = vmatpush1.xpose.msra.mxu0 0.0
    %6963 = vmatprep.subr.mxu0 0.0
    %6964 = vmatpush1.xpose.msra.mxu0 0.0
    %6965 = vmatprep.subr.mxu0 0.0
    %6966 = vmatpush1.xpose.msra.mxu0 0.0
    %6967 = vmatprep.subr.mxu0 0.0
    %6968 = vmatpush1.xpose.msra.mxu0 0.0
    %6969 = vmatprep.subr.mxu0 0.0
    %6970 = vmatpush1.xpose.msra.mxu0 0.0
    %6971 = vmatprep.subr.mxu0 0.0
    %6972 = vmatpush1.xpose.msra.mxu0 0.0
    %6973 = vmatprep.subr.mxu0 0.0
    %6974 = vmatpush1.xpose.msra.mxu0 %v6943
    %6975 = vmatprep.subr.mxu0 0.0
    %6976 = vmatpush1.xpose.msra.mxu0 %v6940
    %6977 = vmatprep.subr.mxu0 0.0
    %6978 = vmatpush2.xpose.msra.mxu0 0.0
    %6979 = vmatprep.subr.mxu0 0.0
    %6980 = vmatpush2.xpose.msra.mxu0 0.0
    %6981 = vmatprep.subr.mxu0 0.0
    %6982 = vmatpush2.xpose.msra.mxu0 0.0
    %6983 = vmatprep.subr.mxu0 0.0
    %6984 = vmatpush2.xpose.msra.mxu0 0.0
    %6985 = vmatprep.subr.mxu0 0.0
    %6986 = vmatpush2.xpose.msra.mxu0 0.0
    %6987 = vmatprep.subr.mxu0 0.0
    %6988 = vmatpush2.xpose.msra.mxu0 0.0
    %6989 = vmatprep.subr.mxu0 0.0
    %6990 = vmatpush2.xpose.msra.mxu0 0.0
    %6991 = vmatprep.subr.mxu0 0.0
    %6992 = vmatpush2.xpose.msra.mxu0 0.0
    %6993 = vmatprep.subr.mxu0 0.0
    %6994 = vmatpush2.xpose.msra.mxu0 0.0
    %6995 = vmatprep.subr.mxu0 0.0
    %6996 = vmatpush2.xpose.msra.mxu0 0.0
    %6997 = vmatprep.subr.mxu0 0.0
    %6998 = vmatpush2.xpose.msra.mxu0 0.0
    %6999 = vmatprep.subr.mxu0 0.0
    %7000 = vmatpush2.xpose.msra.mxu0 0.0
    %7001 = vmatprep.subr.mxu0 0.0
    %7002 = vmatpush2.xpose.msra.mxu0 0.0
    %7003 = vmatprep.subr.mxu0 0.0
    %7004 = vmatpush2.xpose.msra.mxu0 0.0
    %7005 = vmatprep.subr.mxu0 0.0
    %7006 = vmatpush2.xpose.msra.mxu0 0.0
    %7007 = vmatprep.subr.mxu0 0.0
    %7008 = vmatpush2.xpose.msra.mxu0 0.0
    %7009 = vmatprep.mubr.f32.mxu0 0.0
    %7010 = vmatmul.mubr.f32.gmra.mxu0 %v6937
    %v7011 = vpop.f32.mrf.mxu0
    %v7012 = vadd.f32 0.0, %v7011
    %v7013 = vpop.f32.mrf.mxu0
    %7014 = vdwg.mxu0
    %v7016 = vsel %vm384, %v6830, 0
    %v7019 = vsel %vm384, %v6923, 0
    %v7022 = vsel %vm384, %v6928, 0
    %7024 = vmatprep.subr.mxu0 0.0
    %7025 = vmatpush1.xpose.msra.mxu0 0.0
    %7026 = vmatprep.subr.mxu0 0.0
    %7027 = vmatpush1.xpose.msra.mxu0 0.0
    %7028 = vmatprep.subr.mxu0 0.0
    %7029 = vmatpush1.xpose.msra.mxu0 0.0
    %7030 = vmatprep.subr.mxu0 0.0
    %7031 = vmatpush1.xpose.msra.mxu0 0.0
    %7032 = vmatprep.subr.mxu0 0.0
    %7033 = vmatpush1.xpose.msra.mxu0 0.0
    %7034 = vmatprep.subr.mxu0 0.0
    %7035 = vmatpush1.xpose.msra.mxu0 0.0
    %7036 = vmatprep.subr.mxu0 0.0
    %7037 = vmatpush1.xpose.msra.mxu0 0.0
    %7038 = vmatprep.subr.mxu0 0.0
    %7039 = vmatpush1.xpose.msra.mxu0 0.0
    %7040 = vmatprep.subr.mxu0 0.0
    %7041 = vmatpush1.xpose.msra.mxu0 0.0
    %7042 = vmatprep.subr.mxu0 0.0
    %7043 = vmatpush1.xpose.msra.mxu0 0.0
    %7044 = vmatprep.subr.mxu0 0.0
    %7045 = vmatpush1.xpose.msra.mxu0 0.0
    %7046 = vmatprep.subr.mxu0 0.0
    %7047 = vmatpush1.xpose.msra.mxu0 0.0
    %7048 = vmatprep.subr.mxu0 0.0
    %7049 = vmatpush1.xpose.msra.mxu0 0.0
    %7050 = vmatprep.subr.mxu0 0.0
    %7051 = vmatpush1.xpose.msra.mxu0 0.0
    %7052 = vmatprep.subr.mxu0 0.0
    %7053 = vmatpush1.xpose.msra.mxu0 %v7022
    %7054 = vmatprep.subr.mxu0 0.0
    %7055 = vmatpush1.xpose.msra.mxu0 %v7019
    %7056 = vmatprep.subr.mxu0 0.0
    %7057 = vmatpush2.xpose.msra.mxu0 0.0
    %7058 = vmatprep.subr.mxu0 0.0
    %7059 = vmatpush2.xpose.msra.mxu0 0.0
    %7060 = vmatprep.subr.mxu0 0.0
    %7061 = vmatpush2.xpose.msra.mxu0 0.0
    %7062 = vmatprep.subr.mxu0 0.0
    %7063 = vmatpush2.xpose.msra.mxu0 0.0
    %7064 = vmatprep.subr.mxu0 0.0
    %7065 = vmatpush2.xpose.msra.mxu0 0.0
    %7066 = vmatprep.subr.mxu0 0.0
    %7067 = vmatpush2.xpose.msra.mxu0 0.0
    %7068 = vmatprep.subr.mxu0 0.0
    %7069 = vmatpush2.xpose.msra.mxu0 0.0
    %7070 = vmatprep.subr.mxu0 0.0
    %7071 = vmatpush2.xpose.msra.mxu0 0.0
    %7072 = vmatprep.subr.mxu0 0.0
    %7073 = vmatpush2.xpose.msra.mxu0 0.0
    %7074 = vmatprep.subr.mxu0 0.0
    %7075 = vmatpush2.xpose.msra.mxu0 0.0
    %7076 = vmatprep.subr.mxu0 0.0
    %7077 = vmatpush2.xpose.msra.mxu0 0.0
    %7078 = vmatprep.subr.mxu0 0.0
    %7079 = vmatpush2.xpose.msra.mxu0 0.0
    %7080 = vmatprep.subr.mxu0 0.0
    %7081 = vmatpush2.xpose.msra.mxu0 0.0
    %7082 = vmatprep.subr.mxu0 0.0
    %7083 = vmatpush2.xpose.msra.mxu0 0.0
    %7084 = vmatprep.subr.mxu0 0.0
    %7085 = vmatpush2.xpose.msra.mxu0 0.0
    %7086 = vmatprep.subr.mxu0 0.0
    %7087 = vmatpush2.xpose.msra.mxu0 0.0
    %7088 = vmatprep.mubr.f32.mxu0 0.0
    %7089 = vmatmul.mubr.f32.gmra.mxu0 %v7016
    %v7090 = vpop.f32.mrf.mxu0
    %v7091 = vadd.f32 0.0, %v7090
    %v7092 = vpop.f32.mrf.mxu0
    %7093 = vdwg.mxu0
    %v7094 = vmul.f32 %v7012, 0.35355338
    %v7095 = vmul.f32 %v7091, 0.35355338
    %v7096 = vsel %vm545, %v7094, -inf
    %7097 = vmax.xlane.f32.xlu0 %v7096
    %v7098 = vpop.xlane.xlu0 %7097
    %v7099 = vsel %vm545, %v7095, -inf
    %7100 = vmax.xlane.f32.xlu0 %v7099
    %v7101 = vpop.xlane.xlu0 %7100
    %v7102 = vsub.f32 %v7094, %v7098
    %v7103 = vsub.f32 %v7095, %v7101
    %v7104 = vmul.f32 %v7102, 1.442695
    %v7105 = vpow.pop %v7104
    %v7106 = vmul.f32 %v7103, 1.442695
    %v7107 = vpow.pop %v7106
    %v7108 = vsel %vm545, %v7105, 0.0
    %7109 = vadd.xlane.f32.xlu0 %v7108
    %v7110 = vpop.xlane.xlu0 %7109
    %v7111 = vsel %vm545, %v7107, 0.0
    %7112 = vadd.xlane.f32.xlu0 %v7111
    %v7113 = vpop.xlane.xlu0 %7112
    %v7114 = vrcp.pop %v7110
    %v7115 = vrcp.pop %v7113
    %v7116 = vmul.f32 %v7105, %v7114
    %v7117 = vmul.f32 %v7107, %v7115
    %7118 = vrot.lane.b32.xlu0 %v6913, 96
    %v7119 = vpop.permute.xlu0 %7118
    %7120 = vrot.lane.b32.xlu0 %v6918, 96
    %v7121 = vpop.permute.xlu0 %7120
    %v7125 = vsel %vm545, %v7116, 0
    %7127 = vmatprep.subr.mxu0 0.0
    %7128 = vmatpush1.msra.mxu0 0.0
    %7129 = vmatprep.subr.mxu0 0.0
    %7130 = vmatpush1.msra.mxu0 0.0
    %7131 = vmatprep.subr.mxu0 0.0
    %7132 = vmatpush1.msra.mxu0 0.0
    %7133 = vmatprep.subr.mxu0 0.0
    %7134 = vmatpush1.msra.mxu0 0.0
    %7135 = vmatprep.subr.mxu0 0.0
    %7136 = vmatpush1.msra.mxu0 0.0
    %7137 = vmatprep.subr.mxu0 0.0
    %7138 = vmatpush1.msra.mxu0 0.0
    %7139 = vmatprep.subr.mxu0 0.0
    %7140 = vmatpush1.msra.mxu0 0.0
    %7141 = vmatprep.subr.mxu0 0.0
    %7142 = vmatpush1.msra.mxu0 0.0
    %7143 = vmatprep.subr.mxu0 0.0
    %7144 = vmatpush1.msra.mxu0 0.0
    %7145 = vmatprep.subr.mxu0 0.0
    %7146 = vmatpush1.msra.mxu0 0.0
    %7147 = vmatprep.subr.mxu0 0.0
    %7148 = vmatpush1.msra.mxu0 0.0
    %7149 = vmatprep.subr.mxu0 0.0
    %7150 = vmatpush1.msra.mxu0 0.0
    %7151 = vmatprep.subr.mxu0 0.0
    %7152 = vmatpush1.msra.mxu0 0.0
    %7153 = vmatprep.subr.mxu0 0.0
    %7154 = vmatpush1.msra.mxu0 0.0
    %7155 = vmatprep.subr.mxu0 0.0
    %7156 = vmatpush1.msra.mxu0 %v7121
    %7157 = vmatprep.subr.mxu0 0.0
    %7158 = vmatpush1.msra.mxu0 %v7119
    %7159 = vmatprep.subr.mxu0 0.0
    %7160 = vmatpush2.msra.mxu0 0.0
    %7161 = vmatprep.subr.mxu0 0.0
    %7162 = vmatpush2.msra.mxu0 0.0
    %7163 = vmatprep.subr.mxu0 0.0
    %7164 = vmatpush2.msra.mxu0 0.0
    %7165 = vmatprep.subr.mxu0 0.0
    %7166 = vmatpush2.msra.mxu0 0.0
    %7167 = vmatprep.subr.mxu0 0.0
    %7168 = vmatpush2.msra.mxu0 0.0
    %7169 = vmatprep.subr.mxu0 0.0
    %7170 = vmatpush2.msra.mxu0 0.0
    %7171 = vmatprep.subr.mxu0 0.0
    %7172 = vmatpush2.msra.mxu0 0.0
    %7173 = vmatprep.subr.mxu0 0.0
    %7174 = vmatpush2.msra.mxu0 0.0
    %7175 = vmatprep.subr.mxu0 0.0
    %7176 = vmatpush2.msra.mxu0 0.0
    %7177 = vmatprep.subr.mxu0 0.0
    %7178 = vmatpush2.msra.mxu0 0.0
    %7179 = vmatprep.subr.mxu0 0.0
    %7180 = vmatpush2.msra.mxu0 0.0
    %7181 = vmatprep.subr.mxu0 0.0
    %7182 = vmatpush2.msra.mxu0 0.0
    %7183 = vmatprep.subr.mxu0 0.0
    %7184 = vmatpush2.msra.mxu0 0.0
    %7185 = vmatprep.subr.mxu0 0.0
    %7186 = vmatpush2.msra.mxu0 0.0
    %7187 = vmatprep.subr.mxu0 0.0
    %7188 = vmatpush2.msra.mxu0 0.0
    %7189 = vmatprep.subr.mxu0 0.0
    %7190 = vmatpush2.msra.mxu0 0.0
    %7191 = vmatprep.mubr.f32.mxu0 0.0
    %7192 = vmatmul.mubr.f32.gmra.mxu0 %v7125
    %v7193 = vpop.f32.mrf.mxu0
    %v7194 = vadd.f32 0.0, %v7193
    %v7195 = vpop.f32.mrf.mxu0
    %7196 = vdwg.mxu0
    %7197 = vrot.lane.b32.xlu0 %v6923, 96
    %v7198 = vpop.permute.xlu0 %7197
    %7199 = vrot.lane.b32.xlu0 %v6928, 96
    %v7200 = vpop.permute.xlu0 %7199
    %v7204 = vsel %vm545, %v7117, 0
    %7206 = vmatprep.subr.mxu0 0.0
    %7207 = vmatpush1.msra.mxu0 0.0
    %7208 = vmatprep.subr.mxu0 0.0
    %7209 = vmatpush1.msra.mxu0 0.0
    %7210 = vmatprep.subr.mxu0 0.0
    %7211 = vmatpush1.msra.mxu0 0.0
    %7212 = vmatprep.subr.mxu0 0.0
    %7213 = vmatpush1.msra.mxu0 0.0
    %7214 = vmatprep.subr.mxu0 0.0
    %7215 = vmatpush1.msra.mxu0 0.0
    %7216 = vmatprep.subr.mxu0 0.0
    %7217 = vmatpush1.msra.mxu0 0.0
    %7218 = vmatprep.subr.mxu0 0.0
    %7219 = vmatpush1.msra.mxu0 0.0
    %7220 = vmatprep.subr.mxu0 0.0
    %7221 = vmatpush1.msra.mxu0 0.0
    %7222 = vmatprep.subr.mxu0 0.0
    %7223 = vmatpush1.msra.mxu0 0.0
    %7224 = vmatprep.subr.mxu0 0.0
    %7225 = vmatpush1.msra.mxu0 0.0
    %7226 = vmatprep.subr.mxu0 0.0
    %7227 = vmatpush1.msra.mxu0 0.0
    %7228 = vmatprep.subr.mxu0 0.0
    %7229 = vmatpush1.msra.mxu0 0.0
    %7230 = vmatprep.subr.mxu0 0.0
    %7231 = vmatpush1.msra.mxu0 0.0
    %7232 = vmatprep.subr.mxu0 0.0
    %7233 = vmatpush1.msra.mxu0 0.0
    %7234 = vmatprep.subr.mxu0 0.0
    %7235 = vmatpush1.msra.mxu0 %v7200
    %7236 = vmatprep.subr.mxu0 0.0
    %7237 = vmatpush1.msra.mxu0 %v7198
    %7238 = vmatprep.subr.mxu0 0.0
    %7239 = vmatpush2.msra.mxu0 0.0
    %7240 = vmatprep.subr.mxu0 0.0
    %7241 = vmatpush2.msra.mxu0 0.0
    %7242 = vmatprep.subr.mxu0 0.0
    %7243 = vmatpush2.msra.mxu0 0.0
    %7244 = vmatprep.subr.mxu0 0.0
    %7245 = vmatpush2.msra.mxu0 0.0
    %7246 = vmatprep.subr.mxu0 0.0
    %7247 = vmatpush2.msra.mxu0 0.0
    %7248 = vmatprep.subr.mxu0 0.0
    %7249 = vmatpush2.msra.mxu0 0.0
    %7250 = vmatprep.subr.mxu0 0.0
    %7251 = vmatpush2.msra.mxu0 0.0
    %7252 = vmatprep.subr.mxu0 0.0
    %7253 = vmatpush2.msra.mxu0 0.0
    %7254 = vmatprep.subr.mxu0 0.0
    %7255 = vmatpush2.msra.mxu0 0.0
    %7256 = vmatprep.subr.mxu0 0.0
    %7257 = vmatpush2.msra.mxu0 0.0
    %7258 = vmatprep.subr.mxu0 0.0
    %7259 = vmatpush2.msra.mxu0 0.0
    %7260 = vmatprep.subr.mxu0 0.0
    %7261 = vmatpush2.msra.mxu0 0.0
    %7262 = vmatprep.subr.mxu0 0.0
    %7263 = vmatpush2.msra.mxu0 0.0
    %7264 = vmatprep.subr.mxu0 0.0
    %7265 = vmatpush2.msra.mxu0 0.0
    %7266 = vmatprep.subr.mxu0 0.0
    %7267 = vmatpush2.msra.mxu0 0.0
    %7268 = vmatprep.subr.mxu0 0.0
    %7269 = vmatpush2.msra.mxu0 0.0
    %7270 = vmatprep.mubr.f32.mxu0 0.0
    %7271 = vmatmul.mubr.f32.gmra.mxu0 %v7204
    %v7272 = vpop.f32.mrf.mxu0
    %v7273 = vadd.f32 0.0, %v7272
    %v7274 = vpop.f32.mrf.mxu0
    %7275 = vdwg.mxu0
    %7276 = vrot.lane.b32.xlu0 %v6825, 120
    %v7277 = vpop.permute.xlu0 %7276
    %7278 = vrot.lane.b32.xlu0 %v6913, 120
    %v7279 = vpop.permute.xlu0 %7278
    %7280 = vrot.lane.b32.xlu0 %v6918, 120
    %v7281 = vpop.permute.xlu0 %7280
    %v7282 = vsel %vm384, %v7277, 0
    %v7284 = vsel %vm384, %v7279, 0
    %v7286 = vsel %vm384, %v7281, 0
    %7288 = vmatprep.subr.mxu0 0.0
    %7289 = vmatpush1.xpose.msra.mxu0 0.0
    %7290 = vmatprep.subr.mxu0 0.0
    %7291 = vmatpush1.xpose.msra.mxu0 0.0
    %7292 = vmatprep.subr.mxu0 0.0
    %7293 = vmatpush1.xpose.msra.mxu0 0.0
    %7294 = vmatprep.subr.mxu0 0.0
    %7295 = vmatpush1.xpose.msra.mxu0 0.0
    %7296 = vmatprep.subr.mxu0 0.0
    %7297 = vmatpush1.xpose.msra.mxu0 0.0
    %7298 = vmatprep.subr.mxu0 0.0
    %7299 = vmatpush1.xpose.msra.mxu0 0.0
    %7300 = vmatprep.subr.mxu0 0.0
    %7301 = vmatpush1.xpose.msra.mxu0 0.0
    %7302 = vmatprep.subr.mxu0 0.0
    %7303 = vmatpush1.xpose.msra.mxu0 0.0
    %7304 = vmatprep.subr.mxu0 0.0
    %7305 = vmatpush1.xpose.msra.mxu0 0.0
    %7306 = vmatprep.subr.mxu0 0.0
    %7307 = vmatpush1.xpose.msra.mxu0 0.0
    %7308 = vmatprep.subr.mxu0 0.0
    %7309 = vmatpush1.xpose.msra.mxu0 0.0
    %7310 = vmatprep.subr.mxu0 0.0
    %7311 = vmatpush1.xpose.msra.mxu0 0.0
    %7312 = vmatprep.subr.mxu0 0.0
    %7313 = vmatpush1.xpose.msra.mxu0 0.0
    %7314 = vmatprep.subr.mxu0 0.0
    %7315 = vmatpush1.xpose.msra.mxu0 0.0
    %7316 = vmatprep.subr.mxu0 0.0
    %7317 = vmatpush1.xpose.msra.mxu0 %v7286
    %7318 = vmatprep.subr.mxu0 0.0
    %7319 = vmatpush1.xpose.msra.mxu0 %v7284
    %7320 = vmatprep.subr.mxu0 0.0
    %7321 = vmatpush2.xpose.msra.mxu0 0.0
    %7322 = vmatprep.subr.mxu0 0.0
    %7323 = vmatpush2.xpose.msra.mxu0 0.0
    %7324 = vmatprep.subr.mxu0 0.0
    %7325 = vmatpush2.xpose.msra.mxu0 0.0
    %7326 = vmatprep.subr.mxu0 0.0
    %7327 = vmatpush2.xpose.msra.mxu0 0.0
    %7328 = vmatprep.subr.mxu0 0.0
    %7329 = vmatpush2.xpose.msra.mxu0 0.0
    %7330 = vmatprep.subr.mxu0 0.0
    %7331 = vmatpush2.xpose.msra.mxu0 0.0
    %7332 = vmatprep.subr.mxu0 0.0
    %7333 = vmatpush2.xpose.msra.mxu0 0.0
    %7334 = vmatprep.subr.mxu0 0.0
    %7335 = vmatpush2.xpose.msra.mxu0 0.0
    %7336 = vmatprep.subr.mxu0 0.0
    %7337 = vmatpush2.xpose.msra.mxu0 0.0
    %7338 = vmatprep.subr.mxu0 0.0
    %7339 = vmatpush2.xpose.msra.mxu0 0.0
    %7340 = vmatprep.subr.mxu0 0.0
    %7341 = vmatpush2.xpose.msra.mxu0 0.0
    %7342 = vmatprep.subr.mxu0 0.0
    %7343 = vmatpush2.xpose.msra.mxu0 0.0
    %7344 = vmatprep.subr.mxu0 0.0
    %7345 = vmatpush2.xpose.msra.mxu0 0.0
    %7346 = vmatprep.subr.mxu0 0.0
    %7347 = vmatpush2.xpose.msra.mxu0 0.0
    %7348 = vmatprep.subr.mxu0 0.0
    %7349 = vmatpush2.xpose.msra.mxu0 0.0
    %7350 = vmatprep.subr.mxu0 0.0
    %7351 = vmatpush2.xpose.msra.mxu0 0.0
    %7352 = vmatprep.mubr.f32.mxu0 0.0
    %7353 = vmatmul.mubr.f32.gmra.mxu0 %v7282
    %v7354 = vpop.f32.mrf.mxu0
    %v7355 = vadd.f32 0.0, %v7354
    %v7356 = vpop.f32.mrf.mxu0
    %7357 = vdwg.mxu0
    %7358 = vrot.lane.b32.xlu0 %v6830, 120
    %v7359 = vpop.permute.xlu0 %7358
    %7360 = vrot.lane.b32.xlu0 %v6923, 120
    %v7361 = vpop.permute.xlu0 %7360
    %7362 = vrot.lane.b32.xlu0 %v6928, 120
    %v7363 = vpop.permute.xlu0 %7362
    %v7364 = vsel %vm384, %v7359, 0
    %v7366 = vsel %vm384, %v7361, 0
    %v7368 = vsel %vm384, %v7363, 0
    %7370 = vmatprep.subr.mxu0 0.0
    %7371 = vmatpush1.xpose.msra.mxu0 0.0
    %7372 = vmatprep.subr.mxu0 0.0
    %7373 = vmatpush1.xpose.msra.mxu0 0.0
    %7374 = vmatprep.subr.mxu0 0.0
    %7375 = vmatpush1.xpose.msra.mxu0 0.0
    %7376 = vmatprep.subr.mxu0 0.0
    %7377 = vmatpush1.xpose.msra.mxu0 0.0
    %7378 = vmatprep.subr.mxu0 0.0
    %7379 = vmatpush1.xpose.msra.mxu0 0.0
    %7380 = vmatprep.subr.mxu0 0.0
    %7381 = vmatpush1.xpose.msra.mxu0 0.0
    %7382 = vmatprep.subr.mxu0 0.0
    %7383 = vmatpush1.xpose.msra.mxu0 0.0
    %7384 = vmatprep.subr.mxu0 0.0
    %7385 = vmatpush1.xpose.msra.mxu0 0.0
    %7386 = vmatprep.subr.mxu0 0.0
    %7387 = vmatpush1.xpose.msra.mxu0 0.0
    %7388 = vmatprep.subr.mxu0 0.0
    %7389 = vmatpush1.xpose.msra.mxu0 0.0
    %7390 = vmatprep.subr.mxu0 0.0
    %7391 = vmatpush1.xpose.msra.mxu0 0.0
    %7392 = vmatprep.subr.mxu0 0.0
    %7393 = vmatpush1.xpose.msra.mxu0 0.0
    %7394 = vmatprep.subr.mxu0 0.0
    %7395 = vmatpush1.xpose.msra.mxu0 0.0
    %7396 = vmatprep.subr.mxu0 0.0
    %7397 = vmatpush1.xpose.msra.mxu0 0.0
    %7398 = vmatprep.subr.mxu0 0.0
    %7399 = vmatpush1.xpose.msra.mxu0 %v7368
    %7400 = vmatprep.subr.mxu0 0.0
    %7401 = vmatpush1.xpose.msra.mxu0 %v7366
    %7402 = vmatprep.subr.mxu0 0.0
    %7403 = vmatpush2.xpose.msra.mxu0 0.0
    %7404 = vmatprep.subr.mxu0 0.0
    %7405 = vmatpush2.xpose.msra.mxu0 0.0
    %7406 = vmatprep.subr.mxu0 0.0
    %7407 = vmatpush2.xpose.msra.mxu0 0.0
    %7408 = vmatprep.subr.mxu0 0.0
    %7409 = vmatpush2.xpose.msra.mxu0 0.0
    %7410 = vmatprep.subr.mxu0 0.0
    %7411 = vmatpush2.xpose.msra.mxu0 0.0
    %7412 = vmatprep.subr.mxu0 0.0
    %7413 = vmatpush2.xpose.msra.mxu0 0.0
    %7414 = vmatprep.subr.mxu0 0.0
    %7415 = vmatpush2.xpose.msra.mxu0 0.0
    %7416 = vmatprep.subr.mxu0 0.0
    %7417 = vmatpush2.xpose.msra.mxu0 0.0
    %7418 = vmatprep.subr.mxu0 0.0
    %7419 = vmatpush2.xpose.msra.mxu0 0.0
    %7420 = vmatprep.subr.mxu0 0.0
    %7421 = vmatpush2.xpose.msra.mxu0 0.0
    %7422 = vmatprep.subr.mxu0 0.0
    %7423 = vmatpush2.xpose.msra.mxu0 0.0
    %7424 = vmatprep.subr.mxu0 0.0
    %7425 = vmatpush2.xpose.msra.mxu0 0.0
    %7426 = vmatprep.subr.mxu0 0.0
    %7427 = vmatpush2.xpose.msra.mxu0 0.0
    %7428 = vmatprep.subr.mxu0 0.0
    %7429 = vmatpush2.xpose.msra.mxu0 0.0
    %7430 = vmatprep.subr.mxu0 0.0
    %7431 = vmatpush2.xpose.msra.mxu0 0.0
    %7432 = vmatprep.subr.mxu0 0.0
    %7433 = vmatpush2.xpose.msra.mxu0 0.0
    %7434 = vmatprep.mubr.f32.mxu0 0.0
    %7435 = vmatmul.mubr.f32.gmra.mxu0 %v7364
    %v7436 = vpop.f32.mrf.mxu0
    %v7437 = vadd.f32 0.0, %v7436
    %v7438 = vpop.f32.mrf.mxu0
    %7439 = vdwg.mxu0
    %v7440 = vmul.f32 %v7355, 0.35355338
    %v7441 = vmul.f32 %v7437, 0.35355338
    %v7442 = vsel %vm545, %v7440, -inf
    %7443 = vmax.xlane.f32.xlu0 %v7442
    %v7444 = vpop.xlane.xlu0 %7443
    %v7445 = vsel %vm545, %v7441, -inf
    %7446 = vmax.xlane.f32.xlu0 %v7445
    %v7447 = vpop.xlane.xlu0 %7446
    %v7448 = vsub.f32 %v7440, %v7444
    %v7449 = vsub.f32 %v7441, %v7447
    %v7450 = vmul.f32 %v7448, 1.442695
    %v7451 = vpow.pop %v7450
    %v7452 = vmul.f32 %v7449, 1.442695
    %v7453 = vpow.pop %v7452
    %v7454 = vsel %vm545, %v7451, 0.0
    %7455 = vadd.xlane.f32.xlu0 %v7454
    %v7456 = vpop.xlane.xlu0 %7455
    %v7457 = vsel %vm545, %v7453, 0.0
    %7458 = vadd.xlane.f32.xlu0 %v7457
    %v7459 = vpop.xlane.xlu0 %7458
    %v7460 = vrcp.pop %v7456
    %v7461 = vrcp.pop %v7459
    %v7462 = vmul.f32 %v7451, %v7460
    %v7463 = vmul.f32 %v7453, %v7461
    %7464 = vrot.lane.b32.xlu0 %v6913, 88
    %v7465 = vpop.permute.xlu0 %7464
    %7466 = vrot.lane.b32.xlu0 %v6918, 88
    %v7467 = vpop.permute.xlu0 %7466
    %v7471 = vsel %vm545, %v7462, 0
    %7473 = vmatprep.subr.mxu0 0.0
    %7474 = vmatpush1.msra.mxu0 0.0
    %7475 = vmatprep.subr.mxu0 0.0
    %7476 = vmatpush1.msra.mxu0 0.0
    %7477 = vmatprep.subr.mxu0 0.0
    %7478 = vmatpush1.msra.mxu0 0.0
    %7479 = vmatprep.subr.mxu0 0.0
    %7480 = vmatpush1.msra.mxu0 0.0
    %7481 = vmatprep.subr.mxu0 0.0
    %7482 = vmatpush1.msra.mxu0 0.0
    %7483 = vmatprep.subr.mxu0 0.0
    %7484 = vmatpush1.msra.mxu0 0.0
    %7485 = vmatprep.subr.mxu0 0.0
    %7486 = vmatpush1.msra.mxu0 0.0
    %7487 = vmatprep.subr.mxu0 0.0
    %7488 = vmatpush1.msra.mxu0 0.0
    %7489 = vmatprep.subr.mxu0 0.0
    %7490 = vmatpush1.msra.mxu0 0.0
    %7491 = vmatprep.subr.mxu0 0.0
    %7492 = vmatpush1.msra.mxu0 0.0
    %7493 = vmatprep.subr.mxu0 0.0
    %7494 = vmatpush1.msra.mxu0 0.0
    %7495 = vmatprep.subr.mxu0 0.0
    %7496 = vmatpush1.msra.mxu0 0.0
    %7497 = vmatprep.subr.mxu0 0.0
    %7498 = vmatpush1.msra.mxu0 0.0
    %7499 = vmatprep.subr.mxu0 0.0
    %7500 = vmatpush1.msra.mxu0 0.0
    %7501 = vmatprep.subr.mxu0 0.0
    %7502 = vmatpush1.msra.mxu0 %v7467
    %7503 = vmatprep.subr.mxu0 0.0
    %7504 = vmatpush1.msra.mxu0 %v7465
    %7505 = vmatprep.subr.mxu0 0.0
    %7506 = vmatpush2.msra.mxu0 0.0
    %7507 = vmatprep.subr.mxu0 0.0
    %7508 = vmatpush2.msra.mxu0 0.0
    %7509 = vmatprep.subr.mxu0 0.0
    %7510 = vmatpush2.msra.mxu0 0.0
    %7511 = vmatprep.subr.mxu0 0.0
    %7512 = vmatpush2.msra.mxu0 0.0
    %7513 = vmatprep.subr.mxu0 0.0
    %7514 = vmatpush2.msra.mxu0 0.0
    %7515 = vmatprep.subr.mxu0 0.0
    %7516 = vmatpush2.msra.mxu0 0.0
    %7517 = vmatprep.subr.mxu0 0.0
    %7518 = vmatpush2.msra.mxu0 0.0
    %7519 = vmatprep.subr.mxu0 0.0
    %7520 = vmatpush2.msra.mxu0 0.0
    %7521 = vmatprep.subr.mxu0 0.0
    %7522 = vmatpush2.msra.mxu0 0.0
    %7523 = vmatprep.subr.mxu0 0.0
    %7524 = vmatpush2.msra.mxu0 0.0
    %7525 = vmatprep.subr.mxu0 0.0
    %7526 = vmatpush2.msra.mxu0 0.0
    %7527 = vmatprep.subr.mxu0 0.0
    %7528 = vmatpush2.msra.mxu0 0.0
    %7529 = vmatprep.subr.mxu0 0.0
    %7530 = vmatpush2.msra.mxu0 0.0
    %7531 = vmatprep.subr.mxu0 0.0
    %7532 = vmatpush2.msra.mxu0 0.0
    %7533 = vmatprep.subr.mxu0 0.0
    %7534 = vmatpush2.msra.mxu0 0.0
    %7535 = vmatprep.subr.mxu0 0.0
    %7536 = vmatpush2.msra.mxu0 0.0
    %7537 = vmatprep.mubr.f32.mxu0 0.0
    %7538 = vmatmul.mubr.f32.gmra.mxu0 %v7471
    %v7539 = vpop.f32.mrf.mxu0
    %v7540 = vadd.f32 0.0, %v7539
    %v7541 = vpop.f32.mrf.mxu0
    %7542 = vdwg.mxu0
    %7543 = vrot.lane.b32.xlu0 %v6923, 88
    %v7544 = vpop.permute.xlu0 %7543
    %7545 = vrot.lane.b32.xlu0 %v6928, 88
    %v7546 = vpop.permute.xlu0 %7545
    %v7550 = vsel %vm545, %v7463, 0
    %7552 = vmatprep.subr.mxu0 0.0
    %7553 = vmatpush1.msra.mxu0 0.0
    %7554 = vmatprep.subr.mxu0 0.0
    %7555 = vmatpush1.msra.mxu0 0.0
    %7556 = vmatprep.subr.mxu0 0.0
    %7557 = vmatpush1.msra.mxu0 0.0
    %7558 = vmatprep.subr.mxu0 0.0
    %7559 = vmatpush1.msra.mxu0 0.0
    %7560 = vmatprep.subr.mxu0 0.0
    %7561 = vmatpush1.msra.mxu0 0.0
    %7562 = vmatprep.subr.mxu0 0.0
    %7563 = vmatpush1.msra.mxu0 0.0
    %7564 = vmatprep.subr.mxu0 0.0
    %7565 = vmatpush1.msra.mxu0 0.0
    %7566 = vmatprep.subr.mxu0 0.0
    %7567 = vmatpush1.msra.mxu0 0.0
    %7568 = vmatprep.subr.mxu0 0.0
    %7569 = vmatpush1.msra.mxu0 0.0
    %7570 = vmatprep.subr.mxu0 0.0
    %7571 = vmatpush1.msra.mxu0 0.0
    %7572 = vmatprep.subr.mxu0 0.0
    %7573 = vmatpush1.msra.mxu0 0.0
    %7574 = vmatprep.subr.mxu0 0.0
    %7575 = vmatpush1.msra.mxu0 0.0
    %7576 = vmatprep.subr.mxu0 0.0
    %7577 = vmatpush1.msra.mxu0 0.0
    %7578 = vmatprep.subr.mxu0 0.0
    %7579 = vmatpush1.msra.mxu0 0.0
    %7580 = vmatprep.subr.mxu0 0.0
    %7581 = vmatpush1.msra.mxu0 %v7546
    %7582 = vmatprep.subr.mxu0 0.0
    %7583 = vmatpush1.msra.mxu0 %v7544
    %7584 = vmatprep.subr.mxu0 0.0
    %7585 = vmatpush2.msra.mxu0 0.0
    %7586 = vmatprep.subr.mxu0 0.0
    %7587 = vmatpush2.msra.mxu0 0.0
    %7588 = vmatprep.subr.mxu0 0.0
    %7589 = vmatpush2.msra.mxu0 0.0
    %7590 = vmatprep.subr.mxu0 0.0
    %7591 = vmatpush2.msra.mxu0 0.0
    %7592 = vmatprep.subr.mxu0 0.0
    %7593 = vmatpush2.msra.mxu0 0.0
    %7594 = vmatprep.subr.mxu0 0.0
    %7595 = vmatpush2.msra.mxu0 0.0
    %7596 = vmatprep.subr.mxu0 0.0
    %7597 = vmatpush2.msra.mxu0 0.0
    %7598 = vmatprep.subr.mxu0 0.0
    %7599 = vmatpush2.msra.mxu0 0.0
    %7600 = vmatprep.subr.mxu0 0.0
    %7601 = vmatpush2.msra.mxu0 0.0
    %7602 = vmatprep.subr.mxu0 0.0
    %7603 = vmatpush2.msra.mxu0 0.0
    %7604 = vmatprep.subr.mxu0 0.0
    %7605 = vmatpush2.msra.mxu0 0.0
    %7606 = vmatprep.subr.mxu0 0.0
    %7607 = vmatpush2.msra.mxu0 0.0
    %7608 = vmatprep.subr.mxu0 0.0
    %7609 = vmatpush2.msra.mxu0 0.0
    %7610 = vmatprep.subr.mxu0 0.0
    %7611 = vmatpush2.msra.mxu0 0.0
    %7612 = vmatprep.subr.mxu0 0.0
    %7613 = vmatpush2.msra.mxu0 0.0
    %7614 = vmatprep.subr.mxu0 0.0
    %7615 = vmatpush2.msra.mxu0 0.0
    %7616 = vmatprep.mubr.f32.mxu0 0.0
    %7617 = vmatmul.mubr.f32.gmra.mxu0 %v7550
    %v7618 = vpop.f32.mrf.mxu0
    %v7619 = vadd.f32 0.0, %v7618
    %v7620 = vpop.f32.mrf.mxu0
    %7621 = vdwg.mxu0
    %v7623 = vsel %vm384, %v7540, 0
    %v7626 = vsel %vm384, %v7619, 0
    %7628 = vmatprep.subr.mxu0 0.0
    %7629 = vmatpush1.msra.mxu0 0.0
    %7630 = vmatprep.subr.mxu0 0.0
    %7631 = vmatpush1.msra.mxu0 0.0
    %7632 = vmatprep.subr.mxu0 0.0
    %7633 = vmatpush1.msra.mxu0 0.0
    %7634 = vmatprep.subr.mxu0 0.0
    %7635 = vmatpush1.msra.mxu0 0.0
    %7636 = vmatprep.subr.mxu0 0.0
    %7637 = vmatpush1.msra.mxu0 0.0
    %7638 = vmatprep.subr.mxu0 0.0
    %7639 = vmatpush1.msra.mxu0 0.0
    %7640 = vmatprep.subr.mxu0 0.0
    %7641 = vmatpush1.msra.mxu0 0.0
    %7642 = vmatprep.subr.mxu0 0.0
    %7643 = vmatpush1.msra.mxu0 0.0
    %7644 = vmatprep.subr.mxu0 0.0
    %7645 = vmatpush1.msra.mxu0 0.0
    %7646 = vmatprep.subr.mxu0 0.0
    %7647 = vmatpush1.msra.mxu0 0.0
    %7648 = vmatprep.subr.mxu0 0.0
    %7649 = vmatpush1.msra.mxu0 0.0
    %7650 = vmatprep.subr.mxu0 0.0
    %7651 = vmatpush1.msra.mxu0 0.0
    %7652 = vmatprep.subr.mxu0 0.0
    %7653 = vmatpush1.msra.mxu0 0.0
    %7654 = vmatprep.subr.mxu0 0.0
    %7655 = vmatpush1.msra.mxu0 0.0
    %7656 = vmatprep.subr.mxu0 0.0
    %7657 = vmatpush1.msra.mxu0 0.0
    %7658 = vmatprep.subr.mxu0 0.0
    %7659 = vmatpush1.msra.mxu0 %v6933
    %7660 = vmatprep.subr.mxu0 0.0
    %7661 = vmatpush2.msra.mxu0 0.0
    %7662 = vmatprep.subr.mxu0 0.0
    %7663 = vmatpush2.msra.mxu0 0.0
    %7664 = vmatprep.subr.mxu0 0.0
    %7665 = vmatpush2.msra.mxu0 0.0
    %7666 = vmatprep.subr.mxu0 0.0
    %7667 = vmatpush2.msra.mxu0 0.0
    %7668 = vmatprep.subr.mxu0 0.0
    %7669 = vmatpush2.msra.mxu0 0.0
    %7670 = vmatprep.subr.mxu0 0.0
    %7671 = vmatpush2.msra.mxu0 0.0
    %7672 = vmatprep.subr.mxu0 0.0
    %7673 = vmatpush2.msra.mxu0 0.0
    %7674 = vmatprep.subr.mxu0 0.0
    %7675 = vmatpush2.msra.mxu0 0.0
    %7676 = vmatprep.subr.mxu0 0.0
    %7677 = vmatpush2.msra.mxu0 0.0
    %7678 = vmatprep.subr.mxu0 0.0
    %7679 = vmatpush2.msra.mxu0 0.0
    %7680 = vmatprep.subr.mxu0 0.0
    %7681 = vmatpush2.msra.mxu0 0.0
    %7682 = vmatprep.subr.mxu0 0.0
    %7683 = vmatpush2.msra.mxu0 0.0
    %7684 = vmatprep.subr.mxu0 0.0
    %7685 = vmatpush2.msra.mxu0 0.0
    %7686 = vmatprep.subr.mxu0 0.0
    %7687 = vmatpush2.msra.mxu0 0.0
    %7688 = vmatprep.subr.mxu0 0.0
    %7689 = vmatpush2.msra.mxu0 0.0
    %7690 = vmatprep.subr.mxu0 0.0
    %7691 = vmatpush2.msra.mxu0 0.0
    %7692 = vmatprep.mubr.f32.mxu0 0.0
    %7693 = vmatmul.mubr.f32.gmra.mxu0 %v7623
    %v7694 = vpop.f32.mrf.mxu0
    %v7695 = vadd.f32 0.0, %v7694
    %v7696 = vpop.f32.mrf.mxu0
    %7697 = vmatprep.mubr.f32.mxu0 0.0
    %7698 = vmatmul.mubr.f32.gmra.mxu0 %v7626
    %v7699 = vpop.f32.mrf.mxu0
    %v7700 = vadd.f32 0.0, %v7699
    %v7701 = vpop.f32.mrf.mxu0
    %7702 = vdwg.mxu0
    %v7704 = vsel %vm384, %v7194, 0
    %v7707 = vsel %vm384, %v7273, 0
    %7709 = vmatprep.subr.mxu0 0.0
    %7710 = vmatpush1.msra.mxu0 0.0
    %7711 = vmatprep.subr.mxu0 0.0
    %7712 = vmatpush1.msra.mxu0 0.0
    %7713 = vmatprep.subr.mxu0 0.0
    %7714 = vmatpush1.msra.mxu0 0.0
    %7715 = vmatprep.subr.mxu0 0.0
    %7716 = vmatpush1.msra.mxu0 0.0
    %7717 = vmatprep.subr.mxu0 0.0
    %7718 = vmatpush1.msra.mxu0 0.0
    %7719 = vmatprep.subr.mxu0 0.0
    %7720 = vmatpush1.msra.mxu0 0.0
    %7721 = vmatprep.subr.mxu0 0.0
    %7722 = vmatpush1.msra.mxu0 0.0
    %7723 = vmatprep.subr.mxu0 0.0
    %7724 = vmatpush1.msra.mxu0 0.0
    %7725 = vmatprep.subr.mxu0 0.0
    %7726 = vmatpush1.msra.mxu0 0.0
    %7727 = vmatprep.subr.mxu0 0.0
    %7728 = vmatpush1.msra.mxu0 0.0
    %7729 = vmatprep.subr.mxu0 0.0
    %7730 = vmatpush1.msra.mxu0 0.0
    %7731 = vmatprep.subr.mxu0 0.0
    %7732 = vmatpush1.msra.mxu0 0.0
    %7733 = vmatprep.subr.mxu0 0.0
    %7734 = vmatpush1.msra.mxu0 0.0
    %7735 = vmatprep.subr.mxu0 0.0
    %7736 = vmatpush1.msra.mxu0 0.0
    %7737 = vmatprep.subr.mxu0 0.0
    %7738 = vmatpush1.msra.mxu0 0.0
    %7739 = vmatprep.subr.mxu0 0.0
    %7740 = vmatpush1.msra.mxu0 %v6932
    %7741 = vmatprep.subr.mxu0 0.0
    %7742 = vmatpush2.msra.mxu0 0.0
    %7743 = vmatprep.subr.mxu0 0.0
    %7744 = vmatpush2.msra.mxu0 0.0
    %7745 = vmatprep.subr.mxu0 0.0
    %7746 = vmatpush2.msra.mxu0 0.0
    %7747 = vmatprep.subr.mxu0 0.0
    %7748 = vmatpush2.msra.mxu0 0.0
    %7749 = vmatprep.subr.mxu0 0.0
    %7750 = vmatpush2.msra.mxu0 0.0
    %7751 = vmatprep.subr.mxu0 0.0
    %7752 = vmatpush2.msra.mxu0 0.0
    %7753 = vmatprep.subr.mxu0 0.0
    %7754 = vmatpush2.msra.mxu0 0.0
    %7755 = vmatprep.subr.mxu0 0.0
    %7756 = vmatpush2.msra.mxu0 0.0
    %7757 = vmatprep.subr.mxu0 0.0
    %7758 = vmatpush2.msra.mxu0 0.0
    %7759 = vmatprep.subr.mxu0 0.0
    %7760 = vmatpush2.msra.mxu0 0.0
    %7761 = vmatprep.subr.mxu0 0.0
    %7762 = vmatpush2.msra.mxu0 0.0
    %7763 = vmatprep.subr.mxu0 0.0
    %7764 = vmatpush2.msra.mxu0 0.0
    %7765 = vmatprep.subr.mxu0 0.0
    %7766 = vmatpush2.msra.mxu0 0.0
    %7767 = vmatprep.subr.mxu0 0.0
    %7768 = vmatpush2.msra.mxu0 0.0
    %7769 = vmatprep.subr.mxu0 0.0
    %7770 = vmatpush2.msra.mxu0 0.0
    %7771 = vmatprep.subr.mxu0 0.0
    %7772 = vmatpush2.msra.mxu0 0.0
    %7773 = vmatprep.mubr.f32.mxu0 0.0
    %7774 = vmatmul.mubr.f32.gmra.mxu0 %v7704
    %v7775 = vpop.f32.mrf.mxu0
    %v7776 = vadd.f32 %v7695, %v7775
    %v7777 = vpop.f32.mrf.mxu0
    %7778 = vmatprep.mubr.f32.mxu0 0.0
    %7779 = vmatmul.mubr.f32.gmra.mxu0 %v7707
    %v7780 = vpop.f32.mrf.mxu0
    %v7781 = vadd.f32 %v7700, %v7780
    %v7782 = vpop.f32.mrf.mxu0
    %7783 = vdwg.mxu0
    %7784 = vrot.lane.b32.xlu0 %v6825, 112
    %v7785 = vpop.permute.xlu0 %7784
    %7786 = vrot.lane.b32.xlu0 %v6913, 112
    %v7787 = vpop.permute.xlu0 %7786
    %7788 = vrot.lane.b32.xlu0 %v6918, 112
    %v7789 = vpop.permute.xlu0 %7788
    %v7790 = vsel %vm384, %v7785, 0
    %v7792 = vsel %vm384, %v7787, 0
    %v7794 = vsel %vm384, %v7789, 0
    %7796 = vmatprep.subr.mxu0 0.0
    %7797 = vmatpush1.xpose.msra.mxu0 0.0
    %7798 = vmatprep.subr.mxu0 0.0
    %7799 = vmatpush1.xpose.msra.mxu0 0.0
    %7800 = vmatprep.subr.mxu0 0.0
    %7801 = vmatpush1.xpose.msra.mxu0 0.0
    %7802 = vmatprep.subr.mxu0 0.0
    %7803 = vmatpush1.xpose.msra.mxu0 0.0
    %7804 = vmatprep.subr.mxu0 0.0
    %7805 = vmatpush1.xpose.msra.mxu0 0.0
    %7806 = vmatprep.subr.mxu0 0.0
    %7807 = vmatpush1.xpose.msra.mxu0 0.0
    %7808 = vmatprep.subr.mxu0 0.0
    %7809 = vmatpush1.xpose.msra.mxu0 0.0
    %7810 = vmatprep.subr.mxu0 0.0
    %7811 = vmatpush1.xpose.msra.mxu0 0.0
    %7812 = vmatprep.subr.mxu0 0.0
    %7813 = vmatpush1.xpose.msra.mxu0 0.0
    %7814 = vmatprep.subr.mxu0 0.0
    %7815 = vmatpush1.xpose.msra.mxu0 0.0
    %7816 = vmatprep.subr.mxu0 0.0
    %7817 = vmatpush1.xpose.msra.mxu0 0.0
    %7818 = vmatprep.subr.mxu0 0.0
    %7819 = vmatpush1.xpose.msra.mxu0 0.0
    %7820 = vmatprep.subr.mxu0 0.0
    %7821 = vmatpush1.xpose.msra.mxu0 0.0
    %7822 = vmatprep.subr.mxu0 0.0
    %7823 = vmatpush1.xpose.msra.mxu0 0.0
    %7824 = vmatprep.subr.mxu0 0.0
    %7825 = vmatpush1.xpose.msra.mxu0 %v7794
    %7826 = vmatprep.subr.mxu0 0.0
    %7827 = vmatpush1.xpose.msra.mxu0 %v7792
    %7828 = vmatprep.subr.mxu0 0.0
    %7829 = vmatpush2.xpose.msra.mxu0 0.0
    %7830 = vmatprep.subr.mxu0 0.0
    %7831 = vmatpush2.xpose.msra.mxu0 0.0
    %7832 = vmatprep.subr.mxu0 0.0
    %7833 = vmatpush2.xpose.msra.mxu0 0.0
    %7834 = vmatprep.subr.mxu0 0.0
    %7835 = vmatpush2.xpose.msra.mxu0 0.0
    %7836 = vmatprep.subr.mxu0 0.0
    %7837 = vmatpush2.xpose.msra.mxu0 0.0
    %7838 = vmatprep.subr.mxu0 0.0
    %7839 = vmatpush2.xpose.msra.mxu0 0.0
    %7840 = vmatprep.subr.mxu0 0.0
    %7841 = vmatpush2.xpose.msra.mxu0 0.0
    %7842 = vmatprep.subr.mxu0 0.0
    %7843 = vmatpush2.xpose.msra.mxu0 0.0
    %7844 = vmatprep.subr.mxu0 0.0
    %7845 = vmatpush2.xpose.msra.mxu0 0.0
    %7846 = vmatprep.subr.mxu0 0.0
    %7847 = vmatpush2.xpose.msra.mxu0 0.0
    %7848 = vmatprep.subr.mxu0 0.0
    %7849 = vmatpush2.xpose.msra.mxu0 0.0
    %7850 = vmatprep.subr.mxu0 0.0
    %7851 = vmatpush2.xpose.msra.mxu0 0.0
    %7852 = vmatprep.subr.mxu0 0.0
    %7853 = vmatpush2.xpose.msra.mxu0 0.0
    %7854 = vmatprep.subr.mxu0 0.0
    %7855 = vmatpush2.xpose.msra.mxu0 0.0
    %7856 = vmatprep.subr.mxu0 0.0
    %7857 = vmatpush2.xpose.msra.mxu0 0.0
    %7858 = vmatprep.subr.mxu0 0.0
    %7859 = vmatpush2.xpose.msra.mxu0 0.0
    %7860 = vmatprep.mubr.f32.mxu0 0.0
    %7861 = vmatmul.mubr.f32.gmra.mxu0 %v7790
    %v7862 = vpop.f32.mrf.mxu0
    %v7863 = vadd.f32 0.0, %v7862
    %v7864 = vpop.f32.mrf.mxu0
    %7865 = vdwg.mxu0
    %7866 = vrot.lane.b32.xlu0 %v6830, 112
    %v7867 = vpop.permute.xlu0 %7866
    %7868 = vrot.lane.b32.xlu0 %v6923, 112
    %v7869 = vpop.permute.xlu0 %7868
    %7870 = vrot.lane.b32.xlu0 %v6928, 112
    %v7871 = vpop.permute.xlu0 %7870
    %v7872 = vsel %vm384, %v7867, 0
    %v7874 = vsel %vm384, %v7869, 0
    %v7876 = vsel %vm384, %v7871, 0
    %7878 = vmatprep.subr.mxu0 0.0
    %7879 = vmatpush1.xpose.msra.mxu0 0.0
    %7880 = vmatprep.subr.mxu0 0.0
    %7881 = vmatpush1.xpose.msra.mxu0 0.0
    %7882 = vmatprep.subr.mxu0 0.0
    %7883 = vmatpush1.xpose.msra.mxu0 0.0
    %7884 = vmatprep.subr.mxu0 0.0
    %7885 = vmatpush1.xpose.msra.mxu0 0.0
    %7886 = vmatprep.subr.mxu0 0.0
    %7887 = vmatpush1.xpose.msra.mxu0 0.0
    %7888 = vmatprep.subr.mxu0 0.0
    %7889 = vmatpush1.xpose.msra.mxu0 0.0
    %7890 = vmatprep.subr.mxu0 0.0
    %7891 = vmatpush1.xpose.msra.mxu0 0.0
    %7892 = vmatprep.subr.mxu0 0.0
    %7893 = vmatpush1.xpose.msra.mxu0 0.0
    %7894 = vmatprep.subr.mxu0 0.0
    %7895 = vmatpush1.xpose.msra.mxu0 0.0
    %7896 = vmatprep.subr.mxu0 0.0
    %7897 = vmatpush1.xpose.msra.mxu0 0.0
    %7898 = vmatprep.subr.mxu0 0.0
    %7899 = vmatpush1.xpose.msra.mxu0 0.0
    %7900 = vmatprep.subr.mxu0 0.0
    %7901 = vmatpush1.xpose.msra.mxu0 0.0
    %7902 = vmatprep.subr.mxu0 0.0
    %7903 = vmatpush1.xpose.msra.mxu0 0.0
    %7904 = vmatprep.subr.mxu0 0.0
    %7905 = vmatpush1.xpose.msra.mxu0 0.0
    %7906 = vmatprep.subr.mxu0 0.0
    %7907 = vmatpush1.xpose.msra.mxu0 %v7876
    %7908 = vmatprep.subr.mxu0 0.0
    %7909 = vmatpush1.xpose.msra.mxu0 %v7874
    %7910 = vmatprep.subr.mxu0 0.0
    %7911 = vmatpush2.xpose.msra.mxu0 0.0
    %7912 = vmatprep.subr.mxu0 0.0
    %7913 = vmatpush2.xpose.msra.mxu0 0.0
    %7914 = vmatprep.subr.mxu0 0.0
    %7915 = vmatpush2.xpose.msra.mxu0 0.0
    %7916 = vmatprep.subr.mxu0 0.0
    %7917 = vmatpush2.xpose.msra.mxu0 0.0
    %7918 = vmatprep.subr.mxu0 0.0
    %7919 = vmatpush2.xpose.msra.mxu0 0.0
    %7920 = vmatprep.subr.mxu0 0.0
    %7921 = vmatpush2.xpose.msra.mxu0 0.0
    %7922 = vmatprep.subr.mxu0 0.0
    %7923 = vmatpush2.xpose.msra.mxu0 0.0
    %7924 = vmatprep.subr.mxu0 0.0
    %7925 = vmatpush2.xpose.msra.mxu0 0.0
    %7926 = vmatprep.subr.mxu0 0.0
    %7927 = vmatpush2.xpose.msra.mxu0 0.0
    %7928 = vmatprep.subr.mxu0 0.0
    %7929 = vmatpush2.xpose.msra.mxu0 0.0
    %7930 = vmatprep.subr.mxu0 0.0
    %7931 = vmatpush2.xpose.msra.mxu0 0.0
    %7932 = vmatprep.subr.mxu0 0.0
    %7933 = vmatpush2.xpose.msra.mxu0 0.0
    %7934 = vmatprep.subr.mxu0 0.0
    %7935 = vmatpush2.xpose.msra.mxu0 0.0
    %7936 = vmatprep.subr.mxu0 0.0
    %7937 = vmatpush2.xpose.msra.mxu0 0.0
    %7938 = vmatprep.subr.mxu0 0.0
    %7939 = vmatpush2.xpose.msra.mxu0 0.0
    %7940 = vmatprep.subr.mxu0 0.0
    %7941 = vmatpush2.xpose.msra.mxu0 0.0
    %7942 = vmatprep.mubr.f32.mxu0 0.0
    %7943 = vmatmul.mubr.f32.gmra.mxu0 %v7872
    %v7944 = vpop.f32.mrf.mxu0
    %v7945 = vadd.f32 0.0, %v7944
    %v7946 = vpop.f32.mrf.mxu0
    %7947 = vdwg.mxu0
    %v7948 = vmul.f32 %v7863, 0.35355338
    %v7949 = vmul.f32 %v7945, 0.35355338
    %v7950 = vsel %vm545, %v7948, -inf
    %7951 = vmax.xlane.f32.xlu0 %v7950
    %v7952 = vpop.xlane.xlu0 %7951
    %v7953 = vsel %vm545, %v7949, -inf
    %7954 = vmax.xlane.f32.xlu0 %v7953
    %v7955 = vpop.xlane.xlu0 %7954
    %v7956 = vsub.f32 %v7948, %v7952
    %v7957 = vsub.f32 %v7949, %v7955
    %v7958 = vmul.f32 %v7956, 1.442695
    %v7959 = vpow.pop %v7958
    %v7960 = vmul.f32 %v7957, 1.442695
    %v7961 = vpow.pop %v7960
    %v7962 = vsel %vm545, %v7959, 0.0
    %7963 = vadd.xlane.f32.xlu0 %v7962
    %v7964 = vpop.xlane.xlu0 %7963
    %v7965 = vsel %vm545, %v7961, 0.0
    %7966 = vadd.xlane.f32.xlu0 %v7965
    %v7967 = vpop.xlane.xlu0 %7966
    %v7968 = vrcp.pop %v7964
    %v7969 = vrcp.pop %v7967
    %v7970 = vmul.f32 %v7959, %v7968
    %v7971 = vmul.f32 %v7961, %v7969
    %7972 = vrot.lane.b32.xlu0 %v6913, 80
    %v7973 = vpop.permute.xlu0 %7972
    %7974 = vrot.lane.b32.xlu0 %v6918, 80
    %v7975 = vpop.permute.xlu0 %7974
    %v7979 = vsel %vm545, %v7970, 0
    %7981 = vmatprep.subr.mxu0 0.0
    %7982 = vmatpush1.msra.mxu0 0.0
    %7983 = vmatprep.subr.mxu0 0.0
    %7984 = vmatpush1.msra.mxu0 0.0
    %7985 = vmatprep.subr.mxu0 0.0
    %7986 = vmatpush1.msra.mxu0 0.0
    %7987 = vmatprep.subr.mxu0 0.0
    %7988 = vmatpush1.msra.mxu0 0.0
    %7989 = vmatprep.subr.mxu0 0.0
    %7990 = vmatpush1.msra.mxu0 0.0
    %7991 = vmatprep.subr.mxu0 0.0
    %7992 = vmatpush1.msra.mxu0 0.0
    %7993 = vmatprep.subr.mxu0 0.0
    %7994 = vmatpush1.msra.mxu0 0.0
    %7995 = vmatprep.subr.mxu0 0.0
    %7996 = vmatpush1.msra.mxu0 0.0
    %7997 = vmatprep.subr.mxu0 0.0
    %7998 = vmatpush1.msra.mxu0 0.0
    %7999 = vmatprep.subr.mxu0 0.0
    %8000 = vmatpush1.msra.mxu0 0.0
    %8001 = vmatprep.subr.mxu0 0.0
    %8002 = vmatpush1.msra.mxu0 0.0
    %8003 = vmatprep.subr.mxu0 0.0
    %8004 = vmatpush1.msra.mxu0 0.0
    %8005 = vmatprep.subr.mxu0 0.0
    %8006 = vmatpush1.msra.mxu0 0.0
    %8007 = vmatprep.subr.mxu0 0.0
    %8008 = vmatpush1.msra.mxu0 0.0
    %8009 = vmatprep.subr.mxu0 0.0
    %8010 = vmatpush1.msra.mxu0 %v7975
    %8011 = vmatprep.subr.mxu0 0.0
    %8012 = vmatpush1.msra.mxu0 %v7973
    %8013 = vmatprep.subr.mxu0 0.0
    %8014 = vmatpush2.msra.mxu0 0.0
    %8015 = vmatprep.subr.mxu0 0.0
    %8016 = vmatpush2.msra.mxu0 0.0
    %8017 = vmatprep.subr.mxu0 0.0
    %8018 = vmatpush2.msra.mxu0 0.0
    %8019 = vmatprep.subr.mxu0 0.0
    %8020 = vmatpush2.msra.mxu0 0.0
    %8021 = vmatprep.subr.mxu0 0.0
    %8022 = vmatpush2.msra.mxu0 0.0
    %8023 = vmatprep.subr.mxu0 0.0
    %8024 = vmatpush2.msra.mxu0 0.0
    %8025 = vmatprep.subr.mxu0 0.0
    %8026 = vmatpush2.msra.mxu0 0.0
    %8027 = vmatprep.subr.mxu0 0.0
    %8028 = vmatpush2.msra.mxu0 0.0
    %8029 = vmatprep.subr.mxu0 0.0
    %8030 = vmatpush2.msra.mxu0 0.0
    %8031 = vmatprep.subr.mxu0 0.0
    %8032 = vmatpush2.msra.mxu0 0.0
    %8033 = vmatprep.subr.mxu0 0.0
    %8034 = vmatpush2.msra.mxu0 0.0
    %8035 = vmatprep.subr.mxu0 0.0
    %8036 = vmatpush2.msra.mxu0 0.0
    %8037 = vmatprep.subr.mxu0 0.0
    %8038 = vmatpush2.msra.mxu0 0.0
    %8039 = vmatprep.subr.mxu0 0.0
    %8040 = vmatpush2.msra.mxu0 0.0
    %8041 = vmatprep.subr.mxu0 0.0
    %8042 = vmatpush2.msra.mxu0 0.0
    %8043 = vmatprep.subr.mxu0 0.0
    %8044 = vmatpush2.msra.mxu0 0.0
    %8045 = vmatprep.mubr.f32.mxu0 0.0
    %8046 = vmatmul.mubr.f32.gmra.mxu0 %v7979
    %v8047 = vpop.f32.mrf.mxu0
    %v8048 = vadd.f32 0.0, %v8047
    %v8049 = vpop.f32.mrf.mxu0
    %8050 = vdwg.mxu0
    %8051 = vrot.lane.b32.xlu0 %v6923, 80
    %v8052 = vpop.permute.xlu0 %8051
    %8053 = vrot.lane.b32.xlu0 %v6928, 80
    %v8054 = vpop.permute.xlu0 %8053
    %v8058 = vsel %vm545, %v7971, 0
    %8060 = vmatprep.subr.mxu0 0.0
    %8061 = vmatpush1.msra.mxu0 0.0
    %8062 = vmatprep.subr.mxu0 0.0
    %8063 = vmatpush1.msra.mxu0 0.0
    %8064 = vmatprep.subr.mxu0 0.0
    %8065 = vmatpush1.msra.mxu0 0.0
    %8066 = vmatprep.subr.mxu0 0.0
    %8067 = vmatpush1.msra.mxu0 0.0
    %8068 = vmatprep.subr.mxu0 0.0
    %8069 = vmatpush1.msra.mxu0 0.0
    %8070 = vmatprep.subr.mxu0 0.0
    %8071 = vmatpush1.msra.mxu0 0.0
    %8072 = vmatprep.subr.mxu0 0.0
    %8073 = vmatpush1.msra.mxu0 0.0
    %8074 = vmatprep.subr.mxu0 0.0
    %8075 = vmatpush1.msra.mxu0 0.0
    %8076 = vmatprep.subr.mxu0 0.0
    %8077 = vmatpush1.msra.mxu0 0.0
    %8078 = vmatprep.subr.mxu0 0.0
    %8079 = vmatpush1.msra.mxu0 0.0
    %8080 = vmatprep.subr.mxu0 0.0
    %8081 = vmatpush1.msra.mxu0 0.0
    %8082 = vmatprep.subr.mxu0 0.0
    %8083 = vmatpush1.msra.mxu0 0.0
    %8084 = vmatprep.subr.mxu0 0.0
    %8085 = vmatpush1.msra.mxu0 0.0
    %8086 = vmatprep.subr.mxu0 0.0
    %8087 = vmatpush1.msra.mxu0 0.0
    %8088 = vmatprep.subr.mxu0 0.0
    %8089 = vmatpush1.msra.mxu0 %v8054
    %8090 = vmatprep.subr.mxu0 0.0
    %8091 = vmatpush1.msra.mxu0 %v8052
    %8092 = vmatprep.subr.mxu0 0.0
    %8093 = vmatpush2.msra.mxu0 0.0
    %8094 = vmatprep.subr.mxu0 0.0
    %8095 = vmatpush2.msra.mxu0 0.0
    %8096 = vmatprep.subr.mxu0 0.0
    %8097 = vmatpush2.msra.mxu0 0.0
    %8098 = vmatprep.subr.mxu0 0.0
    %8099 = vmatpush2.msra.mxu0 0.0
    %8100 = vmatprep.subr.mxu0 0.0
    %8101 = vmatpush2.msra.mxu0 0.0
    %8102 = vmatprep.subr.mxu0 0.0
    %8103 = vmatpush2.msra.mxu0 0.0
    %8104 = vmatprep.subr.mxu0 0.0
    %8105 = vmatpush2.msra.mxu0 0.0
    %8106 = vmatprep.subr.mxu0 0.0
    %8107 = vmatpush2.msra.mxu0 0.0
    %8108 = vmatprep.subr.mxu0 0.0
    %8109 = vmatpush2.msra.mxu0 0.0
    %8110 = vmatprep.subr.mxu0 0.0
    %8111 = vmatpush2.msra.mxu0 0.0
    %8112 = vmatprep.subr.mxu0 0.0
    %8113 = vmatpush2.msra.mxu0 0.0
    %8114 = vmatprep.subr.mxu0 0.0
    %8115 = vmatpush2.msra.mxu0 0.0
    %8116 = vmatprep.subr.mxu0 0.0
    %8117 = vmatpush2.msra.mxu0 0.0
    %8118 = vmatprep.subr.mxu0 0.0
    %8119 = vmatpush2.msra.mxu0 0.0
    %8120 = vmatprep.subr.mxu0 0.0
    %8121 = vmatpush2.msra.mxu0 0.0
    %8122 = vmatprep.subr.mxu0 0.0
    %8123 = vmatpush2.msra.mxu0 0.0
    %8124 = vmatprep.mubr.f32.mxu0 0.0
    %8125 = vmatmul.mubr.f32.gmra.mxu0 %v8058
    %v8126 = vpop.f32.mrf.mxu0
    %v8127 = vadd.f32 0.0, %v8126
    %v8128 = vpop.f32.mrf.mxu0
    %8129 = vdwg.mxu0
    %v8131 = vsel %vm384, %v8048, 0
    %v8134 = vsel %vm384, %v8127, 0
    %8136 = vmatprep.subr.mxu0 0.0
    %8137 = vmatpush1.msra.mxu0 0.0
    %8138 = vmatprep.subr.mxu0 0.0
    %8139 = vmatpush1.msra.mxu0 0.0
    %8140 = vmatprep.subr.mxu0 0.0
    %8141 = vmatpush1.msra.mxu0 0.0
    %8142 = vmatprep.subr.mxu0 0.0
    %8143 = vmatpush1.msra.mxu0 0.0
    %8144 = vmatprep.subr.mxu0 0.0
    %8145 = vmatpush1.msra.mxu0 0.0
    %8146 = vmatprep.subr.mxu0 0.0
    %8147 = vmatpush1.msra.mxu0 0.0
    %8148 = vmatprep.subr.mxu0 0.0
    %8149 = vmatpush1.msra.mxu0 0.0
    %8150 = vmatprep.subr.mxu0 0.0
    %8151 = vmatpush1.msra.mxu0 0.0
    %8152 = vmatprep.subr.mxu0 0.0
    %8153 = vmatpush1.msra.mxu0 0.0
    %8154 = vmatprep.subr.mxu0 0.0
    %8155 = vmatpush1.msra.mxu0 0.0
    %8156 = vmatprep.subr.mxu0 0.0
    %8157 = vmatpush1.msra.mxu0 0.0
    %8158 = vmatprep.subr.mxu0 0.0
    %8159 = vmatpush1.msra.mxu0 0.0
    %8160 = vmatprep.subr.mxu0 0.0
    %8161 = vmatpush1.msra.mxu0 0.0
    %8162 = vmatprep.subr.mxu0 0.0
    %8163 = vmatpush1.msra.mxu0 0.0
    %8164 = vmatprep.subr.mxu0 0.0
    %8165 = vmatpush1.msra.mxu0 0.0
    %8166 = vmatprep.subr.mxu0 0.0
    %8167 = vmatpush1.msra.mxu0 %v6934
    %8168 = vmatprep.subr.mxu0 0.0
    %8169 = vmatpush2.msra.mxu0 0.0
    %8170 = vmatprep.subr.mxu0 0.0
    %8171 = vmatpush2.msra.mxu0 0.0
    %8172 = vmatprep.subr.mxu0 0.0
    %8173 = vmatpush2.msra.mxu0 0.0
    %8174 = vmatprep.subr.mxu0 0.0
    %8175 = vmatpush2.msra.mxu0 0.0
    %8176 = vmatprep.subr.mxu0 0.0
    %8177 = vmatpush2.msra.mxu0 0.0
    %8178 = vmatprep.subr.mxu0 0.0
    %8179 = vmatpush2.msra.mxu0 0.0
    %8180 = vmatprep.subr.mxu0 0.0
    %8181 = vmatpush2.msra.mxu0 0.0
    %8182 = vmatprep.subr.mxu0 0.0
    %8183 = vmatpush2.msra.mxu0 0.0
    %8184 = vmatprep.subr.mxu0 0.0
    %8185 = vmatpush2.msra.mxu0 0.0
    %8186 = vmatprep.subr.mxu0 0.0
    %8187 = vmatpush2.msra.mxu0 0.0
    %8188 = vmatprep.subr.mxu0 0.0
    %8189 = vmatpush2.msra.mxu0 0.0
    %8190 = vmatprep.subr.mxu0 0.0
    %8191 = vmatpush2.msra.mxu0 0.0
    %8192 = vmatprep.subr.mxu0 0.0
    %8193 = vmatpush2.msra.mxu0 0.0
    %8194 = vmatprep.subr.mxu0 0.0
    %8195 = vmatpush2.msra.mxu0 0.0
    %8196 = vmatprep.subr.mxu0 0.0
    %8197 = vmatpush2.msra.mxu0 0.0
    %8198 = vmatprep.subr.mxu0 0.0
    %8199 = vmatpush2.msra.mxu0 0.0
    %8200 = vmatprep.mubr.f32.mxu0 0.0
    %8201 = vmatmul.mubr.f32.gmra.mxu0 %v8131
    %v8202 = vpop.f32.mrf.mxu0
    %v8203 = vadd.f32 0.0, %v8202
    %v8204 = vpop.f32.mrf.mxu0
    %8205 = vmatprep.mubr.f32.mxu0 0.0
    %8206 = vmatmul.mubr.f32.gmra.mxu0 %v8134
    %v8207 = vpop.f32.mrf.mxu0
    %v8208 = vadd.f32 0.0, %v8207
    %v8209 = vpop.f32.mrf.mxu0
    %8210 = vdwg.mxu0
    %v8211 = vadd.f32 %v7776, %v8203
    %v8212 = vadd.f32 %v7781, %v8208
    %8213 = vrot.lane.b32.xlu0 %v6825, 104
    %v8214 = vpop.permute.xlu0 %8213
    %8215 = vrot.lane.b32.xlu0 %v6913, 104
    %v8216 = vpop.permute.xlu0 %8215
    %8217 = vrot.lane.b32.xlu0 %v6918, 104
    %v8218 = vpop.permute.xlu0 %8217
    %v8219 = vsel %vm384, %v8214, 0
    %v8221 = vsel %vm384, %v8216, 0
    %v8223 = vsel %vm384, %v8218, 0
    %8225 = vmatprep.subr.mxu0 0.0
    %8226 = vmatpush1.xpose.msra.mxu0 0.0
    %8227 = vmatprep.subr.mxu0 0.0
    %8228 = vmatpush1.xpose.msra.mxu0 0.0
    %8229 = vmatprep.subr.mxu0 0.0
    %8230 = vmatpush1.xpose.msra.mxu0 0.0
    %8231 = vmatprep.subr.mxu0 0.0
    %8232 = vmatpush1.xpose.msra.mxu0 0.0
    %8233 = vmatprep.subr.mxu0 0.0
    %8234 = vmatpush1.xpose.msra.mxu0 0.0
    %8235 = vmatprep.subr.mxu0 0.0
    %8236 = vmatpush1.xpose.msra.mxu0 0.0
    %8237 = vmatprep.subr.mxu0 0.0
    %8238 = vmatpush1.xpose.msra.mxu0 0.0
    %8239 = vmatprep.subr.mxu0 0.0
    %8240 = vmatpush1.xpose.msra.mxu0 0.0
    %8241 = vmatprep.subr.mxu0 0.0
    %8242 = vmatpush1.xpose.msra.mxu0 0.0
    %8243 = vmatprep.subr.mxu0 0.0
    %8244 = vmatpush1.xpose.msra.mxu0 0.0
    %8245 = vmatprep.subr.mxu0 0.0
    %8246 = vmatpush1.xpose.msra.mxu0 0.0
    %8247 = vmatprep.subr.mxu0 0.0
    %8248 = vmatpush1.xpose.msra.mxu0 0.0
    %8249 = vmatprep.subr.mxu0 0.0
    %8250 = vmatpush1.xpose.msra.mxu0 0.0
    %8251 = vmatprep.subr.mxu0 0.0
    %8252 = vmatpush1.xpose.msra.mxu0 0.0
    %8253 = vmatprep.subr.mxu0 0.0
    %8254 = vmatpush1.xpose.msra.mxu0 %v8223
    %8255 = vmatprep.subr.mxu0 0.0
    %8256 = vmatpush1.xpose.msra.mxu0 %v8221
    %8257 = vmatprep.subr.mxu0 0.0
    %8258 = vmatpush2.xpose.msra.mxu0 0.0
    %8259 = vmatprep.subr.mxu0 0.0
    %8260 = vmatpush2.xpose.msra.mxu0 0.0
    %8261 = vmatprep.subr.mxu0 0.0
    %8262 = vmatpush2.xpose.msra.mxu0 0.0
    %8263 = vmatprep.subr.mxu0 0.0
    %8264 = vmatpush2.xpose.msra.mxu0 0.0
    %8265 = vmatprep.subr.mxu0 0.0
    %8266 = vmatpush2.xpose.msra.mxu0 0.0
    %8267 = vmatprep.subr.mxu0 0.0
    %8268 = vmatpush2.xpose.msra.mxu0 0.0
    %8269 = vmatprep.subr.mxu0 0.0
    %8270 = vmatpush2.xpose.msra.mxu0 0.0
    %8271 = vmatprep.subr.mxu0 0.0
    %8272 = vmatpush2.xpose.msra.mxu0 0.0
    %8273 = vmatprep.subr.mxu0 0.0
    %8274 = vmatpush2.xpose.msra.mxu0 0.0
    %8275 = vmatprep.subr.mxu0 0.0
    %8276 = vmatpush2.xpose.msra.mxu0 0.0
    %8277 = vmatprep.subr.mxu0 0.0
    %8278 = vmatpush2.xpose.msra.mxu0 0.0
    %8279 = vmatprep.subr.mxu0 0.0
    %8280 = vmatpush2.xpose.msra.mxu0 0.0
    %8281 = vmatprep.subr.mxu0 0.0
    %8282 = vmatpush2.xpose.msra.mxu0 0.0
    %8283 = vmatprep.subr.mxu0 0.0
    %8284 = vmatpush2.xpose.msra.mxu0 0.0
    %8285 = vmatprep.subr.mxu0 0.0
    %8286 = vmatpush2.xpose.msra.mxu0 0.0
    %8287 = vmatprep.subr.mxu0 0.0
    %8288 = vmatpush2.xpose.msra.mxu0 0.0
    %8289 = vmatprep.mubr.f32.mxu0 0.0
    %8290 = vmatmul.mubr.f32.gmra.mxu0 %v8219
    %v8291 = vpop.f32.mrf.mxu0
    %v8292 = vadd.f32 0.0, %v8291
    %v8293 = vpop.f32.mrf.mxu0
    %8294 = vdwg.mxu0
    %8295 = vrot.lane.b32.xlu0 %v6830, 104
    %v8296 = vpop.permute.xlu0 %8295
    %8297 = vrot.lane.b32.xlu0 %v6923, 104
    %v8298 = vpop.permute.xlu0 %8297
    %8299 = vrot.lane.b32.xlu0 %v6928, 104
    %v8300 = vpop.permute.xlu0 %8299
    %v8301 = vsel %vm384, %v8296, 0
    %v8303 = vsel %vm384, %v8298, 0
    %v8305 = vsel %vm384, %v8300, 0
    %8307 = vmatprep.subr.mxu0 0.0
    %8308 = vmatpush1.xpose.msra.mxu0 0.0
    %8309 = vmatprep.subr.mxu0 0.0
    %8310 = vmatpush1.xpose.msra.mxu0 0.0
    %8311 = vmatprep.subr.mxu0 0.0
    %8312 = vmatpush1.xpose.msra.mxu0 0.0
    %8313 = vmatprep.subr.mxu0 0.0
    %8314 = vmatpush1.xpose.msra.mxu0 0.0
    %8315 = vmatprep.subr.mxu0 0.0
    %8316 = vmatpush1.xpose.msra.mxu0 0.0
    %8317 = vmatprep.subr.mxu0 0.0
    %8318 = vmatpush1.xpose.msra.mxu0 0.0
    %8319 = vmatprep.subr.mxu0 0.0
    %8320 = vmatpush1.xpose.msra.mxu0 0.0
    %8321 = vmatprep.subr.mxu0 0.0
    %8322 = vmatpush1.xpose.msra.mxu0 0.0
    %8323 = vmatprep.subr.mxu0 0.0
    %8324 = vmatpush1.xpose.msra.mxu0 0.0
    %8325 = vmatprep.subr.mxu0 0.0
    %8326 = vmatpush1.xpose.msra.mxu0 0.0
    %8327 = vmatprep.subr.mxu0 0.0
    %8328 = vmatpush1.xpose.msra.mxu0 0.0
    %8329 = vmatprep.subr.mxu0 0.0
    %8330 = vmatpush1.xpose.msra.mxu0 0.0
    %8331 = vmatprep.subr.mxu0 0.0
    %8332 = vmatpush1.xpose.msra.mxu0 0.0
    %8333 = vmatprep.subr.mxu0 0.0
    %8334 = vmatpush1.xpose.msra.mxu0 0.0
    %8335 = vmatprep.subr.mxu0 0.0
    %8336 = vmatpush1.xpose.msra.mxu0 %v8305
    %8337 = vmatprep.subr.mxu0 0.0
    %8338 = vmatpush1.xpose.msra.mxu0 %v8303
    %8339 = vmatprep.subr.mxu0 0.0
    %8340 = vmatpush2.xpose.msra.mxu0 0.0
    %8341 = vmatprep.subr.mxu0 0.0
    %8342 = vmatpush2.xpose.msra.mxu0 0.0
    %8343 = vmatprep.subr.mxu0 0.0
    %8344 = vmatpush2.xpose.msra.mxu0 0.0
    %8345 = vmatprep.subr.mxu0 0.0
    %8346 = vmatpush2.xpose.msra.mxu0 0.0
    %8347 = vmatprep.subr.mxu0 0.0
    %8348 = vmatpush2.xpose.msra.mxu0 0.0
    %8349 = vmatprep.subr.mxu0 0.0
    %8350 = vmatpush2.xpose.msra.mxu0 0.0
    %8351 = vmatprep.subr.mxu0 0.0
    %8352 = vmatpush2.xpose.msra.mxu0 0.0
    %8353 = vmatprep.subr.mxu0 0.0
    %8354 = vmatpush2.xpose.msra.mxu0 0.0
    %8355 = vmatprep.subr.mxu0 0.0
    %8356 = vmatpush2.xpose.msra.mxu0 0.0
    %8357 = vmatprep.subr.mxu0 0.0
    %8358 = vmatpush2.xpose.msra.mxu0 0.0
    %8359 = vmatprep.subr.mxu0 0.0
    %8360 = vmatpush2.xpose.msra.mxu0 0.0
    %8361 = vmatprep.subr.mxu0 0.0
    %8362 = vmatpush2.xpose.msra.mxu0 0.0
    %8363 = vmatprep.subr.mxu0 0.0
    %8364 = vmatpush2.xpose.msra.mxu0 0.0
    %8365 = vmatprep.subr.mxu0 0.0
    %8366 = vmatpush2.xpose.msra.mxu0 0.0
    %8367 = vmatprep.subr.mxu0 0.0
    %8368 = vmatpush2.xpose.msra.mxu0 0.0
    %8369 = vmatprep.subr.mxu0 0.0
    %8370 = vmatpush2.xpose.msra.mxu0 0.0
    %8371 = vmatprep.mubr.f32.mxu0 0.0
    %8372 = vmatmul.mubr.f32.gmra.mxu0 %v8301
    %v8373 = vpop.f32.mrf.mxu0
    %v8374 = vadd.f32 0.0, %v8373
    %v8375 = vpop.f32.mrf.mxu0
    %8376 = vdwg.mxu0
    %v8377 = vmul.f32 %v8292, 0.35355338
    %v8378 = vmul.f32 %v8374, 0.35355338
    %v8379 = vsel %vm545, %v8377, -inf
    %8380 = vmax.xlane.f32.xlu0 %v8379
    %v8381 = vpop.xlane.xlu0 %8380
    %v8382 = vsel %vm545, %v8378, -inf
    %8383 = vmax.xlane.f32.xlu0 %v8382
    %v8384 = vpop.xlane.xlu0 %8383
    %v8385 = vsub.f32 %v8377, %v8381
    %v8386 = vsub.f32 %v8378, %v8384
    %v8387 = vmul.f32 %v8385, 1.442695
    %v8388 = vpow.pop %v8387
    %v8389 = vmul.f32 %v8386, 1.442695
    %v8390 = vpow.pop %v8389
    %v8391 = vsel %vm545, %v8388, 0.0
    %8392 = vadd.xlane.f32.xlu0 %v8391
    %v8393 = vpop.xlane.xlu0 %8392
    %v8394 = vsel %vm545, %v8390, 0.0
    %8395 = vadd.xlane.f32.xlu0 %v8394
    %v8396 = vpop.xlane.xlu0 %8395
    %v8397 = vrcp.pop %v8393
    %v8398 = vrcp.pop %v8396
    %v8399 = vmul.f32 %v8388, %v8397
    %v8400 = vmul.f32 %v8390, %v8398
    %8401 = vrot.lane.b32.xlu0 %v6913, 72
    %v8402 = vpop.permute.xlu0 %8401
    %8403 = vrot.lane.b32.xlu0 %v6918, 72
    %v8404 = vpop.permute.xlu0 %8403
    %v8408 = vsel %vm545, %v8399, 0
    %8410 = vmatprep.subr.mxu0 0.0
    %8411 = vmatpush1.msra.mxu0 0.0
    %8412 = vmatprep.subr.mxu0 0.0
    %8413 = vmatpush1.msra.mxu0 0.0
    %8414 = vmatprep.subr.mxu0 0.0
    %8415 = vmatpush1.msra.mxu0 0.0
    %8416 = vmatprep.subr.mxu0 0.0
    %8417 = vmatpush1.msra.mxu0 0.0
    %8418 = vmatprep.subr.mxu0 0.0
    %8419 = vmatpush1.msra.mxu0 0.0
    %8420 = vmatprep.subr.mxu0 0.0
    %8421 = vmatpush1.msra.mxu0 0.0
    %8422 = vmatprep.subr.mxu0 0.0
    %8423 = vmatpush1.msra.mxu0 0.0
    %8424 = vmatprep.subr.mxu0 0.0
    %8425 = vmatpush1.msra.mxu0 0.0
    %8426 = vmatprep.subr.mxu0 0.0
    %8427 = vmatpush1.msra.mxu0 0.0
    %8428 = vmatprep.subr.mxu0 0.0
    %8429 = vmatpush1.msra.mxu0 0.0
    %8430 = vmatprep.subr.mxu0 0.0
    %8431 = vmatpush1.msra.mxu0 0.0
    %8432 = vmatprep.subr.mxu0 0.0
    %8433 = vmatpush1.msra.mxu0 0.0
    %8434 = vmatprep.subr.mxu0 0.0
    %8435 = vmatpush1.msra.mxu0 0.0
    %8436 = vmatprep.subr.mxu0 0.0
    %8437 = vmatpush1.msra.mxu0 0.0
    %8438 = vmatprep.subr.mxu0 0.0
    %8439 = vmatpush1.msra.mxu0 %v8404
    %8440 = vmatprep.subr.mxu0 0.0
    %8441 = vmatpush1.msra.mxu0 %v8402
    %8442 = vmatprep.subr.mxu0 0.0
    %8443 = vmatpush2.msra.mxu0 0.0
    %8444 = vmatprep.subr.mxu0 0.0
    %8445 = vmatpush2.msra.mxu0 0.0
    %8446 = vmatprep.subr.mxu0 0.0
    %8447 = vmatpush2.msra.mxu0 0.0
    %8448 = vmatprep.subr.mxu0 0.0
    %8449 = vmatpush2.msra.mxu0 0.0
    %8450 = vmatprep.subr.mxu0 0.0
    %8451 = vmatpush2.msra.mxu0 0.0
    %8452 = vmatprep.subr.mxu0 0.0
    %8453 = vmatpush2.msra.mxu0 0.0
    %8454 = vmatprep.subr.mxu0 0.0
    %8455 = vmatpush2.msra.mxu0 0.0
    %8456 = vmatprep.subr.mxu0 0.0
    %8457 = vmatpush2.msra.mxu0 0.0
    %8458 = vmatprep.subr.mxu0 0.0
    %8459 = vmatpush2.msra.mxu0 0.0
    %8460 = vmatprep.subr.mxu0 0.0
    %8461 = vmatpush2.msra.mxu0 0.0
    %8462 = vmatprep.subr.mxu0 0.0
    %8463 = vmatpush2.msra.mxu0 0.0
    %8464 = vmatprep.subr.mxu0 0.0
    %8465 = vmatpush2.msra.mxu0 0.0
    %8466 = vmatprep.subr.mxu0 0.0
    %8467 = vmatpush2.msra.mxu0 0.0
    %8468 = vmatprep.subr.mxu0 0.0
    %8469 = vmatpush2.msra.mxu0 0.0
    %8470 = vmatprep.subr.mxu0 0.0
    %8471 = vmatpush2.msra.mxu0 0.0
    %8472 = vmatprep.subr.mxu0 0.0
    %8473 = vmatpush2.msra.mxu0 0.0
    %8474 = vmatprep.mubr.f32.mxu0 0.0
    %8475 = vmatmul.mubr.f32.gmra.mxu0 %v8408
    %v8476 = vpop.f32.mrf.mxu0
    %v8477 = vadd.f32 0.0, %v8476
    %v8478 = vpop.f32.mrf.mxu0
    %8479 = vdwg.mxu0
    %8480 = vrot.lane.b32.xlu0 %v6923, 72
    %v8481 = vpop.permute.xlu0 %8480
    %8482 = vrot.lane.b32.xlu0 %v6928, 72
    %v8483 = vpop.permute.xlu0 %8482
    %v8487 = vsel %vm545, %v8400, 0
    %8489 = vmatprep.subr.mxu0 0.0
    %8490 = vmatpush1.msra.mxu0 0.0
    %8491 = vmatprep.subr.mxu0 0.0
    %8492 = vmatpush1.msra.mxu0 0.0
    %8493 = vmatprep.subr.mxu0 0.0
    %8494 = vmatpush1.msra.mxu0 0.0
    %8495 = vmatprep.subr.mxu0 0.0
    %8496 = vmatpush1.msra.mxu0 0.0
    %8497 = vmatprep.subr.mxu0 0.0
    %8498 = vmatpush1.msra.mxu0 0.0
    %8499 = vmatprep.subr.mxu0 0.0
    %8500 = vmatpush1.msra.mxu0 0.0
    %8501 = vmatprep.subr.mxu0 0.0
    %8502 = vmatpush1.msra.mxu0 0.0
    %8503 = vmatprep.subr.mxu0 0.0
    %8504 = vmatpush1.msra.mxu0 0.0
    %8505 = vmatprep.subr.mxu0 0.0
    %8506 = vmatpush1.msra.mxu0 0.0
    %8507 = vmatprep.subr.mxu0 0.0
    %8508 = vmatpush1.msra.mxu0 0.0
    %8509 = vmatprep.subr.mxu0 0.0
    %8510 = vmatpush1.msra.mxu0 0.0
    %8511 = vmatprep.subr.mxu0 0.0
    %8512 = vmatpush1.msra.mxu0 0.0
    %8513 = vmatprep.subr.mxu0 0.0
    %8514 = vmatpush1.msra.mxu0 0.0
    %8515 = vmatprep.subr.mxu0 0.0
    %8516 = vmatpush1.msra.mxu0 0.0
    %8517 = vmatprep.subr.mxu0 0.0
    %8518 = vmatpush1.msra.mxu0 %v8483
    %8519 = vmatprep.subr.mxu0 0.0
    %8520 = vmatpush1.msra.mxu0 %v8481
    %8521 = vmatprep.subr.mxu0 0.0
    %8522 = vmatpush2.msra.mxu0 0.0
    %8523 = vmatprep.subr.mxu0 0.0
    %8524 = vmatpush2.msra.mxu0 0.0
    %8525 = vmatprep.subr.mxu0 0.0
    %8526 = vmatpush2.msra.mxu0 0.0
    %8527 = vmatprep.subr.mxu0 0.0
    %8528 = vmatpush2.msra.mxu0 0.0
    %8529 = vmatprep.subr.mxu0 0.0
    %8530 = vmatpush2.msra.mxu0 0.0
    %8531 = vmatprep.subr.mxu0 0.0
    %8532 = vmatpush2.msra.mxu0 0.0
    %8533 = vmatprep.subr.mxu0 0.0
    %8534 = vmatpush2.msra.mxu0 0.0
    %8535 = vmatprep.subr.mxu0 0.0
    %8536 = vmatpush2.msra.mxu0 0.0
    %8537 = vmatprep.subr.mxu0 0.0
    %8538 = vmatpush2.msra.mxu0 0.0
    %8539 = vmatprep.subr.mxu0 0.0
    %8540 = vmatpush2.msra.mxu0 0.0
    %8541 = vmatprep.subr.mxu0 0.0
    %8542 = vmatpush2.msra.mxu0 0.0
    %8543 = vmatprep.subr.mxu0 0.0
    %8544 = vmatpush2.msra.mxu0 0.0
    %8545 = vmatprep.subr.mxu0 0.0
    %8546 = vmatpush2.msra.mxu0 0.0
    %8547 = vmatprep.subr.mxu0 0.0
    %8548 = vmatpush2.msra.mxu0 0.0
    %8549 = vmatprep.subr.mxu0 0.0
    %8550 = vmatpush2.msra.mxu0 0.0
    %8551 = vmatprep.subr.mxu0 0.0
    %8552 = vmatpush2.msra.mxu0 0.0
    %8553 = vmatprep.mubr.f32.mxu0 0.0
    %8554 = vmatmul.mubr.f32.gmra.mxu0 %v8487
    %v8555 = vpop.f32.mrf.mxu0
    %v8556 = vadd.f32 0.0, %v8555
    %v8557 = vpop.f32.mrf.mxu0
    %8558 = vdwg.mxu0
    %v8560 = vsel %vm384, %v8477, 0
    %v8563 = vsel %vm384, %v8556, 0
    %8565 = vmatprep.subr.mxu0 0.0
    %8566 = vmatpush1.msra.mxu0 0.0
    %8567 = vmatprep.subr.mxu0 0.0
    %8568 = vmatpush1.msra.mxu0 0.0
    %8569 = vmatprep.subr.mxu0 0.0
    %8570 = vmatpush1.msra.mxu0 0.0
    %8571 = vmatprep.subr.mxu0 0.0
    %8572 = vmatpush1.msra.mxu0 0.0
    %8573 = vmatprep.subr.mxu0 0.0
    %8574 = vmatpush1.msra.mxu0 0.0
    %8575 = vmatprep.subr.mxu0 0.0
    %8576 = vmatpush1.msra.mxu0 0.0
    %8577 = vmatprep.subr.mxu0 0.0
    %8578 = vmatpush1.msra.mxu0 0.0
    %8579 = vmatprep.subr.mxu0 0.0
    %8580 = vmatpush1.msra.mxu0 0.0
    %8581 = vmatprep.subr.mxu0 0.0
    %8582 = vmatpush1.msra.mxu0 0.0
    %8583 = vmatprep.subr.mxu0 0.0
    %8584 = vmatpush1.msra.mxu0 0.0
    %8585 = vmatprep.subr.mxu0 0.0
    %8586 = vmatpush1.msra.mxu0 0.0
    %8587 = vmatprep.subr.mxu0 0.0
    %8588 = vmatpush1.msra.mxu0 0.0
    %8589 = vmatprep.subr.mxu0 0.0
    %8590 = vmatpush1.msra.mxu0 0.0
    %8591 = vmatprep.subr.mxu0 0.0
    %8592 = vmatpush1.msra.mxu0 0.0
    %8593 = vmatprep.subr.mxu0 0.0
    %8594 = vmatpush1.msra.mxu0 0.0
    %8595 = vmatprep.subr.mxu0 0.0
    %8596 = vmatpush1.msra.mxu0 %v6935
    %8597 = vmatprep.subr.mxu0 0.0
    %8598 = vmatpush2.msra.mxu0 0.0
    %8599 = vmatprep.subr.mxu0 0.0
    %8600 = vmatpush2.msra.mxu0 0.0
    %8601 = vmatprep.subr.mxu0 0.0
    %8602 = vmatpush2.msra.mxu0 0.0
    %8603 = vmatprep.subr.mxu0 0.0
    %8604 = vmatpush2.msra.mxu0 0.0
    %8605 = vmatprep.subr.mxu0 0.0
    %8606 = vmatpush2.msra.mxu0 0.0
    %8607 = vmatprep.subr.mxu0 0.0
    %8608 = vmatpush2.msra.mxu0 0.0
    %8609 = vmatprep.subr.mxu0 0.0
    %8610 = vmatpush2.msra.mxu0 0.0
    %8611 = vmatprep.subr.mxu0 0.0
    %8612 = vmatpush2.msra.mxu0 0.0
    %8613 = vmatprep.subr.mxu0 0.0
    %8614 = vmatpush2.msra.mxu0 0.0
    %8615 = vmatprep.subr.mxu0 0.0
    %8616 = vmatpush2.msra.mxu0 0.0
    %8617 = vmatprep.subr.mxu0 0.0
    %8618 = vmatpush2.msra.mxu0 0.0
    %8619 = vmatprep.subr.mxu0 0.0
    %8620 = vmatpush2.msra.mxu0 0.0
    %8621 = vmatprep.subr.mxu0 0.0
    %8622 = vmatpush2.msra.mxu0 0.0
    %8623 = vmatprep.subr.mxu0 0.0
    %8624 = vmatpush2.msra.mxu0 0.0
    %8625 = vmatprep.subr.mxu0 0.0
    %8626 = vmatpush2.msra.mxu0 0.0
    %8627 = vmatprep.subr.mxu0 0.0
    %8628 = vmatpush2.msra.mxu0 0.0
    %8629 = vmatprep.mubr.f32.mxu0 0.0
    %8630 = vmatmul.mubr.f32.gmra.mxu0 %v8560
    %v8631 = vpop.f32.mrf.mxu0
    %v8632 = vadd.f32 0.0, %v8631
    %v8633 = vpop.f32.mrf.mxu0
    %8634 = vmatprep.mubr.f32.mxu0 0.0
    %8635 = vmatmul.mubr.f32.gmra.mxu0 %v8563
    %v8636 = vpop.f32.mrf.mxu0
    %v8637 = vadd.f32 0.0, %v8636
    %v8638 = vpop.f32.mrf.mxu0
    %8639 = vdwg.mxu0
    %v8640 = vadd.f32 %v8211, %v8632
    %v8641 = vadd.f32 %v8212, %v8637
    %s8642 = scalar_lea.vmem %s10, 3
    %v8643 = vld [vmem:[%s8642] sm:$0x1]
    %v8645 = vlaneseq
    %v8646 = vshrl.u32 %v8645, 7
    %v8647 = vsub.s32 0, %v8646
    %v8648 = vrot.slane %v8643, %v8647
    %v8650 = vadd.f32 %v8640, %v8648
    %v8651 = vadd.f32 %v8641, %v8648
    %s8652 = scalar_lea.vmem %s11, 12
    %v8653 = vld [vmem:[%s8652] sm:$0xf]
    %v8654 = vadd.f32 %v6737, %v8650
    %v8655 = vadd.f32 %v6738, %v8651
    %v8656 = vsel %vm193, %v8654, 0.0
    %8657 = vadd.xlane.f32.xlu0 %v8656
    %v8658 = vpop.xlane.xlu0 %8657
    %v8659 = vsel %vm193, %v8655, 0.0
    %8660 = vadd.xlane.f32.xlu0 %v8659
    %v8661 = vpop.xlane.xlu0 %8660
    %v8662 = vmul.f32 %v8658, %v2110
    %v8663 = vmul.f32 %v8661, %v2110
    %v8664 = vsub.f32 %v8654, %v8662
    %v8665 = vsub.f32 %v8655, %v8663
    %v8666 = vmul.f32 %v8664, %v8664
    %v8667 = vmul.f32 %v8665, %v8665
    %v8668 = vsel %vm193, %v8666, 0.0
    %8669 = vadd.xlane.f32.xlu0 %v8668
    %v8670 = vpop.xlane.xlu0 %8669
    %v8671 = vsel %vm193, %v8667, 0.0
    %8672 = vadd.xlane.f32.xlu0 %v8671
    %v8673 = vpop.xlane.xlu0 %8672
    %v8674 = vmul.f32 %v8670, %v2110
    %v8675 = vmul.f32 %v8673, %v2110
    %v8676 = vadd.f32 %v8674, 1e-05
    %v8677 = vadd.f32 %v8675, 1e-05
    %v8678 = vrsqrt.pop %v8676
    %v8679 = vrsqrt.pop %v8677
    %v8680 = vmul.f32 %v8664, %v8678
    %v8681 = vmul.f32 %v8665, %v8679
    %v8682 = vlaneseq
    %v8683 = vshrl.u32 %v8682, 7
    %v8684 = vsub.s32 0, %v8683
    %v8685 = vrot.slane %v8653, %v8684
    %v8686 = vmul.f32 %v8680, %v8685
    %v8687 = vmul.f32 %v8681, %v8685
    %v8688 = vlaneseq
    %v8689 = vshrl.u32 %v8688, 7
    %v8690 = vsub.s32 1, %v8689
    %v8691 = vrot.slane %v8653, %v8690
    %v8692 = vadd.f32 %v8686, %v8691
    %v8693 = vadd.f32 %v8687, %v8691
    %s8694 = scalar_lea.vmem %s12, 96
    %v8695 = vld [vmem:[%s8694] sm:$0xff]
    %v8696 = vld [vmem:[%s8694 + $0x8] sm:$0xff]
    %v8697 = vld [vmem:[%s8694 + $0x10] sm:$0xff]
    %v8698 = vld [vmem:[%s8694 + $0x18] sm:$0xff]
    %s8699 = scalar_lea.vmem %s13, 3
    %v8700 = vld [vmem:[%s8699] sm:$0x1]
    %v8702 = vlaneseq
    %v8703 = vshrl.u32 %v8702, 7
    %v8704 = vsub.s32 0, %v8703
    %v8705 = vrot.slane %v8700, %v8704
    %v8708 = vsel %vm193, %v8692, 0
    %v8711 = vsel %vm193, %v8693, 0
    %8713 = vmatprep.subr.mxu0 0.0
    %8714 = vmatpush1.msra.mxu0 0.0
    %8715 = vmatprep.subr.mxu0 0.0
    %8716 = vmatpush1.msra.mxu0 0.0
    %8717 = vmatprep.subr.mxu0 0.0
    %8718 = vmatpush1.msra.mxu0 0.0
    %8719 = vmatprep.subr.mxu0 0.0
    %8720 = vmatpush1.msra.mxu0 0.0
    %8721 = vmatprep.subr.mxu0 0.0
    %8722 = vmatpush1.msra.mxu0 0.0
    %8723 = vmatprep.subr.mxu0 0.0
    %8724 = vmatpush1.msra.mxu0 0.0
    %8725 = vmatprep.subr.mxu0 0.0
    %8726 = vmatpush1.msra.mxu0 0.0
    %8727 = vmatprep.subr.mxu0 0.0
    %8728 = vmatpush1.msra.mxu0 0.0
    %8729 = vmatprep.subr.mxu0 0.0
    %8730 = vmatpush1.msra.mxu0 0.0
    %8731 = vmatprep.subr.mxu0 0.0
    %8732 = vmatpush1.msra.mxu0 0.0
    %8733 = vmatprep.subr.mxu0 0.0
    %8734 = vmatpush1.msra.mxu0 0.0
    %8735 = vmatprep.subr.mxu0 0.0
    %8736 = vmatpush1.msra.mxu0 0.0
    %8737 = vmatprep.subr.mxu0 0.0
    %8738 = vmatpush1.msra.mxu0 %v8698
    %8739 = vmatprep.subr.mxu0 0.0
    %8740 = vmatpush1.msra.mxu0 %v8697
    %8741 = vmatprep.subr.mxu0 0.0
    %8742 = vmatpush1.msra.mxu0 %v8696
    %8743 = vmatprep.subr.mxu0 0.0
    %8744 = vmatpush1.msra.mxu0 %v8695
    %8745 = vmatprep.subr.mxu0 0.0
    %8746 = vmatpush2.msra.mxu0 0.0
    %8747 = vmatprep.subr.mxu0 0.0
    %8748 = vmatpush2.msra.mxu0 0.0
    %8749 = vmatprep.subr.mxu0 0.0
    %8750 = vmatpush2.msra.mxu0 0.0
    %8751 = vmatprep.subr.mxu0 0.0
    %8752 = vmatpush2.msra.mxu0 0.0
    %8753 = vmatprep.subr.mxu0 0.0
    %8754 = vmatpush2.msra.mxu0 0.0
    %8755 = vmatprep.subr.mxu0 0.0
    %8756 = vmatpush2.msra.mxu0 0.0
    %8757 = vmatprep.subr.mxu0 0.0
    %8758 = vmatpush2.msra.mxu0 0.0
    %8759 = vmatprep.subr.mxu0 0.0
    %8760 = vmatpush2.msra.mxu0 0.0
    %8761 = vmatprep.subr.mxu0 0.0
    %8762 = vmatpush2.msra.mxu0 0.0
    %8763 = vmatprep.subr.mxu0 0.0
    %8764 = vmatpush2.msra.mxu0 0.0
    %8765 = vmatprep.subr.mxu0 0.0
    %8766 = vmatpush2.msra.mxu0 0.0
    %8767 = vmatprep.subr.mxu0 0.0
    %8768 = vmatpush2.msra.mxu0 0.0
    %8769 = vmatprep.subr.mxu0 0.0
    %8770 = vmatpush2.msra.mxu0 0.0
    %8771 = vmatprep.subr.mxu0 0.0
    %8772 = vmatpush2.msra.mxu0 0.0
    %8773 = vmatprep.subr.mxu0 0.0
    %8774 = vmatpush2.msra.mxu0 0.0
    %8775 = vmatprep.subr.mxu0 0.0
    %8776 = vmatpush2.msra.mxu0 0.0
    %8777 = vmatprep.mubr.f32.mxu0 0.0
    %8778 = vmatmul.mubr.f32.gmra.mxu0 %v8708
    %v8779 = vpop.f32.mrf.mxu0
    %v8780 = vadd.f32 %v8705, %v8779
    %v8781 = vpop.f32.mrf.mxu0
    %8782 = vmatprep.mubr.f32.mxu0 0.0
    %8783 = vmatmul.mubr.f32.gmra.mxu0 %v8711
    %v8784 = vpop.f32.mrf.mxu0
    %v8785 = vadd.f32 %v8705, %v8784
    %v8786 = vpop.f32.mrf.mxu0
    %8787 = vdwg.mxu0
    %v8788 = vmax.f32 %v8780, 0.0
    %v8789 = vmax.f32 %v8785, 0.0
    %s8790 = scalar_lea.vmem %s14, 96
    %v8791 = vld [vmem:[%s8790] sm:$0xff]
    %v8792 = vld [vmem:[%s8790 + $0x8] sm:$0xff]
    %v8793 = vld [vmem:[%s8790 + $0x10] sm:$0xff]
    %v8794 = vld [vmem:[%s8790 + $0x18] sm:$0xff]
    %s8795 = scalar_lea.vmem %s15, 3
    %v8796 = vld [vmem:[%s8795] sm:$0x1]
    %v8798 = vlaneseq
    %v8799 = vshrl.u32 %v8798, 7
    %v8800 = vsub.s32 0, %v8799
    %v8801 = vrot.slane %v8796, %v8800
    %v8804 = vsel %vm193, %v8788, 0
    %v8807 = vsel %vm193, %v8789, 0
    %8809 = vmatprep.subr.mxu0 0.0
    %8810 = vmatpush1.msra.mxu0 0.0
    %8811 = vmatprep.subr.mxu0 0.0
    %8812 = vmatpush1.msra.mxu0 0.0
    %8813 = vmatprep.subr.mxu0 0.0
    %8814 = vmatpush1.msra.mxu0 0.0
    %8815 = vmatprep.subr.mxu0 0.0
    %8816 = vmatpush1.msra.mxu0 0.0
    %8817 = vmatprep.subr.mxu0 0.0
    %8818 = vmatpush1.msra.mxu0 0.0
    %8819 = vmatprep.subr.mxu0 0.0
    %8820 = vmatpush1.msra.mxu0 0.0
    %8821 = vmatprep.subr.mxu0 0.0
    %8822 = vmatpush1.msra.mxu0 0.0
    %8823 = vmatprep.subr.mxu0 0.0
    %8824 = vmatpush1.msra.mxu0 0.0
    %8825 = vmatprep.subr.mxu0 0.0
    %8826 = vmatpush1.msra.mxu0 0.0
    %8827 = vmatprep.subr.mxu0 0.0
    %8828 = vmatpush1.msra.mxu0 0.0
    %8829 = vmatprep.subr.mxu0 0.0
    %8830 = vmatpush1.msra.mxu0 0.0
    %8831 = vmatprep.subr.mxu0 0.0
    %8832 = vmatpush1.msra.mxu0 0.0
    %8833 = vmatprep.subr.mxu0 0.0
    %8834 = vmatpush1.msra.mxu0 %v8794
    %8835 = vmatprep.subr.mxu0 0.0
    %8836 = vmatpush1.msra.mxu0 %v8793
    %8837 = vmatprep.subr.mxu0 0.0
    %8838 = vmatpush1.msra.mxu0 %v8792
    %8839 = vmatprep.subr.mxu0 0.0
    %8840 = vmatpush1.msra.mxu0 %v8791
    %8841 = vmatprep.subr.mxu0 0.0
    %8842 = vmatpush2.msra.mxu0 0.0
    %8843 = vmatprep.subr.mxu0 0.0
    %8844 = vmatpush2.msra.mxu0 0.0
    %8845 = vmatprep.subr.mxu0 0.0
    %8846 = vmatpush2.msra.mxu0 0.0
    %8847 = vmatprep.subr.mxu0 0.0
    %8848 = vmatpush2.msra.mxu0 0.0
    %8849 = vmatprep.subr.mxu0 0.0
    %8850 = vmatpush2.msra.mxu0 0.0
    %8851 = vmatprep.subr.mxu0 0.0
    %8852 = vmatpush2.msra.mxu0 0.0
    %8853 = vmatprep.subr.mxu0 0.0
    %8854 = vmatpush2.msra.mxu0 0.0
    %8855 = vmatprep.subr.mxu0 0.0
    %8856 = vmatpush2.msra.mxu0 0.0
    %8857 = vmatprep.subr.mxu0 0.0
    %8858 = vmatpush2.msra.mxu0 0.0
    %8859 = vmatprep.subr.mxu0 0.0
    %8860 = vmatpush2.msra.mxu0 0.0
    %8861 = vmatprep.subr.mxu0 0.0
    %8862 = vmatpush2.msra.mxu0 0.0
    %8863 = vmatprep.subr.mxu0 0.0
    %8864 = vmatpush2.msra.mxu0 0.0
    %8865 = vmatprep.subr.mxu0 0.0
    %8866 = vmatpush2.msra.mxu0 0.0
    %8867 = vmatprep.subr.mxu0 0.0
    %8868 = vmatpush2.msra.mxu0 0.0
    %8869 = vmatprep.subr.mxu0 0.0
    %8870 = vmatpush2.msra.mxu0 0.0
    %8871 = vmatprep.subr.mxu0 0.0
    %8872 = vmatpush2.msra.mxu0 0.0
    %8873 = vmatprep.mubr.f32.mxu0 0.0
    %8874 = vmatmul.mubr.f32.gmra.mxu0 %v8804
    %v8875 = vpop.f32.mrf.mxu0
    %v8876 = vadd.f32 %v8801, %v8875
    %v8877 = vpop.f32.mrf.mxu0
    %8878 = vmatprep.mubr.f32.mxu0 0.0
    %8879 = vmatmul.mubr.f32.gmra.mxu0 %v8807
    %v8880 = vpop.f32.mrf.mxu0
    %v8881 = vadd.f32 %v8801, %v8880
    %v8882 = vpop.f32.mrf.mxu0
    %8883 = vdwg.mxu0
    %v8884 = vadd.f32 %v8692, %v8876
    %v8885 = vadd.f32 %v8693, %v8881
    %v8886 = vsel %vm193, %v8884, 0.0
    %8887 = vadd.xlane.f32.xlu0 %v8886
    %v8888 = vpop.xlane.xlu0 %8887
    %v8889 = vsel %vm193, %v8885, 0.0
    %8890 = vadd.xlane.f32.xlu0 %v8889
    %v8891 = vpop.xlane.xlu0 %8890
    %v8892 = vmul.f32 %v8888, %v2110
    %v8893 = vmul.f32 %v8891, %v2110
    %v8894 = vsub.f32 %v8884, %v8892
    %v8895 = vsub.f32 %v8885, %v8893
    %v8896 = vmul.f32 %v8894, %v8894
    %v8897 = vmul.f32 %v8895, %v8895
    %v8898 = vsel %vm193, %v8896, 0.0
    %8899 = vadd.xlane.f32.xlu0 %v8898
    %v8900 = vpop.xlane.xlu0 %8899
    %v8901 = vsel %vm193, %v8897, 0.0
    %8902 = vadd.xlane.f32.xlu0 %v8901
    %v8903 = vpop.xlane.xlu0 %8902
    %v8904 = vmul.f32 %v8900, %v2110
    %v8905 = vmul.f32 %v8903, %v2110
    %v8906 = vadd.f32 %v8904, 1e-05
    %v8907 = vadd.f32 %v8905, 1e-05
    %v8908 = vrsqrt.pop %v8906
    %v8909 = vrsqrt.pop %v8907
    %v8910 = vmul.f32 %v8894, %v8908
    %v8911 = vmul.f32 %v8895, %v8909
    %v8912 = vlaneseq
    %v8913 = vshrl.u32 %v8912, 7
    %v8914 = vsub.s32 2, %v8913
    %v8915 = vrot.slane %v8653, %v8914
    %v8916 = vmul.f32 %v8910, %v8915
    %v8917 = vmul.f32 %v8911, %v8915
    %v8918 = vlaneseq
    %v8919 = vshrl.u32 %v8918, 7
    %v8920 = vsub.s32 3, %v8919
    %v8921 = vrot.slane %v8653, %v8920
    %v8922 = vadd.f32 %v8916, %v8921
    %v8923 = vadd.f32 %v8917, %v8921
    %v8924 = vadd.f32 %v181, %v8922
    %v8925 = vadd.f32 %v181, %v8923
    %v8926 = vld [vmem:[%s16] sm:$0xff]
    %v8927 = vld [vmem:[%s16 + $0x8] sm:$0xff]
    %v8928 = vld [vmem:[%s16 + $0x10] sm:$0xff]
    %v8929 = vld [vmem:[%s16 + $0x18] sm:$0xff]
    %v8930 = vld [vmem:[%s17] sm:$0x1]
    %v8932 = vlaneseq
    %v8933 = vshrl.u32 %v8932, 7
    %v8934 = vsub.s32 0, %v8933
    %v8935 = vrot.slane %v8930, %v8934
    %v8938 = vsel %vm193, %v8924, 0
    %v8941 = vsel %vm193, %v8925, 0
    %8943 = vmatprep.subr.mxu0 0.0
    %8944 = vmatpush1.msra.mxu0 0.0
    %8945 = vmatprep.subr.mxu0 0.0
    %8946 = vmatpush1.msra.mxu0 0.0
    %8947 = vmatprep.subr.mxu0 0.0
    %8948 = vmatpush1.msra.mxu0 0.0
    %8949 = vmatprep.subr.mxu0 0.0
    %8950 = vmatpush1.msra.mxu0 0.0
    %8951 = vmatprep.subr.mxu0 0.0
    %8952 = vmatpush1.msra.mxu0 0.0
    %8953 = vmatprep.subr.mxu0 0.0
    %8954 = vmatpush1.msra.mxu0 0.0
    %8955 = vmatprep.subr.mxu0 0.0
    %8956 = vmatpush1.msra.mxu0 0.0
    %8957 = vmatprep.subr.mxu0 0.0
    %8958 = vmatpush1.msra.mxu0 0.0
    %8959 = vmatprep.subr.mxu0 0.0
    %8960 = vmatpush1.msra.mxu0 0.0
    %8961 = vmatprep.subr.mxu0 0.0
    %8962 = vmatpush1.msra.mxu0 0.0
    %8963 = vmatprep.subr.mxu0 0.0
    %8964 = vmatpush1.msra.mxu0 0.0
    %8965 = vmatprep.subr.mxu0 0.0
    %8966 = vmatpush1.msra.mxu0 0.0
    %8967 = vmatprep.subr.mxu0 0.0
    %8968 = vmatpush1.msra.mxu0 %v8929
    %8969 = vmatprep.subr.mxu0 0.0
    %8970 = vmatpush1.msra.mxu0 %v8928
    %8971 = vmatprep.subr.mxu0 0.0
    %8972 = vmatpush1.msra.mxu0 %v8927
    %8973 = vmatprep.subr.mxu0 0.0
    %8974 = vmatpush1.msra.mxu0 %v8926
    %8975 = vmatprep.subr.mxu0 0.0
    %8976 = vmatpush2.msra.mxu0 0.0
    %8977 = vmatprep.subr.mxu0 0.0
    %8978 = vmatpush2.msra.mxu0 0.0
    %8979 = vmatprep.subr.mxu0 0.0
    %8980 = vmatpush2.msra.mxu0 0.0
    %8981 = vmatprep.subr.mxu0 0.0
    %8982 = vmatpush2.msra.mxu0 0.0
    %8983 = vmatprep.subr.mxu0 0.0
    %8984 = vmatpush2.msra.mxu0 0.0
    %8985 = vmatprep.subr.mxu0 0.0
    %8986 = vmatpush2.msra.mxu0 0.0
    %8987 = vmatprep.subr.mxu0 0.0
    %8988 = vmatpush2.msra.mxu0 0.0
    %8989 = vmatprep.subr.mxu0 0.0
    %8990 = vmatpush2.msra.mxu0 0.0
    %8991 = vmatprep.subr.mxu0 0.0
    %8992 = vmatpush2.msra.mxu0 0.0
    %8993 = vmatprep.subr.mxu0 0.0
    %8994 = vmatpush2.msra.mxu0 0.0
    %8995 = vmatprep.subr.mxu0 0.0
    %8996 = vmatpush2.msra.mxu0 0.0
    %8997 = vmatprep.subr.mxu0 0.0
    %8998 = vmatpush2.msra.mxu0 0.0
    %8999 = vmatprep.subr.mxu0 0.0
    %9000 = vmatpush2.msra.mxu0 0.0
    %9001 = vmatprep.subr.mxu0 0.0
    %9002 = vmatpush2.msra.mxu0 0.0
    %9003 = vmatprep.subr.mxu0 0.0
    %9004 = vmatpush2.msra.mxu0 0.0
    %9005 = vmatprep.subr.mxu0 0.0
    %9006 = vmatpush2.msra.mxu0 0.0
    %9007 = vmatprep.mubr.f32.mxu0 0.0
    %9008 = vmatmul.mubr.f32.gmra.mxu0 %v8938
    %v9009 = vpop.f32.mrf.mxu0
    %v9010 = vadd.f32 %v8935, %v9009
    %v9011 = vpop.f32.mrf.mxu0
    %9012 = vmatprep.mubr.f32.mxu0 0.0
    %9013 = vmatmul.mubr.f32.gmra.mxu0 %v8941
    %v9014 = vpop.f32.mrf.mxu0
    %v9015 = vadd.f32 %v8935, %v9014
    %v9016 = vpop.f32.mrf.mxu0
    %9017 = vdwg.mxu0
    %9018 = vst.msk [vmem:[#allocation2] sm:$0xff] %vm545, %v9010
    %9019 = vst.msk [vmem:[#allocation2 + $0x8] sm:$0xff] %vm545, %v9015
    // Predicated region
    $region74: #{host_img_transformer_encoder.1} parent=1 // pred_check
      _
    $region75: #{host_img_transformer_encoder.1} parent=1 // pred_check_branch
      %9021 = sbr.rel (0) target = $region77
    $region76: #{host_img_transformer_encoder.1} parent=1 // pred_region
      %s9023 = ssub.s32 256, 256
      %9024 = vsyncadd [#allocation3], %s9023
      %s9025 = sshll.u32 [#allocation2], 4
      %s9026 = int_to_ptr.vmem [resolvable:$true] %s9025
      %9031 = dma.vmem_to_hbm [thread:$0]  %s9026, 256, %s18, [#allocation3], 128, 128, 8
    $region77: #{host_img_transformer_encoder.1} parent=1 // pred_fallthru
      _
    // Predicated region
    $region78: #{host_img_transformer_encoder.1} parent=1 // pred_check
      _
    $region79: #{host_img_transformer_encoder.1} parent=1 // pred_check_branch
      %9033 = sbr.rel (0) target = $region81
    $region80: #{host_img_transformer_encoder.1} parent=1 // pred_region
      %9034 = dma.done [#allocation3], 256
    $region81: #{host_img_transformer_encoder.1} parent=1 // pred_fallthru
      _
    %9035 = vsyncpa [#allocation3], 1

</llo_original>
